<compile_context>
chip_gen: v5e
topology: v5e:2x2
jax: 0.10.0
libtpu: 0.0.40
codegen_flags: <defaults>
</compile_context>

<pallas_src>
import functools

import jax
import jax.numpy as jnp
from jax.experimental import pallas as pl
from jax.experimental.pallas import tpu as pltpu

EPS = 1e-5

# Tile caps (kept modest so double-buffered footprints fit every generation's
# scoped VMEM default, including v7x's 64 MiB physical VMEM).
TM, TN, TK = 256, 256, 256
FUSE_M_MAX = 512            # fully-fused conv+BN path when padded M fits one tile
STAGE_STRIDES = (1, 2, 2, 2)


def _round_up(x, m):
    return ((x + m - 1) // m) * m


def _pick_tile(dim, cap, mult):
    """Pad `dim` to a multiple of `mult`; pick the largest tile (multiple of
    `mult`, <= cap) that divides the padded extent.  Minimizes wasted MACs."""
    dp = _round_up(dim, mult)
    best = mult
    t = mult
    while t <= min(cap, dp):
        if dp % t == 0:
            best = t
        t += mult
    return best, dp


# --------------------------------------------------- fused conv + BN (+res) kernels

def _conv_bn_fused_kernel(a_ref, b_ref, g_ref, bt_ref, o_ref, acc_ref,
                          *, inv_count, relu):
    """Whole-M matmul tile; BN stats + normalize + optional ReLU in finalize."""
    @pl.when(pl.program_id(1) == 0)
    def _():
        acc_ref[...] = jnp.zeros_like(acc_ref)

    acc_ref[...] += jnp.dot(a_ref[...], b_ref[...],
                            preferred_element_type=jnp.float32)

    @pl.when(pl.program_id(1) == pl.num_programs(1) - 1)
    def _():
        y = acc_ref[...]
        # Padded M rows are exact zeros (zero-padded A) -> no effect on sums.
        mean = jnp.sum(y, axis=0, keepdims=True) * inv_count
        var = jnp.sum(y * y, axis=0, keepdims=True) * inv_count - mean * mean
        scale = jax.lax.rsqrt(var + EPS) * g_ref[...]
        shift = bt_ref[...] - mean * scale
        out = y * scale + shift
        if relu:
            out = jnp.maximum(out, 0.0)
        o_ref[...] = out


def _conv_bn_res_fused_kernel(a_ref, b_ref, g_ref, bt_ref, res_ref, o_ref,
                              acc_ref, *, inv_count):
    """Fused finalize: relu(bn(conv)) then relu(+ residual)."""
    @pl.when(pl.program_id(1) == 0)
    def _():
        acc_ref[...] = jnp.zeros_like(acc_ref)

    acc_ref[...] += jnp.dot(a_ref[...], b_ref[...],
                            preferred_element_type=jnp.float32)

    @pl.when(pl.program_id(1) == pl.num_programs(1) - 1)
    def _():
        y = acc_ref[...]
        mean = jnp.sum(y, axis=0, keepdims=True) * inv_count
        var = jnp.sum(y * y, axis=0, keepdims=True) * inv_count - mean * mean
        scale = jax.lax.rsqrt(var + EPS) * g_ref[...]
        shift = bt_ref[...] - mean * scale
        out = jnp.maximum(y * scale + shift, 0.0)
        o_ref[...] = jnp.maximum(out + res_ref[...], 0.0)


def fused_conv_bn(a_p, b_p, g_p, bt_p, *, count, relu, tn, tk, residual_p=None):
    """(Mp,Kp)bf16 @ (Kp,Np)bf16 with fused batch-channel-norm epilogue."""
    Mp, Kp = a_p.shape
    _, Np = b_p.shape
    inv_count = 1.0 / float(count)
    grid = (Np // tn, Kp // tk)
    a_spec = pl.BlockSpec((Mp, tk), lambda j, k: (0, k))
    b_spec = pl.BlockSpec((tk, tn), lambda j, k: (k, j))
    vec_spec = pl.BlockSpec((1, tn), lambda j, k: (0, j))
    out_spec = pl.BlockSpec((Mp, tn), lambda j, k: (0, j))
    if residual_p is None:
        kernel = functools.partial(_conv_bn_fused_kernel,
                                   inv_count=inv_count, relu=relu)
        in_specs = [a_spec, b_spec, vec_spec, vec_spec]
        args = (a_p, b_p, g_p, bt_p)
    else:
        kernel = functools.partial(_conv_bn_res_fused_kernel, inv_count=inv_count)
        in_specs = [a_spec, b_spec, vec_spec, vec_spec,
                    pl.BlockSpec((Mp, tn), lambda j, k: (0, j))]
        args = (a_p, b_p, g_p, bt_p, residual_p)
    return pl.pallas_call(
        kernel,
        out_shape=jax.ShapeDtypeStruct((Mp, Np), jnp.float32),
        grid=grid,
        in_specs=in_specs,
        out_specs=out_spec,
        scratch_shapes=[pltpu.VMEM((Mp, tn), jnp.float32)],
        compiler_params=pltpu.CompilerParams(
            dimension_semantics=("parallel", "arbitrary")),
    )(*args)


# --------------------------------------------------------- fallback (large M) path

def _matmul_bias_kernel(a_ref, b_ref, bias_ref, o_ref, acc_ref):
    """Tiled matmul with f32 VMEM accumulator; bias added at the final K step."""
    @pl.when(pl.program_id(2) == 0)
    def _():
        acc_ref[...] = jnp.zeros_like(acc_ref)

    acc_ref[...] += jnp.dot(a_ref[...], b_ref[...],
                            preferred_element_type=jnp.float32)

    @pl.when(pl.program_id(2) == pl.num_programs(2) - 1)
    def _():
        o_ref[...] = acc_ref[...] + bias_ref[...]


def pallas_matmul(a_p, b_p, bias_p, tm, tn, tk):
    """(Mp,Kp)bf16 @ (Kp,Np)bf16 (+ (1,Np)f32 bias) -> (Mp,Np)f32, pre-padded."""
    Mp, Kp = a_p.shape
    _, Np = b_p.shape
    if bias_p is None:
        bias_p = jnp.zeros((1, Np), jnp.float32)
    grid = (Mp // tm, Np // tn, Kp // tk)
    return pl.pallas_call(
        _matmul_bias_kernel,
        out_shape=jax.ShapeDtypeStruct((Mp, Np), jnp.float32),
        grid=grid,
        in_specs=[
            pl.BlockSpec((tm, tk), lambda i, j, k: (i, k)),
            pl.BlockSpec((tk, tn), lambda i, j, k: (k, j)),
            pl.BlockSpec((1, tn), lambda i, j, k: (0, j)),
        ],
        out_specs=pl.BlockSpec((tm, tn), lambda i, j, k: (i, j)),
        scratch_shapes=[pltpu.VMEM((tm, tn), jnp.float32)],
        compiler_params=pltpu.CompilerParams(
            dimension_semantics=("parallel", "parallel", "arbitrary")),
    )(a_p, b_p, bias_p)


def _bn_stats_kernel(x_ref, stats_ref):
    """Accumulate per-channel sum / sum-of-squares over the M axis."""
    @pl.when(pl.program_id(0) == 0)
    def _():
        stats_ref[...] = jnp.zeros_like(stats_ref)
    x = x_ref[...]
    s = jnp.sum(x, axis=0, keepdims=True)
    ss = jnp.sum(x * x, axis=0, keepdims=True)
    stats_ref[...] += jnp.concatenate([s, ss], axis=0)


def bn_stats(y_p, tmb):
    Mp, Cp = y_p.shape
    return pl.pallas_call(
        _bn_stats_kernel,
        out_shape=jax.ShapeDtypeStruct((2, Cp), jnp.float32),
        grid=(Mp // tmb,),
        in_specs=[pl.BlockSpec((tmb, Cp), lambda i: (i, 0))],
        out_specs=pl.BlockSpec((2, Cp), lambda i: (0, 0)),
        compiler_params=pltpu.CompilerParams(dimension_semantics=("arbitrary",)),
    )(y_p)


def _bn_apply_kernel(x_ref, stats_ref, g_ref, b_ref, o_ref, *, inv_count, relu):
    st = stats_ref[...]
    mean = st[0:1, :] * inv_count
    var = st[1:2, :] * inv_count - mean * mean
    scale = jax.lax.rsqrt(var + EPS) * g_ref[...]
    shift = b_ref[...] - mean * scale
    y = x_ref[...] * scale + shift
    if relu:
        y = jnp.maximum(y, 0.0)
    o_ref[...] = y


def _bn_apply_res_kernel(x_ref, res_ref, stats_ref, g_ref, b_ref, o_ref, *, inv_count):
    st = stats_ref[...]
    mean = st[0:1, :] * inv_count
    var = st[1:2, :] * inv_count - mean * mean
    scale = jax.lax.rsqrt(var + EPS) * g_ref[...]
    shift = b_ref[...] - mean * scale
    y = jnp.maximum(x_ref[...] * scale + shift, 0.0)
    o_ref[...] = jnp.maximum(y + res_ref[...], 0.0)


def bn_apply(y_p, stats, g_p, b_p, *, count, relu, tmb, residual_p=None):
    Mp, Cp = y_p.shape
    inv_count = 1.0 / float(count)
    vec_spec = pl.BlockSpec((1, Cp), lambda i: (0, 0))
    stat_spec = pl.BlockSpec((2, Cp), lambda i: (0, 0))
    tile_spec = pl.BlockSpec((tmb, Cp), lambda i: (i, 0))
    if residual_p is None:
        kernel = functools.partial(_bn_apply_kernel, inv_count=inv_count, relu=relu)
        in_specs = [tile_spec, stat_spec, vec_spec, vec_spec]
        args = (y_p, stats, g_p, b_p)
    else:
        kernel = functools.partial(_bn_apply_res_kernel, inv_count=inv_count)
        in_specs = [tile_spec, tile_spec, stat_spec, vec_spec, vec_spec]
        args = (y_p, residual_p, stats, g_p, b_p)
    return pl.pallas_call(
        kernel,
        out_shape=jax.ShapeDtypeStruct((Mp, Cp), jnp.float32),
        grid=(Mp // tmb,),
        in_specs=in_specs,
        out_specs=tile_spec,
        compiler_params=pltpu.CompilerParams(dimension_semantics=("parallel",)),
    )(*args)


# ------------------------------------------------------------- pooling reductions

def _max_reduce_kernel(x_ref, o_ref):
    o_ref[...] = jnp.max(x_ref[...], axis=1)


def max_reduce(x):
    """(M, KK, C) -> (M, C), max over the window axis (tiled over rows)."""
    M, KK, C = x.shape
    tm = min(TM, _round_up(M, 8))
    Mp = _round_up(M, tm)
    x_p = jnp.pad(x, ((0, Mp - M), (0, 0), (0, 0)), constant_values=-jnp.inf)
    out = pl.pallas_call(
        _max_reduce_kernel,
        out_shape=jax.ShapeDtypeStruct((Mp, C), jnp.float32),
        grid=(Mp // tm,),
        in_specs=[pl.BlockSpec((tm, KK, C), lambda i: (i, 0, 0))],
        out_specs=pl.BlockSpec((tm, C), lambda i: (i, 0)),
        compiler_params=pltpu.CompilerParams(dimension_semantics=("parallel",)),
    )(x_p)
    return out[:M]


def _mean_reduce_kernel(x_ref, o_ref):
    o_ref[...] = jnp.mean(x_ref[...], axis=1)


def mean_reduce(x):
    """(N, HW, C) -> (N, C), adaptive avg-pool to 1x1 (tiled over rows)."""
    N, HW, C = x.shape
    tn = min(TM, _round_up(N, 8))
    Np = _round_up(N, tn)
    x_p = jnp.pad(x, ((0, Np - N), (0, 0), (0, 0)))
    out = pl.pallas_call(
        _mean_reduce_kernel,
        out_shape=jax.ShapeDtypeStruct((Np, C), jnp.float32),
        grid=(Np // tn,),
        in_specs=[pl.BlockSpec((tn, HW, C), lambda i: (i, 0, 0))],
        out_specs=pl.BlockSpec((tn, C), lambda i: (i, 0)),
        compiler_params=pltpu.CompilerParams(dimension_semantics=("parallel",)),
    )(x_p)
    return out[:N]


# --------------------------------------------------------------------- JAX glue

def extract_patches(x_nhwc, k, stride, pad, pad_value=0.0):
    """im2col: (N,H,W,C) -> (N,Hout,Wout,k*k,C), (kh,kw) ordering matches PyTorch."""
    N, H, W, C = x_nhwc.shape
    xp = jnp.pad(x_nhwc, ((0, 0), (pad, pad), (pad, pad), (0, 0)),
                 constant_values=pad_value)
    Hout = (H + 2 * pad - k) // stride + 1
    Wout = (W + 2 * pad - k) // stride + 1
    cols = []
    for kh in range(k):
        for kw in range(k):
            cols.append(
                xp[:, kh: kh + stride * (Hout - 1) + 1: stride,
                      kw: kw + stride * (Wout - 1) + 1: stride, :])
    patches = jnp.stack(cols, axis=3)  # (N, Hout, Wout, k*k, C)
    return patches, Hout, Wout


def conv_bn_relu(x_nhwc, w4, gamma, beta, *, stride, pad, relu, residual=None):
    """Conv (im2col + Pallas MXU matmul) with fused BatchChannelNorm epilogue.

    w4: pre-transposed (k, k, cin, cout) bf16 weight.
    If `residual` is given, the epilogue computes relu(relu(bn(conv)) + residual).
    Conv bias is omitted: it is cancelled exactly by the mean subtraction of the
    per-batch channel norm that always follows it.
    """
    N = x_nhwc.shape[0]
    k, _, cin, cout = w4.shape
    patches, Hout, Wout = extract_patches(x_nhwc, k, stride, pad, 0.0)
    M = N * Hout * Wout
    K = k * k * cin
    a = patches.reshape(M, K)
    b = w4.reshape(K, cout)

    tn, Np = _pick_tile(cout, TN, 128)
    tk, Kp = _pick_tile(K, TK, 128)

    g_p = jnp.pad(gamma.reshape(1, cout).astype(jnp.float32),
                  ((0, 0), (0, Np - cout)))
    bt_p = jnp.pad(beta.reshape(1, cout).astype(jnp.float32),
                   ((0, 0), (0, Np - cout)))
    b_p = jnp.pad(b.astype(jnp.bfloat16), ((0, Kp - K), (0, Np - cout)))

    Mp = _round_up(M, 8)
    if Mp <= FUSE_M_MAX:
        # Single fused kernel: matmul + BN stats + normalize (+relu, +residual).
        a_p = jnp.pad(a.astype(jnp.bfloat16), ((0, Mp - M), (0, Kp - K)))
        res_p = None
        if residual is not None:
            res_p = jnp.pad(residual.reshape(M, cout).astype(jnp.float32),
                            ((0, Mp - M), (0, Np - cout)))
        out_p = fused_conv_bn(a_p, b_p, g_p, bt_p, count=M, relu=relu,
                              tn=tn, tk=tk, residual_p=res_p)
    else:
        # Large-M fallback: tiled matmul -> stats pass -> apply pass.
        tm = min(TM, Mp)
        Mp = _round_up(M, tm)
        a_p = jnp.pad(a.astype(jnp.bfloat16), ((0, Mp - M), (0, Kp - K)))
        y_p = pallas_matmul(a_p, b_p, None, tm, tn, tk)
        stats = bn_stats(y_p, tmb=tm)
        res_p = None
        if residual is not None:
            res_p = jnp.pad(residual.reshape(M, cout).astype(jnp.float32),
                            ((0, Mp - M), (0, Np - cout)))
        out_p = bn_apply(y_p, stats, g_p, bt_p, count=M, relu=relu, tmb=tm,
                         residual_p=res_p)
    return out_p[:M, :cout].reshape(N, Hout, Wout, cout)


def maxpool2d(x_nhwc, k, stride, pad):
    # TODO(synk): window gather still materializes (M, k*k, C) in the wrapper;
    # an in-kernel strided-tap reduction would avoid the k*k expansion.
    N, H, W, C = x_nhwc.shape
    patches, Hout, Wout = extract_patches(x_nhwc, k, stride, pad, pad_value=-jnp.inf)
    y = max_reduce(patches.reshape(N * Hout * Wout, k * k, C))
    return y.reshape(N, Hout, Wout, C)


def linear(x, wT, bias):
    """x @ wT + bias with lane-dense padding (PyTorch Linear semantics)."""
    M, K = x.shape
    _, N = wT.shape
    tn, Np = _pick_tile(N, TN, 128)
    tk, Kp = _pick_tile(K, TK, 128)
    tm = min(TM, _round_up(M, 8))
    Mp = _round_up(M, tm)
    a_p = jnp.pad(x.astype(jnp.bfloat16), ((0, Mp - M), (0, Kp - K)))
    b_p = jnp.pad(wT.astype(jnp.bfloat16), ((0, Kp - K), (0, Np - N)))
    bias_p = jnp.pad(bias.reshape(1, N).astype(jnp.float32),
                     ((0, 0), (0, Np - N)))
    y_p = pallas_matmul(a_p, b_p, bias_p, tm, tn, tk)
    return y_p[:M, :N]


def residual_block(x_nhwc, bp, stride):
    res = x_nhwc
    out = conv_bn_relu(x_nhwc, bp["conv1_w"], bp["bn1_g"], bp["bn1_b"],
                       stride=stride, pad=1, relu=True)
    if "ds_w" in bp:
        res = conv_bn_relu(x_nhwc, bp["ds_w"], bp["ds_g"], bp["ds_b"],
                           stride=stride, pad=0, relu=False)
    # conv2 + bn2 + relu + residual-add + relu, all fused into one kernel epilogue.
    out = conv_bn_relu(out, bp["conv2_w"], bp["bn2_g"], bp["bn2_b"],
                       stride=1, pad=1, relu=True, residual=res)
    return out


def resnet_small_forward(params, x_nchw):
    x = jnp.transpose(x_nchw, (0, 2, 3, 1)).astype(jnp.float32)  # NCHW -> NHWC
    x = conv_bn_relu(x, params["conv1_w"], params["bn1_g"], params["bn1_b"],
                     stride=2, pad=3, relu=True)
    x = maxpool2d(x, k=3, stride=2, pad=1)
    for li, layer_blocks in enumerate(params["layers"]):
        for bi, bp in enumerate(layer_blocks):
            stride = STAGE_STRIDES[li] if bi == 0 else 1
            x = residual_block(x, bp, stride)
    N, H, W, C = x.shape
    x = mean_reduce(x.reshape(N, H * W, C))              # adaptive avg pool -> (N, C)
    logits = linear(x, params["fc_wT"], params["fc_b"])  # x @ W.T + b
    return logits


# --------------------------------------------------------------- parameter init

def init_params(key, input_channels, classes, blocks=(1, 1, 1, 1)):
    """Parameters in PyTorch layout (Conv2d weight = (cout, cin, kh, kw))."""
    keys = iter(jax.random.split(key, 256))

    def conv_init(cout, cin, k):
        fan_in = cin * k * k
        w = jax.random.normal(next(keys), (cout, cin, k, k), jnp.float32) * (
            2.0 / fan_in) ** 0.5
        b = jnp.zeros((cout,), jnp.float32)
        return w, b

    def bn_init(c):
        return jnp.ones((c,), jnp.float32), jnp.zeros((c,), jnp.float32)

    params = {"conv1": conv_init(64, input_channels, 7), "bn1": bn_init(64)}
    stages = [(64, 64, 1), (64, 128, 2), (128, 256, 2), (256, 512, 2)]
    layers = []
    for li, (cin, cout, stride) in enumerate(stages):
        stage_blocks = []
        for bi in range(blocks[li]):
            bcin = cin if bi == 0 else cout
            bp = {"conv1": conv_init(cout, bcin, 3), "bn1": bn_init(cout),
                  "conv2": conv_init(cout, cout, 3), "bn2": bn_init(cout)}
            if bi == 0 and stride != 1:
                bp["ds_conv"] = conv_init(cout, bcin, 1)
                bp["ds_bn"] = bn_init(cout * 4)  # BatchChannelNormvit(out_channels*4)
            stage_blocks.append(bp)
        layers.append(stage_blocks)
    params["layers"] = layers
    params["fc_w"] = jax.random.normal(next(keys), (classes, 512), jnp.float32) * (
        1.0 / 512) ** 0.5
    params["fc_b"] = jnp.zeros((classes,), jnp.float32)
    return params


def prepare_params(raw):
    """One-time conversion: transpose conv weights to (k,k,cin,cout) bf16, take
    fc_w.T, drop conv biases (cancelled by the batch-stat norm), slice ds_bn to
    the first cout entries (only those are used)."""
    def conv_w(wb):
        w, _ = wb
        return jnp.transpose(w, (2, 3, 1, 0)).astype(jnp.bfloat16)

    prepared = {
        "conv1_w": conv_w(raw["conv1"]),
        "bn1_g": raw["bn1"][0], "bn1_b": raw["bn1"][1],
        "fc_wT": raw["fc_w"].T.astype(jnp.bfloat16),
        "fc_b": raw["fc_b"],
    }
    layers = []
    for stage in raw["layers"]:
        blocks = []
        for bp in stage:
            nb = {
                "conv1_w": conv_w(bp["conv1"]),
                "bn1_g": bp["bn1"][0], "bn1_b": bp["bn1"][1],
                "conv2_w": conv_w(bp["conv2"]),
                "bn2_g": bp["bn2"][0], "bn2_b": bp["bn2"][1],
            }
            if "ds_conv" in bp:
                cout = bp["ds_conv"][0].shape[0]
                nb["ds_w"] = conv_w(bp["ds_conv"])
                nb["ds_g"] = bp["ds_bn"][0][:cout]
                nb["ds_b"] = bp["ds_bn"][1][:cout]
            blocks.append(nb)
        layers.append(blocks)
    prepared["layers"] = layers
    return prepared


# ------------------------------------------------------------------------ main

if __name__ == "__main__":
    key = jax.random.PRNGKey(0)
    k_param, k_x = jax.random.split(key)

    batch, in_ch, spatial, classes = 2, 4, 16, 10
    raw_params = init_params(k_param, input_channels=in_ch, classes=classes,
                             blocks=(1, 1, 1, 1))
    params = prepare_params(raw_params)
    x = jax.random.normal(k_x, (batch, in_ch, spatial, spatial), jnp.float32)  # NCHW

    fwd = jax.jit(resnet_small_forward)
    logits = fwd(params, x)
    logits = jax.block_until_ready(logits)

    assert logits.shape == (batch, classes), logits.shape
    assert bool(jnp.all(jnp.isfinite(logits)))
    print("KERNEL_OK")
</pallas_src>

<mosaic_0001>
module attributes {stable_mosaic.version = 11 : i64} {
  func.func @_conv_bn_fused_kernel(%arg0: i32, %arg1: i32, %arg2: memref<128x256xbf16, #tpu.memory_space<vmem>>, %arg3: memref<256x128xbf16, #tpu.memory_space<vmem>>, %arg4: memref<1x128xf32, #tpu.memory_space<vmem>>, %arg5: memref<1x128xf32, #tpu.memory_space<vmem>>, %arg6: memref<128x128xf32, #tpu.memory_space<vmem>>, %arg7: memref<128x128xf32, #tpu.memory_space<vmem>>) attributes {dimension_semantics = [#tpu.dimension_semantics<parallel>, #tpu.dimension_semantics<arbitrary>], iteration_bounds = array<i64: 1, 1>, scalar_prefetch = 0 : i64, scratch_operands = 1 : i64, tpu.core_type = #tpu.core_type<tc>, window_params = [{transform_indices = @transform_0, window_bounds = array<i64: 128, 256>}, {transform_indices = @transform_1, window_bounds = array<i64: 256, 128>}, {transform_indices = @transform_2, window_bounds = array<i64: 1, 128>}, {transform_indices = @transform_3, window_bounds = array<i64: 1, 128>}, {transform_indices = @transform_4, window_bounds = array<i64: 128, 128>}]} {
    %c0_i32 = arith.constant 0 : i32
    %0 = arith.cmpi eq, %arg1, %c0_i32 : i32
    %1 = arith.extui %0 : i1 to i32
    %c0_i32_0 = arith.constant 0 : i32
    %2 = arith.cmpi ne, %1, %c0_i32_0 : i32
    scf.if %2 {
      %cst_10 = arith.constant 0.000000e+00 : f32
      %12 = vector.broadcast %cst_10 : f32 to vector<128x128xf32>
      %c0_11 = arith.constant 0 : index
      %c0_12 = arith.constant 0 : index
      %13 = vector.load %arg7[%c0_11, %c0_12] : memref<128x128xf32, #tpu.memory_space<vmem>>, vector<128x128xf32>
      tpu.vector_store %arg7[%c0_11, %c0_12], %12 {strides = array<i32>} : memref<128x128xf32, #tpu.memory_space<vmem>>, vector<128x128xf32>,
    } else {
    }
    %c0 = arith.constant 0 : index
    %c0_1 = arith.constant 0 : index
    %3 = vector.load %arg7[%c0, %c0_1] : memref<128x128xf32, #tpu.memory_space<vmem>>, vector<128x128xf32>
    %c0_2 = arith.constant 0 : index
    %c0_3 = arith.constant 0 : index
    %4 = vector.load %arg2[%c0_2, %c0_3] : memref<128x256xbf16, #tpu.memory_space<vmem>>, vector<128x256xbf16>
    %c0_4 = arith.constant 0 : index
    %c0_5 = arith.constant 0 : index
    %5 = vector.load %arg3[%c0_4, %c0_5] : memref<256x128xbf16, #tpu.memory_space<vmem>>, vector<256x128xbf16>
    %cst = arith.constant dense<0.000000e+00> : vector<128x128xf32>
    %6 = tpu.matmul %4, %5, %cst {dimension_numbers = #tpu.dot_dimension_numbers<[1], [0], [0], [1], [0, 0, 1, 1], [], []>} : vector<128x256xbf16>, vector<256x128xbf16>, vector<128x128xf32> -> vector<128x128xf32>
    %7 = arith.addf %3, %6 : vector<128x128xf32>
    %c0_6 = arith.constant 0 : index
    %c0_7 = arith.constant 0 : index
    %8 = vector.load %arg7[%c0_6, %c0_7] : memref<128x128xf32, #tpu.memory_space<vmem>>, vector<128x128xf32>
    tpu.vector_store %arg7[%c0_6, %c0_7], %7 {strides = array<i32>} : memref<128x128xf32, #tpu.memory_space<vmem>>, vector<128x128xf32>,
    %c0_i32_8 = arith.constant 0 : i32
    %9 = arith.cmpi eq, %arg1, %c0_i32_8 : i32
    %10 = arith.extui %9 : i1 to i32
    %c0_i32_9 = arith.constant 0 : i32
    %11 = arith.cmpi ne, %10, %c0_i32_9 : i32
    scf.if %11 {
      %c0_10 = arith.constant 0 : index
      %c0_11 = arith.constant 0 : index
      %12 = vector.load %arg7[%c0_10, %c0_11] : memref<128x128xf32, #tpu.memory_space<vmem>>, vector<128x128xf32>
      %cst_12 = arith.constant dense<0.000000e+00> : vector<128xf32>
      %13 = vector.multi_reduction <add>, %12, %cst_12 [0] : vector<128x128xf32> to vector<128xf32>
      %14 = vector.shape_cast %13 : vector<128xf32> to vector<1x128xf32>
      %cst_13 = arith.constant 7.812500e-03 : f32
      %15 = vector.broadcast %cst_13 : f32 to vector<1x128xf32>
      %16 = arith.mulf %14, %15 : vector<1x128xf32>
      %17 = arith.mulf %12, %12 : vector<128x128xf32>
      %cst_14 = arith.constant dense<0.000000e+00> : vector<128xf32>
      %18 = vector.multi_reduction <add>, %17, %cst_14 [0] : vector<128x128xf32> to vector<128xf32>
      %19 = vector.shape_cast %18 : vector<128xf32> to vector<1x128xf32>
      %cst_15 = arith.constant 7.812500e-03 : f32
      %20 = vector.broadcast %cst_15 : f32 to vector<1x128xf32>
      %21 = arith.mulf %19, %20 : vector<1x128xf32>
      %22 = arith.mulf %16, %16 : vector<1x128xf32>
      %23 = arith.subf %21, %22 : vector<1x128xf32>
      %cst_16 = arith.constant 9.99999974E-6 : f32
      %24 = vector.broadcast %cst_16 : f32 to vector<1x128xf32>
      %25 = arith.addf %23, %24 : vector<1x128xf32>
      %26 = math.rsqrt %25 : vector<1x128xf32>
      %c0_17 = arith.constant 0 : index
      %c0_18 = arith.constant 0 : index
      %27 = vector.load %arg4[%c0_17, %c0_18] : memref<1x128xf32, #tpu.memory_space<vmem>>, vector<1x128xf32>
      %28 = arith.mulf %26, %27 : vector<1x128xf32>
      %c0_19 = arith.constant 0 : index
      %c0_20 = arith.constant 0 : index
      %29 = vector.load %arg5[%c0_19, %c0_20] : memref<1x128xf32, #tpu.memory_space<vmem>>, vector<1x128xf32>
      %30 = arith.mulf %16, %28 : vector<1x128xf32>
      %31 = arith.subf %29, %30 : vector<1x128xf32>
      %32 = vector.broadcast %28 : vector<1x128xf32> to vector<128x128xf32>
      %33 = arith.mulf %12, %32 : vector<128x128xf32>
      %34 = vector.broadcast %31 : vector<1x128xf32> to vector<128x128xf32>
      %35 = arith.addf %33, %34 : vector<128x128xf32>
      %cst_21 = arith.constant 0.000000e+00 : f32
      %36 = vector.broadcast %cst_21 : f32 to vector<128x128xf32>
      %37 = arith.maximumf %35, %36 : vector<128x128xf32>
      %c0_22 = arith.constant 0 : index
      %c0_23 = arith.constant 0 : index
      %38 = vector.load %arg6[%c0_22, %c0_23] : memref<128x128xf32, #tpu.memory_space<vmem>>, vector<128x128xf32>
      tpu.vector_store %arg6[%c0_22, %c0_23], %37 {strides = array<i32>} : memref<128x128xf32, #tpu.memory_space<vmem>>, vector<128x128xf32>,
    } else {
    }
    return
  }
  func.func @transform_0(%arg0: i32, %arg1: i32) -> (i32, i32) {
    %c0_i32 = arith.constant 0 : i32
    %c0_i32_0 = arith.constant 0 : i32
    return %c0_i32, %arg1 : i32, i32
  }
  func.func @transform_1(%arg0: i32, %arg1: i32) -> (i32, i32) {
    %c0_i32 = arith.constant 0 : i32
    return %arg1, %arg0 : i32, i32
  }
  func.func @transform_2(%arg0: i32, %arg1: i32) -> (i32, i32) {
    %c0_i32 = arith.constant 0 : i32
    %c0_i32_0 = arith.constant 0 : i32
    return %c0_i32, %arg0 : i32, i32
  }
  func.func @transform_3(%arg0: i32, %arg1: i32) -> (i32, i32) {
    %c0_i32 = arith.constant 0 : i32
    %c0_i32_0 = arith.constant 0 : i32
    return %c0_i32, %arg0 : i32, i32
  }
  func.func @transform_4(%arg0: i32, %arg1: i32) -> (i32, i32) {
    %c0_i32 = arith.constant 0 : i32
    %c0_i32_0 = arith.constant 0 : i32
    return %c0_i32, %arg0 : i32, i32
  }
}

module attributes {stable_mosaic.version = 11 : i64} {
  func.func @_max_reduce_kernel(%arg0: i32, %arg1: memref<32x9x64xf32, #tpu.memory_space<vmem>>, %arg2: memref<32x64xf32, #tpu.memory_space<vmem>>) attributes {dimension_semantics = [#tpu.dimension_semantics<parallel>], iteration_bounds = array<i64: 1>, scalar_prefetch = 0 : i64, scratch_operands = 0 : i64, tpu.core_type = #tpu.core_type<tc>, window_params = [{transform_indices = @transform_0, window_bounds = array<i64: 32, 9, 64>}, {transform_indices = @transform_1, window_bounds = array<i64: 32, 64>}]} {
    %c0 = arith.constant 0 : index
    %c0_0 = arith.constant 0 : index
    %c0_1 = arith.constant 0 : index
    %0 = vector.load %arg1[%c0, %c0_0, %c0_1] : memref<32x9x64xf32, #tpu.memory_space<vmem>>, vector<32x9x64xf32>
    %cst = arith.constant dense<0xFF800000> : vector<32x64xf32>
    %1 = vector.multi_reduction <maximumf>, %0, %cst [1] : vector<32x9x64xf32> to vector<32x64xf32>
    %c0_2 = arith.constant 0 : index
    %c0_3 = arith.constant 0 : index
    %2 = vector.load %arg2[%c0_2, %c0_3] : memref<32x64xf32, #tpu.memory_space<vmem>>, vector<32x64xf32>
    tpu.vector_store %arg2[%c0_2, %c0_3], %1 {strides = array<i32>} : memref<32x64xf32, #tpu.memory_space<vmem>>, vector<32x64xf32>,
    return
  }
  func.func @transform_0(%arg0: i32) -> (i32, i32, i32) {
    %c0_i32 = arith.constant 0 : i32
    %c0_i32_0 = arith.constant 0 : i32
    %c0_i32_1 = arith.constant 0 : i32
    return %arg0, %c0_i32, %c0_i32_0 : i32, i32, i32
  }
  func.func @transform_1(%arg0: i32) -> (i32, i32) {
    %c0_i32 = arith.constant 0 : i32
    %c0_i32_0 = arith.constant 0 : i32
    return %arg0, %c0_i32 : i32, i32
  }
}

module attributes {stable_mosaic.version = 11 : i64} {
  func.func @_conv_bn_fused_kernel(%arg0: i32, %arg1: i32, %arg2: memref<32x128xbf16, #tpu.memory_space<vmem>>, %arg3: memref<128x128xbf16, #tpu.memory_space<vmem>>, %arg4: memref<1x128xf32, #tpu.memory_space<vmem>>, %arg5: memref<1x128xf32, #tpu.memory_space<vmem>>, %arg6: memref<32x128xf32, #tpu.memory_space<vmem>>, %arg7: memref<32x128xf32, #tpu.memory_space<vmem>>) attributes {dimension_semantics = [#tpu.dimension_semantics<parallel>, #tpu.dimension_semantics<arbitrary>], iteration_bounds = array<i64: 1, 5>, scalar_prefetch = 0 : i64, scratch_operands = 1 : i64, tpu.core_type = #tpu.core_type<tc>, window_params = [{transform_indices = @transform_0, window_bounds = array<i64: 32, 128>}, {transform_indices = @transform_1, window_bounds = array<i64: 128, 128>}, {transform_indices = @transform_2, window_bounds = array<i64: 1, 128>}, {transform_indices = @transform_3, window_bounds = array<i64: 1, 128>}, {transform_indices = @transform_4, window_bounds = array<i64: 32, 128>}]} {
    %c0_i32 = arith.constant 0 : i32
    %0 = arith.cmpi eq, %arg1, %c0_i32 : i32
    %1 = arith.extui %0 : i1 to i32
    %c0_i32_0 = arith.constant 0 : i32
    %2 = arith.cmpi ne, %1, %c0_i32_0 : i32
    scf.if %2 {
      %cst_9 = arith.constant 0.000000e+00 : f32
      %12 = vector.broadcast %cst_9 : f32 to vector<32x128xf32>
      %c0_10 = arith.constant 0 : index
      %c0_11 = arith.constant 0 : index
      %13 = vector.load %arg7[%c0_10, %c0_11] : memref<32x128xf32, #tpu.memory_space<vmem>>, vector<32x128xf32>
      tpu.vector_store %arg7[%c0_10, %c0_11], %12 {strides = array<i32>} : memref<32x128xf32, #tpu.memory_space<vmem>>, vector<32x128xf32>,
    } else {
    }
    %c0 = arith.constant 0 : index
    %c0_1 = arith.constant 0 : index
    %3 = vector.load %arg7[%c0, %c0_1] : memref<32x128xf32, #tpu.memory_space<vmem>>, vector<32x128xf32>
    %c0_2 = arith.constant 0 : index
    %c0_3 = arith.constant 0 : index
    %4 = vector.load %arg2[%c0_2, %c0_3] : memref<32x128xbf16, #tpu.memory_space<vmem>>, vector<32x128xbf16>
    %c0_4 = arith.constant 0 : index
    %c0_5 = arith.constant 0 : index
    %5 = vector.load %arg3[%c0_4, %c0_5] : memref<128x128xbf16, #tpu.memory_space<vmem>>, vector<128x128xbf16>
    %cst = arith.constant dense<0.000000e+00> : vector<32x128xf32>
    %6 = tpu.matmul %4, %5, %cst {dimension_numbers = #tpu.dot_dimension_numbers<[1], [0], [0], [1], [0, 0, 1, 1], [], []>} : vector<32x128xbf16>, vector<128x128xbf16>, vector<32x128xf32> -> vector<32x128xf32>
    %7 = arith.addf %3, %6 : vector<32x128xf32>
    %c0_6 = arith.constant 0 : index
    %c0_7 = arith.constant 0 : index
    %8 = vector.load %arg7[%c0_6, %c0_7] : memref<32x128xf32, #tpu.memory_space<vmem>>, vector<32x128xf32>
    tpu.vector_store %arg7[%c0_6, %c0_7], %7 {strides = array<i32>} : memref<32x128xf32, #tpu.memory_space<vmem>>, vector<32x128xf32>,
    %c4_i32 = arith.constant 4 : i32
    %9 = arith.cmpi eq, %arg1, %c4_i32 : i32
    %10 = arith.extui %9 : i1 to i32
    %c0_i32_8 = arith.constant 0 : i32
    %11 = arith.cmpi ne, %10, %c0_i32_8 : i32
    scf.if %11 {
      %c0_9 = arith.constant 0 : index
      %c0_10 = arith.constant 0 : index
      %12 = vector.load %arg7[%c0_9, %c0_10] : memref<32x128xf32, #tpu.memory_space<vmem>>, vector<32x128xf32>
      %cst_11 = arith.constant dense<0.000000e+00> : vector<128xf32>
      %13 = vector.multi_reduction <add>, %12, %cst_11 [0] : vector<32x128xf32> to vector<128xf32>
      %14 = vector.shape_cast %13 : vector<128xf32> to vector<1x128xf32>
      %cst_12 = arith.constant 3.125000e-02 : f32
      %15 = vector.broadcast %cst_12 : f32 to vector<1x128xf32>
      %16 = arith.mulf %14, %15 : vector<1x128xf32>
      %17 = arith.mulf %12, %12 : vector<32x128xf32>
      %cst_13 = arith.constant dense<0.000000e+00> : vector<128xf32>
      %18 = vector.multi_reduction <add>, %17, %cst_13 [0] : vector<32x128xf32> to vector<128xf32>
      %19 = vector.shape_cast %18 : vector<128xf32> to vector<1x128xf32>
      %cst_14 = arith.constant 3.125000e-02 : f32
      %20 = vector.broadcast %cst_14 : f32 to vector<1x128xf32>
      %21 = arith.mulf %19, %20 : vector<1x128xf32>
      %22 = arith.mulf %16, %16 : vector<1x128xf32>
      %23 = arith.subf %21, %22 : vector<1x128xf32>
      %cst_15 = arith.constant 9.99999974E-6 : f32
      %24 = vector.broadcast %cst_15 : f32 to vector<1x128xf32>
      %25 = arith.addf %23, %24 : vector<1x128xf32>
      %26 = math.rsqrt %25 : vector<1x128xf32>
      %c0_16 = arith.constant 0 : index
      %c0_17 = arith.constant 0 : index
      %27 = vector.load %arg4[%c0_16, %c0_17] : memref<1x128xf32, #tpu.memory_space<vmem>>, vector<1x128xf32>
      %28 = arith.mulf %26, %27 : vector<1x128xf32>
      %c0_18 = arith.constant 0 : index
      %c0_19 = arith.constant 0 : index
      %29 = vector.load %arg5[%c0_18, %c0_19] : memref<1x128xf32, #tpu.memory_space<vmem>>, vector<1x128xf32>
      %30 = arith.mulf %16, %28 : vector<1x128xf32>
      %31 = arith.subf %29, %30 : vector<1x128xf32>
      %32 = vector.broadcast %28 : vector<1x128xf32> to vector<32x128xf32>
      %33 = arith.mulf %12, %32 : vector<32x128xf32>
      %34 = vector.broadcast %31 : vector<1x128xf32> to vector<32x128xf32>
      %35 = arith.addf %33, %34 : vector<32x128xf32>
      %cst_20 = arith.constant 0.000000e+00 : f32
      %36 = vector.broadcast %cst_20 : f32 to vector<32x128xf32>
      %37 = arith.maximumf %35, %36 : vector<32x128xf32>
      %c0_21 = arith.constant 0 : index
      %c0_22 = arith.constant 0 : index
      %38 = vector.load %arg6[%c0_21, %c0_22] : memref<32x128xf32, #tpu.memory_space<vmem>>, vector<32x128xf32>
      tpu.vector_store %arg6[%c0_21, %c0_22], %37 {strides = array<i32>} : memref<32x128xf32, #tpu.memory_space<vmem>>, vector<32x128xf32>,
    } else {
    }
    return
  }
  func.func @transform_0(%arg0: i32, %arg1: i32) -> (i32, i32) {
    %c0_i32 = arith.constant 0 : i32
    %c0_i32_0 = arith.constant 0 : i32
    return %c0_i32, %arg1 : i32, i32
  }
  func.func @transform_1(%arg0: i32, %arg1: i32) -> (i32, i32) {
    %c0_i32 = arith.constant 0 : i32
    return %arg1, %arg0 : i32, i32
  }
  func.func @transform_2(%arg0: i32, %arg1: i32) -> (i32, i32) {
    %c0_i32 = arith.constant 0 : i32
    %c0_i32_0 = arith.constant 0 : i32
    return %c0_i32, %arg0 : i32, i32
  }
  func.func @transform_3(%arg0: i32, %arg1: i32) -> (i32, i32) {
    %c0_i32 = arith.constant 0 : i32
    %c0_i32_0 = arith.constant 0 : i32
    return %c0_i32, %arg0 : i32, i32
  }
  func.func @transform_4(%arg0: i32, %arg1: i32) -> (i32, i32) {
    %c0_i32 = arith.constant 0 : i32
    %c0_i32_0 = arith.constant 0 : i32
    return %c0_i32, %arg0 : i32, i32
  }
}

module attributes {stable_mosaic.version = 11 : i64} {
  func.func @_conv_bn_res_fused_kernel(%arg0: i32, %arg1: i32, %arg2: memref<32x128xbf16, #tpu.memory_space<vmem>>, %arg3: memref<128x128xbf16, #tpu.memory_space<vmem>>, %arg4: memref<1x128xf32, #tpu.memory_space<vmem>>, %arg5: memref<1x128xf32, #tpu.memory_space<vmem>>, %arg6: memref<32x128xf32, #tpu.memory_space<vmem>>, %arg7: memref<32x128xf32, #tpu.memory_space<vmem>>, %arg8: memref<32x128xf32, #tpu.memory_space<vmem>>) attributes {dimension_semantics = [#tpu.dimension_semantics<parallel>, #tpu.dimension_semantics<arbitrary>], iteration_bounds = array<i64: 1, 5>, scalar_prefetch = 0 : i64, scratch_operands = 1 : i64, tpu.core_type = #tpu.core_type<tc>, window_params = [{transform_indices = @transform_0, window_bounds = array<i64: 32, 128>}, {transform_indices = @transform_1, window_bounds = array<i64: 128, 128>}, {transform_indices = @transform_2, window_bounds = array<i64: 1, 128>}, {transform_indices = @transform_3, window_bounds = array<i64: 1, 128>}, {transform_indices = @transform_4, window_bounds = array<i64: 32, 128>}, {transform_indices = @transform_5, window_bounds = array<i64: 32, 128>}]} {
    %c0_i32 = arith.constant 0 : i32
    %0 = arith.cmpi eq, %arg1, %c0_i32 : i32
    %1 = arith.extui %0 : i1 to i32
    %c0_i32_0 = arith.constant 0 : i32
    %2 = arith.cmpi ne, %1, %c0_i32_0 : i32
    scf.if %2 {
      %cst_9 = arith.constant 0.000000e+00 : f32
      %12 = vector.broadcast %cst_9 : f32 to vector<32x128xf32>
      %c0_10 = arith.constant 0 : index
      %c0_11 = arith.constant 0 : index
      %13 = vector.load %arg8[%c0_10, %c0_11] : memref<32x128xf32, #tpu.memory_space<vmem>>, vector<32x128xf32>
      tpu.vector_store %arg8[%c0_10, %c0_11], %12 {strides = array<i32>} : memref<32x128xf32, #tpu.memory_space<vmem>>, vector<32x128xf32>,
    } else {
    }
    %c0 = arith.constant 0 : index
    %c0_1 = arith.constant 0 : index
    %3 = vector.load %arg8[%c0, %c0_1] : memref<32x128xf32, #tpu.memory_space<vmem>>, vector<32x128xf32>
    %c0_2 = arith.constant 0 : index
    %c0_3 = arith.constant 0 : index
    %4 = vector.load %arg2[%c0_2, %c0_3] : memref<32x128xbf16, #tpu.memory_space<vmem>>, vector<32x128xbf16>
    %c0_4 = arith.constant 0 : index
    %c0_5 = arith.constant 0 : index
    %5 = vector.load %arg3[%c0_4, %c0_5] : memref<128x128xbf16, #tpu.memory_space<vmem>>, vector<128x128xbf16>
    %cst = arith.constant dense<0.000000e+00> : vector<32x128xf32>
    %6 = tpu.matmul %4, %5, %cst {dimension_numbers = #tpu.dot_dimension_numbers<[1], [0], [0], [1], [0, 0, 1, 1], [], []>} : vector<32x128xbf16>, vector<128x128xbf16>, vector<32x128xf32> -> vector<32x128xf32>
    %7 = arith.addf %3, %6 : vector<32x128xf32>
    %c0_6 = arith.constant 0 : index
    %c0_7 = arith.constant 0 : index
    %8 = vector.load %arg8[%c0_6, %c0_7] : memref<32x128xf32, #tpu.memory_space<vmem>>, vector<32x128xf32>
    tpu.vector_store %arg8[%c0_6, %c0_7], %7 {strides = array<i32>} : memref<32x128xf32, #tpu.memory_space<vmem>>, vector<32x128xf32>,
    %c4_i32 = arith.constant 4 : i32
    %9 = arith.cmpi eq, %arg1, %c4_i32 : i32
    %10 = arith.extui %9 : i1 to i32
    %c0_i32_8 = arith.constant 0 : i32
    %11 = arith.cmpi ne, %10, %c0_i32_8 : i32
    scf.if %11 {
      %c0_9 = arith.constant 0 : index
      %c0_10 = arith.constant 0 : index
      %12 = vector.load %arg8[%c0_9, %c0_10] : memref<32x128xf32, #tpu.memory_space<vmem>>, vector<32x128xf32>
      %cst_11 = arith.constant dense<0.000000e+00> : vector<128xf32>
      %13 = vector.multi_reduction <add>, %12, %cst_11 [0] : vector<32x128xf32> to vector<128xf32>
      %14 = vector.shape_cast %13 : vector<128xf32> to vector<1x128xf32>
      %cst_12 = arith.constant 3.125000e-02 : f32
      %15 = vector.broadcast %cst_12 : f32 to vector<1x128xf32>
      %16 = arith.mulf %14, %15 : vector<1x128xf32>
      %17 = arith.mulf %12, %12 : vector<32x128xf32>
      %cst_13 = arith.constant dense<0.000000e+00> : vector<128xf32>
      %18 = vector.multi_reduction <add>, %17, %cst_13 [0] : vector<32x128xf32> to vector<128xf32>
      %19 = vector.shape_cast %18 : vector<128xf32> to vector<1x128xf32>
      %cst_14 = arith.constant 3.125000e-02 : f32
      %20 = vector.broadcast %cst_14 : f32 to vector<1x128xf32>
      %21 = arith.mulf %19, %20 : vector<1x128xf32>
      %22 = arith.mulf %16, %16 : vector<1x128xf32>
      %23 = arith.subf %21, %22 : vector<1x128xf32>
      %cst_15 = arith.constant 9.99999974E-6 : f32
      %24 = vector.broadcast %cst_15 : f32 to vector<1x128xf32>
      %25 = arith.addf %23, %24 : vector<1x128xf32>
      %26 = math.rsqrt %25 : vector<1x128xf32>
      %c0_16 = arith.constant 0 : index
      %c0_17 = arith.constant 0 : index
      %27 = vector.load %arg4[%c0_16, %c0_17] : memref<1x128xf32, #tpu.memory_space<vmem>>, vector<1x128xf32>
      %28 = arith.mulf %26, %27 : vector<1x128xf32>
      %c0_18 = arith.constant 0 : index
      %c0_19 = arith.constant 0 : index
      %29 = vector.load %arg5[%c0_18, %c0_19] : memref<1x128xf32, #tpu.memory_space<vmem>>, vector<1x128xf32>
      %30 = arith.mulf %16, %28 : vector<1x128xf32>
      %31 = arith.subf %29, %30 : vector<1x128xf32>
      %32 = vector.broadcast %28 : vector<1x128xf32> to vector<32x128xf32>
      %33 = arith.mulf %12, %32 : vector<32x128xf32>
      %34 = vector.broadcast %31 : vector<1x128xf32> to vector<32x128xf32>
      %35 = arith.addf %33, %34 : vector<32x128xf32>
      %cst_20 = arith.constant 0.000000e+00 : f32
      %36 = vector.broadcast %cst_20 : f32 to vector<32x128xf32>
      %37 = arith.maximumf %35, %36 : vector<32x128xf32>
      %c0_21 = arith.constant 0 : index
      %c0_22 = arith.constant 0 : index
      %38 = vector.load %arg6[%c0_21, %c0_22] : memref<32x128xf32, #tpu.memory_space<vmem>>, vector<32x128xf32>
      %39 = arith.addf %37, %38 : vector<32x128xf32>
      %cst_23 = arith.constant 0.000000e+00 : f32
      %40 = vector.broadcast %cst_23 : f32 to vector<32x128xf32>
      %41 = arith.maximumf %39, %40 : vector<32x128xf32>
      %c0_24 = arith.constant 0 : index
      %c0_25 = arith.constant 0 : index
      %42 = vector.load %arg7[%c0_24, %c0_25] : memref<32x128xf32, #tpu.memory_space<vmem>>, vector<32x128xf32>
      tpu.vector_store %arg7[%c0_24, %c0_25], %41 {strides = array<i32>} : memref<32x128xf32, #tpu.memory_space<vmem>>, vector<32x128xf32>,
    } else {
    }
    return
  }
  func.func @transform_0(%arg0: i32, %arg1: i32) -> (i32, i32) {
    %c0_i32 = arith.constant 0 : i32
    %c0_i32_0 = arith.constant 0 : i32
    return %c0_i32, %arg1 : i32, i32
  }
  func.func @transform_1(%arg0: i32, %arg1: i32) -> (i32, i32) {
    %c0_i32 = arith.constant 0 : i32
    return %arg1, %arg0 : i32, i32
  }
  func.func @transform_2(%arg0: i32, %arg1: i32) -> (i32, i32) {
    %c0_i32 = arith.constant 0 : i32
    %c0_i32_0 = arith.constant 0 : i32
    return %c0_i32, %arg0 : i32, i32
  }
  func.func @transform_3(%arg0: i32, %arg1: i32) -> (i32, i32) {
    %c0_i32 = arith.constant 0 : i32
    %c0_i32_0 = arith.constant 0 : i32
    return %c0_i32, %arg0 : i32, i32
  }
  func.func @transform_4(%arg0: i32, %arg1: i32) -> (i32, i32) {
    %c0_i32 = arith.constant 0 : i32
    %c0_i32_0 = arith.constant 0 : i32
    return %c0_i32, %arg0 : i32, i32
  }
  func.func @transform_5(%arg0: i32, %arg1: i32) -> (i32, i32) {
    %c0_i32 = arith.constant 0 : i32
    %c0_i32_0 = arith.constant 0 : i32
    return %c0_i32, %arg0 : i32, i32
  }
}

module attributes {stable_mosaic.version = 11 : i64} {
  func.func @_conv_bn_fused_kernel(%arg0: i32, %arg1: i32, %arg2: memref<8x128xbf16, #tpu.memory_space<vmem>>, %arg3: memref<128x128xbf16, #tpu.memory_space<vmem>>, %arg4: memref<1x128xf32, #tpu.memory_space<vmem>>, %arg5: memref<1x128xf32, #tpu.memory_space<vmem>>, %arg6: memref<8x128xf32, #tpu.memory_space<vmem>>, %arg7: memref<8x128xf32, #tpu.memory_space<vmem>>) attributes {dimension_semantics = [#tpu.dimension_semantics<parallel>, #tpu.dimension_semantics<arbitrary>], iteration_bounds = array<i64: 1, 5>, scalar_prefetch = 0 : i64, scratch_operands = 1 : i64, tpu.core_type = #tpu.core_type<tc>, window_params = [{transform_indices = @transform_0, window_bounds = array<i64: 8, 128>}, {transform_indices = @transform_1, window_bounds = array<i64: 128, 128>}, {transform_indices = @transform_2, window_bounds = array<i64: 1, 128>}, {transform_indices = @transform_3, window_bounds = array<i64: 1, 128>}, {transform_indices = @transform_4, window_bounds = array<i64: 8, 128>}]} {
    %c0_i32 = arith.constant 0 : i32
    %0 = arith.cmpi eq, %arg1, %c0_i32 : i32
    %1 = arith.extui %0 : i1 to i32
    %c0_i32_0 = arith.constant 0 : i32
    %2 = arith.cmpi ne, %1, %c0_i32_0 : i32
    scf.if %2 {
      %cst_9 = arith.constant 0.000000e+00 : f32
      %12 = vector.broadcast %cst_9 : f32 to vector<8x128xf32>
      %c0_10 = arith.constant 0 : index
      %c0_11 = arith.constant 0 : index
      %13 = vector.load %arg7[%c0_10, %c0_11] : memref<8x128xf32, #tpu.memory_space<vmem>>, vector<8x128xf32>
      tpu.vector_store %arg7[%c0_10, %c0_11], %12 {strides = array<i32>} : memref<8x128xf32, #tpu.memory_space<vmem>>, vector<8x128xf32>,
    } else {
    }
    %c0 = arith.constant 0 : index
    %c0_1 = arith.constant 0 : index
    %3 = vector.load %arg7[%c0, %c0_1] : memref<8x128xf32, #tpu.memory_space<vmem>>, vector<8x128xf32>
    %c0_2 = arith.constant 0 : index
    %c0_3 = arith.constant 0 : index
    %4 = vector.load %arg2[%c0_2, %c0_3] : memref<8x128xbf16, #tpu.memory_space<vmem>>, vector<8x128xbf16>
    %c0_4 = arith.constant 0 : index
    %c0_5 = arith.constant 0 : index
    %5 = vector.load %arg3[%c0_4, %c0_5] : memref<128x128xbf16, #tpu.memory_space<vmem>>, vector<128x128xbf16>
    %cst = arith.constant dense<0.000000e+00> : vector<8x128xf32>
    %6 = tpu.matmul %4, %5, %cst {dimension_numbers = #tpu.dot_dimension_numbers<[1], [0], [0], [1], [0, 0, 1, 1], [], []>} : vector<8x128xbf16>, vector<128x128xbf16>, vector<8x128xf32> -> vector<8x128xf32>
    %7 = arith.addf %3, %6 : vector<8x128xf32>
    %c0_6 = arith.constant 0 : index
    %c0_7 = arith.constant 0 : index
    %8 = vector.load %arg7[%c0_6, %c0_7] : memref<8x128xf32, #tpu.memory_space<vmem>>, vector<8x128xf32>
    tpu.vector_store %arg7[%c0_6, %c0_7], %7 {strides = array<i32>} : memref<8x128xf32, #tpu.memory_space<vmem>>, vector<8x128xf32>,
    %c4_i32 = arith.constant 4 : i32
    %9 = arith.cmpi eq, %arg1, %c4_i32 : i32
    %10 = arith.extui %9 : i1 to i32
    %c0_i32_8 = arith.constant 0 : i32
    %11 = arith.cmpi ne, %10, %c0_i32_8 : i32
    scf.if %11 {
      %c0_9 = arith.constant 0 : index
      %c0_10 = arith.constant 0 : index
      %12 = vector.load %arg7[%c0_9, %c0_10] : memref<8x128xf32, #tpu.memory_space<vmem>>, vector<8x128xf32>
      %cst_11 = arith.constant dense<0.000000e+00> : vector<128xf32>
      %13 = vector.multi_reduction <add>, %12, %cst_11 [0] : vector<8x128xf32> to vector<128xf32>
      %14 = vector.shape_cast %13 : vector<128xf32> to vector<1x128xf32>
      %cst_12 = arith.constant 1.250000e-01 : f32
      %15 = vector.broadcast %cst_12 : f32 to vector<1x128xf32>
      %16 = arith.mulf %14, %15 : vector<1x128xf32>
      %17 = arith.mulf %12, %12 : vector<8x128xf32>
      %cst_13 = arith.constant dense<0.000000e+00> : vector<128xf32>
      %18 = vector.multi_reduction <add>, %17, %cst_13 [0] : vector<8x128xf32> to vector<128xf32>
      %19 = vector.shape_cast %18 : vector<128xf32> to vector<1x128xf32>
      %cst_14 = arith.constant 1.250000e-01 : f32
      %20 = vector.broadcast %cst_14 : f32 to vector<1x128xf32>
      %21 = arith.mulf %19, %20 : vector<1x128xf32>
      %22 = arith.mulf %16, %16 : vector<1x128xf32>
      %23 = arith.subf %21, %22 : vector<1x128xf32>
      %cst_15 = arith.constant 9.99999974E-6 : f32
      %24 = vector.broadcast %cst_15 : f32 to vector<1x128xf32>
      %25 = arith.addf %23, %24 : vector<1x128xf32>
      %26 = math.rsqrt %25 : vector<1x128xf32>
      %c0_16 = arith.constant 0 : index
      %c0_17 = arith.constant 0 : index
      %27 = vector.load %arg4[%c0_16, %c0_17] : memref<1x128xf32, #tpu.memory_space<vmem>>, vector<1x128xf32>
      %28 = arith.mulf %26, %27 : vector<1x128xf32>
      %c0_18 = arith.constant 0 : index
      %c0_19 = arith.constant 0 : index
      %29 = vector.load %arg5[%c0_18, %c0_19] : memref<1x128xf32, #tpu.memory_space<vmem>>, vector<1x128xf32>
      %30 = arith.mulf %16, %28 : vector<1x128xf32>
      %31 = arith.subf %29, %30 : vector<1x128xf32>
      %32 = vector.broadcast %28 : vector<1x128xf32> to vector<8x128xf32>
      %33 = arith.mulf %12, %32 : vector<8x128xf32>
      %34 = vector.broadcast %31 : vector<1x128xf32> to vector<8x128xf32>
      %35 = arith.addf %33, %34 : vector<8x128xf32>
      %cst_20 = arith.constant 0.000000e+00 : f32
      %36 = vector.broadcast %cst_20 : f32 to vector<8x128xf32>
      %37 = arith.maximumf %35, %36 : vector<8x128xf32>
      %c0_21 = arith.constant 0 : index
      %c0_22 = arith.constant 0 : index
      %38 = vector.load %arg6[%c0_21, %c0_22] : memref<8x128xf32, #tpu.memory_space<vmem>>, vector<8x128xf32>
      tpu.vector_store %arg6[%c0_21, %c0_22], %37 {strides = array<i32>} : memref<8x128xf32, #tpu.memory_space<vmem>>, vector<8x128xf32>,
    } else {
    }
    return
  }
  func.func @transform_0(%arg0: i32, %arg1: i32) -> (i32, i32) {
    %c0_i32 = arith.constant 0 : i32
    %c0_i32_0 = arith.constant 0 : i32
    return %c0_i32, %arg1 : i32, i32
  }
  func.func @transform_1(%arg0: i32, %arg1: i32) -> (i32, i32) {
    %c0_i32 = arith.constant 0 : i32
    return %arg1, %arg0 : i32, i32
  }
  func.func @transform_2(%arg0: i32, %arg1: i32) -> (i32, i32) {
    %c0_i32 = arith.constant 0 : i32
    %c0_i32_0 = arith.constant 0 : i32
    return %c0_i32, %arg0 : i32, i32
  }
  func.func @transform_3(%arg0: i32, %arg1: i32) -> (i32, i32) {
    %c0_i32 = arith.constant 0 : i32
    %c0_i32_0 = arith.constant 0 : i32
    return %c0_i32, %arg0 : i32, i32
  }
  func.func @transform_4(%arg0: i32, %arg1: i32) -> (i32, i32) {
    %c0_i32 = arith.constant 0 : i32
    %c0_i32_0 = arith.constant 0 : i32
    return %c0_i32, %arg0 : i32, i32
  }
}

module attributes {stable_mosaic.version = 11 : i64} {
  func.func @_conv_bn_res_fused_kernel(%arg0: i32, %arg1: i32, %arg2: memref<8x128xbf16, #tpu.memory_space<vmem>>, %arg3: memref<128x128xbf16, #tpu.memory_space<vmem>>, %arg4: memref<1x128xf32, #tpu.memory_space<vmem>>, %arg5: memref<1x128xf32, #tpu.memory_space<vmem>>, %arg6: memref<8x128xf32, #tpu.memory_space<vmem>>, %arg7: memref<8x128xf32, #tpu.memory_space<vmem>>, %arg8: memref<8x128xf32, #tpu.memory_space<vmem>>) attributes {dimension_semantics = [#tpu.dimension_semantics<parallel>, #tpu.dimension_semantics<arbitrary>], iteration_bounds = array<i64: 1, 9>, scalar_prefetch = 0 : i64, scratch_operands = 1 : i64, tpu.core_type = #tpu.core_type<tc>, window_params = [{transform_indices = @transform_0, window_bounds = array<i64: 8, 128>}, {transform_indices = @transform_1, window_bounds = array<i64: 128, 128>}, {transform_indices = @transform_2, window_bounds = array<i64: 1, 128>}, {transform_indices = @transform_3, window_bounds = array<i64: 1, 128>}, {transform_indices = @transform_4, window_bounds = array<i64: 8, 128>}, {transform_indices = @transform_5, window_bounds = array<i64: 8, 128>}]} {
    %c0_i32 = arith.constant 0 : i32
    %0 = arith.cmpi eq, %arg1, %c0_i32 : i32
    %1 = arith.extui %0 : i1 to i32
    %c0_i32_0 = arith.constant 0 : i32
    %2 = arith.cmpi ne, %1, %c0_i32_0 : i32
    scf.if %2 {
      %cst_9 = arith.constant 0.000000e+00 : f32
      %12 = vector.broadcast %cst_9 : f32 to vector<8x128xf32>
      %c0_10 = arith.constant 0 : index
      %c0_11 = arith.constant 0 : index
      %13 = vector.load %arg8[%c0_10, %c0_11] : memref<8x128xf32, #tpu.memory_space<vmem>>, vector<8x128xf32>
      tpu.vector_store %arg8[%c0_10, %c0_11], %12 {strides = array<i32>} : memref<8x128xf32, #tpu.memory_space<vmem>>, vector<8x128xf32>,
    } else {
    }
    %c0 = arith.constant 0 : index
    %c0_1 = arith.constant 0 : index
    %3 = vector.load %arg8[%c0, %c0_1] : memref<8x128xf32, #tpu.memory_space<vmem>>, vector<8x128xf32>
    %c0_2 = arith.constant 0 : index
    %c0_3 = arith.constant 0 : index
    %4 = vector.load %arg2[%c0_2, %c0_3] : memref<8x128xbf16, #tpu.memory_space<vmem>>, vector<8x128xbf16>
    %c0_4 = arith.constant 0 : index
    %c0_5 = arith.constant 0 : index
    %5 = vector.load %arg3[%c0_4, %c0_5] : memref<128x128xbf16, #tpu.memory_space<vmem>>, vector<128x128xbf16>
    %cst = arith.constant dense<0.000000e+00> : vector<8x128xf32>
    %6 = tpu.matmul %4, %5, %cst {dimension_numbers = #tpu.dot_dimension_numbers<[1], [0], [0], [1], [0, 0, 1, 1], [], []>} : vector<8x128xbf16>, vector<128x128xbf16>, vector<8x128xf32> -> vector<8x128xf32>
    %7 = arith.addf %3, %6 : vector<8x128xf32>
    %c0_6 = arith.constant 0 : index
    %c0_7 = arith.constant 0 : index
    %8 = vector.load %arg8[%c0_6, %c0_7] : memref<8x128xf32, #tpu.memory_space<vmem>>, vector<8x128xf32>
    tpu.vector_store %arg8[%c0_6, %c0_7], %7 {strides = array<i32>} : memref<8x128xf32, #tpu.memory_space<vmem>>, vector<8x128xf32>,
    %c8_i32 = arith.constant 8 : i32
    %9 = arith.cmpi eq, %arg1, %c8_i32 : i32
    %10 = arith.extui %9 : i1 to i32
    %c0_i32_8 = arith.constant 0 : i32
    %11 = arith.cmpi ne, %10, %c0_i32_8 : i32
    scf.if %11 {
      %c0_9 = arith.constant 0 : index
      %c0_10 = arith.constant 0 : index
      %12 = vector.load %arg8[%c0_9, %c0_10] : memref<8x128xf32, #tpu.memory_space<vmem>>, vector<8x128xf32>
      %cst_11 = arith.constant dense<0.000000e+00> : vector<128xf32>
      %13 = vector.multi_reduction <add>, %12, %cst_11 [0] : vector<8x128xf32> to vector<128xf32>
      %14 = vector.shape_cast %13 : vector<128xf32> to vector<1x128xf32>
      %cst_12 = arith.constant 1.250000e-01 : f32
      %15 = vector.broadcast %cst_12 : f32 to vector<1x128xf32>
      %16 = arith.mulf %14, %15 : vector<1x128xf32>
      %17 = arith.mulf %12, %12 : vector<8x128xf32>
      %cst_13 = arith.constant dense<0.000000e+00> : vector<128xf32>
      %18 = vector.multi_reduction <add>, %17, %cst_13 [0] : vector<8x128xf32> to vector<128xf32>
      %19 = vector.shape_cast %18 : vector<128xf32> to vector<1x128xf32>
      %cst_14 = arith.constant 1.250000e-01 : f32
      %20 = vector.broadcast %cst_14 : f32 to vector<1x128xf32>
      %21 = arith.mulf %19, %20 : vector<1x128xf32>
      %22 = arith.mulf %16, %16 : vector<1x128xf32>
      %23 = arith.subf %21, %22 : vector<1x128xf32>
      %cst_15 = arith.constant 9.99999974E-6 : f32
      %24 = vector.broadcast %cst_15 : f32 to vector<1x128xf32>
      %25 = arith.addf %23, %24 : vector<1x128xf32>
      %26 = math.rsqrt %25 : vector<1x128xf32>
      %c0_16 = arith.constant 0 : index
      %c0_17 = arith.constant 0 : index
      %27 = vector.load %arg4[%c0_16, %c0_17] : memref<1x128xf32, #tpu.memory_space<vmem>>, vector<1x128xf32>
      %28 = arith.mulf %26, %27 : vector<1x128xf32>
      %c0_18 = arith.constant 0 : index
      %c0_19 = arith.constant 0 : index
      %29 = vector.load %arg5[%c0_18, %c0_19] : memref<1x128xf32, #tpu.memory_space<vmem>>, vector<1x128xf32>
      %30 = arith.mulf %16, %28 : vector<1x128xf32>
      %31 = arith.subf %29, %30 : vector<1x128xf32>
      %32 = vector.broadcast %28 : vector<1x128xf32> to vector<8x128xf32>
      %33 = arith.mulf %12, %32 : vector<8x128xf32>
      %34 = vector.broadcast %31 : vector<1x128xf32> to vector<8x128xf32>
      %35 = arith.addf %33, %34 : vector<8x128xf32>
      %cst_20 = arith.constant 0.000000e+00 : f32
      %36 = vector.broadcast %cst_20 : f32 to vector<8x128xf32>
      %37 = arith.maximumf %35, %36 : vector<8x128xf32>
      %c0_21 = arith.constant 0 : index
      %c0_22 = arith.constant 0 : index
      %38 = vector.load %arg6[%c0_21, %c0_22] : memref<8x128xf32, #tpu.memory_space<vmem>>, vector<8x128xf32>
      %39 = arith.addf %37, %38 : vector<8x128xf32>
      %cst_23 = arith.constant 0.000000e+00 : f32
      %40 = vector.broadcast %cst_23 : f32 to vector<8x128xf32>
      %41 = arith.maximumf %39, %40 : vector<8x128xf32>
      %c0_24 = arith.constant 0 : index
      %c0_25 = arith.constant 0 : index
      %42 = vector.load %arg7[%c0_24, %c0_25] : memref<8x128xf32, #tpu.memory_space<vmem>>, vector<8x128xf32>
      tpu.vector_store %arg7[%c0_24, %c0_25], %41 {strides = array<i32>} : memref<8x128xf32, #tpu.memory_space<vmem>>, vector<8x128xf32>,
    } else {
    }
    return
  }
  func.func @transform_0(%arg0: i32, %arg1: i32) -> (i32, i32) {
    %c0_i32 = arith.constant 0 : i32
    %c0_i32_0 = arith.constant 0 : i32
    return %c0_i32, %arg1 : i32, i32
  }
  func.func @transform_1(%arg0: i32, %arg1: i32) -> (i32, i32) {
    %c0_i32 = arith.constant 0 : i32
    return %arg1, %arg0 : i32, i32
  }
  func.func @transform_2(%arg0: i32, %arg1: i32) -> (i32, i32) {
    %c0_i32 = arith.constant 0 : i32
    %c0_i32_0 = arith.constant 0 : i32
    return %c0_i32, %arg0 : i32, i32
  }
  func.func @transform_3(%arg0: i32, %arg1: i32) -> (i32, i32) {
    %c0_i32 = arith.constant 0 : i32
    %c0_i32_0 = arith.constant 0 : i32
    return %c0_i32, %arg0 : i32, i32
  }
  func.func @transform_4(%arg0: i32, %arg1: i32) -> (i32, i32) {
    %c0_i32 = arith.constant 0 : i32
    %c0_i32_0 = arith.constant 0 : i32
    return %c0_i32, %arg0 : i32, i32
  }
  func.func @transform_5(%arg0: i32, %arg1: i32) -> (i32, i32) {
    %c0_i32 = arith.constant 0 : i32
    %c0_i32_0 = arith.constant 0 : i32
    return %c0_i32, %arg0 : i32, i32
  }
}

module attributes {stable_mosaic.version = 11 : i64} {
  func.func @_conv_bn_fused_kernel(%arg0: i32, %arg1: i32, %arg2: memref<8x128xbf16, #tpu.memory_space<vmem>>, %arg3: memref<128x128xbf16, #tpu.memory_space<vmem>>, %arg4: memref<1x128xf32, #tpu.memory_space<vmem>>, %arg5: memref<1x128xf32, #tpu.memory_space<vmem>>, %arg6: memref<8x128xf32, #tpu.memory_space<vmem>>, %arg7: memref<8x128xf32, #tpu.memory_space<vmem>>) attributes {dimension_semantics = [#tpu.dimension_semantics<parallel>, #tpu.dimension_semantics<arbitrary>], iteration_bounds = array<i64: 1, 1>, scalar_prefetch = 0 : i64, scratch_operands = 1 : i64, tpu.core_type = #tpu.core_type<tc>, window_params = [{transform_indices = @transform_0, window_bounds = array<i64: 8, 128>}, {transform_indices = @transform_1, window_bounds = array<i64: 128, 128>}, {transform_indices = @transform_2, window_bounds = array<i64: 1, 128>}, {transform_indices = @transform_3, window_bounds = array<i64: 1, 128>}, {transform_indices = @transform_4, window_bounds = array<i64: 8, 128>}]} {
    %c0_i32 = arith.constant 0 : i32
    %0 = arith.cmpi eq, %arg1, %c0_i32 : i32
    %1 = arith.extui %0 : i1 to i32
    %c0_i32_0 = arith.constant 0 : i32
    %2 = arith.cmpi ne, %1, %c0_i32_0 : i32
    scf.if %2 {
      %cst_10 = arith.constant 0.000000e+00 : f32
      %12 = vector.broadcast %cst_10 : f32 to vector<8x128xf32>
      %c0_11 = arith.constant 0 : index
      %c0_12 = arith.constant 0 : index
      %13 = vector.load %arg7[%c0_11, %c0_12] : memref<8x128xf32, #tpu.memory_space<vmem>>, vector<8x128xf32>
      tpu.vector_store %arg7[%c0_11, %c0_12], %12 {strides = array<i32>} : memref<8x128xf32, #tpu.memory_space<vmem>>, vector<8x128xf32>,
    } else {
    }
    %c0 = arith.constant 0 : index
    %c0_1 = arith.constant 0 : index
    %3 = vector.load %arg7[%c0, %c0_1] : memref<8x128xf32, #tpu.memory_space<vmem>>, vector<8x128xf32>
    %c0_2 = arith.constant 0 : index
    %c0_3 = arith.constant 0 : index
    %4 = vector.load %arg2[%c0_2, %c0_3] : memref<8x128xbf16, #tpu.memory_space<vmem>>, vector<8x128xbf16>
    %c0_4 = arith.constant 0 : index
    %c0_5 = arith.constant 0 : index
    %5 = vector.load %arg3[%c0_4, %c0_5] : memref<128x128xbf16, #tpu.memory_space<vmem>>, vector<128x128xbf16>
    %cst = arith.constant dense<0.000000e+00> : vector<8x128xf32>
    %6 = tpu.matmul %4, %5, %cst {dimension_numbers = #tpu.dot_dimension_numbers<[1], [0], [0], [1], [0, 0, 1, 1], [], []>} : vector<8x128xbf16>, vector<128x128xbf16>, vector<8x128xf32> -> vector<8x128xf32>
    %7 = arith.addf %3, %6 : vector<8x128xf32>
    %c0_6 = arith.constant 0 : index
    %c0_7 = arith.constant 0 : index
    %8 = vector.load %arg7[%c0_6, %c0_7] : memref<8x128xf32, #tpu.memory_space<vmem>>, vector<8x128xf32>
    tpu.vector_store %arg7[%c0_6, %c0_7], %7 {strides = array<i32>} : memref<8x128xf32, #tpu.memory_space<vmem>>, vector<8x128xf32>,
    %c0_i32_8 = arith.constant 0 : i32
    %9 = arith.cmpi eq, %arg1, %c0_i32_8 : i32
    %10 = arith.extui %9 : i1 to i32
    %c0_i32_9 = arith.constant 0 : i32
    %11 = arith.cmpi ne, %10, %c0_i32_9 : i32
    scf.if %11 {
      %c0_10 = arith.constant 0 : index
      %c0_11 = arith.constant 0 : index
      %12 = vector.load %arg7[%c0_10, %c0_11] : memref<8x128xf32, #tpu.memory_space<vmem>>, vector<8x128xf32>
      %cst_12 = arith.constant dense<0.000000e+00> : vector<128xf32>
      %13 = vector.multi_reduction <add>, %12, %cst_12 [0] : vector<8x128xf32> to vector<128xf32>
      %14 = vector.shape_cast %13 : vector<128xf32> to vector<1x128xf32>
      %cst_13 = arith.constant 1.250000e-01 : f32
      %15 = vector.broadcast %cst_13 : f32 to vector<1x128xf32>
      %16 = arith.mulf %14, %15 : vector<1x128xf32>
      %17 = arith.mulf %12, %12 : vector<8x128xf32>
      %cst_14 = arith.constant dense<0.000000e+00> : vector<128xf32>
      %18 = vector.multi_reduction <add>, %17, %cst_14 [0] : vector<8x128xf32> to vector<128xf32>
      %19 = vector.shape_cast %18 : vector<128xf32> to vector<1x128xf32>
      %cst_15 = arith.constant 1.250000e-01 : f32
      %20 = vector.broadcast %cst_15 : f32 to vector<1x128xf32>
      %21 = arith.mulf %19, %20 : vector<1x128xf32>
      %22 = arith.mulf %16, %16 : vector<1x128xf32>
      %23 = arith.subf %21, %22 : vector<1x128xf32>
      %cst_16 = arith.constant 9.99999974E-6 : f32
      %24 = vector.broadcast %cst_16 : f32 to vector<1x128xf32>
      %25 = arith.addf %23, %24 : vector<1x128xf32>
      %26 = math.rsqrt %25 : vector<1x128xf32>
      %c0_17 = arith.constant 0 : index
      %c0_18 = arith.constant 0 : index
      %27 = vector.load %arg4[%c0_17, %c0_18] : memref<1x128xf32, #tpu.memory_space<vmem>>, vector<1x128xf32>
      %28 = arith.mulf %26, %27 : vector<1x128xf32>
      %c0_19 = arith.constant 0 : index
      %c0_20 = arith.constant 0 : index
      %29 = vector.load %arg5[%c0_19, %c0_20] : memref<1x128xf32, #tpu.memory_space<vmem>>, vector<1x128xf32>
      %30 = arith.mulf %16, %28 : vector<1x128xf32>
      %31 = arith.subf %29, %30 : vector<1x128xf32>
      %32 = vector.broadcast %28 : vector<1x128xf32> to vector<8x128xf32>
      %33 = arith.mulf %12, %32 : vector<8x128xf32>
      %34 = vector.broadcast %31 : vector<1x128xf32> to vector<8x128xf32>
      %35 = arith.addf %33, %34 : vector<8x128xf32>
      %c0_21 = arith.constant 0 : index
      %c0_22 = arith.constant 0 : index
      %36 = vector.load %arg6[%c0_21, %c0_22] : memref<8x128xf32, #tpu.memory_space<vmem>>, vector<8x128xf32>
      tpu.vector_store %arg6[%c0_21, %c0_22], %35 {strides = array<i32>} : memref<8x128xf32, #tpu.memory_space<vmem>>, vector<8x128xf32>,
    } else {
    }
    return
  }
  func.func @transform_0(%arg0: i32, %arg1: i32) -> (i32, i32) {
    %c0_i32 = arith.constant 0 : i32
    %c0_i32_0 = arith.constant 0 : i32
    return %c0_i32, %arg1 : i32, i32
  }
  func.func @transform_1(%arg0: i32, %arg1: i32) -> (i32, i32) {
    %c0_i32 = arith.constant 0 : i32
    return %arg1, %arg0 : i32, i32
  }
  func.func @transform_2(%arg0: i32, %arg1: i32) -> (i32, i32) {
    %c0_i32 = arith.constant 0 : i32
    %c0_i32_0 = arith.constant 0 : i32
    return %c0_i32, %arg0 : i32, i32
  }
  func.func @transform_3(%arg0: i32, %arg1: i32) -> (i32, i32) {
    %c0_i32 = arith.constant 0 : i32
    %c0_i32_0 = arith.constant 0 : i32
    return %c0_i32, %arg0 : i32, i32
  }
  func.func @transform_4(%arg0: i32, %arg1: i32) -> (i32, i32) {
    %c0_i32 = arith.constant 0 : i32
    %c0_i32_0 = arith.constant 0 : i32
    return %c0_i32, %arg0 : i32, i32
  }
}

module attributes {stable_mosaic.version = 11 : i64} {
  func.func @_conv_bn_fused_kernel(%arg0: i32, %arg1: i32, %arg2: memref<8x128xbf16, #tpu.memory_space<vmem>>, %arg3: memref<128x256xbf16, #tpu.memory_space<vmem>>, %arg4: memref<1x256xf32, #tpu.memory_space<vmem>>, %arg5: memref<1x256xf32, #tpu.memory_space<vmem>>, %arg6: memref<8x256xf32, #tpu.memory_space<vmem>>, %arg7: memref<8x256xf32, #tpu.memory_space<vmem>>) attributes {dimension_semantics = [#tpu.dimension_semantics<parallel>, #tpu.dimension_semantics<arbitrary>], iteration_bounds = array<i64: 1, 9>, scalar_prefetch = 0 : i64, scratch_operands = 1 : i64, tpu.core_type = #tpu.core_type<tc>, window_params = [{transform_indices = @transform_0, window_bounds = array<i64: 8, 128>}, {transform_indices = @transform_1, window_bounds = array<i64: 128, 256>}, {transform_indices = @transform_2, window_bounds = array<i64: 1, 256>}, {transform_indices = @transform_3, window_bounds = array<i64: 1, 256>}, {transform_indices = @transform_4, window_bounds = array<i64: 8, 256>}]} {
    %c0_i32 = arith.constant 0 : i32
    %0 = arith.cmpi eq, %arg1, %c0_i32 : i32
    %1 = arith.extui %0 : i1 to i32
    %c0_i32_0 = arith.constant 0 : i32
    %2 = arith.cmpi ne, %1, %c0_i32_0 : i32
    scf.if %2 {
      %cst_9 = arith.constant 0.000000e+00 : f32
      %12 = vector.broadcast %cst_9 : f32 to vector<8x256xf32>
      %c0_10 = arith.constant 0 : index
      %c0_11 = arith.constant 0 : index
      %13 = vector.load %arg7[%c0_10, %c0_11] : memref<8x256xf32, #tpu.memory_space<vmem>>, vector<8x256xf32>
      tpu.vector_store %arg7[%c0_10, %c0_11], %12 {strides = array<i32>} : memref<8x256xf32, #tpu.memory_space<vmem>>, vector<8x256xf32>,
    } else {
    }
    %c0 = arith.constant 0 : index
    %c0_1 = arith.constant 0 : index
    %3 = vector.load %arg7[%c0, %c0_1] : memref<8x256xf32, #tpu.memory_space<vmem>>, vector<8x256xf32>
    %c0_2 = arith.constant 0 : index
    %c0_3 = arith.constant 0 : index
    %4 = vector.load %arg2[%c0_2, %c0_3] : memref<8x128xbf16, #tpu.memory_space<vmem>>, vector<8x128xbf16>
    %c0_4 = arith.constant 0 : index
    %c0_5 = arith.constant 0 : index
    %5 = vector.load %arg3[%c0_4, %c0_5] : memref<128x256xbf16, #tpu.memory_space<vmem>>, vector<128x256xbf16>
    %cst = arith.constant dense<0.000000e+00> : vector<8x256xf32>
    %6 = tpu.matmul %4, %5, %cst {dimension_numbers = #tpu.dot_dimension_numbers<[1], [0], [0], [1], [0, 0, 1, 1], [], []>} : vector<8x128xbf16>, vector<128x256xbf16>, vector<8x256xf32> -> vector<8x256xf32>
    %7 = arith.addf %3, %6 : vector<8x256xf32>
    %c0_6 = arith.constant 0 : index
    %c0_7 = arith.constant 0 : index
    %8 = vector.load %arg7[%c0_6, %c0_7] : memref<8x256xf32, #tpu.memory_space<vmem>>, vector<8x256xf32>
    tpu.vector_store %arg7[%c0_6, %c0_7], %7 {strides = array<i32>} : memref<8x256xf32, #tpu.memory_space<vmem>>, vector<8x256xf32>,
    %c8_i32 = arith.constant 8 : i32
    %9 = arith.cmpi eq, %arg1, %c8_i32 : i32
    %10 = arith.extui %9 : i1 to i32
    %c0_i32_8 = arith.constant 0 : i32
    %11 = arith.cmpi ne, %10, %c0_i32_8 : i32
    scf.if %11 {
      %c0_9 = arith.constant 0 : index
      %c0_10 = arith.constant 0 : index
      %12 = vector.load %arg7[%c0_9, %c0_10] : memref<8x256xf32, #tpu.memory_space<vmem>>, vector<8x256xf32>
      %cst_11 = arith.constant dense<0.000000e+00> : vector<256xf32>
      %13 = vector.multi_reduction <add>, %12, %cst_11 [0] : vector<8x256xf32> to vector<256xf32>
      %14 = vector.shape_cast %13 : vector<256xf32> to vector<1x256xf32>
      %cst_12 = arith.constant 5.000000e-01 : f32
      %15 = vector.broadcast %cst_12 : f32 to vector<1x256xf32>
      %16 = arith.mulf %14, %15 : vector<1x256xf32>
      %17 = arith.mulf %12, %12 : vector<8x256xf32>
      %cst_13 = arith.constant dense<0.000000e+00> : vector<256xf32>
      %18 = vector.multi_reduction <add>, %17, %cst_13 [0] : vector<8x256xf32> to vector<256xf32>
      %19 = vector.shape_cast %18 : vector<256xf32> to vector<1x256xf32>
      %cst_14 = arith.constant 5.000000e-01 : f32
      %20 = vector.broadcast %cst_14 : f32 to vector<1x256xf32>
      %21 = arith.mulf %19, %20 : vector<1x256xf32>
      %22 = arith.mulf %16, %16 : vector<1x256xf32>
      %23 = arith.subf %21, %22 : vector<1x256xf32>
      %cst_15 = arith.constant 9.99999974E-6 : f32
      %24 = vector.broadcast %cst_15 : f32 to vector<1x256xf32>
      %25 = arith.addf %23, %24 : vector<1x256xf32>
      %26 = math.rsqrt %25 : vector<1x256xf32>
      %c0_16 = arith.constant 0 : index
      %c0_17 = arith.constant 0 : index
      %27 = vector.load %arg4[%c0_16, %c0_17] : memref<1x256xf32, #tpu.memory_space<vmem>>, vector<1x256xf32>
      %28 = arith.mulf %26, %27 : vector<1x256xf32>
      %c0_18 = arith.constant 0 : index
      %c0_19 = arith.constant 0 : index
      %29 = vector.load %arg5[%c0_18, %c0_19] : memref<1x256xf32, #tpu.memory_space<vmem>>, vector<1x256xf32>
      %30 = arith.mulf %16, %28 : vector<1x256xf32>
      %31 = arith.subf %29, %30 : vector<1x256xf32>
      %32 = vector.broadcast %28 : vector<1x256xf32> to vector<8x256xf32>
      %33 = arith.mulf %12, %32 : vector<8x256xf32>
      %34 = vector.broadcast %31 : vector<1x256xf32> to vector<8x256xf32>
      %35 = arith.addf %33, %34 : vector<8x256xf32>
      %cst_20 = arith.constant 0.000000e+00 : f32
      %36 = vector.broadcast %cst_20 : f32 to vector<8x256xf32>
      %37 = arith.maximumf %35, %36 : vector<8x256xf32>
      %c0_21 = arith.constant 0 : index
      %c0_22 = arith.constant 0 : index
      %38 = vector.load %arg6[%c0_21, %c0_22] : memref<8x256xf32, #tpu.memory_space<vmem>>, vector<8x256xf32>
      tpu.vector_store %arg6[%c0_21, %c0_22], %37 {strides = array<i32>} : memref<8x256xf32, #tpu.memory_space<vmem>>, vector<8x256xf32>,
    } else {
    }
    return
  }
  func.func @transform_0(%arg0: i32, %arg1: i32) -> (i32, i32) {
    %c0_i32 = arith.constant 0 : i32
    %c0_i32_0 = arith.constant 0 : i32
    return %c0_i32, %arg1 : i32, i32
  }
  func.func @transform_1(%arg0: i32, %arg1: i32) -> (i32, i32) {
    %c0_i32 = arith.constant 0 : i32
    return %arg1, %arg0 : i32, i32
  }
  func.func @transform_2(%arg0: i32, %arg1: i32) -> (i32, i32) {
    %c0_i32 = arith.constant 0 : i32
    %c0_i32_0 = arith.constant 0 : i32
    return %c0_i32, %arg0 : i32, i32
  }
  func.func @transform_3(%arg0: i32, %arg1: i32) -> (i32, i32) {
    %c0_i32 = arith.constant 0 : i32
    %c0_i32_0 = arith.constant 0 : i32
    return %c0_i32, %arg0 : i32, i32
  }
  func.func @transform_4(%arg0: i32, %arg1: i32) -> (i32, i32) {
    %c0_i32 = arith.constant 0 : i32
    %c0_i32_0 = arith.constant 0 : i32
    return %c0_i32, %arg0 : i32, i32
  }
}

module attributes {stable_mosaic.version = 11 : i64} {
  func.func @_conv_bn_res_fused_kernel(%arg0: i32, %arg1: i32, %arg2: memref<8x256xbf16, #tpu.memory_space<vmem>>, %arg3: memref<256x256xbf16, #tpu.memory_space<vmem>>, %arg4: memref<1x256xf32, #tpu.memory_space<vmem>>, %arg5: memref<1x256xf32, #tpu.memory_space<vmem>>, %arg6: memref<8x256xf32, #tpu.memory_space<vmem>>, %arg7: memref<8x256xf32, #tpu.memory_space<vmem>>, %arg8: memref<8x256xf32, #tpu.memory_space<vmem>>) attributes {dimension_semantics = [#tpu.dimension_semantics<parallel>, #tpu.dimension_semantics<arbitrary>], iteration_bounds = array<i64: 1, 9>, scalar_prefetch = 0 : i64, scratch_operands = 1 : i64, tpu.core_type = #tpu.core_type<tc>, window_params = [{transform_indices = @transform_0, window_bounds = array<i64: 8, 256>}, {transform_indices = @transform_1, window_bounds = array<i64: 256, 256>}, {transform_indices = @transform_2, window_bounds = array<i64: 1, 256>}, {transform_indices = @transform_3, window_bounds = array<i64: 1, 256>}, {transform_indices = @transform_4, window_bounds = array<i64: 8, 256>}, {transform_indices = @transform_5, window_bounds = array<i64: 8, 256>}]} {
    %c0_i32 = arith.constant 0 : i32
    %0 = arith.cmpi eq, %arg1, %c0_i32 : i32
    %1 = arith.extui %0 : i1 to i32
    %c0_i32_0 = arith.constant 0 : i32
    %2 = arith.cmpi ne, %1, %c0_i32_0 : i32
    scf.if %2 {
      %cst_9 = arith.constant 0.000000e+00 : f32
      %12 = vector.broadcast %cst_9 : f32 to vector<8x256xf32>
      %c0_10 = arith.constant 0 : index
      %c0_11 = arith.constant 0 : index
      %13 = vector.load %arg8[%c0_10, %c0_11] : memref<8x256xf32, #tpu.memory_space<vmem>>, vector<8x256xf32>
      tpu.vector_store %arg8[%c0_10, %c0_11], %12 {strides = array<i32>} : memref<8x256xf32, #tpu.memory_space<vmem>>, vector<8x256xf32>,
    } else {
    }
    %c0 = arith.constant 0 : index
    %c0_1 = arith.constant 0 : index
    %3 = vector.load %arg8[%c0, %c0_1] : memref<8x256xf32, #tpu.memory_space<vmem>>, vector<8x256xf32>
    %c0_2 = arith.constant 0 : index
    %c0_3 = arith.constant 0 : index
    %4 = vector.load %arg2[%c0_2, %c0_3] : memref<8x256xbf16, #tpu.memory_space<vmem>>, vector<8x256xbf16>
    %c0_4 = arith.constant 0 : index
    %c0_5 = arith.constant 0 : index
    %5 = vector.load %arg3[%c0_4, %c0_5] : memref<256x256xbf16, #tpu.memory_space<vmem>>, vector<256x256xbf16>
    %cst = arith.constant dense<0.000000e+00> : vector<8x256xf32>
    %6 = tpu.matmul %4, %5, %cst {dimension_numbers = #tpu.dot_dimension_numbers<[1], [0], [0], [1], [0, 0, 1, 1], [], []>} : vector<8x256xbf16>, vector<256x256xbf16>, vector<8x256xf32> -> vector<8x256xf32>
    %7 = arith.addf %3, %6 : vector<8x256xf32>
    %c0_6 = arith.constant 0 : index
    %c0_7 = arith.constant 0 : index
    %8 = vector.load %arg8[%c0_6, %c0_7] : memref<8x256xf32, #tpu.memory_space<vmem>>, vector<8x256xf32>
    tpu.vector_store %arg8[%c0_6, %c0_7], %7 {strides = array<i32>} : memref<8x256xf32, #tpu.memory_space<vmem>>, vector<8x256xf32>,
    %c8_i32 = arith.constant 8 : i32
    %9 = arith.cmpi eq, %arg1, %c8_i32 : i32
    %10 = arith.extui %9 : i1 to i32
    %c0_i32_8 = arith.constant 0 : i32
    %11 = arith.cmpi ne, %10, %c0_i32_8 : i32
    scf.if %11 {
      %c0_9 = arith.constant 0 : index
      %c0_10 = arith.constant 0 : index
      %12 = vector.load %arg8[%c0_9, %c0_10] : memref<8x256xf32, #tpu.memory_space<vmem>>, vector<8x256xf32>
      %cst_11 = arith.constant dense<0.000000e+00> : vector<256xf32>
      %13 = vector.multi_reduction <add>, %12, %cst_11 [0] : vector<8x256xf32> to vector<256xf32>
      %14 = vector.shape_cast %13 : vector<256xf32> to vector<1x256xf32>
      %cst_12 = arith.constant 5.000000e-01 : f32
      %15 = vector.broadcast %cst_12 : f32 to vector<1x256xf32>
      %16 = arith.mulf %14, %15 : vector<1x256xf32>
      %17 = arith.mulf %12, %12 : vector<8x256xf32>
      %cst_13 = arith.constant dense<0.000000e+00> : vector<256xf32>
      %18 = vector.multi_reduction <add>, %17, %cst_13 [0] : vector<8x256xf32> to vector<256xf32>
      %19 = vector.shape_cast %18 : vector<256xf32> to vector<1x256xf32>
      %cst_14 = arith.constant 5.000000e-01 : f32
      %20 = vector.broadcast %cst_14 : f32 to vector<1x256xf32>
      %21 = arith.mulf %19, %20 : vector<1x256xf32>
      %22 = arith.mulf %16, %16 : vector<1x256xf32>
      %23 = arith.subf %21, %22 : vector<1x256xf32>
      %cst_15 = arith.constant 9.99999974E-6 : f32
      %24 = vector.broadcast %cst_15 : f32 to vector<1x256xf32>
      %25 = arith.addf %23, %24 : vector<1x256xf32>
      %26 = math.rsqrt %25 : vector<1x256xf32>
      %c0_16 = arith.constant 0 : index
      %c0_17 = arith.constant 0 : index
      %27 = vector.load %arg4[%c0_16, %c0_17] : memref<1x256xf32, #tpu.memory_space<vmem>>, vector<1x256xf32>
      %28 = arith.mulf %26, %27 : vector<1x256xf32>
      %c0_18 = arith.constant 0 : index
      %c0_19 = arith.constant 0 : index
      %29 = vector.load %arg5[%c0_18, %c0_19] : memref<1x256xf32, #tpu.memory_space<vmem>>, vector<1x256xf32>
      %30 = arith.mulf %16, %28 : vector<1x256xf32>
      %31 = arith.subf %29, %30 : vector<1x256xf32>
      %32 = vector.broadcast %28 : vector<1x256xf32> to vector<8x256xf32>
      %33 = arith.mulf %12, %32 : vector<8x256xf32>
      %34 = vector.broadcast %31 : vector<1x256xf32> to vector<8x256xf32>
      %35 = arith.addf %33, %34 : vector<8x256xf32>
      %cst_20 = arith.constant 0.000000e+00 : f32
      %36 = vector.broadcast %cst_20 : f32 to vector<8x256xf32>
      %37 = arith.maximumf %35, %36 : vector<8x256xf32>
      %c0_21 = arith.constant 0 : index
      %c0_22 = arith.constant 0 : index
      %38 = vector.load %arg6[%c0_21, %c0_22] : memref<8x256xf32, #tpu.memory_space<vmem>>, vector<8x256xf32>
      %39 = arith.addf %37, %38 : vector<8x256xf32>
      %cst_23 = arith.constant 0.000000e+00 : f32
      %40 = vector.broadcast %cst_23 : f32 to vector<8x256xf32>
      %41 = arith.maximumf %39, %40 : vector<8x256xf32>
      %c0_24 = arith.constant 0 : index
      %c0_25 = arith.constant 0 : index
      %42 = vector.load %arg7[%c0_24, %c0_25] : memref<8x256xf32, #tpu.memory_space<vmem>>, vector<8x256xf32>
      tpu.vector_store %arg7[%c0_24, %c0_25], %41 {strides = array<i32>} : memref<8x256xf32, #tpu.memory_space<vmem>>, vector<8x256xf32>,
    } else {
    }
    return
  }
  func.func @transform_0(%arg0: i32, %arg1: i32) -> (i32, i32) {
    %c0_i32 = arith.constant 0 : i32
    %c0_i32_0 = arith.constant 0 : i32
    return %c0_i32, %arg1 : i32, i32
  }
  func.func @transform_1(%arg0: i32, %arg1: i32) -> (i32, i32) {
    %c0_i32 = arith.constant 0 : i32
    return %arg1, %arg0 : i32, i32
  }
  func.func @transform_2(%arg0: i32, %arg1: i32) -> (i32, i32) {
    %c0_i32 = arith.constant 0 : i32
    %c0_i32_0 = arith.constant 0 : i32
    return %c0_i32, %arg0 : i32, i32
  }
  func.func @transform_3(%arg0: i32, %arg1: i32) -> (i32, i32) {
    %c0_i32 = arith.constant 0 : i32
    %c0_i32_0 = arith.constant 0 : i32
    return %c0_i32, %arg0 : i32, i32
  }
  func.func @transform_4(%arg0: i32, %arg1: i32) -> (i32, i32) {
    %c0_i32 = arith.constant 0 : i32
    %c0_i32_0 = arith.constant 0 : i32
    return %c0_i32, %arg0 : i32, i32
  }
  func.func @transform_5(%arg0: i32, %arg1: i32) -> (i32, i32) {
    %c0_i32 = arith.constant 0 : i32
    %c0_i32_0 = arith.constant 0 : i32
    return %c0_i32, %arg0 : i32, i32
  }
}

module attributes {stable_mosaic.version = 11 : i64} {
  func.func @_conv_bn_fused_kernel(%arg0: i32, %arg1: i32, %arg2: memref<8x128xbf16, #tpu.memory_space<vmem>>, %arg3: memref<128x256xbf16, #tpu.memory_space<vmem>>, %arg4: memref<1x256xf32, #tpu.memory_space<vmem>>, %arg5: memref<1x256xf32, #tpu.memory_space<vmem>>, %arg6: memref<8x256xf32, #tpu.memory_space<vmem>>, %arg7: memref<8x256xf32, #tpu.memory_space<vmem>>) attributes {dimension_semantics = [#tpu.dimension_semantics<parallel>, #tpu.dimension_semantics<arbitrary>], iteration_bounds = array<i64: 1, 1>, scalar_prefetch = 0 : i64, scratch_operands = 1 : i64, tpu.core_type = #tpu.core_type<tc>, window_params = [{transform_indices = @transform_0, window_bounds = array<i64: 8, 128>}, {transform_indices = @transform_1, window_bounds = array<i64: 128, 256>}, {transform_indices = @transform_2, window_bounds = array<i64: 1, 256>}, {transform_indices = @transform_3, window_bounds = array<i64: 1, 256>}, {transform_indices = @transform_4, window_bounds = array<i64: 8, 256>}]} {
    %c0_i32 = arith.constant 0 : i32
    %0 = arith.cmpi eq, %arg1, %c0_i32 : i32
    %1 = arith.extui %0 : i1 to i32
    %c0_i32_0 = arith.constant 0 : i32
    %2 = arith.cmpi ne, %1, %c0_i32_0 : i32
    scf.if %2 {
      %cst_10 = arith.constant 0.000000e+00 : f32
      %12 = vector.broadcast %cst_10 : f32 to vector<8x256xf32>
      %c0_11 = arith.constant 0 : index
      %c0_12 = arith.constant 0 : index
      %13 = vector.load %arg7[%c0_11, %c0_12] : memref<8x256xf32, #tpu.memory_space<vmem>>, vector<8x256xf32>
      tpu.vector_store %arg7[%c0_11, %c0_12], %12 {strides = array<i32>} : memref<8x256xf32, #tpu.memory_space<vmem>>, vector<8x256xf32>,
    } else {
    }
    %c0 = arith.constant 0 : index
    %c0_1 = arith.constant 0 : index
    %3 = vector.load %arg7[%c0, %c0_1] : memref<8x256xf32, #tpu.memory_space<vmem>>, vector<8x256xf32>
    %c0_2 = arith.constant 0 : index
    %c0_3 = arith.constant 0 : index
    %4 = vector.load %arg2[%c0_2, %c0_3] : memref<8x128xbf16, #tpu.memory_space<vmem>>, vector<8x128xbf16>
    %c0_4 = arith.constant 0 : index
    %c0_5 = arith.constant 0 : index
    %5 = vector.load %arg3[%c0_4, %c0_5] : memref<128x256xbf16, #tpu.memory_space<vmem>>, vector<128x256xbf16>
    %cst = arith.constant dense<0.000000e+00> : vector<8x256xf32>
    %6 = tpu.matmul %4, %5, %cst {dimension_numbers = #tpu.dot_dimension_numbers<[1], [0], [0], [1], [0, 0, 1, 1], [], []>} : vector<8x128xbf16>, vector<128x256xbf16>, vector<8x256xf32> -> vector<8x256xf32>
    %7 = arith.addf %3, %6 : vector<8x256xf32>
    %c0_6 = arith.constant 0 : index
    %c0_7 = arith.constant 0 : index
    %8 = vector.load %arg7[%c0_6, %c0_7] : memref<8x256xf32, #tpu.memory_space<vmem>>, vector<8x256xf32>
    tpu.vector_store %arg7[%c0_6, %c0_7], %7 {strides = array<i32>} : memref<8x256xf32, #tpu.memory_space<vmem>>, vector<8x256xf32>,
    %c0_i32_8 = arith.constant 0 : i32
    %9 = arith.cmpi eq, %arg1, %c0_i32_8 : i32
    %10 = arith.extui %9 : i1 to i32
    %c0_i32_9 = arith.constant 0 : i32
    %11 = arith.cmpi ne, %10, %c0_i32_9 : i32
    scf.if %11 {
      %c0_10 = arith.constant 0 : index
      %c0_11 = arith.constant 0 : index
      %12 = vector.load %arg7[%c0_10, %c0_11] : memref<8x256xf32, #tpu.memory_space<vmem>>, vector<8x256xf32>
      %cst_12 = arith.constant dense<0.000000e+00> : vector<256xf32>
      %13 = vector.multi_reduction <add>, %12, %cst_12 [0] : vector<8x256xf32> to vector<256xf32>
      %14 = vector.shape_cast %13 : vector<256xf32> to vector<1x256xf32>
      %cst_13 = arith.constant 5.000000e-01 : f32
      %15 = vector.broadcast %cst_13 : f32 to vector<1x256xf32>
      %16 = arith.mulf %14, %15 : vector<1x256xf32>
      %17 = arith.mulf %12, %12 : vector<8x256xf32>
      %cst_14 = arith.constant dense<0.000000e+00> : vector<256xf32>
      %18 = vector.multi_reduction <add>, %17, %cst_14 [0] : vector<8x256xf32> to vector<256xf32>
      %19 = vector.shape_cast %18 : vector<256xf32> to vector<1x256xf32>
      %cst_15 = arith.constant 5.000000e-01 : f32
      %20 = vector.broadcast %cst_15 : f32 to vector<1x256xf32>
      %21 = arith.mulf %19, %20 : vector<1x256xf32>
      %22 = arith.mulf %16, %16 : vector<1x256xf32>
      %23 = arith.subf %21, %22 : vector<1x256xf32>
      %cst_16 = arith.constant 9.99999974E-6 : f32
      %24 = vector.broadcast %cst_16 : f32 to vector<1x256xf32>
      %25 = arith.addf %23, %24 : vector<1x256xf32>
      %26 = math.rsqrt %25 : vector<1x256xf32>
      %c0_17 = arith.constant 0 : index
      %c0_18 = arith.constant 0 : index
      %27 = vector.load %arg4[%c0_17, %c0_18] : memref<1x256xf32, #tpu.memory_space<vmem>>, vector<1x256xf32>
      %28 = arith.mulf %26, %27 : vector<1x256xf32>
      %c0_19 = arith.constant 0 : index
      %c0_20 = arith.constant 0 : index
      %29 = vector.load %arg5[%c0_19, %c0_20] : memref<1x256xf32, #tpu.memory_space<vmem>>, vector<1x256xf32>
      %30 = arith.mulf %16, %28 : vector<1x256xf32>
      %31 = arith.subf %29, %30 : vector<1x256xf32>
      %32 = vector.broadcast %28 : vector<1x256xf32> to vector<8x256xf32>
      %33 = arith.mulf %12, %32 : vector<8x256xf32>
      %34 = vector.broadcast %31 : vector<1x256xf32> to vector<8x256xf32>
      %35 = arith.addf %33, %34 : vector<8x256xf32>
      %c0_21 = arith.constant 0 : index
      %c0_22 = arith.constant 0 : index
      %36 = vector.load %arg6[%c0_21, %c0_22] : memref<8x256xf32, #tpu.memory_space<vmem>>, vector<8x256xf32>
      tpu.vector_store %arg6[%c0_21, %c0_22], %35 {strides = array<i32>} : memref<8x256xf32, #tpu.memory_space<vmem>>, vector<8x256xf32>,
    } else {
    }
    return
  }
  func.func @transform_0(%arg0: i32, %arg1: i32) -> (i32, i32) {
    %c0_i32 = arith.constant 0 : i32
    %c0_i32_0 = arith.constant 0 : i32
    return %c0_i32, %arg1 : i32, i32
  }
  func.func @transform_1(%arg0: i32, %arg1: i32) -> (i32, i32) {
    %c0_i32 = arith.constant 0 : i32
    return %arg1, %arg0 : i32, i32
  }
  func.func @transform_2(%arg0: i32, %arg1: i32) -> (i32, i32) {
    %c0_i32 = arith.constant 0 : i32
    %c0_i32_0 = arith.constant 0 : i32
    return %c0_i32, %arg0 : i32, i32
  }
  func.func @transform_3(%arg0: i32, %arg1: i32) -> (i32, i32) {
    %c0_i32 = arith.constant 0 : i32
    %c0_i32_0 = arith.constant 0 : i32
    return %c0_i32, %arg0 : i32, i32
  }
  func.func @transform_4(%arg0: i32, %arg1: i32) -> (i32, i32) {
    %c0_i32 = arith.constant 0 : i32
    %c0_i32_0 = arith.constant 0 : i32
    return %c0_i32, %arg0 : i32, i32
  }
}

module attributes {stable_mosaic.version = 11 : i64} {
  func.func @_conv_bn_fused_kernel(%arg0: i32, %arg1: i32, %arg2: memref<8x256xbf16, #tpu.memory_space<vmem>>, %arg3: memref<256x256xbf16, #tpu.memory_space<vmem>>, %arg4: memref<1x256xf32, #tpu.memory_space<vmem>>, %arg5: memref<1x256xf32, #tpu.memory_space<vmem>>, %arg6: memref<8x256xf32, #tpu.memory_space<vmem>>, %arg7: memref<8x256xf32, #tpu.memory_space<vmem>>) attributes {dimension_semantics = [#tpu.dimension_semantics<parallel>, #tpu.dimension_semantics<arbitrary>], iteration_bounds = array<i64: 2, 9>, scalar_prefetch = 0 : i64, scratch_operands = 1 : i64, tpu.core_type = #tpu.core_type<tc>, window_params = [{transform_indices = @transform_0, window_bounds = array<i64: 8, 256>}, {transform_indices = @transform_1, window_bounds = array<i64: 256, 256>}, {transform_indices = @transform_2, window_bounds = array<i64: 1, 256>}, {transform_indices = @transform_3, window_bounds = array<i64: 1, 256>}, {transform_indices = @transform_4, window_bounds = array<i64: 8, 256>}]} {
    %c0_i32 = arith.constant 0 : i32
    %0 = arith.cmpi eq, %arg1, %c0_i32 : i32
    %1 = arith.extui %0 : i1 to i32
    %c0_i32_0 = arith.constant 0 : i32
    %2 = arith.cmpi ne, %1, %c0_i32_0 : i32
    scf.if %2 {
      %cst_9 = arith.constant 0.000000e+00 : f32
      %12 = vector.broadcast %cst_9 : f32 to vector<8x256xf32>
      %c0_10 = arith.constant 0 : index
      %c0_11 = arith.constant 0 : index
      %13 = vector.load %arg7[%c0_10, %c0_11] : memref<8x256xf32, #tpu.memory_space<vmem>>, vector<8x256xf32>
      tpu.vector_store %arg7[%c0_10, %c0_11], %12 {strides = array<i32>} : memref<8x256xf32, #tpu.memory_space<vmem>>, vector<8x256xf32>,
    } else {
    }
    %c0 = arith.constant 0 : index
    %c0_1 = arith.constant 0 : index
    %3 = vector.load %arg7[%c0, %c0_1] : memref<8x256xf32, #tpu.memory_space<vmem>>, vector<8x256xf32>
    %c0_2 = arith.constant 0 : index
    %c0_3 = arith.constant 0 : index
    %4 = vector.load %arg2[%c0_2, %c0_3] : memref<8x256xbf16, #tpu.memory_space<vmem>>, vector<8x256xbf16>
    %c0_4 = arith.constant 0 : index
    %c0_5 = arith.constant 0 : index
    %5 = vector.load %arg3[%c0_4, %c0_5] : memref<256x256xbf16, #tpu.memory_space<vmem>>, vector<256x256xbf16>
    %cst = arith.constant dense<0.000000e+00> : vector<8x256xf32>
    %6 = tpu.matmul %4, %5, %cst {dimension_numbers = #tpu.dot_dimension_numbers<[1], [0], [0], [1], [0, 0, 1, 1], [], []>} : vector<8x256xbf16>, vector<256x256xbf16>, vector<8x256xf32> -> vector<8x256xf32>
    %7 = arith.addf %3, %6 : vector<8x256xf32>
    %c0_6 = arith.constant 0 : index
    %c0_7 = arith.constant 0 : index
    %8 = vector.load %arg7[%c0_6, %c0_7] : memref<8x256xf32, #tpu.memory_space<vmem>>, vector<8x256xf32>
    tpu.vector_store %arg7[%c0_6, %c0_7], %7 {strides = array<i32>} : memref<8x256xf32, #tpu.memory_space<vmem>>, vector<8x256xf32>,
    %c8_i32 = arith.constant 8 : i32
    %9 = arith.cmpi eq, %arg1, %c8_i32 : i32
    %10 = arith.extui %9 : i1 to i32
    %c0_i32_8 = arith.constant 0 : i32
    %11 = arith.cmpi ne, %10, %c0_i32_8 : i32
    scf.if %11 {
      %c0_9 = arith.constant 0 : index
      %c0_10 = arith.constant 0 : index
      %12 = vector.load %arg7[%c0_9, %c0_10] : memref<8x256xf32, #tpu.memory_space<vmem>>, vector<8x256xf32>
      %cst_11 = arith.constant dense<0.000000e+00> : vector<256xf32>
      %13 = vector.multi_reduction <add>, %12, %cst_11 [0] : vector<8x256xf32> to vector<256xf32>
      %14 = vector.shape_cast %13 : vector<256xf32> to vector<1x256xf32>
      %cst_12 = arith.constant 5.000000e-01 : f32
      %15 = vector.broadcast %cst_12 : f32 to vector<1x256xf32>
      %16 = arith.mulf %14, %15 : vector<1x256xf32>
      %17 = arith.mulf %12, %12 : vector<8x256xf32>
      %cst_13 = arith.constant dense<0.000000e+00> : vector<256xf32>
      %18 = vector.multi_reduction <add>, %17, %cst_13 [0] : vector<8x256xf32> to vector<256xf32>
      %19 = vector.shape_cast %18 : vector<256xf32> to vector<1x256xf32>
      %cst_14 = arith.constant 5.000000e-01 : f32
      %20 = vector.broadcast %cst_14 : f32 to vector<1x256xf32>
      %21 = arith.mulf %19, %20 : vector<1x256xf32>
      %22 = arith.mulf %16, %16 : vector<1x256xf32>
      %23 = arith.subf %21, %22 : vector<1x256xf32>
      %cst_15 = arith.constant 9.99999974E-6 : f32
      %24 = vector.broadcast %cst_15 : f32 to vector<1x256xf32>
      %25 = arith.addf %23, %24 : vector<1x256xf32>
      %26 = math.rsqrt %25 : vector<1x256xf32>
      %c0_16 = arith.constant 0 : index
      %c0_17 = arith.constant 0 : index
      %27 = vector.load %arg4[%c0_16, %c0_17] : memref<1x256xf32, #tpu.memory_space<vmem>>, vector<1x256xf32>
      %28 = arith.mulf %26, %27 : vector<1x256xf32>
      %c0_18 = arith.constant 0 : index
      %c0_19 = arith.constant 0 : index
      %29 = vector.load %arg5[%c0_18, %c0_19] : memref<1x256xf32, #tpu.memory_space<vmem>>, vector<1x256xf32>
      %30 = arith.mulf %16, %28 : vector<1x256xf32>
      %31 = arith.subf %29, %30 : vector<1x256xf32>
      %32 = vector.broadcast %28 : vector<1x256xf32> to vector<8x256xf32>
      %33 = arith.mulf %12, %32 : vector<8x256xf32>
      %34 = vector.broadcast %31 : vector<1x256xf32> to vector<8x256xf32>
      %35 = arith.addf %33, %34 : vector<8x256xf32>
      %cst_20 = arith.constant 0.000000e+00 : f32
      %36 = vector.broadcast %cst_20 : f32 to vector<8x256xf32>
      %37 = arith.maximumf %35, %36 : vector<8x256xf32>
      %c0_21 = arith.constant 0 : index
      %c0_22 = arith.constant 0 : index
      %38 = vector.load %arg6[%c0_21, %c0_22] : memref<8x256xf32, #tpu.memory_space<vmem>>, vector<8x256xf32>
      tpu.vector_store %arg6[%c0_21, %c0_22], %37 {strides = array<i32>} : memref<8x256xf32, #tpu.memory_space<vmem>>, vector<8x256xf32>,
    } else {
    }
    return
  }
  func.func @transform_0(%arg0: i32, %arg1: i32) -> (i32, i32) {
    %c0_i32 = arith.constant 0 : i32
    %c0_i32_0 = arith.constant 0 : i32
    return %c0_i32, %arg1 : i32, i32
  }
  func.func @transform_1(%arg0: i32, %arg1: i32) -> (i32, i32) {
    %c0_i32 = arith.constant 0 : i32
    return %arg1, %arg0 : i32, i32
  }
  func.func @transform_2(%arg0: i32, %arg1: i32) -> (i32, i32) {
    %c0_i32 = arith.constant 0 : i32
    %c0_i32_0 = arith.constant 0 : i32
    return %c0_i32, %arg0 : i32, i32
  }
  func.func @transform_3(%arg0: i32, %arg1: i32) -> (i32, i32) {
    %c0_i32 = arith.constant 0 : i32
    %c0_i32_0 = arith.constant 0 : i32
    return %c0_i32, %arg0 : i32, i32
  }
  func.func @transform_4(%arg0: i32, %arg1: i32) -> (i32, i32) {
    %c0_i32 = arith.constant 0 : i32
    %c0_i32_0 = arith.constant 0 : i32
    return %c0_i32, %arg0 : i32, i32
  }
}

module attributes {stable_mosaic.version = 11 : i64} {
  func.func @_conv_bn_fused_kernel(%arg0: i32, %arg1: i32, %arg2: memref<8x256xbf16, #tpu.memory_space<vmem>>, %arg3: memref<256x256xbf16, #tpu.memory_space<vmem>>, %arg4: memref<1x256xf32, #tpu.memory_space<vmem>>, %arg5: memref<1x256xf32, #tpu.memory_space<vmem>>, %arg6: memref<8x256xf32, #tpu.memory_space<vmem>>, %arg7: memref<8x256xf32, #tpu.memory_space<vmem>>) attributes {dimension_semantics = [#tpu.dimension_semantics<parallel>, #tpu.dimension_semantics<arbitrary>], iteration_bounds = array<i64: 2, 1>, scalar_prefetch = 0 : i64, scratch_operands = 1 : i64, tpu.core_type = #tpu.core_type<tc>, window_params = [{transform_indices = @transform_0, window_bounds = array<i64: 8, 256>}, {transform_indices = @transform_1, window_bounds = array<i64: 256, 256>}, {transform_indices = @transform_2, window_bounds = array<i64: 1, 256>}, {transform_indices = @transform_3, window_bounds = array<i64: 1, 256>}, {transform_indices = @transform_4, window_bounds = array<i64: 8, 256>}]} {
    %c0_i32 = arith.constant 0 : i32
    %0 = arith.cmpi eq, %arg1, %c0_i32 : i32
    %1 = arith.extui %0 : i1 to i32
    %c0_i32_0 = arith.constant 0 : i32
    %2 = arith.cmpi ne, %1, %c0_i32_0 : i32
    scf.if %2 {
      %cst_10 = arith.constant 0.000000e+00 : f32
      %12 = vector.broadcast %cst_10 : f32 to vector<8x256xf32>
      %c0_11 = arith.constant 0 : index
      %c0_12 = arith.constant 0 : index
      %13 = vector.load %arg7[%c0_11, %c0_12] : memref<8x256xf32, #tpu.memory_space<vmem>>, vector<8x256xf32>
      tpu.vector_store %arg7[%c0_11, %c0_12], %12 {strides = array<i32>} : memref<8x256xf32, #tpu.memory_space<vmem>>, vector<8x256xf32>,
    } else {
    }
    %c0 = arith.constant 0 : index
    %c0_1 = arith.constant 0 : index
    %3 = vector.load %arg7[%c0, %c0_1] : memref<8x256xf32, #tpu.memory_space<vmem>>, vector<8x256xf32>
    %c0_2 = arith.constant 0 : index
    %c0_3 = arith.constant 0 : index
    %4 = vector.load %arg2[%c0_2, %c0_3] : memref<8x256xbf16, #tpu.memory_space<vmem>>, vector<8x256xbf16>
    %c0_4 = arith.constant 0 : index
    %c0_5 = arith.constant 0 : index
    %5 = vector.load %arg3[%c0_4, %c0_5] : memref<256x256xbf16, #tpu.memory_space<vmem>>, vector<256x256xbf16>
    %cst = arith.constant dense<0.000000e+00> : vector<8x256xf32>
    %6 = tpu.matmul %4, %5, %cst {dimension_numbers = #tpu.dot_dimension_numbers<[1], [0], [0], [1], [0, 0, 1, 1], [], []>} : vector<8x256xbf16>, vector<256x256xbf16>, vector<8x256xf32> -> vector<8x256xf32>
    %7 = arith.addf %3, %6 : vector<8x256xf32>
    %c0_6 = arith.constant 0 : index
    %c0_7 = arith.constant 0 : index
    %8 = vector.load %arg7[%c0_6, %c0_7] : memref<8x256xf32, #tpu.memory_space<vmem>>, vector<8x256xf32>
    tpu.vector_store %arg7[%c0_6, %c0_7], %7 {strides = array<i32>} : memref<8x256xf32, #tpu.memory_space<vmem>>, vector<8x256xf32>,
    %c0_i32_8 = arith.constant 0 : i32
    %9 = arith.cmpi eq, %arg1, %c0_i32_8 : i32
    %10 = arith.extui %9 : i1 to i32
    %c0_i32_9 = arith.constant 0 : i32
    %11 = arith.cmpi ne, %10, %c0_i32_9 : i32
    scf.if %11 {
      %c0_10 = arith.constant 0 : index
      %c0_11 = arith.constant 0 : index
      %12 = vector.load %arg7[%c0_10, %c0_11] : memref<8x256xf32, #tpu.memory_space<vmem>>, vector<8x256xf32>
      %cst_12 = arith.constant dense<0.000000e+00> : vector<256xf32>
      %13 = vector.multi_reduction <add>, %12, %cst_12 [0] : vector<8x256xf32> to vector<256xf32>
      %14 = vector.shape_cast %13 : vector<256xf32> to vector<1x256xf32>
      %cst_13 = arith.constant 5.000000e-01 : f32
      %15 = vector.broadcast %cst_13 : f32 to vector<1x256xf32>
      %16 = arith.mulf %14, %15 : vector<1x256xf32>
      %17 = arith.mulf %12, %12 : vector<8x256xf32>
      %cst_14 = arith.constant dense<0.000000e+00> : vector<256xf32>
      %18 = vector.multi_reduction <add>, %17, %cst_14 [0] : vector<8x256xf32> to vector<256xf32>
      %19 = vector.shape_cast %18 : vector<256xf32> to vector<1x256xf32>
      %cst_15 = arith.constant 5.000000e-01 : f32
      %20 = vector.broadcast %cst_15 : f32 to vector<1x256xf32>
      %21 = arith.mulf %19, %20 : vector<1x256xf32>
      %22 = arith.mulf %16, %16 : vector<1x256xf32>
      %23 = arith.subf %21, %22 : vector<1x256xf32>
      %cst_16 = arith.constant 9.99999974E-6 : f32
      %24 = vector.broadcast %cst_16 : f32 to vector<1x256xf32>
      %25 = arith.addf %23, %24 : vector<1x256xf32>
      %26 = math.rsqrt %25 : vector<1x256xf32>
      %c0_17 = arith.constant 0 : index
      %c0_18 = arith.constant 0 : index
      %27 = vector.load %arg4[%c0_17, %c0_18] : memref<1x256xf32, #tpu.memory_space<vmem>>, vector<1x256xf32>
      %28 = arith.mulf %26, %27 : vector<1x256xf32>
      %c0_19 = arith.constant 0 : index
      %c0_20 = arith.constant 0 : index
      %29 = vector.load %arg5[%c0_19, %c0_20] : memref<1x256xf32, #tpu.memory_space<vmem>>, vector<1x256xf32>
      %30 = arith.mulf %16, %28 : vector<1x256xf32>
      %31 = arith.subf %29, %30 : vector<1x256xf32>
      %32 = vector.broadcast %28 : vector<1x256xf32> to vector<8x256xf32>
      %33 = arith.mulf %12, %32 : vector<8x256xf32>
      %34 = vector.broadcast %31 : vector<1x256xf32> to vector<8x256xf32>
      %35 = arith.addf %33, %34 : vector<8x256xf32>
      %c0_21 = arith.constant 0 : index
      %c0_22 = arith.constant 0 : index
      %36 = vector.load %arg6[%c0_21, %c0_22] : memref<8x256xf32, #tpu.memory_space<vmem>>, vector<8x256xf32>
      tpu.vector_store %arg6[%c0_21, %c0_22], %35 {strides = array<i32>} : memref<8x256xf32, #tpu.memory_space<vmem>>, vector<8x256xf32>,
    } else {
    }
    return
  }
  func.func @transform_0(%arg0: i32, %arg1: i32) -> (i32, i32) {
    %c0_i32 = arith.constant 0 : i32
    %c0_i32_0 = arith.constant 0 : i32
    return %c0_i32, %arg1 : i32, i32
  }
  func.func @transform_1(%arg0: i32, %arg1: i32) -> (i32, i32) {
    %c0_i32 = arith.constant 0 : i32
    return %arg1, %arg0 : i32, i32
  }
  func.func @transform_2(%arg0: i32, %arg1: i32) -> (i32, i32) {
    %c0_i32 = arith.constant 0 : i32
    %c0_i32_0 = arith.constant 0 : i32
    return %c0_i32, %arg0 : i32, i32
  }
  func.func @transform_3(%arg0: i32, %arg1: i32) -> (i32, i32) {
    %c0_i32 = arith.constant 0 : i32
    %c0_i32_0 = arith.constant 0 : i32
    return %c0_i32, %arg0 : i32, i32
  }
  func.func @transform_4(%arg0: i32, %arg1: i32) -> (i32, i32) {
    %c0_i32 = arith.constant 0 : i32
    %c0_i32_0 = arith.constant 0 : i32
    return %c0_i32, %arg0 : i32, i32
  }
}

module attributes {stable_mosaic.version = 11 : i64} {
  func.func @_conv_bn_res_fused_kernel(%arg0: i32, %arg1: i32, %arg2: memref<8x256xbf16, #tpu.memory_space<vmem>>, %arg3: memref<256x256xbf16, #tpu.memory_space<vmem>>, %arg4: memref<1x256xf32, #tpu.memory_space<vmem>>, %arg5: memref<1x256xf32, #tpu.memory_space<vmem>>, %arg6: memref<8x256xf32, #tpu.memory_space<vmem>>, %arg7: memref<8x256xf32, #tpu.memory_space<vmem>>, %arg8: memref<8x256xf32, #tpu.memory_space<vmem>>) attributes {dimension_semantics = [#tpu.dimension_semantics<parallel>, #tpu.dimension_semantics<arbitrary>], iteration_bounds = array<i64: 2, 18>, scalar_prefetch = 0 : i64, scratch_operands = 1 : i64, tpu.core_type = #tpu.core_type<tc>, window_params = [{transform_indices = @transform_0, window_bounds = array<i64: 8, 256>}, {transform_indices = @transform_1, window_bounds = array<i64: 256, 256>}, {transform_indices = @transform_2, window_bounds = array<i64: 1, 256>}, {transform_indices = @transform_3, window_bounds = array<i64: 1, 256>}, {transform_indices = @transform_4, window_bounds = array<i64: 8, 256>}, {transform_indices = @transform_5, window_bounds = array<i64: 8, 256>}]} {
    %c0_i32 = arith.constant 0 : i32
    %0 = arith.cmpi eq, %arg1, %c0_i32 : i32
    %1 = arith.extui %0 : i1 to i32
    %c0_i32_0 = arith.constant 0 : i32
    %2 = arith.cmpi ne, %1, %c0_i32_0 : i32
    scf.if %2 {
      %cst_9 = arith.constant 0.000000e+00 : f32
      %12 = vector.broadcast %cst_9 : f32 to vector<8x256xf32>
      %c0_10 = arith.constant 0 : index
      %c0_11 = arith.constant 0 : index
      %13 = vector.load %arg8[%c0_10, %c0_11] : memref<8x256xf32, #tpu.memory_space<vmem>>, vector<8x256xf32>
      tpu.vector_store %arg8[%c0_10, %c0_11], %12 {strides = array<i32>} : memref<8x256xf32, #tpu.memory_space<vmem>>, vector<8x256xf32>,
    } else {
    }
    %c0 = arith.constant 0 : index
    %c0_1 = arith.constant 0 : index
    %3 = vector.load %arg8[%c0, %c0_1] : memref<8x256xf32, #tpu.memory_space<vmem>>, vector<8x256xf32>
    %c0_2 = arith.constant 0 : index
    %c0_3 = arith.constant 0 : index
    %4 = vector.load %arg2[%c0_2, %c0_3] : memref<8x256xbf16, #tpu.memory_space<vmem>>, vector<8x256xbf16>
    %c0_4 = arith.constant 0 : index
    %c0_5 = arith.constant 0 : index
    %5 = vector.load %arg3[%c0_4, %c0_5] : memref<256x256xbf16, #tpu.memory_space<vmem>>, vector<256x256xbf16>
    %cst = arith.constant dense<0.000000e+00> : vector<8x256xf32>
    %6 = tpu.matmul %4, %5, %cst {dimension_numbers = #tpu.dot_dimension_numbers<[1], [0], [0], [1], [0, 0, 1, 1], [], []>} : vector<8x256xbf16>, vector<256x256xbf16>, vector<8x256xf32> -> vector<8x256xf32>
    %7 = arith.addf %3, %6 : vector<8x256xf32>
    %c0_6 = arith.constant 0 : index
    %c0_7 = arith.constant 0 : index
    %8 = vector.load %arg8[%c0_6, %c0_7] : memref<8x256xf32, #tpu.memory_space<vmem>>, vector<8x256xf32>
    tpu.vector_store %arg8[%c0_6, %c0_7], %7 {strides = array<i32>} : memref<8x256xf32, #tpu.memory_space<vmem>>, vector<8x256xf32>,
    %c17_i32 = arith.constant 17 : i32
    %9 = arith.cmpi eq, %arg1, %c17_i32 : i32
    %10 = arith.extui %9 : i1 to i32
    %c0_i32_8 = arith.constant 0 : i32
    %11 = arith.cmpi ne, %10, %c0_i32_8 : i32
    scf.if %11 {
      %c0_9 = arith.constant 0 : index
      %c0_10 = arith.constant 0 : index
      %12 = vector.load %arg8[%c0_9, %c0_10] : memref<8x256xf32, #tpu.memory_space<vmem>>, vector<8x256xf32>
      %cst_11 = arith.constant dense<0.000000e+00> : vector<256xf32>
      %13 = vector.multi_reduction <add>, %12, %cst_11 [0] : vector<8x256xf32> to vector<256xf32>
      %14 = vector.shape_cast %13 : vector<256xf32> to vector<1x256xf32>
      %cst_12 = arith.constant 5.000000e-01 : f32
      %15 = vector.broadcast %cst_12 : f32 to vector<1x256xf32>
      %16 = arith.mulf %14, %15 : vector<1x256xf32>
      %17 = arith.mulf %12, %12 : vector<8x256xf32>
      %cst_13 = arith.constant dense<0.000000e+00> : vector<256xf32>
      %18 = vector.multi_reduction <add>, %17, %cst_13 [0] : vector<8x256xf32> to vector<256xf32>
      %19 = vector.shape_cast %18 : vector<256xf32> to vector<1x256xf32>
      %cst_14 = arith.constant 5.000000e-01 : f32
      %20 = vector.broadcast %cst_14 : f32 to vector<1x256xf32>
      %21 = arith.mulf %19, %20 : vector<1x256xf32>
      %22 = arith.mulf %16, %16 : vector<1x256xf32>
      %23 = arith.subf %21, %22 : vector<1x256xf32>
      %cst_15 = arith.constant 9.99999974E-6 : f32
      %24 = vector.broadcast %cst_15 : f32 to vector<1x256xf32>
      %25 = arith.addf %23, %24 : vector<1x256xf32>
      %26 = math.rsqrt %25 : vector<1x256xf32>
      %c0_16 = arith.constant 0 : index
      %c0_17 = arith.constant 0 : index
      %27 = vector.load %arg4[%c0_16, %c0_17] : memref<1x256xf32, #tpu.memory_space<vmem>>, vector<1x256xf32>
      %28 = arith.mulf %26, %27 : vector<1x256xf32>
      %c0_18 = arith.constant 0 : index
      %c0_19 = arith.constant 0 : index
      %29 = vector.load %arg5[%c0_18, %c0_19] : memref<1x256xf32, #tpu.memory_space<vmem>>, vector<1x256xf32>
      %30 = arith.mulf %16, %28 : vector<1x256xf32>
      %31 = arith.subf %29, %30 : vector<1x256xf32>
      %32 = vector.broadcast %28 : vector<1x256xf32> to vector<8x256xf32>
      %33 = arith.mulf %12, %32 : vector<8x256xf32>
      %34 = vector.broadcast %31 : vector<1x256xf32> to vector<8x256xf32>
      %35 = arith.addf %33, %34 : vector<8x256xf32>
      %cst_20 = arith.constant 0.000000e+00 : f32
      %36 = vector.broadcast %cst_20 : f32 to vector<8x256xf32>
      %37 = arith.maximumf %35, %36 : vector<8x256xf32>
      %c0_21 = arith.constant 0 : index
      %c0_22 = arith.constant 0 : index
      %38 = vector.load %arg6[%c0_21, %c0_22] : memref<8x256xf32, #tpu.memory_space<vmem>>, vector<8x256xf32>
      %39 = arith.addf %37, %38 : vector<8x256xf32>
      %cst_23 = arith.constant 0.000000e+00 : f32
      %40 = vector.broadcast %cst_23 : f32 to vector<8x256xf32>
      %41 = arith.maximumf %39, %40 : vector<8x256xf32>
      %c0_24 = arith.constant 0 : index
      %c0_25 = arith.constant 0 : index
      %42 = vector.load %arg7[%c0_24, %c0_25] : memref<8x256xf32, #tpu.memory_space<vmem>>, vector<8x256xf32>
      tpu.vector_store %arg7[%c0_24, %c0_25], %41 {strides = array<i32>} : memref<8x256xf32, #tpu.memory_space<vmem>>, vector<8x256xf32>,
    } else {
    }
    return
  }
  func.func @transform_0(%arg0: i32, %arg1: i32) -> (i32, i32) {
    %c0_i32 = arith.constant 0 : i32
    %c0_i32_0 = arith.constant 0 : i32
    return %c0_i32, %arg1 : i32, i32
  }
  func.func @transform_1(%arg0: i32, %arg1: i32) -> (i32, i32) {
    %c0_i32 = arith.constant 0 : i32
    return %arg1, %arg0 : i32, i32
  }
  func.func @transform_2(%arg0: i32, %arg1: i32) -> (i32, i32) {
    %c0_i32 = arith.constant 0 : i32
    %c0_i32_0 = arith.constant 0 : i32
    return %c0_i32, %arg0 : i32, i32
  }
  func.func @transform_3(%arg0: i32, %arg1: i32) -> (i32, i32) {
    %c0_i32 = arith.constant 0 : i32
    %c0_i32_0 = arith.constant 0 : i32
    return %c0_i32, %arg0 : i32, i32
  }
  func.func @transform_4(%arg0: i32, %arg1: i32) -> (i32, i32) {
    %c0_i32 = arith.constant 0 : i32
    %c0_i32_0 = arith.constant 0 : i32
    return %c0_i32, %arg0 : i32, i32
  }
  func.func @transform_5(%arg0: i32, %arg1: i32) -> (i32, i32) {
    %c0_i32 = arith.constant 0 : i32
    %c0_i32_0 = arith.constant 0 : i32
    return %c0_i32, %arg0 : i32, i32
  }
}

module attributes {stable_mosaic.version = 11 : i64} {
  func.func @_mean_reduce_kernel(%arg0: i32, %arg1: memref<8x1x512xf32, #tpu.memory_space<vmem>>, %arg2: memref<8x512xf32, #tpu.memory_space<vmem>>) attributes {dimension_semantics = [#tpu.dimension_semantics<parallel>], iteration_bounds = array<i64: 1>, scalar_prefetch = 0 : i64, scratch_operands = 0 : i64, tpu.core_type = #tpu.core_type<tc>, window_params = [{transform_indices = @transform_0, window_bounds = array<i64: 8, 1, 512>}, {transform_indices = @transform_1, window_bounds = array<i64: 8, 512>}]} {
    %c0 = arith.constant 0 : index
    %c0_0 = arith.constant 0 : index
    %c0_1 = arith.constant 0 : index
    %0 = vector.load %arg1[%c0, %c0_0, %c0_1] : memref<8x1x512xf32, #tpu.memory_space<vmem>>, vector<8x1x512xf32>
    %cst = arith.constant dense<0.000000e+00> : vector<8x512xf32>
    %1 = vector.multi_reduction <add>, %0, %cst [1] : vector<8x1x512xf32> to vector<8x512xf32>
    %cst_2 = arith.constant 1.000000e+00 : f32
    %2 = vector.broadcast %cst_2 : f32 to vector<8x512xf32>
    %3 = arith.divf %1, %2 : vector<8x512xf32>
    %c0_3 = arith.constant 0 : index
    %c0_4 = arith.constant 0 : index
    %4 = vector.load %arg2[%c0_3, %c0_4] : memref<8x512xf32, #tpu.memory_space<vmem>>, vector<8x512xf32>
    tpu.vector_store %arg2[%c0_3, %c0_4], %3 {strides = array<i32>} : memref<8x512xf32, #tpu.memory_space<vmem>>, vector<8x512xf32>,
    return
  }
  func.func @transform_0(%arg0: i32) -> (i32, i32, i32) {
    %c0_i32 = arith.constant 0 : i32
    %c0_i32_0 = arith.constant 0 : i32
    %c0_i32_1 = arith.constant 0 : i32
    return %arg0, %c0_i32, %c0_i32_0 : i32, i32, i32
  }
  func.func @transform_1(%arg0: i32) -> (i32, i32) {
    %c0_i32 = arith.constant 0 : i32
    %c0_i32_0 = arith.constant 0 : i32
    return %arg0, %c0_i32 : i32, i32
  }
}

module attributes {stable_mosaic.version = 11 : i64} {
  func.func @_matmul_bias_kernel(%arg0: i32, %arg1: i32, %arg2: i32, %arg3: memref<8x256xbf16, #tpu.memory_space<vmem>>, %arg4: memref<256x128xbf16, #tpu.memory_space<vmem>>, %arg5: memref<1x128xf32, #tpu.memory_space<vmem>>, %arg6: memref<8x128xf32, #tpu.memory_space<vmem>>, %arg7: memref<8x128xf32, #tpu.memory_space<vmem>>) attributes {dimension_semantics = [#tpu.dimension_semantics<parallel>, #tpu.dimension_semantics<parallel>, #tpu.dimension_semantics<arbitrary>], iteration_bounds = array<i64: 1, 1, 2>, scalar_prefetch = 0 : i64, scratch_operands = 1 : i64, tpu.core_type = #tpu.core_type<tc>, window_params = [{transform_indices = @transform_0, window_bounds = array<i64: 8, 256>}, {transform_indices = @transform_1, window_bounds = array<i64: 256, 128>}, {transform_indices = @transform_2, window_bounds = array<i64: 1, 128>}, {transform_indices = @transform_3, window_bounds = array<i64: 8, 128>}]} {
    %c0_i32 = arith.constant 0 : i32
    %0 = arith.cmpi eq, %arg2, %c0_i32 : i32
    %1 = arith.extui %0 : i1 to i32
    %c0_i32_0 = arith.constant 0 : i32
    %2 = arith.cmpi ne, %1, %c0_i32_0 : i32
    scf.if %2 {
      %cst_9 = arith.constant 0.000000e+00 : f32
      %12 = vector.broadcast %cst_9 : f32 to vector<8x128xf32>
      %c0_10 = arith.constant 0 : index
      %c0_11 = arith.constant 0 : index
      %13 = vector.load %arg7[%c0_10, %c0_11] : memref<8x128xf32, #tpu.memory_space<vmem>>, vector<8x128xf32>
      tpu.vector_store %arg7[%c0_10, %c0_11], %12 {strides = array<i32>} : memref<8x128xf32, #tpu.memory_space<vmem>>, vector<8x128xf32>,
    } else {
    }
    %c0 = arith.constant 0 : index
    %c0_1 = arith.constant 0 : index
    %3 = vector.load %arg7[%c0, %c0_1] : memref<8x128xf32, #tpu.memory_space<vmem>>, vector<8x128xf32>
    %c0_2 = arith.constant 0 : index
    %c0_3 = arith.constant 0 : index
    %4 = vector.load %arg3[%c0_2, %c0_3] : memref<8x256xbf16, #tpu.memory_space<vmem>>, vector<8x256xbf16>
    %c0_4 = arith.constant 0 : index
    %c0_5 = arith.constant 0 : index
    %5 = vector.load %arg4[%c0_4, %c0_5] : memref<256x128xbf16, #tpu.memory_space<vmem>>, vector<256x128xbf16>
    %cst = arith.constant dense<0.000000e+00> : vector<8x128xf32>
    %6 = tpu.matmul %4, %5, %cst {dimension_numbers = #tpu.dot_dimension_numbers<[1], [0], [0], [1], [0, 0, 1, 1], [], []>} : vector<8x256xbf16>, vector<256x128xbf16>, vector<8x128xf32> -> vector<8x128xf32>
    %7 = arith.addf %3, %6 : vector<8x128xf32>
    %c0_6 = arith.constant 0 : index
    %c0_7 = arith.constant 0 : index
    %8 = vector.load %arg7[%c0_6, %c0_7] : memref<8x128xf32, #tpu.memory_space<vmem>>, vector<8x128xf32>
    tpu.vector_store %arg7[%c0_6, %c0_7], %7 {strides = array<i32>} : memref<8x128xf32, #tpu.memory_space<vmem>>, vector<8x128xf32>,
    %c1_i32 = arith.constant 1 : i32
    %9 = arith.cmpi eq, %arg2, %c1_i32 : i32
    %10 = arith.extui %9 : i1 to i32
    %c0_i32_8 = arith.constant 0 : i32
    %11 = arith.cmpi ne, %10, %c0_i32_8 : i32
    scf.if %11 {
      %c0_9 = arith.constant 0 : index
      %c0_10 = arith.constant 0 : index
      %12 = vector.load %arg7[%c0_9, %c0_10] : memref<8x128xf32, #tpu.memory_space<vmem>>, vector<8x128xf32>
      %c0_11 = arith.constant 0 : index
      %c0_12 = arith.constant 0 : index
      %13 = vector.load %arg5[%c0_11, %c0_12] : memref<1x128xf32, #tpu.memory_space<vmem>>, vector<1x128xf32>
      %14 = vector.broadcast %13 : vector<1x128xf32> to vector<8x128xf32>
      %15 = arith.addf %12, %14 : vector<8x128xf32>
      %c0_13 = arith.constant 0 : index
      %c0_14 = arith.constant 0 : index
      %16 = vector.load %arg6[%c0_13, %c0_14] : memref<8x128xf32, #tpu.memory_space<vmem>>, vector<8x128xf32>
      tpu.vector_store %arg6[%c0_13, %c0_14], %15 {strides = array<i32>} : memref<8x128xf32, #tpu.memory_space<vmem>>, vector<8x128xf32>,
    } else {
    }
    return
  }
  func.func @transform_0(%arg0: i32, %arg1: i32, %arg2: i32) -> (i32, i32) {
    %c0_i32 = arith.constant 0 : i32
    return %arg0, %arg2 : i32, i32
  }
  func.func @transform_1(%arg0: i32, %arg1: i32, %arg2: i32) -> (i32, i32) {
    %c0_i32 = arith.constant 0 : i32
    return %arg2, %arg1 : i32, i32
  }
  func.func @transform_2(%arg0: i32, %arg1: i32, %arg2: i32) -> (i32, i32) {
    %c0_i32 = arith.constant 0 : i32
    %c0_i32_0 = arith.constant 0 : i32
    return %c0_i32, %arg1 : i32, i32
  }
  func.func @transform_3(%arg0: i32, %arg1: i32, %arg2: i32) -> (i32, i32) {
    %c0_i32 = arith.constant 0 : i32
    return %arg0, %arg1 : i32, i32
  }
}

</mosaic_0001>

<llo_original>
// kernel: resnet_small_forward.15
$region0: #{resnet_small_forward.15}
  #allocation0 [shape = 'u32[]', space=smem, size = 0x4, offset = 0x4, fixed_abs, tag = 'smem constant byte address 0x4 - core index']
  #allocation1 [shape = 'u32[72,128]{1,0:T(1,128)}', space=vmem, size = 0x9000, scoped, tag = 'internal scratch']
  #allocation2 [shape = 'f32[128,128]{1,0:T(8,128)}', space=vmem, size = 0x10000, scoped, tag = 'scratch operand']
  %s0 = inlined_call_operand.vmem [shape: bf16[128,256], index: 0, kind: input, shape index: {}]
  %s1 = inlined_call_operand.vmem [shape: bf16[256,128], index: 1, kind: input, shape index: {}]
  %s2 = inlined_call_operand.vmem [shape: f32[1,128], index: 2, kind: input, shape index: {}]
  %s3 = inlined_call_operand.vmem [shape: f32[1,128], index: 3, kind: input, shape index: {}]
  %s4 = inlined_call_operand.vmem [shape: f32[128,128], index: 4, kind: output, shape index: {}]
  %s5 = sld [smem:[#allocation0]]
  $region34: #{resnet_small_forward.15} parent=0
    _
  %s7 = ssub.s32 1, %s5
  %s8 = scalar_select 0, %s7, %s5
  // Predicated region
  $region2: #{resnet_small_forward.15} parent=0 // pred_check
    _
  $region3: #{resnet_small_forward.15} parent=0 // pred_check_branch
    %10 = sbr.rel (0) target = $region5
  $region4: #{resnet_small_forward.15} parent=0 // pred_region
    _
  $region5: #{resnet_small_forward.15} parent=0 // pred_fallthru
    _
  // Predicated region
  $region6: #{resnet_small_forward.15} parent=0 // pred_check
    _
  $region7: #{resnet_small_forward.15} parent=0 // pred_check_branch
    %12 = sbr.rel (0) target = $region9
  $region8: #{resnet_small_forward.15} parent=0 // pred_region
    _
  $region9: #{resnet_small_forward.15} parent=0 // pred_fallthru
    _
  // Predicated region
  $region10: #{resnet_small_forward.15} parent=0 // pred_check
    _
  $region11: #{resnet_small_forward.15} parent=0 // pred_check_branch
    %14 = sbr.rel (0) target = $region13
  $region12: #{resnet_small_forward.15} parent=0 // pred_region
    _
  $region13: #{resnet_small_forward.15} parent=0 // pred_fallthru
    _
  // Predicated region
  $region14: #{resnet_small_forward.15} parent=0 // pred_check
    _
  $region15: #{resnet_small_forward.15} parent=0 // pred_check_branch
    %16 = sbr.rel (0) target = $region17
  $region16: #{resnet_small_forward.15} parent=0 // pred_region
    _
  $region17: #{resnet_small_forward.15} parent=0 // pred_fallthru
    _
  %p17 = scmp.eq.s32.totalorder 0, 0
  // Predicated region
  $region18: #{resnet_small_forward.15} parent=0 // pred_check
    %p18 = pneg %p17
  $region19: #{resnet_small_forward.15} parent=0 // pred_check_branch
    %20 = sbr.rel (%p18) target = $region21
  $region20: #{resnet_small_forward.15} parent=0 // pred_region
    %21 = vst [vmem:[#allocation2] sm:$0xff] 0.0
    %22 = vst [vmem:[#allocation2 + $0x8] sm:$0xff] 0.0
    %23 = vst [vmem:[#allocation2 + $0x10] sm:$0xff] 0.0
    %24 = vst [vmem:[#allocation2 + $0x18] sm:$0xff] 0.0
    %25 = vst [vmem:[#allocation2 + $0x20] sm:$0xff] 0.0
    %26 = vst [vmem:[#allocation2 + $0x28] sm:$0xff] 0.0
    %27 = vst [vmem:[#allocation2 + $0x30] sm:$0xff] 0.0
    %28 = vst [vmem:[#allocation2 + $0x38] sm:$0xff] 0.0
    %29 = vst [vmem:[#allocation2 + $0x40] sm:$0xff] 0.0
    %30 = vst [vmem:[#allocation2 + $0x48] sm:$0xff] 0.0
    %31 = vst [vmem:[#allocation2 + $0x50] sm:$0xff] 0.0
    %32 = vst [vmem:[#allocation2 + $0x58] sm:$0xff] 0.0
    %33 = vst [vmem:[#allocation2 + $0x60] sm:$0xff] 0.0
    %34 = vst [vmem:[#allocation2 + $0x68] sm:$0xff] 0.0
    %35 = vst [vmem:[#allocation2 + $0x70] sm:$0xff] 0.0
    %36 = vst [vmem:[#allocation2 + $0x78] sm:$0xff] 0.0
  $region21: #{resnet_small_forward.15} parent=0 // pred_fallthru
    _
  %v37 = vld [vmem:[#allocation2] sm:$0xff]
  %v38 = vld [vmem:[#allocation2 + $0x8] sm:$0xff]
  %v39 = vld [vmem:[#allocation2 + $0x10] sm:$0xff]
  %v40 = vld [vmem:[#allocation2 + $0x18] sm:$0xff]
  %v41 = vld [vmem:[#allocation2 + $0x20] sm:$0xff]
  %v42 = vld [vmem:[#allocation2 + $0x28] sm:$0xff]
  %v43 = vld [vmem:[#allocation2 + $0x30] sm:$0xff]
  %v44 = vld [vmem:[#allocation2 + $0x38] sm:$0xff]
  %v45 = vld [vmem:[#allocation2 + $0x40] sm:$0xff]
  %v46 = vld [vmem:[#allocation2 + $0x48] sm:$0xff]
  %v47 = vld [vmem:[#allocation2 + $0x50] sm:$0xff]
  %v48 = vld [vmem:[#allocation2 + $0x58] sm:$0xff]
  %v49 = vld [vmem:[#allocation2 + $0x60] sm:$0xff]
  %v50 = vld [vmem:[#allocation2 + $0x68] sm:$0xff]
  %v51 = vld [vmem:[#allocation2 + $0x70] sm:$0xff]
  %v52 = vld [vmem:[#allocation2 + $0x78] sm:$0xff]
  %v53 = vld [vmem:[%s0] sm:$0xff]
  %v54 = vld [vmem:[%s0 + $0x8] sm:$0xff]
  %v55 = vld [vmem:[%s0 + $0x10] sm:$0xff]
  %v56 = vld [vmem:[%s0 + $0x18] sm:$0xff]
  %v57 = vld [vmem:[%s0 + $0x20] sm:$0xff]
  %v58 = vld [vmem:[%s0 + $0x28] sm:$0xff]
  %v59 = vld [vmem:[%s0 + $0x30] sm:$0xff]
  %v60 = vld [vmem:[%s0 + $0x38] sm:$0xff]
  %v61 = vld [vmem:[%s0 + $0x40] sm:$0xff]
  %v62 = vld [vmem:[%s0 + $0x48] sm:$0xff]
  %v63 = vld [vmem:[%s0 + $0x50] sm:$0xff]
  %v64 = vld [vmem:[%s0 + $0x58] sm:$0xff]
  %v65 = vld [vmem:[%s0 + $0x60] sm:$0xff]
  %v66 = vld [vmem:[%s0 + $0x68] sm:$0xff]
  %v67 = vld [vmem:[%s0 + $0x70] sm:$0xff]
  %v68 = vld [vmem:[%s0 + $0x78] sm:$0xff]
  %v69 = vld [vmem:[%s1] sm:$0xf]
  %v70 = vld [vmem:[%s1 + $0x4] sm:$0xf]
  %v71 = vld [vmem:[%s1 + $0x8] sm:$0xf]
  %v72 = vld [vmem:[%s1 + $0xc] sm:$0xf]
  %v73 = vld [vmem:[%s1 + $0x10] sm:$0xf]
  %v74 = vld [vmem:[%s1 + $0x14] sm:$0xf]
  %v75 = vld [vmem:[%s1 + $0x18] sm:$0xf]
  %v76 = vld [vmem:[%s1 + $0x1c] sm:$0xf]
  %v77 = vld [vmem:[%s1 + $0x20] sm:$0xf]
  %v78 = vld [vmem:[%s1 + $0x24] sm:$0xf]
  %v79 = vld [vmem:[%s1 + $0x28] sm:$0xf]
  %v80 = vld [vmem:[%s1 + $0x2c] sm:$0xf]
  %v81 = vld [vmem:[%s1 + $0x30] sm:$0xf]
  %v82 = vld [vmem:[%s1 + $0x34] sm:$0xf]
  %v83 = vld [vmem:[%s1 + $0x38] sm:$0xf]
  %v84 = vld [vmem:[%s1 + $0x3c] sm:$0xf]
  %v85 = vld [vmem:[%s1 + $0x40] sm:$0xf]
  %v86 = vld [vmem:[%s1 + $0x44] sm:$0xf]
  %v87 = vld [vmem:[%s1 + $0x48] sm:$0xf]
  %v88 = vld [vmem:[%s1 + $0x4c] sm:$0xf]
  %v89 = vld [vmem:[%s1 + $0x50] sm:$0xf]
  %v90 = vld [vmem:[%s1 + $0x54] sm:$0xf]
  %v91 = vld [vmem:[%s1 + $0x58] sm:$0xf]
  %v92 = vld [vmem:[%s1 + $0x5c] sm:$0xf]
  %v93 = vld [vmem:[%s1 + $0x60] sm:$0xf]
  %v94 = vld [vmem:[%s1 + $0x64] sm:$0xf]
  %v95 = vld [vmem:[%s1 + $0x68] sm:$0xf]
  %v96 = vld [vmem:[%s1 + $0x6c] sm:$0xf]
  %v97 = vld [vmem:[%s1 + $0x70] sm:$0xf]
  %v98 = vld [vmem:[%s1 + $0x74] sm:$0xf]
  %v99 = vld [vmem:[%s1 + $0x78] sm:$0xf]
  %v100 = vld [vmem:[%s1 + $0x7c] sm:$0xf]
  %v117 = vunpack.c.l.b16 %v53
  %v118 = vunpack.c.h.b16 %v53
  %v119 = vunpack.c.l.b16 %v54
  %v120 = vunpack.c.h.b16 %v54
  %v121 = vunpack.c.l.b16 %v55
  %v122 = vunpack.c.h.b16 %v55
  %v123 = vunpack.c.l.b16 %v56
  %v124 = vunpack.c.h.b16 %v56
  %v125 = vunpack.c.l.b16 %v57
  %v126 = vunpack.c.h.b16 %v57
  %v127 = vunpack.c.l.b16 %v58
  %v128 = vunpack.c.h.b16 %v58
  %v129 = vunpack.c.l.b16 %v59
  %v130 = vunpack.c.h.b16 %v59
  %v131 = vunpack.c.l.b16 %v60
  %v132 = vunpack.c.h.b16 %v60
  %v133 = vunpack.c.l.b16 %v61
  %v134 = vunpack.c.h.b16 %v61
  %v135 = vunpack.c.l.b16 %v62
  %v136 = vunpack.c.h.b16 %v62
  %v137 = vunpack.c.l.b16 %v63
  %v138 = vunpack.c.h.b16 %v63
  %v139 = vunpack.c.l.b16 %v64
  %v140 = vunpack.c.h.b16 %v64
  %v141 = vunpack.c.l.b16 %v65
  %v142 = vunpack.c.h.b16 %v65
  %v143 = vunpack.c.l.b16 %v66
  %v144 = vunpack.c.h.b16 %v66
  %v145 = vunpack.c.l.b16 %v67
  %v146 = vunpack.c.h.b16 %v67
  %v147 = vunpack.c.l.b16 %v68
  %v148 = vunpack.c.h.b16 %v68
  %v149 = vpack.c.b16 %v119, %v117
  %v150 = vpack.c.b16 %v120, %v118
  %v151 = vpack.c.b16 %v123, %v121
  %v152 = vpack.c.b16 %v124, %v122
  %v153 = vpack.c.b16 %v127, %v125
  %v154 = vpack.c.b16 %v128, %v126
  %v155 = vpack.c.b16 %v131, %v129
  %v156 = vpack.c.b16 %v132, %v130
  %v157 = vpack.c.b16 %v135, %v133
  %v158 = vpack.c.b16 %v136, %v134
  %v159 = vpack.c.b16 %v139, %v137
  %v160 = vpack.c.b16 %v140, %v138
  %v161 = vpack.c.b16 %v143, %v141
  %v162 = vpack.c.b16 %v144, %v142
  %v163 = vpack.c.b16 %v147, %v145
  %v164 = vpack.c.b16 %v148, %v146
  %v213 = vunpack.c.l.b16 %v69
  %v214 = vunpack.c.l.b16 %v70
  %v215 = vunpack.c.l.b16 %v71
  %v216 = vunpack.c.l.b16 %v72
  %v217 = vunpack.c.l.b16 %v73
  %v218 = vunpack.c.l.b16 %v74
  %v219 = vunpack.c.l.b16 %v75
  %v220 = vunpack.c.l.b16 %v76
  %v221 = vunpack.c.l.b16 %v77
  %v222 = vunpack.c.l.b16 %v78
  %v223 = vunpack.c.l.b16 %v79
  %v224 = vunpack.c.l.b16 %v80
  %v225 = vunpack.c.l.b16 %v81
  %v226 = vunpack.c.l.b16 %v82
  %v227 = vunpack.c.l.b16 %v83
  %v228 = vunpack.c.l.b16 %v84
  %v229 = vunpack.c.l.b16 %v85
  %v230 = vunpack.c.l.b16 %v86
  %v231 = vunpack.c.l.b16 %v87
  %v232 = vunpack.c.l.b16 %v88
  %v233 = vunpack.c.l.b16 %v89
  %v234 = vunpack.c.l.b16 %v90
  %v235 = vunpack.c.l.b16 %v91
  %v236 = vunpack.c.l.b16 %v92
  %v237 = vunpack.c.l.b16 %v93
  %v238 = vunpack.c.l.b16 %v94
  %v239 = vunpack.c.l.b16 %v95
  %v240 = vunpack.c.l.b16 %v96
  %v241 = vunpack.c.l.b16 %v97
  %v242 = vunpack.c.l.b16 %v98
  %v243 = vunpack.c.l.b16 %v99
  %v244 = vunpack.c.l.b16 %v100
  %v245 = vpack.c.b16 %v214, %v213
  %v246 = vpack.c.b16 %v216, %v215
  %v247 = vpack.c.b16 %v218, %v217
  %v248 = vpack.c.b16 %v220, %v219
  %v249 = vpack.c.b16 %v222, %v221
  %v250 = vpack.c.b16 %v224, %v223
  %v251 = vpack.c.b16 %v226, %v225
  %v252 = vpack.c.b16 %v228, %v227
  %v253 = vpack.c.b16 %v230, %v229
  %v254 = vpack.c.b16 %v232, %v231
  %v255 = vpack.c.b16 %v234, %v233
  %v256 = vpack.c.b16 %v236, %v235
  %v257 = vpack.c.b16 %v238, %v237
  %v258 = vpack.c.b16 %v240, %v239
  %v259 = vpack.c.b16 %v242, %v241
  %v260 = vpack.c.b16 %v244, %v243
  %277 = vmatpush.bf16.msra.mxu0 %v252
  %278 = vmatpush.bf16.msra.mxu0 %v251
  %279 = vmatpush.bf16.msra.mxu0 %v250
  %280 = vmatpush.bf16.msra.mxu0 %v249
  %281 = vmatpush.bf16.msra.mxu0 %v248
  %282 = vmatpush.bf16.msra.mxu0 %v247
  %283 = vmatpush.bf16.msra.mxu0 %v246
  %284 = vmatpush.bf16.msra.mxu0 %v245
  %285 = vmatmul.bf16.gmra.mxu0 %v149
  %v286 = vpop.f32.mrf.mxu0
  %v287 = vadd.f32 0.0, %v286
  %v288 = vpop.f32.mrf.mxu0
  %v289 = vadd.f32 0.0, %v288
  %290 = vmatmul.bf16.gmra.mxu0 %v151
  %v291 = vpop.f32.mrf.mxu0
  %v292 = vadd.f32 0.0, %v291
  %v293 = vpop.f32.mrf.mxu0
  %v294 = vadd.f32 0.0, %v293
  %295 = vmatmul.bf16.gmra.mxu0 %v153
  %v296 = vpop.f32.mrf.mxu0
  %v297 = vadd.f32 0.0, %v296
  %v298 = vpop.f32.mrf.mxu0
  %v299 = vadd.f32 0.0, %v298
  %300 = vmatmul.bf16.gmra.mxu0 %v155
  %v301 = vpop.f32.mrf.mxu0
  %v302 = vadd.f32 0.0, %v301
  %v303 = vpop.f32.mrf.mxu0
  %v304 = vadd.f32 0.0, %v303
  %305 = vmatmul.bf16.gmra.mxu0 %v157
  %v306 = vpop.f32.mrf.mxu0
  %v307 = vadd.f32 0.0, %v306
  %v308 = vpop.f32.mrf.mxu0
  %v309 = vadd.f32 0.0, %v308
  %310 = vmatmul.bf16.gmra.mxu0 %v159
  %v311 = vpop.f32.mrf.mxu0
  %v312 = vadd.f32 0.0, %v311
  %v313 = vpop.f32.mrf.mxu0
  %v314 = vadd.f32 0.0, %v313
  %315 = vmatmul.bf16.gmra.mxu0 %v161
  %v316 = vpop.f32.mrf.mxu0
  %v317 = vadd.f32 0.0, %v316
  %v318 = vpop.f32.mrf.mxu0
  %v319 = vadd.f32 0.0, %v318
  %320 = vmatmul.bf16.gmra.mxu0 %v163
  %v321 = vpop.f32.mrf.mxu0
  %v322 = vadd.f32 0.0, %v321
  %v323 = vpop.f32.mrf.mxu0
  %v324 = vadd.f32 0.0, %v323
  %325 = vdwg.mxu0
  %326 = vmatpush.bf16.msra.mxu0 %v260
  %327 = vmatpush.bf16.msra.mxu0 %v259
  %328 = vmatpush.bf16.msra.mxu0 %v258
  %329 = vmatpush.bf16.msra.mxu0 %v257
  %330 = vmatpush.bf16.msra.mxu0 %v256
  %331 = vmatpush.bf16.msra.mxu0 %v255
  %332 = vmatpush.bf16.msra.mxu0 %v254
  %333 = vmatpush.bf16.msra.mxu0 %v253
  %334 = vmatmul.bf16.gmra.mxu0 %v150
  %v335 = vpop.f32.mrf.mxu0
  %v336 = vadd.f32 %v287, %v335
  %v337 = vpop.f32.mrf.mxu0
  %v338 = vadd.f32 %v289, %v337
  %339 = vmatmul.bf16.gmra.mxu0 %v152
  %v340 = vpop.f32.mrf.mxu0
  %v341 = vadd.f32 %v292, %v340
  %v342 = vpop.f32.mrf.mxu0
  %v343 = vadd.f32 %v294, %v342
  %344 = vmatmul.bf16.gmra.mxu0 %v154
  %v345 = vpop.f32.mrf.mxu0
  %v346 = vadd.f32 %v297, %v345
  %v347 = vpop.f32.mrf.mxu0
  %v348 = vadd.f32 %v299, %v347
  %349 = vmatmul.bf16.gmra.mxu0 %v156
  %v350 = vpop.f32.mrf.mxu0
  %v351 = vadd.f32 %v302, %v350
  %v352 = vpop.f32.mrf.mxu0
  %v353 = vadd.f32 %v304, %v352
  %354 = vmatmul.bf16.gmra.mxu0 %v158
  %v355 = vpop.f32.mrf.mxu0
  %v356 = vadd.f32 %v307, %v355
  %v357 = vpop.f32.mrf.mxu0
  %v358 = vadd.f32 %v309, %v357
  %359 = vmatmul.bf16.gmra.mxu0 %v160
  %v360 = vpop.f32.mrf.mxu0
  %v361 = vadd.f32 %v312, %v360
  %v362 = vpop.f32.mrf.mxu0
  %v363 = vadd.f32 %v314, %v362
  %364 = vmatmul.bf16.gmra.mxu0 %v162
  %v365 = vpop.f32.mrf.mxu0
  %v366 = vadd.f32 %v317, %v365
  %v367 = vpop.f32.mrf.mxu0
  %v368 = vadd.f32 %v319, %v367
  %369 = vmatmul.bf16.gmra.mxu0 %v164
  %v370 = vpop.f32.mrf.mxu0
  %v371 = vadd.f32 %v322, %v370
  %v372 = vpop.f32.mrf.mxu0
  %v373 = vadd.f32 %v324, %v372
  %374 = vdwg.mxu0
  %v375 = vadd.f32 %v37, %v336
  %v376 = vadd.f32 %v38, %v338
  %v377 = vadd.f32 %v39, %v341
  %v378 = vadd.f32 %v40, %v343
  %v379 = vadd.f32 %v41, %v346
  %v380 = vadd.f32 %v42, %v348
  %v381 = vadd.f32 %v43, %v351
  %v382 = vadd.f32 %v44, %v353
  %v383 = vadd.f32 %v45, %v356
  %v384 = vadd.f32 %v46, %v358
  %v385 = vadd.f32 %v47, %v361
  %v386 = vadd.f32 %v48, %v363
  %v387 = vadd.f32 %v49, %v366
  %v388 = vadd.f32 %v50, %v368
  %v389 = vadd.f32 %v51, %v371
  %v390 = vadd.f32 %v52, %v373
  %391 = vst [vmem:[#allocation2] sm:$0xff] %v375
  %392 = vst [vmem:[#allocation2 + $0x8] sm:$0xff] %v376
  %393 = vst [vmem:[#allocation2 + $0x10] sm:$0xff] %v377
  %394 = vst [vmem:[#allocation2 + $0x18] sm:$0xff] %v378
  %395 = vst [vmem:[#allocation2 + $0x20] sm:$0xff] %v379
  %396 = vst [vmem:[#allocation2 + $0x28] sm:$0xff] %v380
  %397 = vst [vmem:[#allocation2 + $0x30] sm:$0xff] %v381
  %398 = vst [vmem:[#allocation2 + $0x38] sm:$0xff] %v382
  %399 = vst [vmem:[#allocation2 + $0x40] sm:$0xff] %v383
  %400 = vst [vmem:[#allocation2 + $0x48] sm:$0xff] %v384
  %401 = vst [vmem:[#allocation2 + $0x50] sm:$0xff] %v385
  %402 = vst [vmem:[#allocation2 + $0x58] sm:$0xff] %v386
  %403 = vst [vmem:[#allocation2 + $0x60] sm:$0xff] %v387
  %404 = vst [vmem:[#allocation2 + $0x68] sm:$0xff] %v388
  %405 = vst [vmem:[#allocation2 + $0x70] sm:$0xff] %v389
  %406 = vst [vmem:[#allocation2 + $0x78] sm:$0xff] %v390
  // Predicated region
  $region22: #{resnet_small_forward.15} parent=0 // pred_check
    %p407 = pneg %p17
  $region23: #{resnet_small_forward.15} parent=0 // pred_check_branch
    %409 = sbr.rel (%p407) target = $region25
  $region24: #{resnet_small_forward.15} parent=0 // pred_region
    %v410 = vld [vmem:[#allocation2] sm:$0xff]
    %v411 = vld [vmem:[#allocation2 + $0x8] sm:$0xff]
    %v412 = vld [vmem:[#allocation2 + $0x10] sm:$0xff]
    %v413 = vld [vmem:[#allocation2 + $0x18] sm:$0xff]
    %v414 = vld [vmem:[#allocation2 + $0x20] sm:$0xff]
    %v415 = vld [vmem:[#allocation2 + $0x28] sm:$0xff]
    %v416 = vld [vmem:[#allocation2 + $0x30] sm:$0xff]
    %v417 = vld [vmem:[#allocation2 + $0x38] sm:$0xff]
    %v418 = vld [vmem:[#allocation2 + $0x40] sm:$0xff]
    %v419 = vld [vmem:[#allocation2 + $0x48] sm:$0xff]
    %v420 = vld [vmem:[#allocation2 + $0x50] sm:$0xff]
    %v421 = vld [vmem:[#allocation2 + $0x58] sm:$0xff]
    %v422 = vld [vmem:[#allocation2 + $0x60] sm:$0xff]
    %v423 = vld [vmem:[#allocation2 + $0x68] sm:$0xff]
    %v424 = vld [vmem:[#allocation2 + $0x70] sm:$0xff]
    %v425 = vld [vmem:[#allocation2 + $0x78] sm:$0xff]
    %v426 = vadd.f32 %v410, %v411
    %v427 = vadd.f32 %v426, %v412
    %v428 = vadd.f32 %v427, %v413
    %v429 = vadd.f32 %v428, %v414
    %v430 = vadd.f32 %v429, %v415
    %v431 = vadd.f32 %v430, %v416
    %v432 = vadd.f32 %v431, %v417
    %v433 = vadd.f32 %v432, %v418
    %v434 = vadd.f32 %v433, %v419
    %v435 = vadd.f32 %v434, %v420
    %v436 = vadd.f32 %v435, %v421
    %v437 = vadd.f32 %v436, %v422
    %v438 = vadd.f32 %v437, %v423
    %v439 = vadd.f32 %v438, %v424
    %v440 = vadd.f32 %v439, %v425
    %v441 = vrot.slane %v440, 4
    %v442 = vadd.f32 %v440, %v441
    %v443 = vrot.slane %v442, 2
    %v444 = vadd.f32 %v442, %v443
    %v445 = vrot.slane %v444, 1
    %v446 = vadd.f32 %v444, %v445
    %v447 = vmul.f32 %v446, 0.0078125
    %v448 = vmul.f32 %v410, %v410
    %v449 = vmul.f32 %v411, %v411
    %v450 = vmul.f32 %v412, %v412
    %v451 = vmul.f32 %v413, %v413
    %v452 = vmul.f32 %v414, %v414
    %v453 = vmul.f32 %v415, %v415
    %v454 = vmul.f32 %v416, %v416
    %v455 = vmul.f32 %v417, %v417
    %v456 = vmul.f32 %v418, %v418
    %v457 = vmul.f32 %v419, %v419
    %v458 = vmul.f32 %v420, %v420
    %v459 = vmul.f32 %v421, %v421
    %v460 = vmul.f32 %v422, %v422
    %v461 = vmul.f32 %v423, %v423
    %v462 = vmul.f32 %v424, %v424
    %v463 = vmul.f32 %v425, %v425
    %v464 = vadd.f32 %v448, %v449
    %v465 = vadd.f32 %v464, %v450
    %v466 = vadd.f32 %v465, %v451
    %v467 = vadd.f32 %v466, %v452
    %v468 = vadd.f32 %v467, %v453
    %v469 = vadd.f32 %v468, %v454
    %v470 = vadd.f32 %v469, %v455
    %v471 = vadd.f32 %v470, %v456
    %v472 = vadd.f32 %v471, %v457
    %v473 = vadd.f32 %v472, %v458
    %v474 = vadd.f32 %v473, %v459
    %v475 = vadd.f32 %v474, %v460
    %v476 = vadd.f32 %v475, %v461
    %v477 = vadd.f32 %v476, %v462
    %v478 = vadd.f32 %v477, %v463
    %v479 = vrot.slane %v478, 4
    %v480 = vadd.f32 %v478, %v479
    %v481 = vrot.slane %v480, 2
    %v482 = vadd.f32 %v480, %v481
    %v483 = vrot.slane %v482, 1
    %v484 = vadd.f32 %v482, %v483
    %v485 = vmul.f32 %v484, 0.0078125
    %v486 = vmul.f32 %v447, %v447
    %v487 = vsub.f32 %v485, %v486
    %v488 = vadd.f32 %v487, 1e-05
    %v489 = vrsqrt.pop %v488
    %v490 = vmul.f32 %v489, %v488
    %v491 = vmul.f32 %v490, %v489
    %v492 = vmul.f32 0.5, %v491
    %v493 = vsub.f32 1.5, %v492
    %v494 = vmul.f32 %v489, %v493
    %vm495 = vweird.f32 %v488
    %vm496 = vweird.f32 %v489
    %vm497 = vmor %vm495, %vm496
    %v498 = vsel %vm497, %v489, %v494
    %v499 = vld [vmem:[%s2] sm:$0x1]
    %v500 = vmul.f32 %v498, %v499
    %v501 = vld [vmem:[%s3] sm:$0x1]
    %v502 = vmul.f32 %v447, %v500
    %v503 = vsub.f32 %v501, %v502
    %v504 = vperm.slane %v500, 0
    %v505 = vmul.f32 %v410, %v504
    %v506 = vmul.f32 %v411, %v504
    %v507 = vmul.f32 %v412, %v504
    %v508 = vmul.f32 %v413, %v504
    %v509 = vmul.f32 %v414, %v504
    %v510 = vmul.f32 %v415, %v504
    %v511 = vmul.f32 %v416, %v504
    %v512 = vmul.f32 %v417, %v504
    %v513 = vmul.f32 %v418, %v504
    %v514 = vmul.f32 %v419, %v504
    %v515 = vmul.f32 %v420, %v504
    %v516 = vmul.f32 %v421, %v504
    %v517 = vmul.f32 %v422, %v504
    %v518 = vmul.f32 %v423, %v504
    %v519 = vmul.f32 %v424, %v504
    %v520 = vmul.f32 %v425, %v504
    %v522 = vperm.slane %v503, 0
    %v524 = vadd.f32 %v505, %v522
    %v525 = vadd.f32 %v506, %v522
    %v526 = vadd.f32 %v507, %v522
    %v527 = vadd.f32 %v508, %v522
    %v528 = vadd.f32 %v509, %v522
    %v529 = vadd.f32 %v510, %v522
    %v530 = vadd.f32 %v511, %v522
    %v531 = vadd.f32 %v512, %v522
    %v532 = vadd.f32 %v513, %v522
    %v533 = vadd.f32 %v514, %v522
    %v534 = vadd.f32 %v515, %v522
    %v535 = vadd.f32 %v516, %v522
    %v536 = vadd.f32 %v517, %v522
    %v537 = vadd.f32 %v518, %v522
    %v538 = vadd.f32 %v519, %v522
    %v539 = vadd.f32 %v520, %v522
    %v540 = vmax.f32 %v524, 0.0
    %v541 = vmax.f32 %v525, 0.0
    %v542 = vmax.f32 %v526, 0.0
    %v543 = vmax.f32 %v527, 0.0
    %v544 = vmax.f32 %v528, 0.0
    %v545 = vmax.f32 %v529, 0.0
    %v546 = vmax.f32 %v530, 0.0
    %v547 = vmax.f32 %v531, 0.0
    %v548 = vmax.f32 %v532, 0.0
    %v549 = vmax.f32 %v533, 0.0
    %v550 = vmax.f32 %v534, 0.0
    %v551 = vmax.f32 %v535, 0.0
    %v552 = vmax.f32 %v536, 0.0
    %v553 = vmax.f32 %v537, 0.0
    %v554 = vmax.f32 %v538, 0.0
    %v555 = vmax.f32 %v539, 0.0
    %556 = vst [vmem:[%s4] sm:$0xff] %v540
    %557 = vst [vmem:[%s4 + $0x8] sm:$0xff] %v541
    %558 = vst [vmem:[%s4 + $0x10] sm:$0xff] %v542
    %559 = vst [vmem:[%s4 + $0x18] sm:$0xff] %v543
    %560 = vst [vmem:[%s4 + $0x20] sm:$0xff] %v544
    %561 = vst [vmem:[%s4 + $0x28] sm:$0xff] %v545
    %562 = vst [vmem:[%s4 + $0x30] sm:$0xff] %v546
    %563 = vst [vmem:[%s4 + $0x38] sm:$0xff] %v547
    %564 = vst [vmem:[%s4 + $0x40] sm:$0xff] %v548
    %565 = vst [vmem:[%s4 + $0x48] sm:$0xff] %v549
    %566 = vst [vmem:[%s4 + $0x50] sm:$0xff] %v550
    %567 = vst [vmem:[%s4 + $0x58] sm:$0xff] %v551
    %568 = vst [vmem:[%s4 + $0x60] sm:$0xff] %v552
    %569 = vst [vmem:[%s4 + $0x68] sm:$0xff] %v553
    %570 = vst [vmem:[%s4 + $0x70] sm:$0xff] %v554
    %571 = vst [vmem:[%s4 + $0x78] sm:$0xff] %v555
  $region25: #{resnet_small_forward.15} parent=0 // pred_fallthru
    _
  // Predicated region
  $region26: #{resnet_small_forward.15} parent=0 // pred_check
    _
  $region27: #{resnet_small_forward.15} parent=0 // pred_check_branch
    %573 = sbr.rel (0) target = $region29
  $region28: #{resnet_small_forward.15} parent=0 // pred_region
    _
  $region29: #{resnet_small_forward.15} parent=0 // pred_fallthru
    _
  // Predicated region
  $region30: #{resnet_small_forward.15} parent=0 // pred_check
    _
  $region31: #{resnet_small_forward.15} parent=0 // pred_check_branch
    %575 = sbr.rel (0) target = $region33
  $region32: #{resnet_small_forward.15} parent=0 // pred_region
    _
  $region33: #{resnet_small_forward.15} parent=0 // pred_fallthru
    _

// kernel: resnet_small_forward.16
$region0: #{resnet_small_forward.16}
  #allocation0 [shape = 'u32[]', space=smem, size = 0x4, offset = 0x4, fixed_abs, tag = 'smem constant byte address 0x4 - core index']
  #allocation1 [shape = 'u32[72,128]{1,0:T(1,128)}', space=vmem, size = 0x9000, scoped, tag = 'internal scratch']
  %s0 = inlined_call_operand.vmem [shape: f32[32,9,64], index: 0, kind: input, shape index: {}]
  %s1 = inlined_call_operand.vmem [shape: f32[32,64], index: 1, kind: output, shape index: {}]
  %s2 = sld [smem:[#allocation0]]
  $region14: #{resnet_small_forward.16} parent=0
    _
  %s4 = ssub.s32 1, %s2
  %s5 = scalar_select 0, %s4, %s2
  // Predicated region
  $region2: #{resnet_small_forward.16} parent=0 // pred_check
    _
  $region3: #{resnet_small_forward.16} parent=0 // pred_check_branch
    %7 = sbr.rel (0) target = $region5
  $region4: #{resnet_small_forward.16} parent=0 // pred_region
    _
  $region5: #{resnet_small_forward.16} parent=0 // pred_fallthru
    _
  %v8 = vld [vmem:[%s0] sm:$0xff]
  %v9 = vld [vmem:[%s0 + $0x8] sm:$0x1]
  %v10 = vld [vmem:[%s0 + $0x10] sm:$0xff]
  %v11 = vld [vmem:[%s0 + $0x18] sm:$0x1]
  %v12 = vld [vmem:[%s0 + $0x20] sm:$0xff]
  %v13 = vld [vmem:[%s0 + $0x28] sm:$0x1]
  %v14 = vld [vmem:[%s0 + $0x30] sm:$0xff]
  %v15 = vld [vmem:[%s0 + $0x38] sm:$0x1]
  %v16 = vld [vmem:[%s0 + $0x40] sm:$0xff]
  %v17 = vld [vmem:[%s0 + $0x48] sm:$0x1]
  %v18 = vld [vmem:[%s0 + $0x50] sm:$0xff]
  %v19 = vld [vmem:[%s0 + $0x58] sm:$0x1]
  %v20 = vld [vmem:[%s0 + $0x60] sm:$0xff]
  %v21 = vld [vmem:[%s0 + $0x68] sm:$0x1]
  %v22 = vld [vmem:[%s0 + $0x70] sm:$0xff]
  %v23 = vld [vmem:[%s0 + $0x78] sm:$0x1]
  %v24 = vld [vmem:[%s0 + $0x80] sm:$0xff]
  %v25 = vld [vmem:[%s0 + $0x88] sm:$0x1]
  %v26 = vld [vmem:[%s0 + $0x90] sm:$0xff]
  %v27 = vld [vmem:[%s0 + $0x98] sm:$0x1]
  %v28 = vld [vmem:[%s0 + $0xa0] sm:$0xff]
  %v29 = vld [vmem:[%s0 + $0xa8] sm:$0x1]
  %v30 = vld [vmem:[%s0 + $0xb0] sm:$0xff]
  %v31 = vld [vmem:[%s0 + $0xb8] sm:$0x1]
  %v32 = vld [vmem:[%s0 + $0xc0] sm:$0xff]
  %v33 = vld [vmem:[%s0 + $0xc8] sm:$0x1]
  %v34 = vld [vmem:[%s0 + $0xd0] sm:$0xff]
  %v35 = vld [vmem:[%s0 + $0xd8] sm:$0x1]
  %v36 = vld [vmem:[%s0 + $0xe0] sm:$0xff]
  %v37 = vld [vmem:[%s0 + $0xe8] sm:$0x1]
  %v38 = vld [vmem:[%s0 + $0xf0] sm:$0xff]
  %v39 = vld [vmem:[%s0 + $0xf8] sm:$0x1]
  %v40 = vld [vmem:[%s0 + $0x100] sm:$0xff]
  %v41 = vld [vmem:[%s0 + $0x108] sm:$0x1]
  %v42 = vld [vmem:[%s0 + $0x110] sm:$0xff]
  %v43 = vld [vmem:[%s0 + $0x118] sm:$0x1]
  %v44 = vld [vmem:[%s0 + $0x120] sm:$0xff]
  %v45 = vld [vmem:[%s0 + $0x128] sm:$0x1]
  %v46 = vld [vmem:[%s0 + $0x130] sm:$0xff]
  %v47 = vld [vmem:[%s0 + $0x138] sm:$0x1]
  %v48 = vld [vmem:[%s0 + $0x140] sm:$0xff]
  %v49 = vld [vmem:[%s0 + $0x148] sm:$0x1]
  %v50 = vld [vmem:[%s0 + $0x150] sm:$0xff]
  %v51 = vld [vmem:[%s0 + $0x158] sm:$0x1]
  %v52 = vld [vmem:[%s0 + $0x160] sm:$0xff]
  %v53 = vld [vmem:[%s0 + $0x168] sm:$0x1]
  %v54 = vld [vmem:[%s0 + $0x170] sm:$0xff]
  %v55 = vld [vmem:[%s0 + $0x178] sm:$0x1]
  %v56 = vld [vmem:[%s0 + $0x180] sm:$0xff]
  %v57 = vld [vmem:[%s0 + $0x188] sm:$0x1]
  %v58 = vld [vmem:[%s0 + $0x190] sm:$0xff]
  %v59 = vld [vmem:[%s0 + $0x198] sm:$0x1]
  %v60 = vld [vmem:[%s0 + $0x1a0] sm:$0xff]
  %v61 = vld [vmem:[%s0 + $0x1a8] sm:$0x1]
  %v62 = vld [vmem:[%s0 + $0x1b0] sm:$0xff]
  %v63 = vld [vmem:[%s0 + $0x1b8] sm:$0x1]
  %v64 = vld [vmem:[%s0 + $0x1c0] sm:$0xff]
  %v65 = vld [vmem:[%s0 + $0x1c8] sm:$0x1]
  %v66 = vld [vmem:[%s0 + $0x1d0] sm:$0xff]
  %v67 = vld [vmem:[%s0 + $0x1d8] sm:$0x1]
  %v68 = vld [vmem:[%s0 + $0x1e0] sm:$0xff]
  %v69 = vld [vmem:[%s0 + $0x1e8] sm:$0x1]
  %v70 = vld [vmem:[%s0 + $0x1f0] sm:$0xff]
  %v71 = vld [vmem:[%s0 + $0x1f8] sm:$0x1]
  %vm72 = vcmask 523264
  %v73 = vsel %vm72, %v8, -inf
  %vm74 = vcmask 516096
  %v75 = vsel %vm74, %v9, -inf
  %v76 = vmax.f32 %v73, %v75
  %v77 = vrot.slane %v76, 4
  %v78 = vmax.f32 %v76, %v77
  %v79 = vrot.slane %v78, 2
  %v80 = vmax.f32 %v78, %v79
  %v81 = vrot.slane %v80, 1
  %v82 = vmax.f32 %v80, %v81
  %v83 = vsel %vm72, %v10, -inf
  %v84 = vsel %vm74, %v11, -inf
  %v85 = vmax.f32 %v83, %v84
  %v86 = vrot.slane %v85, 4
  %v87 = vmax.f32 %v85, %v86
  %v88 = vrot.slane %v87, 2
  %v89 = vmax.f32 %v87, %v88
  %v90 = vrot.slane %v89, 1
  %v91 = vmax.f32 %v89, %v90
  %v92 = vsel %vm72, %v12, -inf
  %v93 = vsel %vm74, %v13, -inf
  %v94 = vmax.f32 %v92, %v93
  %v95 = vrot.slane %v94, 4
  %v96 = vmax.f32 %v94, %v95
  %v97 = vrot.slane %v96, 2
  %v98 = vmax.f32 %v96, %v97
  %v99 = vrot.slane %v98, 1
  %v100 = vmax.f32 %v98, %v99
  %v101 = vsel %vm72, %v14, -inf
  %v102 = vsel %vm74, %v15, -inf
  %v103 = vmax.f32 %v101, %v102
  %v104 = vrot.slane %v103, 4
  %v105 = vmax.f32 %v103, %v104
  %v106 = vrot.slane %v105, 2
  %v107 = vmax.f32 %v105, %v106
  %v108 = vrot.slane %v107, 1
  %v109 = vmax.f32 %v107, %v108
  %v110 = vsel %vm72, %v16, -inf
  %v111 = vsel %vm74, %v17, -inf
  %v112 = vmax.f32 %v110, %v111
  %v113 = vrot.slane %v112, 4
  %v114 = vmax.f32 %v112, %v113
  %v115 = vrot.slane %v114, 2
  %v116 = vmax.f32 %v114, %v115
  %v117 = vrot.slane %v116, 1
  %v118 = vmax.f32 %v116, %v117
  %v119 = vsel %vm72, %v18, -inf
  %v120 = vsel %vm74, %v19, -inf
  %v121 = vmax.f32 %v119, %v120
  %v122 = vrot.slane %v121, 4
  %v123 = vmax.f32 %v121, %v122
  %v124 = vrot.slane %v123, 2
  %v125 = vmax.f32 %v123, %v124
  %v126 = vrot.slane %v125, 1
  %v127 = vmax.f32 %v125, %v126
  %v128 = vsel %vm72, %v20, -inf
  %v129 = vsel %vm74, %v21, -inf
  %v130 = vmax.f32 %v128, %v129
  %v131 = vrot.slane %v130, 4
  %v132 = vmax.f32 %v130, %v131
  %v133 = vrot.slane %v132, 2
  %v134 = vmax.f32 %v132, %v133
  %v135 = vrot.slane %v134, 1
  %v136 = vmax.f32 %v134, %v135
  %v137 = vsel %vm72, %v22, -inf
  %v138 = vsel %vm74, %v23, -inf
  %v139 = vmax.f32 %v137, %v138
  %v140 = vrot.slane %v139, 4
  %v141 = vmax.f32 %v139, %v140
  %v142 = vrot.slane %v141, 2
  %v143 = vmax.f32 %v141, %v142
  %v144 = vrot.slane %v143, 1
  %v145 = vmax.f32 %v143, %v144
  %v146 = vsel %vm72, %v24, -inf
  %v147 = vsel %vm74, %v25, -inf
  %v148 = vmax.f32 %v146, %v147
  %v149 = vrot.slane %v148, 4
  %v150 = vmax.f32 %v148, %v149
  %v151 = vrot.slane %v150, 2
  %v152 = vmax.f32 %v150, %v151
  %v153 = vrot.slane %v152, 1
  %v154 = vmax.f32 %v152, %v153
  %v155 = vsel %vm72, %v26, -inf
  %v156 = vsel %vm74, %v27, -inf
  %v157 = vmax.f32 %v155, %v156
  %v158 = vrot.slane %v157, 4
  %v159 = vmax.f32 %v157, %v158
  %v160 = vrot.slane %v159, 2
  %v161 = vmax.f32 %v159, %v160
  %v162 = vrot.slane %v161, 1
  %v163 = vmax.f32 %v161, %v162
  %v164 = vsel %vm72, %v28, -inf
  %v165 = vsel %vm74, %v29, -inf
  %v166 = vmax.f32 %v164, %v165
  %v167 = vrot.slane %v166, 4
  %v168 = vmax.f32 %v166, %v167
  %v169 = vrot.slane %v168, 2
  %v170 = vmax.f32 %v168, %v169
  %v171 = vrot.slane %v170, 1
  %v172 = vmax.f32 %v170, %v171
  %v173 = vsel %vm72, %v30, -inf
  %v174 = vsel %vm74, %v31, -inf
  %v175 = vmax.f32 %v173, %v174
  %v176 = vrot.slane %v175, 4
  %v177 = vmax.f32 %v175, %v176
  %v178 = vrot.slane %v177, 2
  %v179 = vmax.f32 %v177, %v178
  %v180 = vrot.slane %v179, 1
  %v181 = vmax.f32 %v179, %v180
  %v182 = vsel %vm72, %v32, -inf
  %v183 = vsel %vm74, %v33, -inf
  %v184 = vmax.f32 %v182, %v183
  %v185 = vrot.slane %v184, 4
  %v186 = vmax.f32 %v184, %v185
  %v187 = vrot.slane %v186, 2
  %v188 = vmax.f32 %v186, %v187
  %v189 = vrot.slane %v188, 1
  %v190 = vmax.f32 %v188, %v189
  %v191 = vsel %vm72, %v34, -inf
  %v192 = vsel %vm74, %v35, -inf
  %v193 = vmax.f32 %v191, %v192
  %v194 = vrot.slane %v193, 4
  %v195 = vmax.f32 %v193, %v194
  %v196 = vrot.slane %v195, 2
  %v197 = vmax.f32 %v195, %v196
  %v198 = vrot.slane %v197, 1
  %v199 = vmax.f32 %v197, %v198
  %v200 = vsel %vm72, %v36, -inf
  %v201 = vsel %vm74, %v37, -inf
  %v202 = vmax.f32 %v200, %v201
  %v203 = vrot.slane %v202, 4
  %v204 = vmax.f32 %v202, %v203
  %v205 = vrot.slane %v204, 2
  %v206 = vmax.f32 %v204, %v205
  %v207 = vrot.slane %v206, 1
  %v208 = vmax.f32 %v206, %v207
  %v209 = vsel %vm72, %v38, -inf
  %v210 = vsel %vm74, %v39, -inf
  %v211 = vmax.f32 %v209, %v210
  %v212 = vrot.slane %v211, 4
  %v213 = vmax.f32 %v211, %v212
  %v214 = vrot.slane %v213, 2
  %v215 = vmax.f32 %v213, %v214
  %v216 = vrot.slane %v215, 1
  %v217 = vmax.f32 %v215, %v216
  %v218 = vsel %vm72, %v40, -inf
  %v219 = vsel %vm74, %v41, -inf
  %v220 = vmax.f32 %v218, %v219
  %v221 = vrot.slane %v220, 4
  %v222 = vmax.f32 %v220, %v221
  %v223 = vrot.slane %v222, 2
  %v224 = vmax.f32 %v222, %v223
  %v225 = vrot.slane %v224, 1
  %v226 = vmax.f32 %v224, %v225
  %v227 = vsel %vm72, %v42, -inf
  %v228 = vsel %vm74, %v43, -inf
  %v229 = vmax.f32 %v227, %v228
  %v230 = vrot.slane %v229, 4
  %v231 = vmax.f32 %v229, %v230
  %v232 = vrot.slane %v231, 2
  %v233 = vmax.f32 %v231, %v232
  %v234 = vrot.slane %v233, 1
  %v235 = vmax.f32 %v233, %v234
  %v236 = vsel %vm72, %v44, -inf
  %v237 = vsel %vm74, %v45, -inf
  %v238 = vmax.f32 %v236, %v237
  %v239 = vrot.slane %v238, 4
  %v240 = vmax.f32 %v238, %v239
  %v241 = vrot.slane %v240, 2
  %v242 = vmax.f32 %v240, %v241
  %v243 = vrot.slane %v242, 1
  %v244 = vmax.f32 %v242, %v243
  %v245 = vsel %vm72, %v46, -inf
  %v246 = vsel %vm74, %v47, -inf
  %v247 = vmax.f32 %v245, %v246
  %v248 = vrot.slane %v247, 4
  %v249 = vmax.f32 %v247, %v248
  %v250 = vrot.slane %v249, 2
  %v251 = vmax.f32 %v249, %v250
  %v252 = vrot.slane %v251, 1
  %v253 = vmax.f32 %v251, %v252
  %v254 = vsel %vm72, %v48, -inf
  %v255 = vsel %vm74, %v49, -inf
  %v256 = vmax.f32 %v254, %v255
  %v257 = vrot.slane %v256, 4
  %v258 = vmax.f32 %v256, %v257
  %v259 = vrot.slane %v258, 2
  %v260 = vmax.f32 %v258, %v259
  %v261 = vrot.slane %v260, 1
  %v262 = vmax.f32 %v260, %v261
  %v263 = vsel %vm72, %v50, -inf
  %v264 = vsel %vm74, %v51, -inf
  %v265 = vmax.f32 %v263, %v264
  %v266 = vrot.slane %v265, 4
  %v267 = vmax.f32 %v265, %v266
  %v268 = vrot.slane %v267, 2
  %v269 = vmax.f32 %v267, %v268
  %v270 = vrot.slane %v269, 1
  %v271 = vmax.f32 %v269, %v270
  %v272 = vsel %vm72, %v52, -inf
  %v273 = vsel %vm74, %v53, -inf
  %v274 = vmax.f32 %v272, %v273
  %v275 = vrot.slane %v274, 4
  %v276 = vmax.f32 %v274, %v275
  %v277 = vrot.slane %v276, 2
  %v278 = vmax.f32 %v276, %v277
  %v279 = vrot.slane %v278, 1
  %v280 = vmax.f32 %v278, %v279
  %v281 = vsel %vm72, %v54, -inf
  %v282 = vsel %vm74, %v55, -inf
  %v283 = vmax.f32 %v281, %v282
  %v284 = vrot.slane %v283, 4
  %v285 = vmax.f32 %v283, %v284
  %v286 = vrot.slane %v285, 2
  %v287 = vmax.f32 %v285, %v286
  %v288 = vrot.slane %v287, 1
  %v289 = vmax.f32 %v287, %v288
  %v290 = vsel %vm72, %v56, -inf
  %v291 = vsel %vm74, %v57, -inf
  %v292 = vmax.f32 %v290, %v291
  %v293 = vrot.slane %v292, 4
  %v294 = vmax.f32 %v292, %v293
  %v295 = vrot.slane %v294, 2
  %v296 = vmax.f32 %v294, %v295
  %v297 = vrot.slane %v296, 1
  %v298 = vmax.f32 %v296, %v297
  %v299 = vsel %vm72, %v58, -inf
  %v300 = vsel %vm74, %v59, -inf
  %v301 = vmax.f32 %v299, %v300
  %v302 = vrot.slane %v301, 4
  %v303 = vmax.f32 %v301, %v302
  %v304 = vrot.slane %v303, 2
  %v305 = vmax.f32 %v303, %v304
  %v306 = vrot.slane %v305, 1
  %v307 = vmax.f32 %v305, %v306
  %v308 = vsel %vm72, %v60, -inf
  %v309 = vsel %vm74, %v61, -inf
  %v310 = vmax.f32 %v308, %v309
  %v311 = vrot.slane %v310, 4
  %v312 = vmax.f32 %v310, %v311
  %v313 = vrot.slane %v312, 2
  %v314 = vmax.f32 %v312, %v313
  %v315 = vrot.slane %v314, 1
  %v316 = vmax.f32 %v314, %v315
  %v317 = vsel %vm72, %v62, -inf
  %v318 = vsel %vm74, %v63, -inf
  %v319 = vmax.f32 %v317, %v318
  %v320 = vrot.slane %v319, 4
  %v321 = vmax.f32 %v319, %v320
  %v322 = vrot.slane %v321, 2
  %v323 = vmax.f32 %v321, %v322
  %v324 = vrot.slane %v323, 1
  %v325 = vmax.f32 %v323, %v324
  %v326 = vsel %vm72, %v64, -inf
  %v327 = vsel %vm74, %v65, -inf
  %v328 = vmax.f32 %v326, %v327
  %v329 = vrot.slane %v328, 4
  %v330 = vmax.f32 %v328, %v329
  %v331 = vrot.slane %v330, 2
  %v332 = vmax.f32 %v330, %v331
  %v333 = vrot.slane %v332, 1
  %v334 = vmax.f32 %v332, %v333
  %v335 = vsel %vm72, %v66, -inf
  %v336 = vsel %vm74, %v67, -inf
  %v337 = vmax.f32 %v335, %v336
  %v338 = vrot.slane %v337, 4
  %v339 = vmax.f32 %v337, %v338
  %v340 = vrot.slane %v339, 2
  %v341 = vmax.f32 %v339, %v340
  %v342 = vrot.slane %v341, 1
  %v343 = vmax.f32 %v341, %v342
  %v344 = vsel %vm72, %v68, -inf
  %v345 = vsel %vm74, %v69, -inf
  %v346 = vmax.f32 %v344, %v345
  %v347 = vrot.slane %v346, 4
  %v348 = vmax.f32 %v346, %v347
  %v349 = vrot.slane %v348, 2
  %v350 = vmax.f32 %v348, %v349
  %v351 = vrot.slane %v350, 1
  %v352 = vmax.f32 %v350, %v351
  %v353 = vsel %vm72, %v70, -inf
  %v354 = vsel %vm74, %v71, -inf
  %v355 = vmax.f32 %v353, %v354
  %v356 = vrot.slane %v355, 4
  %v357 = vmax.f32 %v355, %v356
  %v358 = vrot.slane %v357, 2
  %v359 = vmax.f32 %v357, %v358
  %v360 = vrot.slane %v359, 1
  %v361 = vmax.f32 %v359, %v360
  %vm394 = vcmask 1041409
  %v395 = vsel %vm394, %v91, %v82
  %vm396 = vcmask 1042434
  %v397 = vsel %vm396, %v100, %v395
  %vm398 = vcmask 1043459
  %v399 = vsel %vm398, %v109, %v397
  %vm400 = vcmask 1044484
  %v401 = vsel %vm400, %v118, %v399
  %vm402 = vcmask 1045509
  %v403 = vsel %vm402, %v127, %v401
  %vm404 = vcmask 1046534
  %v405 = vsel %vm404, %v136, %v403
  %vm406 = vcmask 1047559
  %v407 = vsel %vm406, %v145, %v405
  %v408 = vsel %vm394, %v163, %v154
  %v409 = vsel %vm396, %v172, %v408
  %v410 = vsel %vm398, %v181, %v409
  %v411 = vsel %vm400, %v190, %v410
  %v412 = vsel %vm402, %v199, %v411
  %v413 = vsel %vm404, %v208, %v412
  %v414 = vsel %vm406, %v217, %v413
  %v415 = vsel %vm394, %v235, %v226
  %v416 = vsel %vm396, %v244, %v415
  %v417 = vsel %vm398, %v253, %v416
  %v418 = vsel %vm400, %v262, %v417
  %v419 = vsel %vm402, %v271, %v418
  %v420 = vsel %vm404, %v280, %v419
  %v421 = vsel %vm406, %v289, %v420
  %v422 = vsel %vm394, %v307, %v298
  %v423 = vsel %vm396, %v316, %v422
  %v424 = vsel %vm398, %v325, %v423
  %v425 = vsel %vm400, %v334, %v424
  %v426 = vsel %vm402, %v343, %v425
  %v427 = vsel %vm404, %v352, %v426
  %v428 = vsel %vm406, %v361, %v427
  %433 = vst.msk [vmem:[%s1] sm:$0xff] %vm72, %v407
  %434 = vst.msk [vmem:[%s1 + $0x8] sm:$0xff] %vm72, %v414
  %435 = vst.msk [vmem:[%s1 + $0x10] sm:$0xff] %vm72, %v421
  %436 = vst.msk [vmem:[%s1 + $0x18] sm:$0xff] %vm72, %v428
  // Predicated region
  $region6: #{resnet_small_forward.16} parent=0 // pred_check
    _
  $region7: #{resnet_small_forward.16} parent=0 // pred_check_branch
    %438 = sbr.rel (0) target = $region9
  $region8: #{resnet_small_forward.16} parent=0 // pred_region
    _
  $region9: #{resnet_small_forward.16} parent=0 // pred_fallthru
    _
  // Predicated region
  $region10: #{resnet_small_forward.16} parent=0 // pred_check
    _
  $region11: #{resnet_small_forward.16} parent=0 // pred_check_branch
    %440 = sbr.rel (0) target = $region13
  $region12: #{resnet_small_forward.16} parent=0 // pred_region
    _
  $region13: #{resnet_small_forward.16} parent=0 // pred_fallthru
    _

// kernel: resnet_small_forward.17
$region0: #{resnet_small_forward.17}
  #allocation0 [shape = 'u32[]', space=smem, size = 0x4, offset = 0x4, fixed_abs, tag = 'smem constant byte address 0x4 - core index']
  #allocation1 [shape = 'u32[72,128]{1,0:T(1,128)}', space=vmem, size = 0x9000, scoped, tag = 'internal scratch']
  #allocation2 [shape = 'f32[32,128]{1,0:T(8,128)}', space=vmem, size = 0x4000, scoped, tag = 'scratch operand']
  %s0 = inlined_call_operand.vmem [shape: bf16[32,640], index: 0, kind: input, shape index: {}]
  %s1 = inlined_call_operand.vmem [shape: bf16[640,128], index: 1, kind: input, shape index: {}]
  %s2 = inlined_call_operand.vmem [shape: f32[1,128], index: 2, kind: input, shape index: {}]
  %s3 = inlined_call_operand.vmem [shape: f32[1,128], index: 3, kind: input, shape index: {}]
  %s4 = inlined_call_operand.vmem [shape: f32[32,128], index: 4, kind: output, shape index: {}]
  %s5 = sld [smem:[#allocation0]]
  $region98: #{resnet_small_forward.17} parent=0
    _
  %s7 = ssub.s32 1, %s5
  %s8 = scalar_select 0, %s7, %s5
  $region1: #{resnet_small_forward.17} parent=0
    #allocation3 [shape = 'u8[16384]{0}', space=vmem, size = 0x4000, scoped, tag = 'input window, operand 0']
    loop: start=0, step=1, limit=7
    $region2: #{resnet_small_forward.17} parent=1 // loop_pre_header
      _
    $region3: #{resnet_small_forward.17} parent=1 // loop_header
      %s10 = sphi 0, %s14
      %p11 = scmp.ge.s32.totalorder %s10, 7
      %s17 = sphi 0, %s29
      %s18 = sphi 0, %s25
      %s19 = sphi 0, %s17
      %s20 = sphi 0, %s18
      %s21 = sphi 0, %s19
      %s22 = sphi 0, %s20
      %s32 = sphi 0, %s34
      %s35 = sphi 0, %s32
      %s36 = sphi 0, %s35
      %s52 = sphi 0, %s36
      %s60 = sphi 0, %s62
      %s63 = sphi 0, %s60
      %s64 = sphi 0, %s63
      %s80 = sphi 0, %s64
      %s86 = sphi 0, %s88
      %s89 = sphi 0, %s86
      %s90 = sphi 0, %s89
      %s106 = sphi 0, %s90
      %s112 = sphi 0, %s114
      %s115 = sphi 0, %s112
      %s116 = sphi 0, %s115
      %s132 = sphi 0, %s116
      %s138 = sphi 0, %s140
      %s141 = sphi 0, %s138
      %s142 = sphi 0, %s141
      %s158 = sphi 0, %s142
    $region4: #{resnet_small_forward.17} parent=1 // loop_header_branch
      %13 = sbr.rel (%p11) target = $region8
    $region5: #{resnet_small_forward.17} parent=1 // loop_body
      %s15 = ssub.s32 %s10, 1
      %s16 = ssub.s32 %s10, 2
      %s23 = sadd.s32 1, %s18
      %p24 = scmp.ge.s32.totalorder %s23, 5
      %s25 = scalar_select %p24, 0, %s23
      %s26 = sadd.s32 1, %s17
      %s27 = scalar_select %p24, %s26, %s17
      %p28 = scmp.ge.s32.totalorder %s27, 1
      %s29 = scalar_select %p28, 0, %s27
      %s30 = ssub.s32 %s18, %s25
      %p31 = scmp.eq.s32.totalorder %s30, 0
      %s33 = sadd.s32 %s32, 1
      %s34 = scalar_select %p31, %s32, %s33
      %p37 = pneg %p31
      %p38 = scmp.eq.s32.totalorder %s10, 4
      %p39 = por %p37, %p38
      %p40 = scmp.ne.s32.totalorder %s32, %s35
      %p41 = scmp.eq.s32.totalorder %s10, 0
      %p42 = por %p40, %p41
      %p43 = scmp.ne.s32.totalorder %s32, %s35
      %p44 = scmp.eq.s32.totalorder %s15, 4
      %p45 = por %p43, %p44
      %p46 = scmp.ne.s32.totalorder %s35, %s36
      %p47 = scmp.eq.s32.totalorder %s15, 0
      %p48 = por %p46, %p47
      %p49 = scmp.ne.s32.totalorder %s35, %s36
      %p50 = scmp.eq.s32.totalorder %s16, 4
      %p51 = por %p49, %p50
      %p53 = scmp.ne.s32.totalorder %s36, %s52
      %p54 = scmp.eq.s32.totalorder %s16, 0
      %p55 = por %p53, %p54
      %s56 = ssub.s32 %s18, %s25
      %s57 = ssub.s32 %s17, %s29
      %s58 = sor.u32 %s56, %s57
      %p59 = scmp.eq.s32.totalorder %s58, 0
      %s61 = sadd.s32 %s60, 1
      %s62 = scalar_select %p59, %s60, %s61
      %p65 = pneg %p59
      %p66 = scmp.eq.s32.totalorder %s10, 4
      %p67 = por %p65, %p66
      %p68 = scmp.ne.s32.totalorder %s60, %s63
      %p69 = scmp.eq.s32.totalorder %s10, 0
      %p70 = por %p68, %p69
      %p71 = scmp.ne.s32.totalorder %s60, %s63
      %p72 = scmp.eq.s32.totalorder %s15, 4
      %p73 = por %p71, %p72
      %p74 = scmp.ne.s32.totalorder %s63, %s64
      %p75 = scmp.eq.s32.totalorder %s15, 0
      %p76 = por %p74, %p75
      %p77 = scmp.ne.s32.totalorder %s63, %s64
      %p78 = scmp.eq.s32.totalorder %s16, 4
      %p79 = por %p77, %p78
      %p81 = scmp.ne.s32.totalorder %s64, %s80
      %p82 = scmp.eq.s32.totalorder %s16, 0
      %p83 = por %p81, %p82
      %s84 = ssub.s32 %s17, %s29
      %p85 = scmp.eq.s32.totalorder %s84, 0
      %s87 = sadd.s32 %s86, 1
      %s88 = scalar_select %p85, %s86, %s87
      %p91 = pneg %p85
      %p92 = scmp.eq.s32.totalorder %s10, 4
      %p93 = por %p91, %p92
      %p94 = scmp.ne.s32.totalorder %s86, %s89
      %p95 = scmp.eq.s32.totalorder %s10, 0
      %p96 = por %p94, %p95
      %p97 = scmp.ne.s32.totalorder %s86, %s89
      %p98 = scmp.eq.s32.totalorder %s15, 4
      %p99 = por %p97, %p98
      %p100 = scmp.ne.s32.totalorder %s89, %s90
      %p101 = scmp.eq.s32.totalorder %s15, 0
      %p102 = por %p100, %p101
      %p103 = scmp.ne.s32.totalorder %s89, %s90
      %p104 = scmp.eq.s32.totalorder %s16, 4
      %p105 = por %p103, %p104
      %p107 = scmp.ne.s32.totalorder %s90, %s106
      %p108 = scmp.eq.s32.totalorder %s16, 0
      %p109 = por %p107, %p108
      %s110 = ssub.s32 %s17, %s29
      %p111 = scmp.eq.s32.totalorder %s110, 0
      %s113 = sadd.s32 %s112, 1
      %s114 = scalar_select %p111, %s112, %s113
      %p117 = pneg %p111
      %p118 = scmp.eq.s32.totalorder %s10, 4
      %p119 = por %p117, %p118
      %p120 = scmp.ne.s32.totalorder %s112, %s115
      %p121 = scmp.eq.s32.totalorder %s10, 0
      %p122 = por %p120, %p121
      %p123 = scmp.ne.s32.totalorder %s112, %s115
      %p124 = scmp.eq.s32.totalorder %s15, 4
      %p125 = por %p123, %p124
      %p126 = scmp.ne.s32.totalorder %s115, %s116
      %p127 = scmp.eq.s32.totalorder %s15, 0
      %p128 = por %p126, %p127
      %p129 = scmp.ne.s32.totalorder %s115, %s116
      %p130 = scmp.eq.s32.totalorder %s16, 4
      %p131 = por %p129, %p130
      %p133 = scmp.ne.s32.totalorder %s116, %s132
      %p134 = scmp.eq.s32.totalorder %s16, 0
      %p135 = por %p133, %p134
      %s136 = ssub.s32 %s17, %s29
      %p137 = scmp.eq.s32.totalorder %s136, 0
      %s139 = sadd.s32 %s138, 1
      %s140 = scalar_select %p137, %s138, %s139
      %p143 = pneg %p137
      %p144 = scmp.eq.s32.totalorder %s10, 4
      %p145 = por %p143, %p144
      %p146 = scmp.ne.s32.totalorder %s138, %s141
      %p147 = scmp.eq.s32.totalorder %s10, 0
      %p148 = por %p146, %p147
      %p149 = scmp.ne.s32.totalorder %s138, %s141
      %p150 = scmp.eq.s32.totalorder %s15, 4
      %p151 = por %p149, %p150
      %p152 = scmp.ne.s32.totalorder %s141, %s142
      %p153 = scmp.eq.s32.totalorder %s15, 0
      %p154 = por %p152, %p153
      %p155 = scmp.ne.s32.totalorder %s141, %s142
      %p156 = scmp.eq.s32.totalorder %s16, 4
      %p157 = por %p155, %p156
      %p159 = scmp.ne.s32.totalorder %s142, %s158
      %p160 = scmp.eq.s32.totalorder %s16, 0
      %p161 = por %p159, %p160
      %p162 = scmp.le.s32.totalorder 1, %s10
      %p163 = scmp.lt.s32.totalorder %s10, 6
      %p164 = pnand %p162, %p163
      %p165 = pneg %p164
      // Predicated region
      $region9: #{resnet_small_forward.17} parent=5 // pred_check
        _
      $region10: #{resnet_small_forward.17} parent=5 // pred_check_branch
        %167 = sbr.rel (%p164) target = $region12
      $region11: #{resnet_small_forward.17} parent=5 // pred_region
        %s168 = ssub.s32 %s10, 1
        // Predicated region
        $region13: #{resnet_small_forward.17} parent=11 // pred_check
          %p169 = pneg %p102
        $region14: #{resnet_small_forward.17} parent=11 // pred_check_branch
          %171 = sbr.rel (%p169) target = $region16
        $region15: #{resnet_small_forward.17} parent=11 // pred_region
          %p172 = scmp.lt.s32.totalorder %s19, 0
          %s173 = scalar_select %p172, %s19, 0
          %s174 = scalar_lea.vmem %s2, %s173
        $region16: #{resnet_small_forward.17} parent=11 // pred_fallthru
          _
        // Predicated region
        $region17: #{resnet_small_forward.17} parent=11 // pred_check
          %p175 = pneg %p128
        $region18: #{resnet_small_forward.17} parent=11 // pred_check_branch
          %177 = sbr.rel (%p175) target = $region20
        $region19: #{resnet_small_forward.17} parent=11 // pred_region
          %p178 = scmp.lt.s32.totalorder %s19, 0
          %s179 = scalar_select %p178, %s19, 0
          %s180 = scalar_lea.vmem %s3, %s179
        $region20: #{resnet_small_forward.17} parent=11 // pred_fallthru
          _
      $region12: #{resnet_small_forward.17} parent=5 // pred_fallthru
        _
      %p181 = scmp.lt.s32.totalorder %s10, 5
      // Predicated region
      $region21: #{resnet_small_forward.17} parent=5 // pred_check
        %p182 = pneg %p181
      $region22: #{resnet_small_forward.17} parent=5 // pred_check_branch
        %184 = sbr.rel (%p182) target = $region24
      $region23: #{resnet_small_forward.17} parent=5 // pred_region
        // Predicated region
        $region25: #{resnet_small_forward.17} parent=23 // pred_check
          %p185 = pneg %p42
        $region26: #{resnet_small_forward.17} parent=23 // pred_check_branch
          %187 = sbr.rel (%p185) target = $region28
        $region27: #{resnet_small_forward.17} parent=23 // pred_region
          %s188 = sand.u32 %s32, 1
          %s189 = sand.u32 %s32, 1
          %s190 = smul.addr %s189, 16
          %s191 = scalar_lea.vmem [#allocation3], %s190
          %s192 = smul.addr %s18, 4
          %s193 = scalar_lea.vmem %s0, %s192
          // Predicated region
          $region29: #{resnet_small_forward.17} parent=27 // pred_check
            _
          $region30: #{resnet_small_forward.17} parent=27 // pred_check_branch
            %195 = sbr.rel (0) target = $region32
          $region31: #{resnet_small_forward.17} parent=27 // pred_region
            // Predicated region
            $region33: #{resnet_small_forward.17} parent=31 // pred_check
              _
            $region34: #{resnet_small_forward.17} parent=31 // pred_check_branch
              %197 = sbr.rel target = $region36
            $region35: #{resnet_small_forward.17} parent=31 // pred_region
              // Predicated region
              $region48: #{resnet_small_forward.17} parent=35 // pred_check
                _
              $region49: #{resnet_small_forward.17} parent=35 // pred_check_branch
                %219 = sbr.rel (0) target = $region51
              $region50: #{resnet_small_forward.17} parent=35 // pred_region
                loop: start=0, step=1, limit=1
                $region52: #{resnet_small_forward.17} parent=50 // loop_pre_header
                  _
                $region53: #{resnet_small_forward.17} parent=50 // loop_header
                  %s221 = sphi 0, %s225
                  %p222 = scmp.ge.s32.totalorder %s221, 1
                  %s226 = sphi %s193, %s193
                  %s227 = sphi %s191, %s191
                $region54: #{resnet_small_forward.17} parent=50 // loop_header_branch
                  %224 = sbr.rel (%p222) target = $region58
                $region55: #{resnet_small_forward.17} parent=50 // loop_body
                  _
                $region56: #{resnet_small_forward.17} parent=50 // loop_footer
                  %s225 = sadd.s32 1, %s221
                $region57: #{resnet_small_forward.17} parent=50 // loop_footer_branch
                  %220 = sbr.rel target = $region53
                $region58: #{resnet_small_forward.17} parent=50 // loop_exit
                  _
                %s229 = ssub.s32 16, 1
                loop: start=0, step=1, limit=1
                $region59: #{resnet_small_forward.17} parent=50 // loop_pre_header
                  _
                $region60: #{resnet_small_forward.17} parent=50 // loop_header
                  %s231 = sphi 0, %s235
                  %p232 = scmp.ge.s32.totalorder %s231, 1
                  %s236 = sphi %s193, %s193
                  %s237 = sphi %s191, %s191
                $region61: #{resnet_small_forward.17} parent=50 // loop_header_branch
                  %234 = sbr.rel (%p232) target = $region65
                $region62: #{resnet_small_forward.17} parent=50 // loop_body
                  %v238 = vld [vmem:[%s236] sm:%s229]
                  %239 = vst [vmem:[%s237] sm:%s229] %v238
                  %v240 = vld [vmem:[%s236 + $0x14] sm:%s229]
                  %241 = vst [vmem:[%s237 + $0x4] sm:%s229] %v240
                  %v242 = vld [vmem:[%s236 + $0x28] sm:%s229]
                  %243 = vst [vmem:[%s237 + $0x8] sm:%s229] %v242
                  %v244 = vld [vmem:[%s236 + $0x3c] sm:%s229]
                  %245 = vst [vmem:[%s237 + $0xc] sm:%s229] %v244
                $region63: #{resnet_small_forward.17} parent=50 // loop_footer
                  %s235 = sadd.s32 1, %s231
                $region64: #{resnet_small_forward.17} parent=50 // loop_footer_branch
                  %230 = sbr.rel target = $region60
                $region65: #{resnet_small_forward.17} parent=50 // loop_exit
                  _
              $region51: #{resnet_small_forward.17} parent=35 // pred_fallthru
                _
            $region36: #{resnet_small_forward.17} parent=31 // pred_fallthru
              _
            // Predicated region
            $region37: #{resnet_small_forward.17} parent=31 // pred_check
              _
            $region38: #{resnet_small_forward.17} parent=31 // pred_check_branch
              %199 = sbr.rel (0) target = $region40
            $region39: #{resnet_small_forward.17} parent=31 // pred_region
              %s201 = ssub.s32 16, 1
              loop: start=0, step=1, limit=1
              $region41: #{resnet_small_forward.17} parent=39 // loop_pre_header
                _
              $region42: #{resnet_small_forward.17} parent=39 // loop_header
                %s203 = sphi 0, %s207
                %p204 = scmp.ge.s32.totalorder %s203, 1
                %s208 = sphi %s193, %s193
                %s209 = sphi %s191, %s191
              $region43: #{resnet_small_forward.17} parent=39 // loop_header_branch
                %206 = sbr.rel (%p204) target = $region47
              $region44: #{resnet_small_forward.17} parent=39 // loop_body
                %v210 = vld [vmem:[%s208] sm:%s201]
                %211 = vst [vmem:[%s209] sm:%s201] %v210
                %v212 = vld [vmem:[%s208 + $0x14] sm:%s201]
                %213 = vst [vmem:[%s209 + $0x4] sm:%s201] %v212
                %v214 = vld [vmem:[%s208 + $0x28] sm:%s201]
                %215 = vst [vmem:[%s209 + $0x8] sm:%s201] %v214
                %v216 = vld [vmem:[%s208 + $0x3c] sm:%s201]
                %217 = vst [vmem:[%s209 + $0xc] sm:%s201] %v216
              $region45: #{resnet_small_forward.17} parent=39 // loop_footer
                %s207 = sadd.s32 1, %s203
              $region46: #{resnet_small_forward.17} parent=39 // loop_footer_branch
                %202 = sbr.rel target = $region42
              $region47: #{resnet_small_forward.17} parent=39 // loop_exit
                _
            $region40: #{resnet_small_forward.17} parent=31 // pred_fallthru
              _
          $region32: #{resnet_small_forward.17} parent=27 // pred_fallthru
            _
          %246 = vnop
        $region28: #{resnet_small_forward.17} parent=23 // pred_fallthru
          _
        // Predicated region
        $region66: #{resnet_small_forward.17} parent=23 // pred_check
          %p247 = pneg %p70
        $region67: #{resnet_small_forward.17} parent=23 // pred_check_branch
          %249 = sbr.rel (%p247) target = $region69
        $region68: #{resnet_small_forward.17} parent=23 // pred_region
          %s250 = smul.u32 16, %s18
          %p251 = scmp.lt.s32.totalorder %s250, 79
          %s252 = scalar_select %p251, %s250, 79
          %p253 = scmp.lt.s32.totalorder %s17, 0
          %s254 = scalar_select %p253, %s17, 0
          %s255 = sadd.s32 %s254, %s252
          %s256 = smul.addr %s255, 4
          %s257 = scalar_lea.vmem %s1, %s256
          %s258 = smul.u32 16, %s18
        $region69: #{resnet_small_forward.17} parent=23 // pred_fallthru
          _
      $region24: #{resnet_small_forward.17} parent=5 // pred_fallthru
        _
      %p259 = scmp.le.s32.totalorder 1, %s10
      %p260 = scmp.lt.s32.totalorder %s10, 6
      %p261 = pnand %p259, %p260
      %p262 = pneg %p261
      // Predicated region
      $region70: #{resnet_small_forward.17} parent=5 // pred_check
        _
      $region71: #{resnet_small_forward.17} parent=5 // pred_check_branch
        %264 = sbr.rel (%p261) target = $region73
      $region72: #{resnet_small_forward.17} parent=5 // pred_region
        %s265 = ssub.s32 %s10, 1
        %s266 = sand.u32 %s35, 1
        %s267 = sand.u32 %s35, 1
        %s268 = smul.addr %s267, 16
        %s269 = scalar_lea.vmem [#allocation3], %s268
        // Predicated region
        $region74: #{resnet_small_forward.17} parent=72 // pred_check
          %p270 = pneg %p48
        $region75: #{resnet_small_forward.17} parent=72 // pred_check_branch
          %272 = sbr.rel (%p270) target = $region77
        $region76: #{resnet_small_forward.17} parent=72 // pred_region
          _
        $region77: #{resnet_small_forward.17} parent=72 // pred_fallthru
          _
        %s273 = sand.u32 %s35, 1
        %s274 = sand.u32 %s35, 1
        %s275 = smul.addr %s274, 16
        %s276 = scalar_lea.vmem [#allocation3], %s275
        %p277 = pneg %p48
        %p278 = pneg %p45
        %s279 = smul.u32 16, %s20
        %p280 = scmp.lt.s32.totalorder %s279, 79
        %s281 = scalar_select %p280, %s279, 79
        %p282 = scmp.lt.s32.totalorder %s19, 0
        %s283 = scalar_select %p282, %s19, 0
        %s284 = sadd.s32 %s283, %s281
        %s285 = smul.addr %s284, 4
        %s286 = scalar_lea.vmem %s1, %s285
        %p287 = pneg %p76
        %p288 = pneg %p73
        %p289 = scmp.lt.s32.totalorder %s19, 0
        %s290 = scalar_select %p289, %s19, 0
        %s291 = scalar_lea.vmem %s2, %s290
        %p292 = pneg %p102
        %p293 = pneg %p99
        %p294 = scmp.lt.s32.totalorder %s19, 0
        %s295 = scalar_select %p294, %s19, 0
        %s296 = scalar_lea.vmem %s3, %s295
        %p297 = pneg %p128
        %p298 = pneg %p125
        %p299 = pneg %p154
        %p300 = pneg %p151
        %p301 = scmp.lt.s32.totalorder %s19, 0
        %s302 = scalar_select %p301, %s19, 0
        %s303 = smul.addr %s302, 8
        %s304 = scalar_lea.vmem %s4, %s303
        %s305 = smul.u32 16, %s20
        %p306 = scmp.lt.s32.totalorder %s305, 79
        %s307 = scalar_select %p306, %s305, 79
        %p308 = scmp.lt.s32.totalorder %s19, 0
        %s309 = scalar_select %p308, %s19, 0
        %s310 = sadd.s32 %s309, %s307
        %s311 = smul.addr %s310, 4
        %s312 = scalar_lea.vmem %s1, %s311
        %s313 = smul.u32 16, %s20
        %p314 = scmp.lt.s32.totalorder %s19, 0
        %s315 = scalar_select %p314, %s19, 0
        %s316 = scalar_lea.vmem %s2, %s315
        %p317 = scmp.lt.s32.totalorder %s19, 0
        %s318 = scalar_select %p317, %s19, 0
        %s319 = scalar_lea.vmem %s3, %s318
        %p320 = scmp.lt.s32.totalorder %s19, 0
        %s321 = scalar_select %p320, %s19, 0
        %s322 = smul.addr %s321, 8
        %s323 = scalar_lea.vmem %s4, %s322
        %p324 = scmp.eq.s32.totalorder %s20, 0
        // Predicated region
        $region78: #{resnet_small_forward.17} parent=72 // pred_check
          %p325 = pneg %p324
        $region79: #{resnet_small_forward.17} parent=72 // pred_check_branch
          %327 = sbr.rel (%p325) target = $region81
        $region80: #{resnet_small_forward.17} parent=72 // pred_region
          %328 = vst [vmem:[#allocation2] sm:$0xff] 0.0
          %329 = vst [vmem:[#allocation2 + $0x8] sm:$0xff] 0.0
          %330 = vst [vmem:[#allocation2 + $0x10] sm:$0xff] 0.0
          %331 = vst [vmem:[#allocation2 + $0x18] sm:$0xff] 0.0
        $region81: #{resnet_small_forward.17} parent=72 // pred_fallthru
          _
        %v332 = vld [vmem:[#allocation2] sm:$0xff]
        %v333 = vld [vmem:[#allocation2 + $0x8] sm:$0xff]
        %v334 = vld [vmem:[#allocation2 + $0x10] sm:$0xff]
        %v335 = vld [vmem:[#allocation2 + $0x18] sm:$0xff]
        %v336 = vld [vmem:[%s269] sm:$0xf]
        %v337 = vld [vmem:[%s269 + $0x4] sm:$0xf]
        %v338 = vld [vmem:[%s269 + $0x8] sm:$0xf]
        %v339 = vld [vmem:[%s269 + $0xc] sm:$0xf]
        %v340 = vld [vmem:[%s312] sm:$0xf]
        %v341 = vld [vmem:[%s312 + $0x4] sm:$0xf]
        %v342 = vld [vmem:[%s312 + $0x8] sm:$0xf]
        %v343 = vld [vmem:[%s312 + $0xc] sm:$0xf]
        %v344 = vld [vmem:[%s312 + $0x10] sm:$0xf]
        %v345 = vld [vmem:[%s312 + $0x14] sm:$0xf]
        %v346 = vld [vmem:[%s312 + $0x18] sm:$0xf]
        %v347 = vld [vmem:[%s312 + $0x1c] sm:$0xf]
        %v348 = vld [vmem:[%s312 + $0x20] sm:$0xf]
        %v349 = vld [vmem:[%s312 + $0x24] sm:$0xf]
        %v350 = vld [vmem:[%s312 + $0x28] sm:$0xf]
        %v351 = vld [vmem:[%s312 + $0x2c] sm:$0xf]
        %v352 = vld [vmem:[%s312 + $0x30] sm:$0xf]
        %v353 = vld [vmem:[%s312 + $0x34] sm:$0xf]
        %v354 = vld [vmem:[%s312 + $0x38] sm:$0xf]
        %v355 = vld [vmem:[%s312 + $0x3c] sm:$0xf]
        %v360 = vunpack.c.l.b16 %v336
        %v361 = vunpack.c.l.b16 %v337
        %v362 = vunpack.c.l.b16 %v338
        %v363 = vunpack.c.l.b16 %v339
        %v364 = vpack.c.b16 %v361, %v360
        %v365 = vpack.c.b16 %v363, %v362
        %v384 = vunpack.c.l.b16 %v340
        %v385 = vunpack.c.l.b16 %v341
        %v386 = vunpack.c.l.b16 %v342
        %v387 = vunpack.c.l.b16 %v343
        %v388 = vunpack.c.l.b16 %v344
        %v389 = vunpack.c.l.b16 %v345
        %v390 = vunpack.c.l.b16 %v346
        %v391 = vunpack.c.l.b16 %v347
        %v392 = vunpack.c.l.b16 %v348
        %v393 = vunpack.c.l.b16 %v349
        %v394 = vunpack.c.l.b16 %v350
        %v395 = vunpack.c.l.b16 %v351
        %v396 = vunpack.c.l.b16 %v352
        %v397 = vunpack.c.l.b16 %v353
        %v398 = vunpack.c.l.b16 %v354
        %v399 = vunpack.c.l.b16 %v355
        %v400 = vpack.c.b16 %v385, %v384
        %v401 = vpack.c.b16 %v387, %v386
        %v402 = vpack.c.b16 %v389, %v388
        %v403 = vpack.c.b16 %v391, %v390
        %v404 = vpack.c.b16 %v393, %v392
        %v405 = vpack.c.b16 %v395, %v394
        %v406 = vpack.c.b16 %v397, %v396
        %v407 = vpack.c.b16 %v399, %v398
        %416 = vmatpush.bf16.msra.mxu0 %v407
        %417 = vmatpush.bf16.msra.mxu0 %v406
        %418 = vmatpush.bf16.msra.mxu0 %v405
        %419 = vmatpush.bf16.msra.mxu0 %v404
        %420 = vmatpush.bf16.msra.mxu0 %v403
        %421 = vmatpush.bf16.msra.mxu0 %v402
        %422 = vmatpush.bf16.msra.mxu0 %v401
        %423 = vmatpush.bf16.msra.mxu0 %v400
        %424 = vmatmul.bf16.gmra.mxu0 %v364
        %v425 = vpop.f32.mrf.mxu0
        %v426 = vadd.f32 0.0, %v425
        %v427 = vpop.f32.mrf.mxu0
        %v428 = vadd.f32 0.0, %v427
        %429 = vmatmul.bf16.gmra.mxu0 %v365
        %v430 = vpop.f32.mrf.mxu0
        %v431 = vadd.f32 0.0, %v430
        %v432 = vpop.f32.mrf.mxu0
        %v433 = vadd.f32 0.0, %v432
        %434 = vdwg.mxu0
        %v435 = vadd.f32 %v332, %v426
        %v436 = vadd.f32 %v333, %v428
        %v437 = vadd.f32 %v334, %v431
        %v438 = vadd.f32 %v335, %v433
        %439 = vst [vmem:[#allocation2] sm:$0xff] %v435
        %440 = vst [vmem:[#allocation2 + $0x8] sm:$0xff] %v436
        %441 = vst [vmem:[#allocation2 + $0x10] sm:$0xff] %v437
        %442 = vst [vmem:[#allocation2 + $0x18] sm:$0xff] %v438
        %p443 = scmp.eq.s32.totalorder %s20, 4
        // Predicated region
        $region82: #{resnet_small_forward.17} parent=72 // pred_check
          %p444 = pneg %p443
        $region83: #{resnet_small_forward.17} parent=72 // pred_check_branch
          %446 = sbr.rel (%p444) target = $region85
        $region84: #{resnet_small_forward.17} parent=72 // pred_region
          %v447 = vld [vmem:[#allocation2] sm:$0xff]
          %v448 = vld [vmem:[#allocation2 + $0x8] sm:$0xff]
          %v449 = vld [vmem:[#allocation2 + $0x10] sm:$0xff]
          %v450 = vld [vmem:[#allocation2 + $0x18] sm:$0xff]
          %v451 = vadd.f32 %v447, %v448
          %v452 = vadd.f32 %v451, %v449
          %v453 = vadd.f32 %v452, %v450
          %v454 = vrot.slane %v453, 4
          %v455 = vadd.f32 %v453, %v454
          %v456 = vrot.slane %v455, 2
          %v457 = vadd.f32 %v455, %v456
          %v458 = vrot.slane %v457, 1
          %v459 = vadd.f32 %v457, %v458
          %v460 = vmul.f32 %v459, 0.03125
          %v461 = vmul.f32 %v447, %v447
          %v462 = vmul.f32 %v448, %v448
          %v463 = vmul.f32 %v449, %v449
          %v464 = vmul.f32 %v450, %v450
          %v465 = vadd.f32 %v461, %v462
          %v466 = vadd.f32 %v465, %v463
          %v467 = vadd.f32 %v466, %v464
          %v468 = vrot.slane %v467, 4
          %v469 = vadd.f32 %v467, %v468
          %v470 = vrot.slane %v469, 2
          %v471 = vadd.f32 %v469, %v470
          %v472 = vrot.slane %v471, 1
          %v473 = vadd.f32 %v471, %v472
          %v474 = vmul.f32 %v473, 0.03125
          %v475 = vmul.f32 %v460, %v460
          %v476 = vsub.f32 %v474, %v475
          %v477 = vadd.f32 %v476, 1e-05
          %v478 = vrsqrt.pop %v477
          %v479 = vmul.f32 %v478, %v477
          %v480 = vmul.f32 %v479, %v478
          %v481 = vmul.f32 0.5, %v480
          %v482 = vsub.f32 1.5, %v481
          %v483 = vmul.f32 %v478, %v482
          %vm484 = vweird.f32 %v477
          %vm485 = vweird.f32 %v478
          %vm486 = vmor %vm484, %vm485
          %v487 = vsel %vm486, %v478, %v483
          %v488 = vld [vmem:[%s316] sm:$0x1]
          %v489 = vmul.f32 %v487, %v488
          %v490 = vld [vmem:[%s319] sm:$0x1]
          %v491 = vmul.f32 %v460, %v489
          %v492 = vsub.f32 %v490, %v491
          %v493 = vperm.slane %v489, 0
          %v494 = vmul.f32 %v447, %v493
          %v495 = vmul.f32 %v448, %v493
          %v496 = vmul.f32 %v449, %v493
          %v497 = vmul.f32 %v450, %v493
          %v499 = vperm.slane %v492, 0
          %v501 = vadd.f32 %v494, %v499
          %v502 = vadd.f32 %v495, %v499
          %v503 = vadd.f32 %v496, %v499
          %v504 = vadd.f32 %v497, %v499
          %v505 = vmax.f32 %v501, 0.0
          %v506 = vmax.f32 %v502, 0.0
          %v507 = vmax.f32 %v503, 0.0
          %v508 = vmax.f32 %v504, 0.0
          %509 = vst [vmem:[%s323] sm:$0xff] %v505
          %510 = vst [vmem:[%s323 + $0x8] sm:$0xff] %v506
          %511 = vst [vmem:[%s323 + $0x10] sm:$0xff] %v507
          %512 = vst [vmem:[%s323 + $0x18] sm:$0xff] %v508
        $region85: #{resnet_small_forward.17} parent=72 // pred_fallthru
          _
        %p513 = scmp.lt.s32.totalorder %s19, 0
        %s514 = scalar_select %p513, %s19, 0
        %s515 = smul.addr %s514, 8
        %s516 = scalar_lea.vmem %s4, %s515
        // Predicated region
        $region86: #{resnet_small_forward.17} parent=72 // pred_check
          %p517 = pneg %p151
        $region87: #{resnet_small_forward.17} parent=72 // pred_check_branch
          %519 = sbr.rel (%p517) target = $region89
        $region88: #{resnet_small_forward.17} parent=72 // pred_region
          _
        $region89: #{resnet_small_forward.17} parent=72 // pred_fallthru
          _
        // Predicated region
        $region90: #{resnet_small_forward.17} parent=72 // pred_check
          %p520 = pneg %p151
        $region91: #{resnet_small_forward.17} parent=72 // pred_check_branch
          %522 = sbr.rel (%p520) target = $region93
        $region92: #{resnet_small_forward.17} parent=72 // pred_region
          %p523 = scmp.lt.s32.totalorder %s19, 0
          %s524 = scalar_select %p523, %s19, 0
          %s525 = smul.addr %s524, 8
          %s526 = scalar_lea.vmem %s4, %s525
        $region93: #{resnet_small_forward.17} parent=72 // pred_fallthru
          _
      $region73: #{resnet_small_forward.17} parent=5 // pred_fallthru
        _
      %p527 = scmp.le.s32.totalorder 2, %s10
      // Predicated region
      $region94: #{resnet_small_forward.17} parent=5 // pred_check
        %p528 = pneg %p527
      $region95: #{resnet_small_forward.17} parent=5 // pred_check_branch
        %530 = sbr.rel (%p528) target = $region97
      $region96: #{resnet_small_forward.17} parent=5 // pred_region
        %s531 = ssub.s32 %s10, 2
      $region97: #{resnet_small_forward.17} parent=5 // pred_fallthru
        _
    $region6: #{resnet_small_forward.17} parent=1 // loop_footer
      %s14 = sadd.s32 1, %s10
    $region7: #{resnet_small_forward.17} parent=1 // loop_footer_branch
      %9 = sbr.rel target = $region3
    $region8: #{resnet_small_forward.17} parent=1 // loop_exit
      _

// kernel: resnet_small_forward.18
$region0: #{resnet_small_forward.18}
  #allocation0 [shape = 'u32[]', space=smem, size = 0x4, offset = 0x4, fixed_abs, tag = 'smem constant byte address 0x4 - core index']
  #allocation1 [shape = 'u32[72,128]{1,0:T(1,128)}', space=vmem, size = 0x9000, scoped, tag = 'internal scratch']
  #allocation2 [shape = 'f32[32,128]{1,0:T(8,128)}', space=vmem, size = 0x4000, scoped, tag = 'scratch operand']
  %s0 = inlined_call_operand.vmem [shape: bf16[32,640], index: 0, kind: input, shape index: {}]
  %s1 = inlined_call_operand.vmem [shape: bf16[640,128], index: 1, kind: input, shape index: {}]
  %s2 = inlined_call_operand.vmem [shape: f32[1,128], index: 2, kind: input, shape index: {}]
  %s3 = inlined_call_operand.vmem [shape: f32[1,128], index: 3, kind: input, shape index: {}]
  %s4 = inlined_call_operand.vmem [shape: f32[32,128], index: 4, kind: input, shape index: {}]
  %s5 = inlined_call_operand.vmem [shape: f32[32,128], index: 5, kind: output, shape index: {}]
  %s6 = sld [smem:[#allocation0]]
  $region102: #{resnet_small_forward.18} parent=0
    _
  %s8 = ssub.s32 1, %s6
  %s9 = scalar_select 0, %s8, %s6
  $region1: #{resnet_small_forward.18} parent=0
    #allocation3 [shape = 'u8[16384]{0}', space=vmem, size = 0x4000, scoped, tag = 'input window, operand 0']
    loop: start=0, step=1, limit=7
    $region2: #{resnet_small_forward.18} parent=1 // loop_pre_header
      _
    $region3: #{resnet_small_forward.18} parent=1 // loop_header
      %s11 = sphi 0, %s15
      %p12 = scmp.ge.s32.totalorder %s11, 7
      %s18 = sphi 0, %s30
      %s19 = sphi 0, %s26
      %s20 = sphi 0, %s18
      %s21 = sphi 0, %s19
      %s22 = sphi 0, %s20
      %s23 = sphi 0, %s21
      %s33 = sphi 0, %s35
      %s36 = sphi 0, %s33
      %s37 = sphi 0, %s36
      %s53 = sphi 0, %s37
      %s61 = sphi 0, %s63
      %s64 = sphi 0, %s61
      %s65 = sphi 0, %s64
      %s81 = sphi 0, %s65
      %s87 = sphi 0, %s89
      %s90 = sphi 0, %s87
      %s91 = sphi 0, %s90
      %s107 = sphi 0, %s91
      %s113 = sphi 0, %s115
      %s116 = sphi 0, %s113
      %s117 = sphi 0, %s116
      %s133 = sphi 0, %s117
      %s139 = sphi 0, %s141
      %s142 = sphi 0, %s139
      %s143 = sphi 0, %s142
      %s159 = sphi 0, %s143
      %s165 = sphi 0, %s167
      %s168 = sphi 0, %s165
      %s169 = sphi 0, %s168
      %s185 = sphi 0, %s169
    $region4: #{resnet_small_forward.18} parent=1 // loop_header_branch
      %14 = sbr.rel (%p12) target = $region8
    $region5: #{resnet_small_forward.18} parent=1 // loop_body
      %s16 = ssub.s32 %s11, 1
      %s17 = ssub.s32 %s11, 2
      %s24 = sadd.s32 1, %s19
      %p25 = scmp.ge.s32.totalorder %s24, 5
      %s26 = scalar_select %p25, 0, %s24
      %s27 = sadd.s32 1, %s18
      %s28 = scalar_select %p25, %s27, %s18
      %p29 = scmp.ge.s32.totalorder %s28, 1
      %s30 = scalar_select %p29, 0, %s28
      %s31 = ssub.s32 %s19, %s26
      %p32 = scmp.eq.s32.totalorder %s31, 0
      %s34 = sadd.s32 %s33, 1
      %s35 = scalar_select %p32, %s33, %s34
      %p38 = pneg %p32
      %p39 = scmp.eq.s32.totalorder %s11, 4
      %p40 = por %p38, %p39
      %p41 = scmp.ne.s32.totalorder %s33, %s36
      %p42 = scmp.eq.s32.totalorder %s11, 0
      %p43 = por %p41, %p42
      %p44 = scmp.ne.s32.totalorder %s33, %s36
      %p45 = scmp.eq.s32.totalorder %s16, 4
      %p46 = por %p44, %p45
      %p47 = scmp.ne.s32.totalorder %s36, %s37
      %p48 = scmp.eq.s32.totalorder %s16, 0
      %p49 = por %p47, %p48
      %p50 = scmp.ne.s32.totalorder %s36, %s37
      %p51 = scmp.eq.s32.totalorder %s17, 4
      %p52 = por %p50, %p51
      %p54 = scmp.ne.s32.totalorder %s37, %s53
      %p55 = scmp.eq.s32.totalorder %s17, 0
      %p56 = por %p54, %p55
      %s57 = ssub.s32 %s19, %s26
      %s58 = ssub.s32 %s18, %s30
      %s59 = sor.u32 %s57, %s58
      %p60 = scmp.eq.s32.totalorder %s59, 0
      %s62 = sadd.s32 %s61, 1
      %s63 = scalar_select %p60, %s61, %s62
      %p66 = pneg %p60
      %p67 = scmp.eq.s32.totalorder %s11, 4
      %p68 = por %p66, %p67
      %p69 = scmp.ne.s32.totalorder %s61, %s64
      %p70 = scmp.eq.s32.totalorder %s11, 0
      %p71 = por %p69, %p70
      %p72 = scmp.ne.s32.totalorder %s61, %s64
      %p73 = scmp.eq.s32.totalorder %s16, 4
      %p74 = por %p72, %p73
      %p75 = scmp.ne.s32.totalorder %s64, %s65
      %p76 = scmp.eq.s32.totalorder %s16, 0
      %p77 = por %p75, %p76
      %p78 = scmp.ne.s32.totalorder %s64, %s65
      %p79 = scmp.eq.s32.totalorder %s17, 4
      %p80 = por %p78, %p79
      %p82 = scmp.ne.s32.totalorder %s65, %s81
      %p83 = scmp.eq.s32.totalorder %s17, 0
      %p84 = por %p82, %p83
      %s85 = ssub.s32 %s18, %s30
      %p86 = scmp.eq.s32.totalorder %s85, 0
      %s88 = sadd.s32 %s87, 1
      %s89 = scalar_select %p86, %s87, %s88
      %p92 = pneg %p86
      %p93 = scmp.eq.s32.totalorder %s11, 4
      %p94 = por %p92, %p93
      %p95 = scmp.ne.s32.totalorder %s87, %s90
      %p96 = scmp.eq.s32.totalorder %s11, 0
      %p97 = por %p95, %p96
      %p98 = scmp.ne.s32.totalorder %s87, %s90
      %p99 = scmp.eq.s32.totalorder %s16, 4
      %p100 = por %p98, %p99
      %p101 = scmp.ne.s32.totalorder %s90, %s91
      %p102 = scmp.eq.s32.totalorder %s16, 0
      %p103 = por %p101, %p102
      %p104 = scmp.ne.s32.totalorder %s90, %s91
      %p105 = scmp.eq.s32.totalorder %s17, 4
      %p106 = por %p104, %p105
      %p108 = scmp.ne.s32.totalorder %s91, %s107
      %p109 = scmp.eq.s32.totalorder %s17, 0
      %p110 = por %p108, %p109
      %s111 = ssub.s32 %s18, %s30
      %p112 = scmp.eq.s32.totalorder %s111, 0
      %s114 = sadd.s32 %s113, 1
      %s115 = scalar_select %p112, %s113, %s114
      %p118 = pneg %p112
      %p119 = scmp.eq.s32.totalorder %s11, 4
      %p120 = por %p118, %p119
      %p121 = scmp.ne.s32.totalorder %s113, %s116
      %p122 = scmp.eq.s32.totalorder %s11, 0
      %p123 = por %p121, %p122
      %p124 = scmp.ne.s32.totalorder %s113, %s116
      %p125 = scmp.eq.s32.totalorder %s16, 4
      %p126 = por %p124, %p125
      %p127 = scmp.ne.s32.totalorder %s116, %s117
      %p128 = scmp.eq.s32.totalorder %s16, 0
      %p129 = por %p127, %p128
      %p130 = scmp.ne.s32.totalorder %s116, %s117
      %p131 = scmp.eq.s32.totalorder %s17, 4
      %p132 = por %p130, %p131
      %p134 = scmp.ne.s32.totalorder %s117, %s133
      %p135 = scmp.eq.s32.totalorder %s17, 0
      %p136 = por %p134, %p135
      %s137 = ssub.s32 %s18, %s30
      %p138 = scmp.eq.s32.totalorder %s137, 0
      %s140 = sadd.s32 %s139, 1
      %s141 = scalar_select %p138, %s139, %s140
      %p144 = pneg %p138
      %p145 = scmp.eq.s32.totalorder %s11, 4
      %p146 = por %p144, %p145
      %p147 = scmp.ne.s32.totalorder %s139, %s142
      %p148 = scmp.eq.s32.totalorder %s11, 0
      %p149 = por %p147, %p148
      %p150 = scmp.ne.s32.totalorder %s139, %s142
      %p151 = scmp.eq.s32.totalorder %s16, 4
      %p152 = por %p150, %p151
      %p153 = scmp.ne.s32.totalorder %s142, %s143
      %p154 = scmp.eq.s32.totalorder %s16, 0
      %p155 = por %p153, %p154
      %p156 = scmp.ne.s32.totalorder %s142, %s143
      %p157 = scmp.eq.s32.totalorder %s17, 4
      %p158 = por %p156, %p157
      %p160 = scmp.ne.s32.totalorder %s143, %s159
      %p161 = scmp.eq.s32.totalorder %s17, 0
      %p162 = por %p160, %p161
      %s163 = ssub.s32 %s18, %s30
      %p164 = scmp.eq.s32.totalorder %s163, 0
      %s166 = sadd.s32 %s165, 1
      %s167 = scalar_select %p164, %s165, %s166
      %p170 = pneg %p164
      %p171 = scmp.eq.s32.totalorder %s11, 4
      %p172 = por %p170, %p171
      %p173 = scmp.ne.s32.totalorder %s165, %s168
      %p174 = scmp.eq.s32.totalorder %s11, 0
      %p175 = por %p173, %p174
      %p176 = scmp.ne.s32.totalorder %s165, %s168
      %p177 = scmp.eq.s32.totalorder %s16, 4
      %p178 = por %p176, %p177
      %p179 = scmp.ne.s32.totalorder %s168, %s169
      %p180 = scmp.eq.s32.totalorder %s16, 0
      %p181 = por %p179, %p180
      %p182 = scmp.ne.s32.totalorder %s168, %s169
      %p183 = scmp.eq.s32.totalorder %s17, 4
      %p184 = por %p182, %p183
      %p186 = scmp.ne.s32.totalorder %s169, %s185
      %p187 = scmp.eq.s32.totalorder %s17, 0
      %p188 = por %p186, %p187
      %p189 = scmp.le.s32.totalorder 1, %s11
      %p190 = scmp.lt.s32.totalorder %s11, 6
      %p191 = pnand %p189, %p190
      %p192 = pneg %p191
      // Predicated region
      $region9: #{resnet_small_forward.18} parent=5 // pred_check
        _
      $region10: #{resnet_small_forward.18} parent=5 // pred_check_branch
        %194 = sbr.rel (%p191) target = $region12
      $region11: #{resnet_small_forward.18} parent=5 // pred_region
        %s195 = ssub.s32 %s11, 1
        // Predicated region
        $region13: #{resnet_small_forward.18} parent=11 // pred_check
          %p196 = pneg %p103
        $region14: #{resnet_small_forward.18} parent=11 // pred_check_branch
          %198 = sbr.rel (%p196) target = $region16
        $region15: #{resnet_small_forward.18} parent=11 // pred_region
          %p199 = scmp.lt.s32.totalorder %s20, 0
          %s200 = scalar_select %p199, %s20, 0
          %s201 = scalar_lea.vmem %s2, %s200
        $region16: #{resnet_small_forward.18} parent=11 // pred_fallthru
          _
        // Predicated region
        $region17: #{resnet_small_forward.18} parent=11 // pred_check
          %p202 = pneg %p129
        $region18: #{resnet_small_forward.18} parent=11 // pred_check_branch
          %204 = sbr.rel (%p202) target = $region20
        $region19: #{resnet_small_forward.18} parent=11 // pred_region
          %p205 = scmp.lt.s32.totalorder %s20, 0
          %s206 = scalar_select %p205, %s20, 0
          %s207 = scalar_lea.vmem %s3, %s206
        $region20: #{resnet_small_forward.18} parent=11 // pred_fallthru
          _
        // Predicated region
        $region21: #{resnet_small_forward.18} parent=11 // pred_check
          %p208 = pneg %p155
        $region22: #{resnet_small_forward.18} parent=11 // pred_check_branch
          %210 = sbr.rel (%p208) target = $region24
        $region23: #{resnet_small_forward.18} parent=11 // pred_region
          %p211 = scmp.lt.s32.totalorder %s20, 0
          %s212 = scalar_select %p211, %s20, 0
          %s213 = smul.addr %s212, 8
          %s214 = scalar_lea.vmem %s4, %s213
        $region24: #{resnet_small_forward.18} parent=11 // pred_fallthru
          _
      $region12: #{resnet_small_forward.18} parent=5 // pred_fallthru
        _
      %p215 = scmp.lt.s32.totalorder %s11, 5
      // Predicated region
      $region25: #{resnet_small_forward.18} parent=5 // pred_check
        %p216 = pneg %p215
      $region26: #{resnet_small_forward.18} parent=5 // pred_check_branch
        %218 = sbr.rel (%p216) target = $region28
      $region27: #{resnet_small_forward.18} parent=5 // pred_region
        // Predicated region
        $region29: #{resnet_small_forward.18} parent=27 // pred_check
          %p219 = pneg %p43
        $region30: #{resnet_small_forward.18} parent=27 // pred_check_branch
          %221 = sbr.rel (%p219) target = $region32
        $region31: #{resnet_small_forward.18} parent=27 // pred_region
          %s222 = sand.u32 %s33, 1
          %s223 = sand.u32 %s33, 1
          %s224 = smul.addr %s223, 16
          %s225 = scalar_lea.vmem [#allocation3], %s224
          %s226 = smul.addr %s19, 4
          %s227 = scalar_lea.vmem %s0, %s226
          // Predicated region
          $region33: #{resnet_small_forward.18} parent=31 // pred_check
            _
          $region34: #{resnet_small_forward.18} parent=31 // pred_check_branch
            %229 = sbr.rel (0) target = $region36
          $region35: #{resnet_small_forward.18} parent=31 // pred_region
            // Predicated region
            $region37: #{resnet_small_forward.18} parent=35 // pred_check
              _
            $region38: #{resnet_small_forward.18} parent=35 // pred_check_branch
              %231 = sbr.rel target = $region40
            $region39: #{resnet_small_forward.18} parent=35 // pred_region
              // Predicated region
              $region52: #{resnet_small_forward.18} parent=39 // pred_check
                _
              $region53: #{resnet_small_forward.18} parent=39 // pred_check_branch
                %253 = sbr.rel (0) target = $region55
              $region54: #{resnet_small_forward.18} parent=39 // pred_region
                loop: start=0, step=1, limit=1
                $region56: #{resnet_small_forward.18} parent=54 // loop_pre_header
                  _
                $region57: #{resnet_small_forward.18} parent=54 // loop_header
                  %s255 = sphi 0, %s259
                  %p256 = scmp.ge.s32.totalorder %s255, 1
                  %s260 = sphi %s227, %s227
                  %s261 = sphi %s225, %s225
                $region58: #{resnet_small_forward.18} parent=54 // loop_header_branch
                  %258 = sbr.rel (%p256) target = $region62
                $region59: #{resnet_small_forward.18} parent=54 // loop_body
                  _
                $region60: #{resnet_small_forward.18} parent=54 // loop_footer
                  %s259 = sadd.s32 1, %s255
                $region61: #{resnet_small_forward.18} parent=54 // loop_footer_branch
                  %254 = sbr.rel target = $region57
                $region62: #{resnet_small_forward.18} parent=54 // loop_exit
                  _
                %s263 = ssub.s32 16, 1
                loop: start=0, step=1, limit=1
                $region63: #{resnet_small_forward.18} parent=54 // loop_pre_header
                  _
                $region64: #{resnet_small_forward.18} parent=54 // loop_header
                  %s265 = sphi 0, %s269
                  %p266 = scmp.ge.s32.totalorder %s265, 1
                  %s270 = sphi %s227, %s227
                  %s271 = sphi %s225, %s225
                $region65: #{resnet_small_forward.18} parent=54 // loop_header_branch
                  %268 = sbr.rel (%p266) target = $region69
                $region66: #{resnet_small_forward.18} parent=54 // loop_body
                  %v272 = vld [vmem:[%s270] sm:%s263]
                  %273 = vst [vmem:[%s271] sm:%s263] %v272
                  %v274 = vld [vmem:[%s270 + $0x14] sm:%s263]
                  %275 = vst [vmem:[%s271 + $0x4] sm:%s263] %v274
                  %v276 = vld [vmem:[%s270 + $0x28] sm:%s263]
                  %277 = vst [vmem:[%s271 + $0x8] sm:%s263] %v276
                  %v278 = vld [vmem:[%s270 + $0x3c] sm:%s263]
                  %279 = vst [vmem:[%s271 + $0xc] sm:%s263] %v278
                $region67: #{resnet_small_forward.18} parent=54 // loop_footer
                  %s269 = sadd.s32 1, %s265
                $region68: #{resnet_small_forward.18} parent=54 // loop_footer_branch
                  %264 = sbr.rel target = $region64
                $region69: #{resnet_small_forward.18} parent=54 // loop_exit
                  _
              $region55: #{resnet_small_forward.18} parent=39 // pred_fallthru
                _
            $region40: #{resnet_small_forward.18} parent=35 // pred_fallthru
              _
            // Predicated region
            $region41: #{resnet_small_forward.18} parent=35 // pred_check
              _
            $region42: #{resnet_small_forward.18} parent=35 // pred_check_branch
              %233 = sbr.rel (0) target = $region44
            $region43: #{resnet_small_forward.18} parent=35 // pred_region
              %s235 = ssub.s32 16, 1
              loop: start=0, step=1, limit=1
              $region45: #{resnet_small_forward.18} parent=43 // loop_pre_header
                _
              $region46: #{resnet_small_forward.18} parent=43 // loop_header
                %s237 = sphi 0, %s241
                %p238 = scmp.ge.s32.totalorder %s237, 1
                %s242 = sphi %s227, %s227
                %s243 = sphi %s225, %s225
              $region47: #{resnet_small_forward.18} parent=43 // loop_header_branch
                %240 = sbr.rel (%p238) target = $region51
              $region48: #{resnet_small_forward.18} parent=43 // loop_body
                %v244 = vld [vmem:[%s242] sm:%s235]
                %245 = vst [vmem:[%s243] sm:%s235] %v244
                %v246 = vld [vmem:[%s242 + $0x14] sm:%s235]
                %247 = vst [vmem:[%s243 + $0x4] sm:%s235] %v246
                %v248 = vld [vmem:[%s242 + $0x28] sm:%s235]
                %249 = vst [vmem:[%s243 + $0x8] sm:%s235] %v248
                %v250 = vld [vmem:[%s242 + $0x3c] sm:%s235]
                %251 = vst [vmem:[%s243 + $0xc] sm:%s235] %v250
              $region49: #{resnet_small_forward.18} parent=43 // loop_footer
                %s241 = sadd.s32 1, %s237
              $region50: #{resnet_small_forward.18} parent=43 // loop_footer_branch
                %236 = sbr.rel target = $region46
              $region51: #{resnet_small_forward.18} parent=43 // loop_exit
                _
            $region44: #{resnet_small_forward.18} parent=35 // pred_fallthru
              _
          $region36: #{resnet_small_forward.18} parent=31 // pred_fallthru
            _
          %280 = vnop
        $region32: #{resnet_small_forward.18} parent=27 // pred_fallthru
          _
        // Predicated region
        $region70: #{resnet_small_forward.18} parent=27 // pred_check
          %p281 = pneg %p71
        $region71: #{resnet_small_forward.18} parent=27 // pred_check_branch
          %283 = sbr.rel (%p281) target = $region73
        $region72: #{resnet_small_forward.18} parent=27 // pred_region
          %s284 = smul.u32 16, %s19
          %p285 = scmp.lt.s32.totalorder %s284, 79
          %s286 = scalar_select %p285, %s284, 79
          %p287 = scmp.lt.s32.totalorder %s18, 0
          %s288 = scalar_select %p287, %s18, 0
          %s289 = sadd.s32 %s288, %s286
          %s290 = smul.addr %s289, 4
          %s291 = scalar_lea.vmem %s1, %s290
          %s292 = smul.u32 16, %s19
        $region73: #{resnet_small_forward.18} parent=27 // pred_fallthru
          _
      $region28: #{resnet_small_forward.18} parent=5 // pred_fallthru
        _
      %p293 = scmp.le.s32.totalorder 1, %s11
      %p294 = scmp.lt.s32.totalorder %s11, 6
      %p295 = pnand %p293, %p294
      %p296 = pneg %p295
      // Predicated region
      $region74: #{resnet_small_forward.18} parent=5 // pred_check
        _
      $region75: #{resnet_small_forward.18} parent=5 // pred_check_branch
        %298 = sbr.rel (%p295) target = $region77
      $region76: #{resnet_small_forward.18} parent=5 // pred_region
        %s299 = ssub.s32 %s11, 1
        %s300 = sand.u32 %s36, 1
        %s301 = sand.u32 %s36, 1
        %s302 = smul.addr %s301, 16
        %s303 = scalar_lea.vmem [#allocation3], %s302
        // Predicated region
        $region78: #{resnet_small_forward.18} parent=76 // pred_check
          %p304 = pneg %p49
        $region79: #{resnet_small_forward.18} parent=76 // pred_check_branch
          %306 = sbr.rel (%p304) target = $region81
        $region80: #{resnet_small_forward.18} parent=76 // pred_region
          _
        $region81: #{resnet_small_forward.18} parent=76 // pred_fallthru
          _
        %s307 = sand.u32 %s36, 1
        %s308 = sand.u32 %s36, 1
        %s309 = smul.addr %s308, 16
        %s310 = scalar_lea.vmem [#allocation3], %s309
        %p311 = pneg %p49
        %p312 = pneg %p46
        %s313 = smul.u32 16, %s21
        %p314 = scmp.lt.s32.totalorder %s313, 79
        %s315 = scalar_select %p314, %s313, 79
        %p316 = scmp.lt.s32.totalorder %s20, 0
        %s317 = scalar_select %p316, %s20, 0
        %s318 = sadd.s32 %s317, %s315
        %s319 = smul.addr %s318, 4
        %s320 = scalar_lea.vmem %s1, %s319
        %p321 = pneg %p77
        %p322 = pneg %p74
        %p323 = scmp.lt.s32.totalorder %s20, 0
        %s324 = scalar_select %p323, %s20, 0
        %s325 = scalar_lea.vmem %s2, %s324
        %p326 = pneg %p103
        %p327 = pneg %p100
        %p328 = scmp.lt.s32.totalorder %s20, 0
        %s329 = scalar_select %p328, %s20, 0
        %s330 = scalar_lea.vmem %s3, %s329
        %p331 = pneg %p129
        %p332 = pneg %p126
        %p333 = scmp.lt.s32.totalorder %s20, 0
        %s334 = scalar_select %p333, %s20, 0
        %s335 = smul.addr %s334, 8
        %s336 = scalar_lea.vmem %s4, %s335
        %p337 = pneg %p155
        %p338 = pneg %p152
        %p339 = pneg %p181
        %p340 = pneg %p178
        %p341 = scmp.lt.s32.totalorder %s20, 0
        %s342 = scalar_select %p341, %s20, 0
        %s343 = smul.addr %s342, 8
        %s344 = scalar_lea.vmem %s5, %s343
        %s345 = smul.u32 16, %s21
        %p346 = scmp.lt.s32.totalorder %s345, 79
        %s347 = scalar_select %p346, %s345, 79
        %p348 = scmp.lt.s32.totalorder %s20, 0
        %s349 = scalar_select %p348, %s20, 0
        %s350 = sadd.s32 %s349, %s347
        %s351 = smul.addr %s350, 4
        %s352 = scalar_lea.vmem %s1, %s351
        %s353 = smul.u32 16, %s21
        %p354 = scmp.lt.s32.totalorder %s20, 0
        %s355 = scalar_select %p354, %s20, 0
        %s356 = scalar_lea.vmem %s2, %s355
        %p357 = scmp.lt.s32.totalorder %s20, 0
        %s358 = scalar_select %p357, %s20, 0
        %s359 = scalar_lea.vmem %s3, %s358
        %p360 = scmp.lt.s32.totalorder %s20, 0
        %s361 = scalar_select %p360, %s20, 0
        %s362 = smul.addr %s361, 8
        %s363 = scalar_lea.vmem %s4, %s362
        %p364 = scmp.lt.s32.totalorder %s20, 0
        %s365 = scalar_select %p364, %s20, 0
        %s366 = smul.addr %s365, 8
        %s367 = scalar_lea.vmem %s5, %s366
        %p368 = scmp.eq.s32.totalorder %s21, 0
        // Predicated region
        $region82: #{resnet_small_forward.18} parent=76 // pred_check
          %p369 = pneg %p368
        $region83: #{resnet_small_forward.18} parent=76 // pred_check_branch
          %371 = sbr.rel (%p369) target = $region85
        $region84: #{resnet_small_forward.18} parent=76 // pred_region
          %372 = vst [vmem:[#allocation2] sm:$0xff] 0.0
          %373 = vst [vmem:[#allocation2 + $0x8] sm:$0xff] 0.0
          %374 = vst [vmem:[#allocation2 + $0x10] sm:$0xff] 0.0
          %375 = vst [vmem:[#allocation2 + $0x18] sm:$0xff] 0.0
        $region85: #{resnet_small_forward.18} parent=76 // pred_fallthru
          _
        %v376 = vld [vmem:[#allocation2] sm:$0xff]
        %v377 = vld [vmem:[#allocation2 + $0x8] sm:$0xff]
        %v378 = vld [vmem:[#allocation2 + $0x10] sm:$0xff]
        %v379 = vld [vmem:[#allocation2 + $0x18] sm:$0xff]
        %v380 = vld [vmem:[%s303] sm:$0xf]
        %v381 = vld [vmem:[%s303 + $0x4] sm:$0xf]
        %v382 = vld [vmem:[%s303 + $0x8] sm:$0xf]
        %v383 = vld [vmem:[%s303 + $0xc] sm:$0xf]
        %v384 = vld [vmem:[%s352] sm:$0xf]
        %v385 = vld [vmem:[%s352 + $0x4] sm:$0xf]
        %v386 = vld [vmem:[%s352 + $0x8] sm:$0xf]
        %v387 = vld [vmem:[%s352 + $0xc] sm:$0xf]
        %v388 = vld [vmem:[%s352 + $0x10] sm:$0xf]
        %v389 = vld [vmem:[%s352 + $0x14] sm:$0xf]
        %v390 = vld [vmem:[%s352 + $0x18] sm:$0xf]
        %v391 = vld [vmem:[%s352 + $0x1c] sm:$0xf]
        %v392 = vld [vmem:[%s352 + $0x20] sm:$0xf]
        %v393 = vld [vmem:[%s352 + $0x24] sm:$0xf]
        %v394 = vld [vmem:[%s352 + $0x28] sm:$0xf]
        %v395 = vld [vmem:[%s352 + $0x2c] sm:$0xf]
        %v396 = vld [vmem:[%s352 + $0x30] sm:$0xf]
        %v397 = vld [vmem:[%s352 + $0x34] sm:$0xf]
        %v398 = vld [vmem:[%s352 + $0x38] sm:$0xf]
        %v399 = vld [vmem:[%s352 + $0x3c] sm:$0xf]
        %v404 = vunpack.c.l.b16 %v380
        %v405 = vunpack.c.l.b16 %v381
        %v406 = vunpack.c.l.b16 %v382
        %v407 = vunpack.c.l.b16 %v383
        %v408 = vpack.c.b16 %v405, %v404
        %v409 = vpack.c.b16 %v407, %v406
        %v428 = vunpack.c.l.b16 %v384
        %v429 = vunpack.c.l.b16 %v385
        %v430 = vunpack.c.l.b16 %v386
        %v431 = vunpack.c.l.b16 %v387
        %v432 = vunpack.c.l.b16 %v388
        %v433 = vunpack.c.l.b16 %v389
        %v434 = vunpack.c.l.b16 %v390
        %v435 = vunpack.c.l.b16 %v391
        %v436 = vunpack.c.l.b16 %v392
        %v437 = vunpack.c.l.b16 %v393
        %v438 = vunpack.c.l.b16 %v394
        %v439 = vunpack.c.l.b16 %v395
        %v440 = vunpack.c.l.b16 %v396
        %v441 = vunpack.c.l.b16 %v397
        %v442 = vunpack.c.l.b16 %v398
        %v443 = vunpack.c.l.b16 %v399
        %v444 = vpack.c.b16 %v429, %v428
        %v445 = vpack.c.b16 %v431, %v430
        %v446 = vpack.c.b16 %v433, %v432
        %v447 = vpack.c.b16 %v435, %v434
        %v448 = vpack.c.b16 %v437, %v436
        %v449 = vpack.c.b16 %v439, %v438
        %v450 = vpack.c.b16 %v441, %v440
        %v451 = vpack.c.b16 %v443, %v442
        %460 = vmatpush.bf16.msra.mxu0 %v451
        %461 = vmatpush.bf16.msra.mxu0 %v450
        %462 = vmatpush.bf16.msra.mxu0 %v449
        %463 = vmatpush.bf16.msra.mxu0 %v448
        %464 = vmatpush.bf16.msra.mxu0 %v447
        %465 = vmatpush.bf16.msra.mxu0 %v446
        %466 = vmatpush.bf16.msra.mxu0 %v445
        %467 = vmatpush.bf16.msra.mxu0 %v444
        %468 = vmatmul.bf16.gmra.mxu0 %v408
        %v469 = vpop.f32.mrf.mxu0
        %v470 = vadd.f32 0.0, %v469
        %v471 = vpop.f32.mrf.mxu0
        %v472 = vadd.f32 0.0, %v471
        %473 = vmatmul.bf16.gmra.mxu0 %v409
        %v474 = vpop.f32.mrf.mxu0
        %v475 = vadd.f32 0.0, %v474
        %v476 = vpop.f32.mrf.mxu0
        %v477 = vadd.f32 0.0, %v476
        %478 = vdwg.mxu0
        %v479 = vadd.f32 %v376, %v470
        %v480 = vadd.f32 %v377, %v472
        %v481 = vadd.f32 %v378, %v475
        %v482 = vadd.f32 %v379, %v477
        %483 = vst [vmem:[#allocation2] sm:$0xff] %v479
        %484 = vst [vmem:[#allocation2 + $0x8] sm:$0xff] %v480
        %485 = vst [vmem:[#allocation2 + $0x10] sm:$0xff] %v481
        %486 = vst [vmem:[#allocation2 + $0x18] sm:$0xff] %v482
        %p487 = scmp.eq.s32.totalorder %s21, 4
        // Predicated region
        $region86: #{resnet_small_forward.18} parent=76 // pred_check
          %p488 = pneg %p487
        $region87: #{resnet_small_forward.18} parent=76 // pred_check_branch
          %490 = sbr.rel (%p488) target = $region89
        $region88: #{resnet_small_forward.18} parent=76 // pred_region
          %v491 = vld [vmem:[#allocation2] sm:$0xff]
          %v492 = vld [vmem:[#allocation2 + $0x8] sm:$0xff]
          %v493 = vld [vmem:[#allocation2 + $0x10] sm:$0xff]
          %v494 = vld [vmem:[#allocation2 + $0x18] sm:$0xff]
          %v495 = vadd.f32 %v491, %v492
          %v496 = vadd.f32 %v495, %v493
          %v497 = vadd.f32 %v496, %v494
          %v498 = vrot.slane %v497, 4
          %v499 = vadd.f32 %v497, %v498
          %v500 = vrot.slane %v499, 2
          %v501 = vadd.f32 %v499, %v500
          %v502 = vrot.slane %v501, 1
          %v503 = vadd.f32 %v501, %v502
          %v504 = vmul.f32 %v503, 0.03125
          %v505 = vmul.f32 %v491, %v491
          %v506 = vmul.f32 %v492, %v492
          %v507 = vmul.f32 %v493, %v493
          %v508 = vmul.f32 %v494, %v494
          %v509 = vadd.f32 %v505, %v506
          %v510 = vadd.f32 %v509, %v507
          %v511 = vadd.f32 %v510, %v508
          %v512 = vrot.slane %v511, 4
          %v513 = vadd.f32 %v511, %v512
          %v514 = vrot.slane %v513, 2
          %v515 = vadd.f32 %v513, %v514
          %v516 = vrot.slane %v515, 1
          %v517 = vadd.f32 %v515, %v516
          %v518 = vmul.f32 %v517, 0.03125
          %v519 = vmul.f32 %v504, %v504
          %v520 = vsub.f32 %v518, %v519
          %v521 = vadd.f32 %v520, 1e-05
          %v522 = vrsqrt.pop %v521
          %v523 = vmul.f32 %v522, %v521
          %v524 = vmul.f32 %v523, %v522
          %v525 = vmul.f32 0.5, %v524
          %v526 = vsub.f32 1.5, %v525
          %v527 = vmul.f32 %v522, %v526
          %vm528 = vweird.f32 %v521
          %vm529 = vweird.f32 %v522
          %vm530 = vmor %vm528, %vm529
          %v531 = vsel %vm530, %v522, %v527
          %v532 = vld [vmem:[%s356] sm:$0x1]
          %v533 = vmul.f32 %v531, %v532
          %v534 = vld [vmem:[%s359] sm:$0x1]
          %v535 = vmul.f32 %v504, %v533
          %v536 = vsub.f32 %v534, %v535
          %v537 = vperm.slane %v533, 0
          %v538 = vmul.f32 %v491, %v537
          %v539 = vmul.f32 %v492, %v537
          %v540 = vmul.f32 %v493, %v537
          %v541 = vmul.f32 %v494, %v537
          %v543 = vperm.slane %v536, 0
          %v545 = vadd.f32 %v538, %v543
          %v546 = vadd.f32 %v539, %v543
          %v547 = vadd.f32 %v540, %v543
          %v548 = vadd.f32 %v541, %v543
          %v549 = vmax.f32 %v545, 0.0
          %v550 = vmax.f32 %v546, 0.0
          %v551 = vmax.f32 %v547, 0.0
          %v552 = vmax.f32 %v548, 0.0
          %v553 = vld [vmem:[%s363] sm:$0xff]
          %v554 = vld [vmem:[%s363 + $0x8] sm:$0xff]
          %v555 = vld [vmem:[%s363 + $0x10] sm:$0xff]
          %v556 = vld [vmem:[%s363 + $0x18] sm:$0xff]
          %v557 = vadd.f32 %v549, %v553
          %v558 = vadd.f32 %v550, %v554
          %v559 = vadd.f32 %v551, %v555
          %v560 = vadd.f32 %v552, %v556
          %v561 = vmax.f32 %v557, 0.0
          %v562 = vmax.f32 %v558, 0.0
          %v563 = vmax.f32 %v559, 0.0
          %v564 = vmax.f32 %v560, 0.0
          %565 = vst [vmem:[%s367] sm:$0xff] %v561
          %566 = vst [vmem:[%s367 + $0x8] sm:$0xff] %v562
          %567 = vst [vmem:[%s367 + $0x10] sm:$0xff] %v563
          %568 = vst [vmem:[%s367 + $0x18] sm:$0xff] %v564
        $region89: #{resnet_small_forward.18} parent=76 // pred_fallthru
          _
        %p569 = scmp.lt.s32.totalorder %s20, 0
        %s570 = scalar_select %p569, %s20, 0
        %s571 = smul.addr %s570, 8
        %s572 = scalar_lea.vmem %s5, %s571
        // Predicated region
        $region90: #{resnet_small_forward.18} parent=76 // pred_check
          %p573 = pneg %p178
        $region91: #{resnet_small_forward.18} parent=76 // pred_check_branch
          %575 = sbr.rel (%p573) target = $region93
        $region92: #{resnet_small_forward.18} parent=76 // pred_region
          _
        $region93: #{resnet_small_forward.18} parent=76 // pred_fallthru
          _
        // Predicated region
        $region94: #{resnet_small_forward.18} parent=76 // pred_check
          %p576 = pneg %p178
        $region95: #{resnet_small_forward.18} parent=76 // pred_check_branch
          %578 = sbr.rel (%p576) target = $region97
        $region96: #{resnet_small_forward.18} parent=76 // pred_region
          %p579 = scmp.lt.s32.totalorder %s20, 0
          %s580 = scalar_select %p579, %s20, 0
          %s581 = smul.addr %s580, 8
          %s582 = scalar_lea.vmem %s5, %s581
        $region97: #{resnet_small_forward.18} parent=76 // pred_fallthru
          _
      $region77: #{resnet_small_forward.18} parent=5 // pred_fallthru
        _
      %p583 = scmp.le.s32.totalorder 2, %s11
      // Predicated region
      $region98: #{resnet_small_forward.18} parent=5 // pred_check
        %p584 = pneg %p583
      $region99: #{resnet_small_forward.18} parent=5 // pred_check_branch
        %586 = sbr.rel (%p584) target = $region101
      $region100: #{resnet_small_forward.18} parent=5 // pred_region
        %s587 = ssub.s32 %s11, 2
      $region101: #{resnet_small_forward.18} parent=5 // pred_fallthru
        _
    $region6: #{resnet_small_forward.18} parent=1 // loop_footer
      %s15 = sadd.s32 1, %s11
    $region7: #{resnet_small_forward.18} parent=1 // loop_footer_branch
      %10 = sbr.rel target = $region3
    $region8: #{resnet_small_forward.18} parent=1 // loop_exit
      _

// kernel: resnet_small_forward.19
$region0: #{resnet_small_forward.19}
  #allocation0 [shape = 'u32[]', space=smem, size = 0x4, offset = 0x4, fixed_abs, tag = 'smem constant byte address 0x4 - core index']
  #allocation1 [shape = 'u32[72,128]{1,0:T(1,128)}', space=vmem, size = 0x9000, scoped, tag = 'internal scratch']
  #allocation2 [shape = 'f32[8,128]{1,0:T(8,128)}', space=vmem, size = 0x1000, scoped, tag = 'scratch operand']
  %s0 = inlined_call_operand.vmem [shape: bf16[8,640], index: 0, kind: input, shape index: {}]
  %s1 = inlined_call_operand.vmem [shape: bf16[640,128], index: 1, kind: input, shape index: {}]
  %s2 = inlined_call_operand.vmem [shape: f32[1,128], index: 2, kind: input, shape index: {}]
  %s3 = inlined_call_operand.hbm [shape: f32[1,128], index: 3, kind: input, shape index: {}]
  %s4 = inlined_call_operand.vmem [shape: f32[8,128], index: 4, kind: output, shape index: {}]
  %s5 = sld [smem:[#allocation0]]
  $region61: #{resnet_small_forward.19} parent=0
    _
  %s7 = ssub.s32 1, %s5
  %s8 = scalar_select 0, %s7, %s5
  $region1: #{resnet_small_forward.19} parent=0
    #allocation3 [shape = 'u8[512]{0}', space=vmem, size = 0x400, scoped, tag = 'input window, operand 3, single buffered']
    #allocation4 [shape = 's32[2]{0}', space=sflag, size = 0x8, scoped, tag = 'scoped memory for resnet_small_forward.19']
    %9 = vsyncpa [#allocation4], 0
    loop: start=0, step=1, limit=7
    $region2: #{resnet_small_forward.19} parent=1 // loop_pre_header
      _
    $region3: #{resnet_small_forward.19} parent=1 // loop_header
      %s11 = sphi 0, %s15
      %p12 = scmp.ge.s32.totalorder %s11, 7
      %s18 = sphi 0, %s30
      %s19 = sphi 0, %s26
      %s20 = sphi 0, %s18
      %s21 = sphi 0, %s19
      %s22 = sphi 0, %s20
      %s23 = sphi 0, %s21
      %s33 = sphi 0, %s35
      %s36 = sphi 0, %s33
      %s37 = sphi 0, %s36
      %s53 = sphi 0, %s37
      %s61 = sphi 0, %s63
      %s64 = sphi 0, %s61
      %s65 = sphi 0, %s64
      %s81 = sphi 0, %s65
      %s87 = sphi 0, %s89
      %s90 = sphi 0, %s87
      %s91 = sphi 0, %s90
      %s107 = sphi 0, %s91
      %s113 = sphi 0, %s115
      %s116 = sphi 0, %s113
      %s117 = sphi 0, %s116
      %s133 = sphi 0, %s117
      %s139 = sphi 0, %s141
      %s142 = sphi 0, %s139
      %s143 = sphi 0, %s142
      %s159 = sphi 0, %s143
    $region4: #{resnet_small_forward.19} parent=1 // loop_header_branch
      %14 = sbr.rel (%p12) target = $region8
    $region5: #{resnet_small_forward.19} parent=1 // loop_body
      %s16 = ssub.s32 %s11, 1
      %s17 = ssub.s32 %s11, 2
      %s24 = sadd.s32 1, %s19
      %p25 = scmp.ge.s32.totalorder %s24, 5
      %s26 = scalar_select %p25, 0, %s24
      %s27 = sadd.s32 1, %s18
      %s28 = scalar_select %p25, %s27, %s18
      %p29 = scmp.ge.s32.totalorder %s28, 1
      %s30 = scalar_select %p29, 0, %s28
      %s31 = ssub.s32 %s19, %s26
      %p32 = scmp.eq.s32.totalorder %s31, 0
      %s34 = sadd.s32 %s33, 1
      %s35 = scalar_select %p32, %s33, %s34
      %p38 = pneg %p32
      %p39 = scmp.eq.s32.totalorder %s11, 4
      %p40 = por %p38, %p39
      %p41 = scmp.ne.s32.totalorder %s33, %s36
      %p42 = scmp.eq.s32.totalorder %s11, 0
      %p43 = por %p41, %p42
      %p44 = scmp.ne.s32.totalorder %s33, %s36
      %p45 = scmp.eq.s32.totalorder %s16, 4
      %p46 = por %p44, %p45
      %p47 = scmp.ne.s32.totalorder %s36, %s37
      %p48 = scmp.eq.s32.totalorder %s16, 0
      %p49 = por %p47, %p48
      %p50 = scmp.ne.s32.totalorder %s36, %s37
      %p51 = scmp.eq.s32.totalorder %s17, 4
      %p52 = por %p50, %p51
      %p54 = scmp.ne.s32.totalorder %s37, %s53
      %p55 = scmp.eq.s32.totalorder %s17, 0
      %p56 = por %p54, %p55
      %s57 = ssub.s32 %s19, %s26
      %s58 = ssub.s32 %s18, %s30
      %s59 = sor.u32 %s57, %s58
      %p60 = scmp.eq.s32.totalorder %s59, 0
      %s62 = sadd.s32 %s61, 1
      %s63 = scalar_select %p60, %s61, %s62
      %p66 = pneg %p60
      %p67 = scmp.eq.s32.totalorder %s11, 4
      %p68 = por %p66, %p67
      %p69 = scmp.ne.s32.totalorder %s61, %s64
      %p70 = scmp.eq.s32.totalorder %s11, 0
      %p71 = por %p69, %p70
      %p72 = scmp.ne.s32.totalorder %s61, %s64
      %p73 = scmp.eq.s32.totalorder %s16, 4
      %p74 = por %p72, %p73
      %p75 = scmp.ne.s32.totalorder %s64, %s65
      %p76 = scmp.eq.s32.totalorder %s16, 0
      %p77 = por %p75, %p76
      %p78 = scmp.ne.s32.totalorder %s64, %s65
      %p79 = scmp.eq.s32.totalorder %s17, 4
      %p80 = por %p78, %p79
      %p82 = scmp.ne.s32.totalorder %s65, %s81
      %p83 = scmp.eq.s32.totalorder %s17, 0
      %p84 = por %p82, %p83
      %s85 = ssub.s32 %s18, %s30
      %p86 = scmp.eq.s32.totalorder %s85, 0
      %s88 = sadd.s32 %s87, 1
      %s89 = scalar_select %p86, %s87, %s88
      %p92 = pneg %p86
      %p93 = scmp.eq.s32.totalorder %s11, 4
      %p94 = por %p92, %p93
      %p95 = scmp.ne.s32.totalorder %s87, %s90
      %p96 = scmp.eq.s32.totalorder %s11, 0
      %p97 = por %p95, %p96
      %p98 = scmp.ne.s32.totalorder %s87, %s90
      %p99 = scmp.eq.s32.totalorder %s16, 4
      %p100 = por %p98, %p99
      %p101 = scmp.ne.s32.totalorder %s90, %s91
      %p102 = scmp.eq.s32.totalorder %s16, 0
      %p103 = por %p101, %p102
      %p104 = scmp.ne.s32.totalorder %s90, %s91
      %p105 = scmp.eq.s32.totalorder %s17, 4
      %p106 = por %p104, %p105
      %p108 = scmp.ne.s32.totalorder %s91, %s107
      %p109 = scmp.eq.s32.totalorder %s17, 0
      %p110 = por %p108, %p109
      %s111 = ssub.s32 %s18, %s30
      %p112 = scmp.eq.s32.totalorder %s111, 0
      %s114 = sadd.s32 %s113, 1
      %s115 = scalar_select %p112, %s113, %s114
      %p118 = pneg %p112
      %p119 = scmp.eq.s32.totalorder %s11, 4
      %p120 = por %p118, %p119
      %p121 = scmp.ne.s32.totalorder %s113, %s116
      %p122 = scmp.eq.s32.totalorder %s11, 0
      %p123 = por %p121, %p122
      %p124 = scmp.ne.s32.totalorder %s113, %s116
      %p125 = scmp.eq.s32.totalorder %s16, 4
      %p126 = por %p124, %p125
      %p127 = scmp.ne.s32.totalorder %s116, %s117
      %p128 = scmp.eq.s32.totalorder %s16, 0
      %p129 = por %p127, %p128
      %p130 = scmp.ne.s32.totalorder %s116, %s117
      %p131 = scmp.eq.s32.totalorder %s17, 4
      %p132 = por %p130, %p131
      %p134 = scmp.ne.s32.totalorder %s117, %s133
      %p135 = scmp.eq.s32.totalorder %s17, 0
      %p136 = por %p134, %p135
      %s137 = ssub.s32 %s18, %s30
      %p138 = scmp.eq.s32.totalorder %s137, 0
      %s140 = sadd.s32 %s139, 1
      %s141 = scalar_select %p138, %s139, %s140
      %p144 = pneg %p138
      %p145 = scmp.eq.s32.totalorder %s11, 4
      %p146 = por %p144, %p145
      %p147 = scmp.ne.s32.totalorder %s139, %s142
      %p148 = scmp.eq.s32.totalorder %s11, 0
      %p149 = por %p147, %p148
      %p150 = scmp.ne.s32.totalorder %s139, %s142
      %p151 = scmp.eq.s32.totalorder %s16, 4
      %p152 = por %p150, %p151
      %p153 = scmp.ne.s32.totalorder %s142, %s143
      %p154 = scmp.eq.s32.totalorder %s16, 0
      %p155 = por %p153, %p154
      %p156 = scmp.ne.s32.totalorder %s142, %s143
      %p157 = scmp.eq.s32.totalorder %s17, 4
      %p158 = por %p156, %p157
      %p160 = scmp.ne.s32.totalorder %s143, %s159
      %p161 = scmp.eq.s32.totalorder %s17, 0
      %p162 = por %p160, %p161
      %p163 = scmp.le.s32.totalorder 1, %s11
      %p164 = scmp.lt.s32.totalorder %s11, 6
      %p165 = pnand %p163, %p164
      %p166 = pneg %p165
      // Predicated region
      $region9: #{resnet_small_forward.19} parent=5 // pred_check
        _
      $region10: #{resnet_small_forward.19} parent=5 // pred_check_branch
        %168 = sbr.rel (%p165) target = $region12
      $region11: #{resnet_small_forward.19} parent=5 // pred_region
        %s169 = ssub.s32 %s11, 1
        // Predicated region
        $region13: #{resnet_small_forward.19} parent=11 // pred_check
          %p170 = pneg %p103
        $region14: #{resnet_small_forward.19} parent=11 // pred_check_branch
          %172 = sbr.rel (%p170) target = $region16
        $region15: #{resnet_small_forward.19} parent=11 // pred_region
          %p173 = scmp.lt.s32.totalorder %s20, 0
          %s174 = scalar_select %p173, %s20, 0
          %s175 = scalar_lea.vmem %s2, %s174
        $region16: #{resnet_small_forward.19} parent=11 // pred_fallthru
          _
        // Predicated region
        $region17: #{resnet_small_forward.19} parent=11 // pred_check
          %p176 = pneg %p129
        $region18: #{resnet_small_forward.19} parent=11 // pred_check_branch
          %178 = sbr.rel (%p176) target = $region20
        $region19: #{resnet_small_forward.19} parent=11 // pred_region
          %180 = vsyncadd [#allocation4], 0
          %s181 = scalar_lea.hbm %s3, %s20
          %s183 = sshll.u32 %s181, 4
          %s184 = int_to_ptr.hbm [resolvable:$true] %s183
          %s185 = sshll.u32 [#allocation3], 4
          %s186 = int_to_ptr.vmem [resolvable:$true] %s185
          %188 = dma.hbm_to_vmem [thread:$0]  %s184, 16, %s186, [#allocation4]
        $region20: #{resnet_small_forward.19} parent=11 // pred_fallthru
          _
      $region12: #{resnet_small_forward.19} parent=5 // pred_fallthru
        _
      %p189 = scmp.lt.s32.totalorder %s11, 5
      // Predicated region
      $region21: #{resnet_small_forward.19} parent=5 // pred_check
        %p190 = pneg %p189
      $region22: #{resnet_small_forward.19} parent=5 // pred_check_branch
        %192 = sbr.rel (%p190) target = $region24
      $region23: #{resnet_small_forward.19} parent=5 // pred_region
        // Predicated region
        $region25: #{resnet_small_forward.19} parent=23 // pred_check
          %p193 = pneg %p43
        $region26: #{resnet_small_forward.19} parent=23 // pred_check_branch
          %195 = sbr.rel (%p193) target = $region28
        $region27: #{resnet_small_forward.19} parent=23 // pred_region
          %p196 = scmp.lt.s32.totalorder %s19, 4
          %s197 = scalar_select %p196, %s19, 4
          %s198 = smul.addr %s197, 4
          %s199 = scalar_lea.vmem %s0, %s198
        $region28: #{resnet_small_forward.19} parent=23 // pred_fallthru
          _
        // Predicated region
        $region29: #{resnet_small_forward.19} parent=23 // pred_check
          %p200 = pneg %p71
        $region30: #{resnet_small_forward.19} parent=23 // pred_check_branch
          %202 = sbr.rel (%p200) target = $region32
        $region31: #{resnet_small_forward.19} parent=23 // pred_region
          %s203 = smul.u32 16, %s19
          %p204 = scmp.lt.s32.totalorder %s203, 79
          %s205 = scalar_select %p204, %s203, 79
          %p206 = scmp.lt.s32.totalorder %s18, 0
          %s207 = scalar_select %p206, %s18, 0
          %s208 = sadd.s32 %s207, %s205
          %s209 = smul.addr %s208, 4
          %s210 = scalar_lea.vmem %s1, %s209
          %s211 = smul.u32 16, %s19
        $region32: #{resnet_small_forward.19} parent=23 // pred_fallthru
          _
      $region24: #{resnet_small_forward.19} parent=5 // pred_fallthru
        _
      %p212 = scmp.le.s32.totalorder 1, %s11
      %p213 = scmp.lt.s32.totalorder %s11, 6
      %p214 = pnand %p212, %p213
      %p215 = pneg %p214
      // Predicated region
      $region33: #{resnet_small_forward.19} parent=5 // pred_check
        _
      $region34: #{resnet_small_forward.19} parent=5 // pred_check_branch
        %217 = sbr.rel (%p214) target = $region36
      $region35: #{resnet_small_forward.19} parent=5 // pred_region
        %s218 = ssub.s32 %s11, 1
        // Predicated region
        $region37: #{resnet_small_forward.19} parent=35 // pred_check
          %p219 = pneg %p129
        $region38: #{resnet_small_forward.19} parent=35 // pred_check_branch
          %221 = sbr.rel (%p219) target = $region40
        $region39: #{resnet_small_forward.19} parent=35 // pred_region
          %223 = dma.done [#allocation4], 16
        $region40: #{resnet_small_forward.19} parent=35 // pred_fallthru
          _
        %p224 = scmp.lt.s32.totalorder %s21, 4
        %s225 = scalar_select %p224, %s21, 4
        %s226 = smul.addr %s225, 4
        %s227 = scalar_lea.vmem %s0, %s226
        %p228 = pneg %p49
        %p229 = pneg %p46
        %s230 = smul.u32 16, %s21
        %p231 = scmp.lt.s32.totalorder %s230, 79
        %s232 = scalar_select %p231, %s230, 79
        %p233 = scmp.lt.s32.totalorder %s20, 0
        %s234 = scalar_select %p233, %s20, 0
        %s235 = sadd.s32 %s234, %s232
        %s236 = smul.addr %s235, 4
        %s237 = scalar_lea.vmem %s1, %s236
        %p238 = pneg %p77
        %p239 = pneg %p74
        %p240 = scmp.lt.s32.totalorder %s20, 0
        %s241 = scalar_select %p240, %s20, 0
        %s242 = scalar_lea.vmem %s2, %s241
        %p243 = pneg %p103
        %p244 = pneg %p100
        %p245 = pneg %p129
        %p246 = pneg %p126
        %p247 = pneg %p155
        %p248 = pneg %p152
        %p249 = scmp.lt.s32.totalorder %s20, 0
        %s250 = scalar_select %p249, %s20, 0
        %s251 = smul.addr %s250, 8
        %s252 = scalar_lea.vmem %s4, %s251
        %p253 = scmp.lt.s32.totalorder %s21, 4
        %s254 = scalar_select %p253, %s21, 4
        %s255 = smul.addr %s254, 4
        %s256 = scalar_lea.vmem %s0, %s255
        %s257 = smul.u32 16, %s21
        %p258 = scmp.lt.s32.totalorder %s257, 79
        %s259 = scalar_select %p258, %s257, 79
        %p260 = scmp.lt.s32.totalorder %s20, 0
        %s261 = scalar_select %p260, %s20, 0
        %s262 = sadd.s32 %s261, %s259
        %s263 = smul.addr %s262, 4
        %s264 = scalar_lea.vmem %s1, %s263
        %s265 = smul.u32 16, %s21
        %p266 = scmp.lt.s32.totalorder %s20, 0
        %s267 = scalar_select %p266, %s20, 0
        %s268 = scalar_lea.vmem %s2, %s267
        %p269 = scmp.lt.s32.totalorder %s20, 0
        %s270 = scalar_select %p269, %s20, 0
        %s271 = smul.addr %s270, 8
        %s272 = scalar_lea.vmem %s4, %s271
        %p273 = scmp.eq.s32.totalorder %s21, 0
        // Predicated region
        $region41: #{resnet_small_forward.19} parent=35 // pred_check
          %p274 = pneg %p273
        $region42: #{resnet_small_forward.19} parent=35 // pred_check_branch
          %276 = sbr.rel (%p274) target = $region44
        $region43: #{resnet_small_forward.19} parent=35 // pred_region
          %277 = vst [vmem:[#allocation2] sm:$0xff] 0.0
        $region44: #{resnet_small_forward.19} parent=35 // pred_fallthru
          _
        %v278 = vld [vmem:[#allocation2] sm:$0xff]
        %v279 = vld [vmem:[%s256] sm:$0xf]
        %v280 = vld [vmem:[%s264] sm:$0xf]
        %v281 = vld [vmem:[%s264 + $0x4] sm:$0xf]
        %v282 = vld [vmem:[%s264 + $0x8] sm:$0xf]
        %v283 = vld [vmem:[%s264 + $0xc] sm:$0xf]
        %v284 = vld [vmem:[%s264 + $0x10] sm:$0xf]
        %v285 = vld [vmem:[%s264 + $0x14] sm:$0xf]
        %v286 = vld [vmem:[%s264 + $0x18] sm:$0xf]
        %v287 = vld [vmem:[%s264 + $0x1c] sm:$0xf]
        %v288 = vld [vmem:[%s264 + $0x20] sm:$0xf]
        %v289 = vld [vmem:[%s264 + $0x24] sm:$0xf]
        %v290 = vld [vmem:[%s264 + $0x28] sm:$0xf]
        %v291 = vld [vmem:[%s264 + $0x2c] sm:$0xf]
        %v292 = vld [vmem:[%s264 + $0x30] sm:$0xf]
        %v293 = vld [vmem:[%s264 + $0x34] sm:$0xf]
        %v294 = vld [vmem:[%s264 + $0x38] sm:$0xf]
        %v295 = vld [vmem:[%s264 + $0x3c] sm:$0xf]
        %v312 = vunpack.c.l.b16 %v280
        %v313 = vunpack.c.l.b16 %v281
        %v314 = vunpack.c.l.b16 %v282
        %v315 = vunpack.c.l.b16 %v283
        %v316 = vunpack.c.l.b16 %v284
        %v317 = vunpack.c.l.b16 %v285
        %v318 = vunpack.c.l.b16 %v286
        %v319 = vunpack.c.l.b16 %v287
        %v320 = vunpack.c.l.b16 %v288
        %v321 = vunpack.c.l.b16 %v289
        %v322 = vunpack.c.l.b16 %v290
        %v323 = vunpack.c.l.b16 %v291
        %v324 = vunpack.c.l.b16 %v292
        %v325 = vunpack.c.l.b16 %v293
        %v326 = vunpack.c.l.b16 %v294
        %v327 = vunpack.c.l.b16 %v295
        %v328 = vpack.c.b16 %v313, %v312
        %v329 = vpack.c.b16 %v315, %v314
        %v330 = vpack.c.b16 %v317, %v316
        %v331 = vpack.c.b16 %v319, %v318
        %v332 = vpack.c.b16 %v321, %v320
        %v333 = vpack.c.b16 %v323, %v322
        %v334 = vpack.c.b16 %v325, %v324
        %v335 = vpack.c.b16 %v327, %v326
        %344 = vmatpush.bf16.msra.mxu0 %v335
        %345 = vmatpush.bf16.msra.mxu0 %v334
        %346 = vmatpush.bf16.msra.mxu0 %v333
        %347 = vmatpush.bf16.msra.mxu0 %v332
        %348 = vmatpush.bf16.msra.mxu0 %v331
        %349 = vmatpush.bf16.msra.mxu0 %v330
        %350 = vmatpush.bf16.msra.mxu0 %v329
        %351 = vmatpush.bf16.msra.mxu0 %v328
        %352 = vmatmul.bf16.gmra.mxu0 %v279
        %v353 = vpop.f32.mrf.mxu0
        %v354 = vadd.f32 0.0, %v353
        %v355 = vpop.f32.mrf.mxu0
        %356 = vdwg.mxu0
        %v357 = vadd.f32 %v278, %v354
        %358 = vst [vmem:[#allocation2] sm:$0xff] %v357
        %p359 = scmp.eq.s32.totalorder %s21, 4
        // Predicated region
        $region45: #{resnet_small_forward.19} parent=35 // pred_check
          %p360 = pneg %p359
        $region46: #{resnet_small_forward.19} parent=35 // pred_check_branch
          %362 = sbr.rel (%p360) target = $region48
        $region47: #{resnet_small_forward.19} parent=35 // pred_region
          %v363 = vld [vmem:[#allocation2] sm:$0xff]
          %v364 = vrot.slane %v363, 4
          %v365 = vadd.f32 %v363, %v364
          %v366 = vrot.slane %v365, 2
          %v367 = vadd.f32 %v365, %v366
          %v368 = vrot.slane %v367, 1
          %v369 = vadd.f32 %v367, %v368
          %v370 = vmul.f32 %v369, 0.125
          %v371 = vmul.f32 %v363, %v363
          %v372 = vrot.slane %v371, 4
          %v373 = vadd.f32 %v371, %v372
          %v374 = vrot.slane %v373, 2
          %v375 = vadd.f32 %v373, %v374
          %v376 = vrot.slane %v375, 1
          %v377 = vadd.f32 %v375, %v376
          %v378 = vmul.f32 %v377, 0.125
          %v379 = vmul.f32 %v370, %v370
          %v380 = vsub.f32 %v378, %v379
          %v381 = vadd.f32 %v380, 1e-05
          %v382 = vrsqrt.pop %v381
          %v383 = vmul.f32 %v382, %v381
          %v384 = vmul.f32 %v383, %v382
          %v385 = vmul.f32 0.5, %v384
          %v386 = vsub.f32 1.5, %v385
          %v387 = vmul.f32 %v382, %v386
          %vm388 = vweird.f32 %v381
          %vm389 = vweird.f32 %v382
          %vm390 = vmor %vm388, %vm389
          %v391 = vsel %vm390, %v382, %v387
          %v392 = vld [vmem:[%s268] sm:$0x1]
          %v393 = vmul.f32 %v391, %v392
          %v394 = vld [vmem:[#allocation3] sm:$0x1]
          %v395 = vmul.f32 %v370, %v393
          %v396 = vsub.f32 %v394, %v395
          %v397 = vperm.slane %v393, 0
          %v398 = vmul.f32 %v363, %v397
          %v400 = vperm.slane %v396, 0
          %v402 = vadd.f32 %v398, %v400
          %v403 = vmax.f32 %v402, 0.0
          %404 = vst [vmem:[%s272] sm:$0xff] %v403
        $region48: #{resnet_small_forward.19} parent=35 // pred_fallthru
          _
        %p405 = scmp.lt.s32.totalorder %s20, 0
        %s406 = scalar_select %p405, %s20, 0
        %s407 = smul.addr %s406, 8
        %s408 = scalar_lea.vmem %s4, %s407
        // Predicated region
        $region49: #{resnet_small_forward.19} parent=35 // pred_check
          %p409 = pneg %p152
        $region50: #{resnet_small_forward.19} parent=35 // pred_check_branch
          %411 = sbr.rel (%p409) target = $region52
        $region51: #{resnet_small_forward.19} parent=35 // pred_region
          _
        $region52: #{resnet_small_forward.19} parent=35 // pred_fallthru
          _
        // Predicated region
        $region53: #{resnet_small_forward.19} parent=35 // pred_check
          %p412 = pneg %p152
        $region54: #{resnet_small_forward.19} parent=35 // pred_check_branch
          %414 = sbr.rel (%p412) target = $region56
        $region55: #{resnet_small_forward.19} parent=35 // pred_region
          %p415 = scmp.lt.s32.totalorder %s20, 0
          %s416 = scalar_select %p415, %s20, 0
          %s417 = smul.addr %s416, 8
          %s418 = scalar_lea.vmem %s4, %s417
        $region56: #{resnet_small_forward.19} parent=35 // pred_fallthru
          _
      $region36: #{resnet_small_forward.19} parent=5 // pred_fallthru
        _
      %p419 = scmp.le.s32.totalorder 2, %s11
      // Predicated region
      $region57: #{resnet_small_forward.19} parent=5 // pred_check
        %p420 = pneg %p419
      $region58: #{resnet_small_forward.19} parent=5 // pred_check_branch
        %422 = sbr.rel (%p420) target = $region60
      $region59: #{resnet_small_forward.19} parent=5 // pred_region
        %s423 = ssub.s32 %s11, 2
      $region60: #{resnet_small_forward.19} parent=5 // pred_fallthru
        _
    $region6: #{resnet_small_forward.19} parent=1 // loop_footer
      %s15 = sadd.s32 1, %s11
    $region7: #{resnet_small_forward.19} parent=1 // loop_footer_branch
      %10 = sbr.rel target = $region3
    $region8: #{resnet_small_forward.19} parent=1 // loop_exit
      _
    %424 = vsyncpa [#allocation4], 1
    %s425 = scalar_lea.sflag [#allocation4], 1
    %426 = vsyncpa %s425, 1

// kernel: resnet_small_forward.21
$region0: #{resnet_small_forward.21}
  #allocation0 [shape = 'u32[]', space=smem, size = 0x4, offset = 0x4, fixed_abs, tag = 'smem constant byte address 0x4 - core index']
  #allocation1 [shape = 'u32[72,128]{1,0:T(1,128)}', space=vmem, size = 0x9000, scoped, tag = 'internal scratch']
  #allocation2 [shape = 'f32[8,128]{1,0:T(8,128)}', space=vmem, size = 0x1000, scoped, tag = 'scratch operand']
  %s0 = inlined_call_operand.vmem [shape: bf16[8,1152], index: 0, kind: input, shape index: {}]
  %s1 = inlined_call_operand.vmem [shape: bf16[1152,128], index: 1, kind: input, shape index: {}]
  %s2 = inlined_call_operand.hbm [shape: f32[1,128], index: 2, kind: input, shape index: {}]
  %s3 = inlined_call_operand.hbm [shape: f32[1,128], index: 3, kind: input, shape index: {}]
  %s4 = inlined_call_operand.vmem [shape: f32[8,128], index: 4, kind: input, shape index: {}]
  %s5 = inlined_call_operand.vmem [shape: f32[8,128], index: 5, kind: output, shape index: {}]
  %s6 = sld [smem:[#allocation0]]
  $region69: #{resnet_small_forward.21} parent=0
    _
  %s8 = ssub.s32 1, %s6
  %s9 = scalar_select 0, %s8, %s6
  $region1: #{resnet_small_forward.21} parent=0
    #allocation3 [shape = 'u8[512]{0}', space=vmem, size = 0x400, scoped, tag = 'input window, operand 2, single buffered']
    #allocation4 [shape = 's32[2]{0}', space=sflag, size = 0x8, scoped, tag = 'scoped memory for resnet_small_forward.21']
    #allocation5 [shape = 'u8[512]{0}', space=vmem, size = 0x400, scoped, tag = 'input window, operand 3, single buffered']
    #allocation6 [shape = 's32[1]{0}', space=sflag, size = 0x4, scoped, tag = 'scoped memory for resnet_small_forward.21']
    %10 = vsyncpa [#allocation4], 0
    %11 = vsyncpa [#allocation6], 0
    loop: start=0, step=1, limit=11
    $region2: #{resnet_small_forward.21} parent=1 // loop_pre_header
      _
    $region3: #{resnet_small_forward.21} parent=1 // loop_header
      %s13 = sphi 0, %s17
      %p14 = scmp.ge.s32.totalorder %s13, 11
      %s20 = sphi 0, %s32
      %s21 = sphi 0, %s28
      %s22 = sphi 0, %s20
      %s23 = sphi 0, %s21
      %s24 = sphi 0, %s22
      %s25 = sphi 0, %s23
      %s35 = sphi 0, %s37
      %s38 = sphi 0, %s35
      %s39 = sphi 0, %s38
      %s55 = sphi 0, %s39
      %s63 = sphi 0, %s65
      %s66 = sphi 0, %s63
      %s67 = sphi 0, %s66
      %s83 = sphi 0, %s67
      %s89 = sphi 0, %s91
      %s92 = sphi 0, %s89
      %s93 = sphi 0, %s92
      %s109 = sphi 0, %s93
      %s115 = sphi 0, %s117
      %s118 = sphi 0, %s115
      %s119 = sphi 0, %s118
      %s135 = sphi 0, %s119
      %s141 = sphi 0, %s143
      %s144 = sphi 0, %s141
      %s145 = sphi 0, %s144
      %s161 = sphi 0, %s145
      %s167 = sphi 0, %s169
      %s170 = sphi 0, %s167
      %s171 = sphi 0, %s170
      %s187 = sphi 0, %s171
    $region4: #{resnet_small_forward.21} parent=1 // loop_header_branch
      %16 = sbr.rel (%p14) target = $region8
    $region5: #{resnet_small_forward.21} parent=1 // loop_body
      %s18 = ssub.s32 %s13, 1
      %s19 = ssub.s32 %s13, 2
      %s26 = sadd.s32 1, %s21
      %p27 = scmp.ge.s32.totalorder %s26, 9
      %s28 = scalar_select %p27, 0, %s26
      %s29 = sadd.s32 1, %s20
      %s30 = scalar_select %p27, %s29, %s20
      %p31 = scmp.ge.s32.totalorder %s30, 1
      %s32 = scalar_select %p31, 0, %s30
      %s33 = ssub.s32 %s21, %s28
      %p34 = scmp.eq.s32.totalorder %s33, 0
      %s36 = sadd.s32 %s35, 1
      %s37 = scalar_select %p34, %s35, %s36
      %p40 = pneg %p34
      %p41 = scmp.eq.s32.totalorder %s13, 8
      %p42 = por %p40, %p41
      %p43 = scmp.ne.s32.totalorder %s35, %s38
      %p44 = scmp.eq.s32.totalorder %s13, 0
      %p45 = por %p43, %p44
      %p46 = scmp.ne.s32.totalorder %s35, %s38
      %p47 = scmp.eq.s32.totalorder %s18, 8
      %p48 = por %p46, %p47
      %p49 = scmp.ne.s32.totalorder %s38, %s39
      %p50 = scmp.eq.s32.totalorder %s18, 0
      %p51 = por %p49, %p50
      %p52 = scmp.ne.s32.totalorder %s38, %s39
      %p53 = scmp.eq.s32.totalorder %s19, 8
      %p54 = por %p52, %p53
      %p56 = scmp.ne.s32.totalorder %s39, %s55
      %p57 = scmp.eq.s32.totalorder %s19, 0
      %p58 = por %p56, %p57
      %s59 = ssub.s32 %s21, %s28
      %s60 = ssub.s32 %s20, %s32
      %s61 = sor.u32 %s59, %s60
      %p62 = scmp.eq.s32.totalorder %s61, 0
      %s64 = sadd.s32 %s63, 1
      %s65 = scalar_select %p62, %s63, %s64
      %p68 = pneg %p62
      %p69 = scmp.eq.s32.totalorder %s13, 8
      %p70 = por %p68, %p69
      %p71 = scmp.ne.s32.totalorder %s63, %s66
      %p72 = scmp.eq.s32.totalorder %s13, 0
      %p73 = por %p71, %p72
      %p74 = scmp.ne.s32.totalorder %s63, %s66
      %p75 = scmp.eq.s32.totalorder %s18, 8
      %p76 = por %p74, %p75
      %p77 = scmp.ne.s32.totalorder %s66, %s67
      %p78 = scmp.eq.s32.totalorder %s18, 0
      %p79 = por %p77, %p78
      %p80 = scmp.ne.s32.totalorder %s66, %s67
      %p81 = scmp.eq.s32.totalorder %s19, 8
      %p82 = por %p80, %p81
      %p84 = scmp.ne.s32.totalorder %s67, %s83
      %p85 = scmp.eq.s32.totalorder %s19, 0
      %p86 = por %p84, %p85
      %s87 = ssub.s32 %s20, %s32
      %p88 = scmp.eq.s32.totalorder %s87, 0
      %s90 = sadd.s32 %s89, 1
      %s91 = scalar_select %p88, %s89, %s90
      %p94 = pneg %p88
      %p95 = scmp.eq.s32.totalorder %s13, 8
      %p96 = por %p94, %p95
      %p97 = scmp.ne.s32.totalorder %s89, %s92
      %p98 = scmp.eq.s32.totalorder %s13, 0
      %p99 = por %p97, %p98
      %p100 = scmp.ne.s32.totalorder %s89, %s92
      %p101 = scmp.eq.s32.totalorder %s18, 8
      %p102 = por %p100, %p101
      %p103 = scmp.ne.s32.totalorder %s92, %s93
      %p104 = scmp.eq.s32.totalorder %s18, 0
      %p105 = por %p103, %p104
      %p106 = scmp.ne.s32.totalorder %s92, %s93
      %p107 = scmp.eq.s32.totalorder %s19, 8
      %p108 = por %p106, %p107
      %p110 = scmp.ne.s32.totalorder %s93, %s109
      %p111 = scmp.eq.s32.totalorder %s19, 0
      %p112 = por %p110, %p111
      %s113 = ssub.s32 %s20, %s32
      %p114 = scmp.eq.s32.totalorder %s113, 0
      %s116 = sadd.s32 %s115, 1
      %s117 = scalar_select %p114, %s115, %s116
      %p120 = pneg %p114
      %p121 = scmp.eq.s32.totalorder %s13, 8
      %p122 = por %p120, %p121
      %p123 = scmp.ne.s32.totalorder %s115, %s118
      %p124 = scmp.eq.s32.totalorder %s13, 0
      %p125 = por %p123, %p124
      %p126 = scmp.ne.s32.totalorder %s115, %s118
      %p127 = scmp.eq.s32.totalorder %s18, 8
      %p128 = por %p126, %p127
      %p129 = scmp.ne.s32.totalorder %s118, %s119
      %p130 = scmp.eq.s32.totalorder %s18, 0
      %p131 = por %p129, %p130
      %p132 = scmp.ne.s32.totalorder %s118, %s119
      %p133 = scmp.eq.s32.totalorder %s19, 8
      %p134 = por %p132, %p133
      %p136 = scmp.ne.s32.totalorder %s119, %s135
      %p137 = scmp.eq.s32.totalorder %s19, 0
      %p138 = por %p136, %p137
      %s139 = ssub.s32 %s20, %s32
      %p140 = scmp.eq.s32.totalorder %s139, 0
      %s142 = sadd.s32 %s141, 1
      %s143 = scalar_select %p140, %s141, %s142
      %p146 = pneg %p140
      %p147 = scmp.eq.s32.totalorder %s13, 8
      %p148 = por %p146, %p147
      %p149 = scmp.ne.s32.totalorder %s141, %s144
      %p150 = scmp.eq.s32.totalorder %s13, 0
      %p151 = por %p149, %p150
      %p152 = scmp.ne.s32.totalorder %s141, %s144
      %p153 = scmp.eq.s32.totalorder %s18, 8
      %p154 = por %p152, %p153
      %p155 = scmp.ne.s32.totalorder %s144, %s145
      %p156 = scmp.eq.s32.totalorder %s18, 0
      %p157 = por %p155, %p156
      %p158 = scmp.ne.s32.totalorder %s144, %s145
      %p159 = scmp.eq.s32.totalorder %s19, 8
      %p160 = por %p158, %p159
      %p162 = scmp.ne.s32.totalorder %s145, %s161
      %p163 = scmp.eq.s32.totalorder %s19, 0
      %p164 = por %p162, %p163
      %s165 = ssub.s32 %s20, %s32
      %p166 = scmp.eq.s32.totalorder %s165, 0
      %s168 = sadd.s32 %s167, 1
      %s169 = scalar_select %p166, %s167, %s168
      %p172 = pneg %p166
      %p173 = scmp.eq.s32.totalorder %s13, 8
      %p174 = por %p172, %p173
      %p175 = scmp.ne.s32.totalorder %s167, %s170
      %p176 = scmp.eq.s32.totalorder %s13, 0
      %p177 = por %p175, %p176
      %p178 = scmp.ne.s32.totalorder %s167, %s170
      %p179 = scmp.eq.s32.totalorder %s18, 8
      %p180 = por %p178, %p179
      %p181 = scmp.ne.s32.totalorder %s170, %s171
      %p182 = scmp.eq.s32.totalorder %s18, 0
      %p183 = por %p181, %p182
      %p184 = scmp.ne.s32.totalorder %s170, %s171
      %p185 = scmp.eq.s32.totalorder %s19, 8
      %p186 = por %p184, %p185
      %p188 = scmp.ne.s32.totalorder %s171, %s187
      %p189 = scmp.eq.s32.totalorder %s19, 0
      %p190 = por %p188, %p189
      %p191 = scmp.le.s32.totalorder 1, %s13
      %p192 = scmp.lt.s32.totalorder %s13, 10
      %p193 = pnand %p191, %p192
      %p194 = pneg %p193
      // Predicated region
      $region9: #{resnet_small_forward.21} parent=5 // pred_check
        _
      $region10: #{resnet_small_forward.21} parent=5 // pred_check_branch
        %196 = sbr.rel (%p193) target = $region12
      $region11: #{resnet_small_forward.21} parent=5 // pred_region
        %s197 = ssub.s32 %s13, 1
        // Predicated region
        $region13: #{resnet_small_forward.21} parent=11 // pred_check
          %p198 = pneg %p105
        $region14: #{resnet_small_forward.21} parent=11 // pred_check_branch
          %200 = sbr.rel (%p198) target = $region16
        $region15: #{resnet_small_forward.21} parent=11 // pred_region
          %202 = vsyncadd [#allocation4], 0
          %s203 = scalar_lea.hbm %s2, %s22
          %s205 = sshll.u32 %s203, 4
          %s206 = int_to_ptr.hbm [resolvable:$true] %s205
          %s207 = sshll.u32 [#allocation3], 4
          %s208 = int_to_ptr.vmem [resolvable:$true] %s207
          %210 = dma.hbm_to_vmem [thread:$0]  %s206, 16, %s208, [#allocation4]
        $region16: #{resnet_small_forward.21} parent=11 // pred_fallthru
          _
        // Predicated region
        $region17: #{resnet_small_forward.21} parent=11 // pred_check
          %p211 = pneg %p131
        $region18: #{resnet_small_forward.21} parent=11 // pred_check_branch
          %213 = sbr.rel (%p211) target = $region20
        $region19: #{resnet_small_forward.21} parent=11 // pred_region
          %215 = vsyncadd [#allocation6], 0
          %s216 = scalar_lea.hbm %s3, %s22
          %s218 = sshll.u32 %s216, 4
          %s219 = int_to_ptr.hbm [resolvable:$true] %s218
          %s220 = sshll.u32 [#allocation5], 4
          %s221 = int_to_ptr.vmem [resolvable:$true] %s220
          %223 = dma.hbm_to_vmem [thread:$0]  %s219, 16, %s221, [#allocation6]
        $region20: #{resnet_small_forward.21} parent=11 // pred_fallthru
          _
        // Predicated region
        $region21: #{resnet_small_forward.21} parent=11 // pred_check
          %p224 = pneg %p157
        $region22: #{resnet_small_forward.21} parent=11 // pred_check_branch
          %226 = sbr.rel (%p224) target = $region24
        $region23: #{resnet_small_forward.21} parent=11 // pred_region
          %p227 = scmp.lt.s32.totalorder %s22, 0
          %s228 = scalar_select %p227, %s22, 0
          %s229 = smul.addr %s228, 8
          %s230 = scalar_lea.vmem %s4, %s229
        $region24: #{resnet_small_forward.21} parent=11 // pred_fallthru
          _
      $region12: #{resnet_small_forward.21} parent=5 // pred_fallthru
        _
      %p231 = scmp.lt.s32.totalorder %s13, 9
      // Predicated region
      $region25: #{resnet_small_forward.21} parent=5 // pred_check
        %p232 = pneg %p231
      $region26: #{resnet_small_forward.21} parent=5 // pred_check_branch
        %234 = sbr.rel (%p232) target = $region28
      $region27: #{resnet_small_forward.21} parent=5 // pred_region
        // Predicated region
        $region29: #{resnet_small_forward.21} parent=27 // pred_check
          %p235 = pneg %p45
        $region30: #{resnet_small_forward.21} parent=27 // pred_check_branch
          %237 = sbr.rel (%p235) target = $region32
        $region31: #{resnet_small_forward.21} parent=27 // pred_region
          %p238 = scmp.lt.s32.totalorder %s21, 8
          %s239 = scalar_select %p238, %s21, 8
          %s240 = smul.addr %s239, 4
          %s241 = scalar_lea.vmem %s0, %s240
        $region32: #{resnet_small_forward.21} parent=27 // pred_fallthru
          _
        // Predicated region
        $region33: #{resnet_small_forward.21} parent=27 // pred_check
          %p242 = pneg %p73
        $region34: #{resnet_small_forward.21} parent=27 // pred_check_branch
          %244 = sbr.rel (%p242) target = $region36
        $region35: #{resnet_small_forward.21} parent=27 // pred_region
          %s245 = smul.u32 16, %s21
          %p246 = scmp.lt.s32.totalorder %s245, 143
          %s247 = scalar_select %p246, %s245, 143
          %p248 = scmp.lt.s32.totalorder %s20, 0
          %s249 = scalar_select %p248, %s20, 0
          %s250 = sadd.s32 %s249, %s247
          %s251 = smul.addr %s250, 4
          %s252 = scalar_lea.vmem %s1, %s251
          %s253 = smul.u32 16, %s21
        $region36: #{resnet_small_forward.21} parent=27 // pred_fallthru
          _
      $region28: #{resnet_small_forward.21} parent=5 // pred_fallthru
        _
      %p254 = scmp.le.s32.totalorder 1, %s13
      %p255 = scmp.lt.s32.totalorder %s13, 10
      %p256 = pnand %p254, %p255
      %p257 = pneg %p256
      // Predicated region
      $region37: #{resnet_small_forward.21} parent=5 // pred_check
        _
      $region38: #{resnet_small_forward.21} parent=5 // pred_check_branch
        %259 = sbr.rel (%p256) target = $region40
      $region39: #{resnet_small_forward.21} parent=5 // pred_region
        %s260 = ssub.s32 %s13, 1
        // Predicated region
        $region41: #{resnet_small_forward.21} parent=39 // pred_check
          %p261 = pneg %p105
        $region42: #{resnet_small_forward.21} parent=39 // pred_check_branch
          %263 = sbr.rel (%p261) target = $region44
        $region43: #{resnet_small_forward.21} parent=39 // pred_region
          %265 = dma.done [#allocation4], 16
        $region44: #{resnet_small_forward.21} parent=39 // pred_fallthru
          _
        // Predicated region
        $region45: #{resnet_small_forward.21} parent=39 // pred_check
          %p266 = pneg %p131
        $region46: #{resnet_small_forward.21} parent=39 // pred_check_branch
          %268 = sbr.rel (%p266) target = $region48
        $region47: #{resnet_small_forward.21} parent=39 // pred_region
          %270 = dma.done [#allocation6], 16
        $region48: #{resnet_small_forward.21} parent=39 // pred_fallthru
          _
        %p271 = scmp.lt.s32.totalorder %s23, 8
        %s272 = scalar_select %p271, %s23, 8
        %s273 = smul.addr %s272, 4
        %s274 = scalar_lea.vmem %s0, %s273
        %p275 = pneg %p51
        %p276 = pneg %p48
        %s277 = smul.u32 16, %s23
        %p278 = scmp.lt.s32.totalorder %s277, 143
        %s279 = scalar_select %p278, %s277, 143
        %p280 = scmp.lt.s32.totalorder %s22, 0
        %s281 = scalar_select %p280, %s22, 0
        %s282 = sadd.s32 %s281, %s279
        %s283 = smul.addr %s282, 4
        %s284 = scalar_lea.vmem %s1, %s283
        %p285 = pneg %p79
        %p286 = pneg %p76
        %p287 = pneg %p105
        %p288 = pneg %p102
        %p289 = pneg %p131
        %p290 = pneg %p128
        %p291 = scmp.lt.s32.totalorder %s22, 0
        %s292 = scalar_select %p291, %s22, 0
        %s293 = smul.addr %s292, 8
        %s294 = scalar_lea.vmem %s4, %s293
        %p295 = pneg %p157
        %p296 = pneg %p154
        %p297 = pneg %p183
        %p298 = pneg %p180
        %p299 = scmp.lt.s32.totalorder %s22, 0
        %s300 = scalar_select %p299, %s22, 0
        %s301 = smul.addr %s300, 8
        %s302 = scalar_lea.vmem %s5, %s301
        %p303 = scmp.lt.s32.totalorder %s23, 8
        %s304 = scalar_select %p303, %s23, 8
        %s305 = smul.addr %s304, 4
        %s306 = scalar_lea.vmem %s0, %s305
        %s307 = smul.u32 16, %s23
        %p308 = scmp.lt.s32.totalorder %s307, 143
        %s309 = scalar_select %p308, %s307, 143
        %p310 = scmp.lt.s32.totalorder %s22, 0
        %s311 = scalar_select %p310, %s22, 0
        %s312 = sadd.s32 %s311, %s309
        %s313 = smul.addr %s312, 4
        %s314 = scalar_lea.vmem %s1, %s313
        %s315 = smul.u32 16, %s23
        %p316 = scmp.lt.s32.totalorder %s22, 0
        %s317 = scalar_select %p316, %s22, 0
        %s318 = smul.addr %s317, 8
        %s319 = scalar_lea.vmem %s4, %s318
        %p320 = scmp.lt.s32.totalorder %s22, 0
        %s321 = scalar_select %p320, %s22, 0
        %s322 = smul.addr %s321, 8
        %s323 = scalar_lea.vmem %s5, %s322
        %p324 = scmp.eq.s32.totalorder %s23, 0
        // Predicated region
        $region49: #{resnet_small_forward.21} parent=39 // pred_check
          %p325 = pneg %p324
        $region50: #{resnet_small_forward.21} parent=39 // pred_check_branch
          %327 = sbr.rel (%p325) target = $region52
        $region51: #{resnet_small_forward.21} parent=39 // pred_region
          %328 = vst [vmem:[#allocation2] sm:$0xff] 0.0
        $region52: #{resnet_small_forward.21} parent=39 // pred_fallthru
          _
        %v329 = vld [vmem:[#allocation2] sm:$0xff]
        %v330 = vld [vmem:[%s306] sm:$0xf]
        %v331 = vld [vmem:[%s314] sm:$0xf]
        %v332 = vld [vmem:[%s314 + $0x4] sm:$0xf]
        %v333 = vld [vmem:[%s314 + $0x8] sm:$0xf]
        %v334 = vld [vmem:[%s314 + $0xc] sm:$0xf]
        %v335 = vld [vmem:[%s314 + $0x10] sm:$0xf]
        %v336 = vld [vmem:[%s314 + $0x14] sm:$0xf]
        %v337 = vld [vmem:[%s314 + $0x18] sm:$0xf]
        %v338 = vld [vmem:[%s314 + $0x1c] sm:$0xf]
        %v339 = vld [vmem:[%s314 + $0x20] sm:$0xf]
        %v340 = vld [vmem:[%s314 + $0x24] sm:$0xf]
        %v341 = vld [vmem:[%s314 + $0x28] sm:$0xf]
        %v342 = vld [vmem:[%s314 + $0x2c] sm:$0xf]
        %v343 = vld [vmem:[%s314 + $0x30] sm:$0xf]
        %v344 = vld [vmem:[%s314 + $0x34] sm:$0xf]
        %v345 = vld [vmem:[%s314 + $0x38] sm:$0xf]
        %v346 = vld [vmem:[%s314 + $0x3c] sm:$0xf]
        %v363 = vunpack.c.l.b16 %v331
        %v364 = vunpack.c.l.b16 %v332
        %v365 = vunpack.c.l.b16 %v333
        %v366 = vunpack.c.l.b16 %v334
        %v367 = vunpack.c.l.b16 %v335
        %v368 = vunpack.c.l.b16 %v336
        %v369 = vunpack.c.l.b16 %v337
        %v370 = vunpack.c.l.b16 %v338
        %v371 = vunpack.c.l.b16 %v339
        %v372 = vunpack.c.l.b16 %v340
        %v373 = vunpack.c.l.b16 %v341
        %v374 = vunpack.c.l.b16 %v342
        %v375 = vunpack.c.l.b16 %v343
        %v376 = vunpack.c.l.b16 %v344
        %v377 = vunpack.c.l.b16 %v345
        %v378 = vunpack.c.l.b16 %v346
        %v379 = vpack.c.b16 %v364, %v363
        %v380 = vpack.c.b16 %v366, %v365
        %v381 = vpack.c.b16 %v368, %v367
        %v382 = vpack.c.b16 %v370, %v369
        %v383 = vpack.c.b16 %v372, %v371
        %v384 = vpack.c.b16 %v374, %v373
        %v385 = vpack.c.b16 %v376, %v375
        %v386 = vpack.c.b16 %v378, %v377
        %395 = vmatpush.bf16.msra.mxu0 %v386
        %396 = vmatpush.bf16.msra.mxu0 %v385
        %397 = vmatpush.bf16.msra.mxu0 %v384
        %398 = vmatpush.bf16.msra.mxu0 %v383
        %399 = vmatpush.bf16.msra.mxu0 %v382
        %400 = vmatpush.bf16.msra.mxu0 %v381
        %401 = vmatpush.bf16.msra.mxu0 %v380
        %402 = vmatpush.bf16.msra.mxu0 %v379
        %403 = vmatmul.bf16.gmra.mxu0 %v330
        %v404 = vpop.f32.mrf.mxu0
        %v405 = vadd.f32 0.0, %v404
        %v406 = vpop.f32.mrf.mxu0
        %407 = vdwg.mxu0
        %v408 = vadd.f32 %v329, %v405
        %409 = vst [vmem:[#allocation2] sm:$0xff] %v408
        %p410 = scmp.eq.s32.totalorder %s23, 8
        // Predicated region
        $region53: #{resnet_small_forward.21} parent=39 // pred_check
          %p411 = pneg %p410
        $region54: #{resnet_small_forward.21} parent=39 // pred_check_branch
          %413 = sbr.rel (%p411) target = $region56
        $region55: #{resnet_small_forward.21} parent=39 // pred_region
          %v414 = vld [vmem:[#allocation2] sm:$0xff]
          %v415 = vrot.slane %v414, 4
          %v416 = vadd.f32 %v414, %v415
          %v417 = vrot.slane %v416, 2
          %v418 = vadd.f32 %v416, %v417
          %v419 = vrot.slane %v418, 1
          %v420 = vadd.f32 %v418, %v419
          %v421 = vmul.f32 %v420, 0.125
          %v422 = vmul.f32 %v414, %v414
          %v423 = vrot.slane %v422, 4
          %v424 = vadd.f32 %v422, %v423
          %v425 = vrot.slane %v424, 2
          %v426 = vadd.f32 %v424, %v425
          %v427 = vrot.slane %v426, 1
          %v428 = vadd.f32 %v426, %v427
          %v429 = vmul.f32 %v428, 0.125
          %v430 = vmul.f32 %v421, %v421
          %v431 = vsub.f32 %v429, %v430
          %v432 = vadd.f32 %v431, 1e-05
          %v433 = vrsqrt.pop %v432
          %v434 = vmul.f32 %v433, %v432
          %v435 = vmul.f32 %v434, %v433
          %v436 = vmul.f32 0.5, %v435
          %v437 = vsub.f32 1.5, %v436
          %v438 = vmul.f32 %v433, %v437
          %vm439 = vweird.f32 %v432
          %vm440 = vweird.f32 %v433
          %vm441 = vmor %vm439, %vm440
          %v442 = vsel %vm441, %v433, %v438
          %v443 = vld [vmem:[#allocation3] sm:$0x1]
          %v444 = vmul.f32 %v442, %v443
          %v445 = vld [vmem:[#allocation5] sm:$0x1]
          %v446 = vmul.f32 %v421, %v444
          %v447 = vsub.f32 %v445, %v446
          %v448 = vperm.slane %v444, 0
          %v449 = vmul.f32 %v414, %v448
          %v451 = vperm.slane %v447, 0
          %v453 = vadd.f32 %v449, %v451
          %v454 = vmax.f32 %v453, 0.0
          %v455 = vld [vmem:[%s319] sm:$0xff]
          %v456 = vadd.f32 %v454, %v455
          %v457 = vmax.f32 %v456, 0.0
          %458 = vst [vmem:[%s323] sm:$0xff] %v457
        $region56: #{resnet_small_forward.21} parent=39 // pred_fallthru
          _
        %p459 = scmp.lt.s32.totalorder %s22, 0
        %s460 = scalar_select %p459, %s22, 0
        %s461 = smul.addr %s460, 8
        %s462 = scalar_lea.vmem %s5, %s461
        // Predicated region
        $region57: #{resnet_small_forward.21} parent=39 // pred_check
          %p463 = pneg %p180
        $region58: #{resnet_small_forward.21} parent=39 // pred_check_branch
          %465 = sbr.rel (%p463) target = $region60
        $region59: #{resnet_small_forward.21} parent=39 // pred_region
          _
        $region60: #{resnet_small_forward.21} parent=39 // pred_fallthru
          _
        // Predicated region
        $region61: #{resnet_small_forward.21} parent=39 // pred_check
          %p466 = pneg %p180
        $region62: #{resnet_small_forward.21} parent=39 // pred_check_branch
          %468 = sbr.rel (%p466) target = $region64
        $region63: #{resnet_small_forward.21} parent=39 // pred_region
          %p469 = scmp.lt.s32.totalorder %s22, 0
          %s470 = scalar_select %p469, %s22, 0
          %s471 = smul.addr %s470, 8
          %s472 = scalar_lea.vmem %s5, %s471
        $region64: #{resnet_small_forward.21} parent=39 // pred_fallthru
          _
      $region40: #{resnet_small_forward.21} parent=5 // pred_fallthru
        _
      %p473 = scmp.le.s32.totalorder 2, %s13
      // Predicated region
      $region65: #{resnet_small_forward.21} parent=5 // pred_check
        %p474 = pneg %p473
      $region66: #{resnet_small_forward.21} parent=5 // pred_check_branch
        %476 = sbr.rel (%p474) target = $region68
      $region67: #{resnet_small_forward.21} parent=5 // pred_region
        %s477 = ssub.s32 %s13, 2
      $region68: #{resnet_small_forward.21} parent=5 // pred_fallthru
        _
    $region6: #{resnet_small_forward.21} parent=1 // loop_footer
      %s17 = sadd.s32 1, %s13
    $region7: #{resnet_small_forward.21} parent=1 // loop_footer_branch
      %12 = sbr.rel target = $region3
    $region8: #{resnet_small_forward.21} parent=1 // loop_exit
      _
    %478 = vsyncpa [#allocation4], 1
    %s479 = scalar_lea.sflag [#allocation4], 1
    %480 = vsyncpa %s479, 1
    %481 = vsyncpa [#allocation6], 1

// kernel: resnet_small_forward.20
$region0: #{resnet_small_forward.20}
  #allocation0 [shape = 'u32[]', space=smem, size = 0x4, offset = 0x4, fixed_abs, tag = 'smem constant byte address 0x4 - core index']
  #allocation1 [shape = 'u32[72,128]{1,0:T(1,128)}', space=vmem, size = 0x9000, scoped, tag = 'internal scratch']
  #allocation2 [shape = 'f32[8,128]{1,0:T(8,128)}', space=vmem, size = 0x1000, scoped, tag = 'scratch operand']
  %s0 = inlined_call_operand.vmem [shape: bf16[8,128], index: 0, kind: input, shape index: {}]
  %s1 = inlined_call_operand.vmem [shape: bf16[128,128], index: 1, kind: input, shape index: {}]
  %s2 = inlined_call_operand.hbm [shape: f32[1,128], index: 2, kind: input, shape index: {}]
  %s3 = inlined_call_operand.hbm [shape: f32[1,128], index: 3, kind: input, shape index: {}]
  %s4 = inlined_call_operand.vmem [shape: f32[8,128], index: 4, kind: output, shape index: {}]
  %s5 = sld [smem:[#allocation0]]
  $region42: #{resnet_small_forward.20} parent=0
    _
  %s7 = ssub.s32 1, %s5
  %s8 = scalar_select 0, %s7, %s5
  $region1: #{resnet_small_forward.20} parent=0
    #allocation3 [shape = 'u8[512]{0}', space=vmem, size = 0x400, scoped, tag = 'input window, operand 2, single buffered']
    #allocation4 [shape = 's32[1]{0}', space=sflag, size = 0x4, scoped, tag = 'scoped memory for resnet_small_forward.20']
    #allocation5 [shape = 'u8[512]{0}', space=vmem, size = 0x400, scoped, tag = 'input window, operand 3, single buffered']
    #allocation6 [shape = 's32[1]{0}', space=sflag, size = 0x4, scoped, tag = 'scoped memory for resnet_small_forward.20']
    %9 = vsyncpa [#allocation4], 0
    %10 = vsyncpa [#allocation6], 0
    // Predicated region
    $region2: #{resnet_small_forward.20} parent=1 // pred_check
      _
    $region3: #{resnet_small_forward.20} parent=1 // pred_check_branch
      %12 = sbr.rel (0) target = $region5
    $region4: #{resnet_small_forward.20} parent=1 // pred_region
      _
    $region5: #{resnet_small_forward.20} parent=1 // pred_fallthru
      _
    // Predicated region
    $region6: #{resnet_small_forward.20} parent=1 // pred_check
      _
    $region7: #{resnet_small_forward.20} parent=1 // pred_check_branch
      %14 = sbr.rel (0) target = $region9
    $region8: #{resnet_small_forward.20} parent=1 // pred_region
      _
    $region9: #{resnet_small_forward.20} parent=1 // pred_fallthru
      _
    // Predicated region
    $region10: #{resnet_small_forward.20} parent=1 // pred_check
      _
    $region11: #{resnet_small_forward.20} parent=1 // pred_check_branch
      %16 = sbr.rel (0) target = $region13
    $region12: #{resnet_small_forward.20} parent=1 // pred_region
      %18 = vsyncadd [#allocation4], 0
      %s20 = sshll.u32 %s2, 4
      %s21 = int_to_ptr.hbm [resolvable:$true] %s20
      %s22 = sshll.u32 [#allocation3], 4
      %s23 = int_to_ptr.vmem [resolvable:$true] %s22
      %25 = dma.hbm_to_vmem [thread:$0]  %s21, 16, %s23, [#allocation4]
    $region13: #{resnet_small_forward.20} parent=1 // pred_fallthru
      _
    // Predicated region
    $region14: #{resnet_small_forward.20} parent=1 // pred_check
      _
    $region15: #{resnet_small_forward.20} parent=1 // pred_check_branch
      %27 = sbr.rel (0) target = $region17
    $region16: #{resnet_small_forward.20} parent=1 // pred_region
      %29 = vsyncadd [#allocation6], 0
      %s31 = sshll.u32 %s3, 4
      %s32 = int_to_ptr.hbm [resolvable:$true] %s31
      %s33 = sshll.u32 [#allocation5], 4
      %s34 = int_to_ptr.vmem [resolvable:$true] %s33
      %36 = dma.hbm_to_vmem [thread:$0]  %s32, 16, %s34, [#allocation6]
    $region17: #{resnet_small_forward.20} parent=1 // pred_fallthru
      _
    // Predicated region
    $region18: #{resnet_small_forward.20} parent=1 // pred_check
      _
    $region19: #{resnet_small_forward.20} parent=1 // pred_check_branch
      %38 = sbr.rel (0) target = $region21
    $region20: #{resnet_small_forward.20} parent=1 // pred_region
      %40 = dma.done [#allocation4], 16
    $region21: #{resnet_small_forward.20} parent=1 // pred_fallthru
      _
    // Predicated region
    $region22: #{resnet_small_forward.20} parent=1 // pred_check
      _
    $region23: #{resnet_small_forward.20} parent=1 // pred_check_branch
      %42 = sbr.rel (0) target = $region25
    $region24: #{resnet_small_forward.20} parent=1 // pred_region
      %44 = dma.done [#allocation6], 16
    $region25: #{resnet_small_forward.20} parent=1 // pred_fallthru
      _
    %p45 = scmp.eq.s32.totalorder 0, 0
    // Predicated region
    $region26: #{resnet_small_forward.20} parent=1 // pred_check
      %p46 = pneg %p45
    $region27: #{resnet_small_forward.20} parent=1 // pred_check_branch
      %48 = sbr.rel (%p46) target = $region29
    $region28: #{resnet_small_forward.20} parent=1 // pred_region
      %49 = vst [vmem:[#allocation2] sm:$0xff] 0.0
    $region29: #{resnet_small_forward.20} parent=1 // pred_fallthru
      _
    %v50 = vld [vmem:[#allocation2] sm:$0xff]
    %v51 = vld [vmem:[%s0] sm:$0xf]
    %v52 = vld [vmem:[%s1] sm:$0xf]
    %v53 = vld [vmem:[%s1 + $0x4] sm:$0xf]
    %v54 = vld [vmem:[%s1 + $0x8] sm:$0xf]
    %v55 = vld [vmem:[%s1 + $0xc] sm:$0xf]
    %v56 = vld [vmem:[%s1 + $0x10] sm:$0xf]
    %v57 = vld [vmem:[%s1 + $0x14] sm:$0xf]
    %v58 = vld [vmem:[%s1 + $0x18] sm:$0xf]
    %v59 = vld [vmem:[%s1 + $0x1c] sm:$0xf]
    %v60 = vld [vmem:[%s1 + $0x20] sm:$0xf]
    %v61 = vld [vmem:[%s1 + $0x24] sm:$0xf]
    %v62 = vld [vmem:[%s1 + $0x28] sm:$0xf]
    %v63 = vld [vmem:[%s1 + $0x2c] sm:$0xf]
    %v64 = vld [vmem:[%s1 + $0x30] sm:$0xf]
    %v65 = vld [vmem:[%s1 + $0x34] sm:$0xf]
    %v66 = vld [vmem:[%s1 + $0x38] sm:$0xf]
    %v67 = vld [vmem:[%s1 + $0x3c] sm:$0xf]
    %v84 = vunpack.c.l.b16 %v52
    %v85 = vunpack.c.l.b16 %v53
    %v86 = vunpack.c.l.b16 %v54
    %v87 = vunpack.c.l.b16 %v55
    %v88 = vunpack.c.l.b16 %v56
    %v89 = vunpack.c.l.b16 %v57
    %v90 = vunpack.c.l.b16 %v58
    %v91 = vunpack.c.l.b16 %v59
    %v92 = vunpack.c.l.b16 %v60
    %v93 = vunpack.c.l.b16 %v61
    %v94 = vunpack.c.l.b16 %v62
    %v95 = vunpack.c.l.b16 %v63
    %v96 = vunpack.c.l.b16 %v64
    %v97 = vunpack.c.l.b16 %v65
    %v98 = vunpack.c.l.b16 %v66
    %v99 = vunpack.c.l.b16 %v67
    %v100 = vpack.c.b16 %v85, %v84
    %v101 = vpack.c.b16 %v87, %v86
    %v102 = vpack.c.b16 %v89, %v88
    %v103 = vpack.c.b16 %v91, %v90
    %v104 = vpack.c.b16 %v93, %v92
    %v105 = vpack.c.b16 %v95, %v94
    %v106 = vpack.c.b16 %v97, %v96
    %v107 = vpack.c.b16 %v99, %v98
    %116 = vmatpush.bf16.msra.mxu0 %v107
    %117 = vmatpush.bf16.msra.mxu0 %v106
    %118 = vmatpush.bf16.msra.mxu0 %v105
    %119 = vmatpush.bf16.msra.mxu0 %v104
    %120 = vmatpush.bf16.msra.mxu0 %v103
    %121 = vmatpush.bf16.msra.mxu0 %v102
    %122 = vmatpush.bf16.msra.mxu0 %v101
    %123 = vmatpush.bf16.msra.mxu0 %v100
    %124 = vmatmul.bf16.gmra.mxu0 %v51
    %v125 = vpop.f32.mrf.mxu0
    %v126 = vadd.f32 0.0, %v125
    %v127 = vpop.f32.mrf.mxu0
    %128 = vdwg.mxu0
    %v129 = vadd.f32 %v50, %v126
    %130 = vst [vmem:[#allocation2] sm:$0xff] %v129
    // Predicated region
    $region30: #{resnet_small_forward.20} parent=1 // pred_check
      %p131 = pneg %p45
    $region31: #{resnet_small_forward.20} parent=1 // pred_check_branch
      %133 = sbr.rel (%p131) target = $region33
    $region32: #{resnet_small_forward.20} parent=1 // pred_region
      %v134 = vld [vmem:[#allocation2] sm:$0xff]
      %v135 = vrot.slane %v134, 4
      %v136 = vadd.f32 %v134, %v135
      %v137 = vrot.slane %v136, 2
      %v138 = vadd.f32 %v136, %v137
      %v139 = vrot.slane %v138, 1
      %v140 = vadd.f32 %v138, %v139
      %v141 = vmul.f32 %v140, 0.125
      %v142 = vmul.f32 %v134, %v134
      %v143 = vrot.slane %v142, 4
      %v144 = vadd.f32 %v142, %v143
      %v145 = vrot.slane %v144, 2
      %v146 = vadd.f32 %v144, %v145
      %v147 = vrot.slane %v146, 1
      %v148 = vadd.f32 %v146, %v147
      %v149 = vmul.f32 %v148, 0.125
      %v150 = vmul.f32 %v141, %v141
      %v151 = vsub.f32 %v149, %v150
      %v152 = vadd.f32 %v151, 1e-05
      %v153 = vrsqrt.pop %v152
      %v154 = vmul.f32 %v153, %v152
      %v155 = vmul.f32 %v154, %v153
      %v156 = vmul.f32 0.5, %v155
      %v157 = vsub.f32 1.5, %v156
      %v158 = vmul.f32 %v153, %v157
      %vm159 = vweird.f32 %v152
      %vm160 = vweird.f32 %v153
      %vm161 = vmor %vm159, %vm160
      %v162 = vsel %vm161, %v153, %v158
      %v163 = vld [vmem:[#allocation3] sm:$0x1]
      %v164 = vmul.f32 %v162, %v163
      %v165 = vld [vmem:[#allocation5] sm:$0x1]
      %v166 = vmul.f32 %v141, %v164
      %v167 = vsub.f32 %v165, %v166
      %v168 = vperm.slane %v164, 0
      %v169 = vmul.f32 %v134, %v168
      %v171 = vperm.slane %v167, 0
      %v173 = vadd.f32 %v169, %v171
      %174 = vst [vmem:[%s4] sm:$0xff] %v173
    $region33: #{resnet_small_forward.20} parent=1 // pred_fallthru
      _
    // Predicated region
    $region34: #{resnet_small_forward.20} parent=1 // pred_check
      _
    $region35: #{resnet_small_forward.20} parent=1 // pred_check_branch
      %176 = sbr.rel (0) target = $region37
    $region36: #{resnet_small_forward.20} parent=1 // pred_region
      _
    $region37: #{resnet_small_forward.20} parent=1 // pred_fallthru
      _
    // Predicated region
    $region38: #{resnet_small_forward.20} parent=1 // pred_check
      _
    $region39: #{resnet_small_forward.20} parent=1 // pred_check_branch
      %178 = sbr.rel (0) target = $region41
    $region40: #{resnet_small_forward.20} parent=1 // pred_region
      _
    $region41: #{resnet_small_forward.20} parent=1 // pred_fallthru
      _
    %179 = vsyncpa [#allocation4], 1
    %180 = vsyncpa [#allocation6], 1

// kernel: resnet_small_forward.22
$region0: #{resnet_small_forward.22}
  #allocation0 [shape = 'u32[]', space=smem, size = 0x4, offset = 0x4, fixed_abs, tag = 'smem constant byte address 0x4 - core index']
  #allocation1 [shape = 'u32[72,128]{1,0:T(1,128)}', space=vmem, size = 0x9000, scoped, tag = 'internal scratch']
  #allocation2 [shape = 'f32[8,256]{1,0:T(8,128)}', space=vmem, size = 0x2000, scoped, tag = 'scratch operand']
  %s0 = inlined_call_operand.vmem [shape: bf16[8,1152], index: 0, kind: input, shape index: {}]
  %s1 = inlined_call_operand.vmem [shape: bf16[1152,256], index: 1, kind: input, shape index: {}]
  %s2 = inlined_call_operand.vmem [shape: f32[1,256], index: 2, kind: input, shape index: {}]
  %s3 = inlined_call_operand.vmem [shape: f32[1,256], index: 3, kind: input, shape index: {}]
  %s4 = inlined_call_operand.vmem [shape: f32[8,256], index: 4, kind: output, shape index: {}]
  %s5 = sld [smem:[#allocation0]]
  $region57: #{resnet_small_forward.22} parent=0
    _
  %s7 = ssub.s32 1, %s5
  %s8 = scalar_select 0, %s7, %s5
  loop: start=0, step=1, limit=11
  $region2: #{resnet_small_forward.22} parent=0 // loop_pre_header
    _
  $region3: #{resnet_small_forward.22} parent=0 // loop_header
    %s10 = sphi 0, %s14
    %p11 = scmp.ge.s32.totalorder %s10, 11
    %s17 = sphi 0, %s29
    %s18 = sphi 0, %s25
    %s19 = sphi 0, %s17
    %s20 = sphi 0, %s18
    %s21 = sphi 0, %s19
    %s22 = sphi 0, %s20
    %s32 = sphi 0, %s34
    %s35 = sphi 0, %s32
    %s36 = sphi 0, %s35
    %s52 = sphi 0, %s36
    %s60 = sphi 0, %s62
    %s63 = sphi 0, %s60
    %s64 = sphi 0, %s63
    %s80 = sphi 0, %s64
    %s86 = sphi 0, %s88
    %s89 = sphi 0, %s86
    %s90 = sphi 0, %s89
    %s106 = sphi 0, %s90
    %s112 = sphi 0, %s114
    %s115 = sphi 0, %s112
    %s116 = sphi 0, %s115
    %s132 = sphi 0, %s116
    %s138 = sphi 0, %s140
    %s141 = sphi 0, %s138
    %s142 = sphi 0, %s141
    %s158 = sphi 0, %s142
  $region4: #{resnet_small_forward.22} parent=0 // loop_header_branch
    %13 = sbr.rel (%p11) target = $region8
  $region5: #{resnet_small_forward.22} parent=0 // loop_body
    %s15 = ssub.s32 %s10, 1
    %s16 = ssub.s32 %s10, 2
    %s23 = sadd.s32 1, %s18
    %p24 = scmp.ge.s32.totalorder %s23, 9
    %s25 = scalar_select %p24, 0, %s23
    %s26 = sadd.s32 1, %s17
    %s27 = scalar_select %p24, %s26, %s17
    %p28 = scmp.ge.s32.totalorder %s27, 1
    %s29 = scalar_select %p28, 0, %s27
    %s30 = ssub.s32 %s18, %s25
    %p31 = scmp.eq.s32.totalorder %s30, 0
    %s33 = sadd.s32 %s32, 1
    %s34 = scalar_select %p31, %s32, %s33
    %p37 = pneg %p31
    %p38 = scmp.eq.s32.totalorder %s10, 8
    %p39 = por %p37, %p38
    %p40 = scmp.ne.s32.totalorder %s32, %s35
    %p41 = scmp.eq.s32.totalorder %s10, 0
    %p42 = por %p40, %p41
    %p43 = scmp.ne.s32.totalorder %s32, %s35
    %p44 = scmp.eq.s32.totalorder %s15, 8
    %p45 = por %p43, %p44
    %p46 = scmp.ne.s32.totalorder %s35, %s36
    %p47 = scmp.eq.s32.totalorder %s15, 0
    %p48 = por %p46, %p47
    %p49 = scmp.ne.s32.totalorder %s35, %s36
    %p50 = scmp.eq.s32.totalorder %s16, 8
    %p51 = por %p49, %p50
    %p53 = scmp.ne.s32.totalorder %s36, %s52
    %p54 = scmp.eq.s32.totalorder %s16, 0
    %p55 = por %p53, %p54
    %s56 = ssub.s32 %s18, %s25
    %s57 = ssub.s32 %s17, %s29
    %s58 = sor.u32 %s56, %s57
    %p59 = scmp.eq.s32.totalorder %s58, 0
    %s61 = sadd.s32 %s60, 1
    %s62 = scalar_select %p59, %s60, %s61
    %p65 = pneg %p59
    %p66 = scmp.eq.s32.totalorder %s10, 8
    %p67 = por %p65, %p66
    %p68 = scmp.ne.s32.totalorder %s60, %s63
    %p69 = scmp.eq.s32.totalorder %s10, 0
    %p70 = por %p68, %p69
    %p71 = scmp.ne.s32.totalorder %s60, %s63
    %p72 = scmp.eq.s32.totalorder %s15, 8
    %p73 = por %p71, %p72
    %p74 = scmp.ne.s32.totalorder %s63, %s64
    %p75 = scmp.eq.s32.totalorder %s15, 0
    %p76 = por %p74, %p75
    %p77 = scmp.ne.s32.totalorder %s63, %s64
    %p78 = scmp.eq.s32.totalorder %s16, 8
    %p79 = por %p77, %p78
    %p81 = scmp.ne.s32.totalorder %s64, %s80
    %p82 = scmp.eq.s32.totalorder %s16, 0
    %p83 = por %p81, %p82
    %s84 = ssub.s32 %s17, %s29
    %p85 = scmp.eq.s32.totalorder %s84, 0
    %s87 = sadd.s32 %s86, 1
    %s88 = scalar_select %p85, %s86, %s87
    %p91 = pneg %p85
    %p92 = scmp.eq.s32.totalorder %s10, 8
    %p93 = por %p91, %p92
    %p94 = scmp.ne.s32.totalorder %s86, %s89
    %p95 = scmp.eq.s32.totalorder %s10, 0
    %p96 = por %p94, %p95
    %p97 = scmp.ne.s32.totalorder %s86, %s89
    %p98 = scmp.eq.s32.totalorder %s15, 8
    %p99 = por %p97, %p98
    %p100 = scmp.ne.s32.totalorder %s89, %s90
    %p101 = scmp.eq.s32.totalorder %s15, 0
    %p102 = por %p100, %p101
    %p103 = scmp.ne.s32.totalorder %s89, %s90
    %p104 = scmp.eq.s32.totalorder %s16, 8
    %p105 = por %p103, %p104
    %p107 = scmp.ne.s32.totalorder %s90, %s106
    %p108 = scmp.eq.s32.totalorder %s16, 0
    %p109 = por %p107, %p108
    %s110 = ssub.s32 %s17, %s29
    %p111 = scmp.eq.s32.totalorder %s110, 0
    %s113 = sadd.s32 %s112, 1
    %s114 = scalar_select %p111, %s112, %s113
    %p117 = pneg %p111
    %p118 = scmp.eq.s32.totalorder %s10, 8
    %p119 = por %p117, %p118
    %p120 = scmp.ne.s32.totalorder %s112, %s115
    %p121 = scmp.eq.s32.totalorder %s10, 0
    %p122 = por %p120, %p121
    %p123 = scmp.ne.s32.totalorder %s112, %s115
    %p124 = scmp.eq.s32.totalorder %s15, 8
    %p125 = por %p123, %p124
    %p126 = scmp.ne.s32.totalorder %s115, %s116
    %p127 = scmp.eq.s32.totalorder %s15, 0
    %p128 = por %p126, %p127
    %p129 = scmp.ne.s32.totalorder %s115, %s116
    %p130 = scmp.eq.s32.totalorder %s16, 8
    %p131 = por %p129, %p130
    %p133 = scmp.ne.s32.totalorder %s116, %s132
    %p134 = scmp.eq.s32.totalorder %s16, 0
    %p135 = por %p133, %p134
    %s136 = ssub.s32 %s17, %s29
    %p137 = scmp.eq.s32.totalorder %s136, 0
    %s139 = sadd.s32 %s138, 1
    %s140 = scalar_select %p137, %s138, %s139
    %p143 = pneg %p137
    %p144 = scmp.eq.s32.totalorder %s10, 8
    %p145 = por %p143, %p144
    %p146 = scmp.ne.s32.totalorder %s138, %s141
    %p147 = scmp.eq.s32.totalorder %s10, 0
    %p148 = por %p146, %p147
    %p149 = scmp.ne.s32.totalorder %s138, %s141
    %p150 = scmp.eq.s32.totalorder %s15, 8
    %p151 = por %p149, %p150
    %p152 = scmp.ne.s32.totalorder %s141, %s142
    %p153 = scmp.eq.s32.totalorder %s15, 0
    %p154 = por %p152, %p153
    %p155 = scmp.ne.s32.totalorder %s141, %s142
    %p156 = scmp.eq.s32.totalorder %s16, 8
    %p157 = por %p155, %p156
    %p159 = scmp.ne.s32.totalorder %s142, %s158
    %p160 = scmp.eq.s32.totalorder %s16, 0
    %p161 = por %p159, %p160
    %p162 = scmp.le.s32.totalorder 1, %s10
    %p163 = scmp.lt.s32.totalorder %s10, 10
    %p164 = pnand %p162, %p163
    %p165 = pneg %p164
    // Predicated region
    $region9: #{resnet_small_forward.22} parent=5 // pred_check
      _
    $region10: #{resnet_small_forward.22} parent=5 // pred_check_branch
      %167 = sbr.rel (%p164) target = $region12
    $region11: #{resnet_small_forward.22} parent=5 // pred_region
      %s168 = ssub.s32 %s10, 1
      // Predicated region
      $region13: #{resnet_small_forward.22} parent=11 // pred_check
        %p169 = pneg %p102
      $region14: #{resnet_small_forward.22} parent=11 // pred_check_branch
        %171 = sbr.rel (%p169) target = $region16
      $region15: #{resnet_small_forward.22} parent=11 // pred_region
        %s172 = smul.u32 2, %s19
        %p173 = scmp.lt.s32.totalorder %s172, 1
        %s174 = scalar_select %p173, %s172, 1
        %s175 = scalar_lea.vmem %s2, %s174
        %s176 = smul.u32 2, %s19
      $region16: #{resnet_small_forward.22} parent=11 // pred_fallthru
        _
      // Predicated region
      $region17: #{resnet_small_forward.22} parent=11 // pred_check
        %p177 = pneg %p128
      $region18: #{resnet_small_forward.22} parent=11 // pred_check_branch
        %179 = sbr.rel (%p177) target = $region20
      $region19: #{resnet_small_forward.22} parent=11 // pred_region
        %s180 = smul.u32 2, %s19
        %p181 = scmp.lt.s32.totalorder %s180, 1
        %s182 = scalar_select %p181, %s180, 1
        %s183 = scalar_lea.vmem %s3, %s182
        %s184 = smul.u32 2, %s19
      $region20: #{resnet_small_forward.22} parent=11 // pred_fallthru
        _
    $region12: #{resnet_small_forward.22} parent=5 // pred_fallthru
      _
    %p185 = scmp.lt.s32.totalorder %s10, 9
    // Predicated region
    $region21: #{resnet_small_forward.22} parent=5 // pred_check
      %p186 = pneg %p185
    $region22: #{resnet_small_forward.22} parent=5 // pred_check_branch
      %188 = sbr.rel (%p186) target = $region24
    $region23: #{resnet_small_forward.22} parent=5 // pred_region
      // Predicated region
      $region25: #{resnet_small_forward.22} parent=23 // pred_check
        %p189 = pneg %p42
      $region26: #{resnet_small_forward.22} parent=23 // pred_check_branch
        %191 = sbr.rel (%p189) target = $region28
      $region27: #{resnet_small_forward.22} parent=23 // pred_region
        %p192 = scmp.lt.s32.totalorder %s18, 8
        %s193 = scalar_select %p192, %s18, 8
        %s194 = smul.addr %s193, 4
        %s195 = scalar_lea.vmem %s0, %s194
      $region28: #{resnet_small_forward.22} parent=23 // pred_fallthru
        _
      // Predicated region
      $region29: #{resnet_small_forward.22} parent=23 // pred_check
        %p196 = pneg %p70
      $region30: #{resnet_small_forward.22} parent=23 // pred_check_branch
        %198 = sbr.rel (%p196) target = $region32
      $region31: #{resnet_small_forward.22} parent=23 // pred_region
        %s199 = smul.u32 16, %s18
        %s200 = smul.u32 2, %s17
        %p201 = scmp.lt.s32.totalorder %s199, 143
        %s202 = scalar_select %p201, %s199, 143
        %p203 = scmp.lt.s32.totalorder %s200, 1
        %s204 = scalar_select %p203, %s200, 1
        %s205 = smul.addr %s202, 2
        %s206 = sadd.s32 %s204, %s205
        %s207 = smul.addr %s206, 4
        %s208 = scalar_lea.vmem %s1, %s207
        %s209 = smul.u32 16, %s18
        %s210 = smul.u32 2, %s17
      $region32: #{resnet_small_forward.22} parent=23 // pred_fallthru
        _
    $region24: #{resnet_small_forward.22} parent=5 // pred_fallthru
      _
    %p211 = scmp.le.s32.totalorder 1, %s10
    %p212 = scmp.lt.s32.totalorder %s10, 10
    %p213 = pnand %p211, %p212
    %p214 = pneg %p213
    // Predicated region
    $region33: #{resnet_small_forward.22} parent=5 // pred_check
      _
    $region34: #{resnet_small_forward.22} parent=5 // pred_check_branch
      %216 = sbr.rel (%p213) target = $region36
    $region35: #{resnet_small_forward.22} parent=5 // pred_region
      %s217 = ssub.s32 %s10, 1
      %p218 = scmp.lt.s32.totalorder %s20, 8
      %s219 = scalar_select %p218, %s20, 8
      %s220 = smul.addr %s219, 4
      %s221 = scalar_lea.vmem %s0, %s220
      %p222 = pneg %p48
      %p223 = pneg %p45
      %s224 = smul.u32 16, %s20
      %s225 = smul.u32 2, %s19
      %p226 = scmp.lt.s32.totalorder %s224, 143
      %s227 = scalar_select %p226, %s224, 143
      %p228 = scmp.lt.s32.totalorder %s225, 1
      %s229 = scalar_select %p228, %s225, 1
      %s230 = smul.addr %s227, 2
      %s231 = sadd.s32 %s229, %s230
      %s232 = smul.addr %s231, 4
      %s233 = scalar_lea.vmem %s1, %s232
      %p234 = pneg %p76
      %p235 = pneg %p73
      %s236 = smul.u32 2, %s19
      %p237 = scmp.lt.s32.totalorder %s236, 1
      %s238 = scalar_select %p237, %s236, 1
      %s239 = scalar_lea.vmem %s2, %s238
      %p240 = pneg %p102
      %p241 = pneg %p99
      %s242 = smul.u32 2, %s19
      %p243 = scmp.lt.s32.totalorder %s242, 1
      %s244 = scalar_select %p243, %s242, 1
      %s245 = scalar_lea.vmem %s3, %s244
      %p246 = pneg %p128
      %p247 = pneg %p125
      %p248 = pneg %p154
      %p249 = pneg %p151
      %s250 = smul.u32 2, %s19
      %p251 = scmp.lt.s32.totalorder %s250, 1
      %s252 = scalar_select %p251, %s250, 1
      %s253 = smul.addr %s252, 8
      %s254 = scalar_lea.vmem %s4, %s253
      %p255 = scmp.lt.s32.totalorder %s20, 8
      %s256 = scalar_select %p255, %s20, 8
      %s257 = smul.addr %s256, 4
      %s258 = scalar_lea.vmem %s0, %s257
      %s259 = smul.u32 16, %s20
      %s260 = smul.u32 2, %s19
      %p261 = scmp.lt.s32.totalorder %s259, 143
      %s262 = scalar_select %p261, %s259, 143
      %p263 = scmp.lt.s32.totalorder %s260, 1
      %s264 = scalar_select %p263, %s260, 1
      %s265 = smul.addr %s262, 2
      %s266 = sadd.s32 %s264, %s265
      %s267 = smul.addr %s266, 4
      %s268 = scalar_lea.vmem %s1, %s267
      %s269 = smul.u32 16, %s20
      %s270 = smul.u32 2, %s19
      %s271 = smul.u32 2, %s19
      %p272 = scmp.lt.s32.totalorder %s271, 1
      %s273 = scalar_select %p272, %s271, 1
      %s274 = scalar_lea.vmem %s2, %s273
      %s275 = smul.u32 2, %s19
      %s276 = smul.u32 2, %s19
      %p277 = scmp.lt.s32.totalorder %s276, 1
      %s278 = scalar_select %p277, %s276, 1
      %s279 = scalar_lea.vmem %s3, %s278
      %s280 = smul.u32 2, %s19
      %s281 = smul.u32 2, %s19
      %p282 = scmp.lt.s32.totalorder %s281, 1
      %s283 = scalar_select %p282, %s281, 1
      %s284 = smul.addr %s283, 8
      %s285 = scalar_lea.vmem %s4, %s284
      %s286 = smul.u32 2, %s19
      %p287 = scmp.eq.s32.totalorder %s20, 0
      // Predicated region
      $region37: #{resnet_small_forward.22} parent=35 // pred_check
        %p288 = pneg %p287
      $region38: #{resnet_small_forward.22} parent=35 // pred_check_branch
        %290 = sbr.rel (%p288) target = $region40
      $region39: #{resnet_small_forward.22} parent=35 // pred_region
        %291 = vst [vmem:[#allocation2] sm:$0xff] 0.0
        %292 = vst [vmem:[#allocation2 + $0x8] sm:$0xff] 0.0
      $region40: #{resnet_small_forward.22} parent=35 // pred_fallthru
        _
      %v293 = vld [vmem:[#allocation2] sm:$0xff]
      %v294 = vld [vmem:[#allocation2 + $0x8] sm:$0xff]
      %v295 = vld [vmem:[%s258] sm:$0xf]
      %v296 = vld [vmem:[%s268] sm:$0xff]
      %v297 = vld [vmem:[%s268 + $0x8] sm:$0xff]
      %v298 = vld [vmem:[%s268 + $0x10] sm:$0xff]
      %v299 = vld [vmem:[%s268 + $0x18] sm:$0xff]
      %v300 = vld [vmem:[%s268 + $0x20] sm:$0xff]
      %v301 = vld [vmem:[%s268 + $0x28] sm:$0xff]
      %v302 = vld [vmem:[%s268 + $0x30] sm:$0xff]
      %v303 = vld [vmem:[%s268 + $0x38] sm:$0xff]
      %v304 = vld [vmem:[%s268 + $0x40] sm:$0xff]
      %v305 = vld [vmem:[%s268 + $0x48] sm:$0xff]
      %v306 = vld [vmem:[%s268 + $0x50] sm:$0xff]
      %v307 = vld [vmem:[%s268 + $0x58] sm:$0xff]
      %v308 = vld [vmem:[%s268 + $0x60] sm:$0xff]
      %v309 = vld [vmem:[%s268 + $0x68] sm:$0xff]
      %v310 = vld [vmem:[%s268 + $0x70] sm:$0xff]
      %v311 = vld [vmem:[%s268 + $0x78] sm:$0xff]
      %v328 = vunpack.c.l.b16 %v296
      %v329 = vunpack.c.h.b16 %v296
      %v330 = vunpack.c.l.b16 %v297
      %v331 = vunpack.c.h.b16 %v297
      %v332 = vunpack.c.l.b16 %v298
      %v333 = vunpack.c.h.b16 %v298
      %v334 = vunpack.c.l.b16 %v299
      %v335 = vunpack.c.h.b16 %v299
      %v336 = vunpack.c.l.b16 %v300
      %v337 = vunpack.c.h.b16 %v300
      %v338 = vunpack.c.l.b16 %v301
      %v339 = vunpack.c.h.b16 %v301
      %v340 = vunpack.c.l.b16 %v302
      %v341 = vunpack.c.h.b16 %v302
      %v342 = vunpack.c.l.b16 %v303
      %v343 = vunpack.c.h.b16 %v303
      %v344 = vunpack.c.l.b16 %v304
      %v345 = vunpack.c.h.b16 %v304
      %v346 = vunpack.c.l.b16 %v305
      %v347 = vunpack.c.h.b16 %v305
      %v348 = vunpack.c.l.b16 %v306
      %v349 = vunpack.c.h.b16 %v306
      %v350 = vunpack.c.l.b16 %v307
      %v351 = vunpack.c.h.b16 %v307
      %v352 = vunpack.c.l.b16 %v308
      %v353 = vunpack.c.h.b16 %v308
      %v354 = vunpack.c.l.b16 %v309
      %v355 = vunpack.c.h.b16 %v309
      %v356 = vunpack.c.l.b16 %v310
      %v357 = vunpack.c.h.b16 %v310
      %v358 = vunpack.c.l.b16 %v311
      %v359 = vunpack.c.h.b16 %v311
      %v360 = vpack.c.b16 %v330, %v328
      %v361 = vpack.c.b16 %v331, %v329
      %v362 = vpack.c.b16 %v334, %v332
      %v363 = vpack.c.b16 %v335, %v333
      %v364 = vpack.c.b16 %v338, %v336
      %v365 = vpack.c.b16 %v339, %v337
      %v366 = vpack.c.b16 %v342, %v340
      %v367 = vpack.c.b16 %v343, %v341
      %v368 = vpack.c.b16 %v346, %v344
      %v369 = vpack.c.b16 %v347, %v345
      %v370 = vpack.c.b16 %v350, %v348
      %v371 = vpack.c.b16 %v351, %v349
      %v372 = vpack.c.b16 %v354, %v352
      %v373 = vpack.c.b16 %v355, %v353
      %v374 = vpack.c.b16 %v358, %v356
      %v375 = vpack.c.b16 %v359, %v357
      %392 = vmatpush.bf16.msra.mxu0 %v374
      %393 = vmatpush.bf16.msra.mxu0 %v372
      %394 = vmatpush.bf16.msra.mxu0 %v370
      %395 = vmatpush.bf16.msra.mxu0 %v368
      %396 = vmatpush.bf16.msra.mxu0 %v366
      %397 = vmatpush.bf16.msra.mxu0 %v364
      %398 = vmatpush.bf16.msra.mxu0 %v362
      %399 = vmatpush.bf16.msra.mxu0 %v360
      %400 = vmatmul.bf16.gmra.mxu0 %v295
      %v401 = vpop.f32.mrf.mxu0
      %v402 = vadd.f32 0.0, %v401
      %v403 = vpop.f32.mrf.mxu0
      %404 = vdwg.mxu0
      %405 = vmatpush.bf16.msra.mxu0 %v375
      %406 = vmatpush.bf16.msra.mxu0 %v373
      %407 = vmatpush.bf16.msra.mxu0 %v371
      %408 = vmatpush.bf16.msra.mxu0 %v369
      %409 = vmatpush.bf16.msra.mxu0 %v367
      %410 = vmatpush.bf16.msra.mxu0 %v365
      %411 = vmatpush.bf16.msra.mxu0 %v363
      %412 = vmatpush.bf16.msra.mxu0 %v361
      %413 = vmatmul.bf16.gmra.mxu0 %v295
      %v414 = vpop.f32.mrf.mxu0
      %v415 = vadd.f32 0.0, %v414
      %v416 = vpop.f32.mrf.mxu0
      %417 = vdwg.mxu0
      %v418 = vadd.f32 %v293, %v402
      %v419 = vadd.f32 %v294, %v415
      %420 = vst [vmem:[#allocation2] sm:$0xff] %v418
      %421 = vst [vmem:[#allocation2 + $0x8] sm:$0xff] %v419
      %p422 = scmp.eq.s32.totalorder %s20, 8
      // Predicated region
      $region41: #{resnet_small_forward.22} parent=35 // pred_check
        %p423 = pneg %p422
      $region42: #{resnet_small_forward.22} parent=35 // pred_check_branch
        %425 = sbr.rel (%p423) target = $region44
      $region43: #{resnet_small_forward.22} parent=35 // pred_region
        %v426 = vld [vmem:[#allocation2] sm:$0xff]
        %v427 = vld [vmem:[#allocation2 + $0x8] sm:$0xff]
        %v428 = vrot.slane %v426, 4
        %v429 = vadd.f32 %v426, %v428
        %v430 = vrot.slane %v429, 2
        %v431 = vadd.f32 %v429, %v430
        %v432 = vrot.slane %v431, 1
        %v433 = vadd.f32 %v431, %v432
        %v434 = vrot.slane %v427, 4
        %v435 = vadd.f32 %v427, %v434
        %v436 = vrot.slane %v435, 2
        %v437 = vadd.f32 %v435, %v436
        %v438 = vrot.slane %v437, 1
        %v439 = vadd.f32 %v437, %v438
        %v440 = vmul.f32 %v433, 0.5
        %v441 = vmul.f32 %v439, 0.5
        %v442 = vmul.f32 %v426, %v426
        %v443 = vmul.f32 %v427, %v427
        %v444 = vrot.slane %v442, 4
        %v445 = vadd.f32 %v442, %v444
        %v446 = vrot.slane %v445, 2
        %v447 = vadd.f32 %v445, %v446
        %v448 = vrot.slane %v447, 1
        %v449 = vadd.f32 %v447, %v448
        %v450 = vrot.slane %v443, 4
        %v451 = vadd.f32 %v443, %v450
        %v452 = vrot.slane %v451, 2
        %v453 = vadd.f32 %v451, %v452
        %v454 = vrot.slane %v453, 1
        %v455 = vadd.f32 %v453, %v454
        %v456 = vmul.f32 %v449, 0.5
        %v457 = vmul.f32 %v455, 0.5
        %v458 = vmul.f32 %v440, %v440
        %v459 = vmul.f32 %v441, %v441
        %v460 = vsub.f32 %v456, %v458
        %v461 = vsub.f32 %v457, %v459
        %v462 = vadd.f32 %v460, 1e-05
        %v463 = vadd.f32 %v461, 1e-05
        %v464 = vrsqrt.pop %v462
        %v465 = vmul.f32 %v464, %v462
        %v466 = vmul.f32 %v465, %v464
        %v467 = vmul.f32 0.5, %v466
        %v468 = vsub.f32 1.5, %v467
        %v469 = vmul.f32 %v464, %v468
        %vm470 = vweird.f32 %v462
        %vm471 = vweird.f32 %v464
        %vm472 = vmor %vm470, %vm471
        %v473 = vsel %vm472, %v464, %v469
        %v474 = vrsqrt.pop %v463
        %v475 = vmul.f32 %v474, %v463
        %v476 = vmul.f32 %v475, %v474
        %v477 = vmul.f32 0.5, %v476
        %v478 = vsub.f32 1.5, %v477
        %v479 = vmul.f32 %v474, %v478
        %vm480 = vweird.f32 %v463
        %vm481 = vweird.f32 %v474
        %vm482 = vmor %vm480, %vm481
        %v483 = vsel %vm482, %v474, %v479
        %v484 = vld [vmem:[%s274] sm:$0x3]
        %v486 = vperm.slane %v484, 0
        %v487 = vperm.slane %v484, 1
        %v490 = vmul.f32 %v473, %v486
        %v491 = vmul.f32 %v483, %v487
        %v492 = vld [vmem:[%s279] sm:$0x3]
        %v493 = vmul.f32 %v440, %v490
        %v494 = vmul.f32 %v441, %v491
        %v497 = vrot.slane %v494, 7
        %vm498 = vcmask 1040384
        %v499 = vsel %vm498, %v493, %v497
        %v501 = vsub.f32 %v492, %v499
        %v502 = vperm.slane %v490, 0
        %v503 = vperm.slane %v491, 0
        %v504 = vmul.f32 %v426, %v502
        %v505 = vmul.f32 %v427, %v503
        %v507 = vperm.slane %v501, 0
        %v508 = vperm.slane %v501, 1
        %v511 = vadd.f32 %v504, %v507
        %v512 = vadd.f32 %v505, %v508
        %v513 = vmax.f32 %v511, 0.0
        %v514 = vmax.f32 %v512, 0.0
        %515 = vst [vmem:[%s285] sm:$0xff] %v513
        %516 = vst [vmem:[%s285 + $0x8] sm:$0xff] %v514
      $region44: #{resnet_small_forward.22} parent=35 // pred_fallthru
        _
      %s517 = smul.u32 2, %s19
      %p518 = scmp.lt.s32.totalorder %s517, 1
      %s519 = scalar_select %p518, %s517, 1
      %s520 = smul.addr %s519, 8
      %s521 = scalar_lea.vmem %s4, %s520
      // Predicated region
      $region45: #{resnet_small_forward.22} parent=35 // pred_check
        %p522 = pneg %p151
      $region46: #{resnet_small_forward.22} parent=35 // pred_check_branch
        %524 = sbr.rel (%p522) target = $region48
      $region47: #{resnet_small_forward.22} parent=35 // pred_region
        %s525 = smul.u32 2, %s19
      $region48: #{resnet_small_forward.22} parent=35 // pred_fallthru
        _
      // Predicated region
      $region49: #{resnet_small_forward.22} parent=35 // pred_check
        %p526 = pneg %p151
      $region50: #{resnet_small_forward.22} parent=35 // pred_check_branch
        %528 = sbr.rel (%p526) target = $region52
      $region51: #{resnet_small_forward.22} parent=35 // pred_region
        %s529 = smul.u32 2, %s19
        %p530 = scmp.lt.s32.totalorder %s529, 1
        %s531 = scalar_select %p530, %s529, 1
        %s532 = smul.addr %s531, 8
        %s533 = scalar_lea.vmem %s4, %s532
      $region52: #{resnet_small_forward.22} parent=35 // pred_fallthru
        _
    $region36: #{resnet_small_forward.22} parent=5 // pred_fallthru
      _
    %p534 = scmp.le.s32.totalorder 2, %s10
    // Predicated region
    $region53: #{resnet_small_forward.22} parent=5 // pred_check
      %p535 = pneg %p534
    $region54: #{resnet_small_forward.22} parent=5 // pred_check_branch
      %537 = sbr.rel (%p535) target = $region56
    $region55: #{resnet_small_forward.22} parent=5 // pred_region
      %s538 = ssub.s32 %s10, 2
    $region56: #{resnet_small_forward.22} parent=5 // pred_fallthru
      _
  $region6: #{resnet_small_forward.22} parent=0 // loop_footer
    %s14 = sadd.s32 1, %s10
  $region7: #{resnet_small_forward.22} parent=0 // loop_footer_branch
    %9 = sbr.rel target = $region3
  $region8: #{resnet_small_forward.22} parent=0 // loop_exit
    _

// kernel: resnet_small_forward.24
$region0: #{resnet_small_forward.24}
  #allocation0 [shape = 'u32[]', space=smem, size = 0x4, offset = 0x4, fixed_abs, tag = 'smem constant byte address 0x4 - core index']
  #allocation1 [shape = 'u32[72,128]{1,0:T(1,128)}', space=vmem, size = 0x9000, scoped, tag = 'internal scratch']
  #allocation2 [shape = 'f32[8,256]{1,0:T(8,128)}', space=vmem, size = 0x2000, scoped, tag = 'scratch operand']
  %s0 = inlined_call_operand.vmem [shape: bf16[8,2304], index: 0, kind: input, shape index: {}]
  %s1 = inlined_call_operand.vmem [shape: bf16[2304,256], index: 1, kind: input, shape index: {}]
  %s2 = inlined_call_operand.vmem [shape: f32[1,256], index: 2, kind: input, shape index: {}]
  %s3 = inlined_call_operand.vmem [shape: f32[1,256], index: 3, kind: input, shape index: {}]
  %s4 = inlined_call_operand.vmem [shape: f32[8,256], index: 4, kind: input, shape index: {}]
  %s5 = inlined_call_operand.vmem [shape: f32[8,256], index: 5, kind: output, shape index: {}]
  %s6 = sld [smem:[#allocation0]]
  $region61: #{resnet_small_forward.24} parent=0
    _
  %s8 = ssub.s32 1, %s6
  %s9 = scalar_select 0, %s8, %s6
  loop: start=0, step=1, limit=11
  $region2: #{resnet_small_forward.24} parent=0 // loop_pre_header
    _
  $region3: #{resnet_small_forward.24} parent=0 // loop_header
    %s11 = sphi 0, %s15
    %p12 = scmp.ge.s32.totalorder %s11, 11
    %s18 = sphi 0, %s30
    %s19 = sphi 0, %s26
    %s20 = sphi 0, %s18
    %s21 = sphi 0, %s19
    %s22 = sphi 0, %s20
    %s23 = sphi 0, %s21
    %s33 = sphi 0, %s35
    %s36 = sphi 0, %s33
    %s37 = sphi 0, %s36
    %s53 = sphi 0, %s37
    %s61 = sphi 0, %s63
    %s64 = sphi 0, %s61
    %s65 = sphi 0, %s64
    %s81 = sphi 0, %s65
    %s87 = sphi 0, %s89
    %s90 = sphi 0, %s87
    %s91 = sphi 0, %s90
    %s107 = sphi 0, %s91
    %s113 = sphi 0, %s115
    %s116 = sphi 0, %s113
    %s117 = sphi 0, %s116
    %s133 = sphi 0, %s117
    %s139 = sphi 0, %s141
    %s142 = sphi 0, %s139
    %s143 = sphi 0, %s142
    %s159 = sphi 0, %s143
    %s165 = sphi 0, %s167
    %s168 = sphi 0, %s165
    %s169 = sphi 0, %s168
    %s185 = sphi 0, %s169
  $region4: #{resnet_small_forward.24} parent=0 // loop_header_branch
    %14 = sbr.rel (%p12) target = $region8
  $region5: #{resnet_small_forward.24} parent=0 // loop_body
    %s16 = ssub.s32 %s11, 1
    %s17 = ssub.s32 %s11, 2
    %s24 = sadd.s32 1, %s19
    %p25 = scmp.ge.s32.totalorder %s24, 9
    %s26 = scalar_select %p25, 0, %s24
    %s27 = sadd.s32 1, %s18
    %s28 = scalar_select %p25, %s27, %s18
    %p29 = scmp.ge.s32.totalorder %s28, 1
    %s30 = scalar_select %p29, 0, %s28
    %s31 = ssub.s32 %s19, %s26
    %p32 = scmp.eq.s32.totalorder %s31, 0
    %s34 = sadd.s32 %s33, 1
    %s35 = scalar_select %p32, %s33, %s34
    %p38 = pneg %p32
    %p39 = scmp.eq.s32.totalorder %s11, 8
    %p40 = por %p38, %p39
    %p41 = scmp.ne.s32.totalorder %s33, %s36
    %p42 = scmp.eq.s32.totalorder %s11, 0
    %p43 = por %p41, %p42
    %p44 = scmp.ne.s32.totalorder %s33, %s36
    %p45 = scmp.eq.s32.totalorder %s16, 8
    %p46 = por %p44, %p45
    %p47 = scmp.ne.s32.totalorder %s36, %s37
    %p48 = scmp.eq.s32.totalorder %s16, 0
    %p49 = por %p47, %p48
    %p50 = scmp.ne.s32.totalorder %s36, %s37
    %p51 = scmp.eq.s32.totalorder %s17, 8
    %p52 = por %p50, %p51
    %p54 = scmp.ne.s32.totalorder %s37, %s53
    %p55 = scmp.eq.s32.totalorder %s17, 0
    %p56 = por %p54, %p55
    %s57 = ssub.s32 %s19, %s26
    %s58 = ssub.s32 %s18, %s30
    %s59 = sor.u32 %s57, %s58
    %p60 = scmp.eq.s32.totalorder %s59, 0
    %s62 = sadd.s32 %s61, 1
    %s63 = scalar_select %p60, %s61, %s62
    %p66 = pneg %p60
    %p67 = scmp.eq.s32.totalorder %s11, 8
    %p68 = por %p66, %p67
    %p69 = scmp.ne.s32.totalorder %s61, %s64
    %p70 = scmp.eq.s32.totalorder %s11, 0
    %p71 = por %p69, %p70
    %p72 = scmp.ne.s32.totalorder %s61, %s64
    %p73 = scmp.eq.s32.totalorder %s16, 8
    %p74 = por %p72, %p73
    %p75 = scmp.ne.s32.totalorder %s64, %s65
    %p76 = scmp.eq.s32.totalorder %s16, 0
    %p77 = por %p75, %p76
    %p78 = scmp.ne.s32.totalorder %s64, %s65
    %p79 = scmp.eq.s32.totalorder %s17, 8
    %p80 = por %p78, %p79
    %p82 = scmp.ne.s32.totalorder %s65, %s81
    %p83 = scmp.eq.s32.totalorder %s17, 0
    %p84 = por %p82, %p83
    %s85 = ssub.s32 %s18, %s30
    %p86 = scmp.eq.s32.totalorder %s85, 0
    %s88 = sadd.s32 %s87, 1
    %s89 = scalar_select %p86, %s87, %s88
    %p92 = pneg %p86
    %p93 = scmp.eq.s32.totalorder %s11, 8
    %p94 = por %p92, %p93
    %p95 = scmp.ne.s32.totalorder %s87, %s90
    %p96 = scmp.eq.s32.totalorder %s11, 0
    %p97 = por %p95, %p96
    %p98 = scmp.ne.s32.totalorder %s87, %s90
    %p99 = scmp.eq.s32.totalorder %s16, 8
    %p100 = por %p98, %p99
    %p101 = scmp.ne.s32.totalorder %s90, %s91
    %p102 = scmp.eq.s32.totalorder %s16, 0
    %p103 = por %p101, %p102
    %p104 = scmp.ne.s32.totalorder %s90, %s91
    %p105 = scmp.eq.s32.totalorder %s17, 8
    %p106 = por %p104, %p105
    %p108 = scmp.ne.s32.totalorder %s91, %s107
    %p109 = scmp.eq.s32.totalorder %s17, 0
    %p110 = por %p108, %p109
    %s111 = ssub.s32 %s18, %s30
    %p112 = scmp.eq.s32.totalorder %s111, 0
    %s114 = sadd.s32 %s113, 1
    %s115 = scalar_select %p112, %s113, %s114
    %p118 = pneg %p112
    %p119 = scmp.eq.s32.totalorder %s11, 8
    %p120 = por %p118, %p119
    %p121 = scmp.ne.s32.totalorder %s113, %s116
    %p122 = scmp.eq.s32.totalorder %s11, 0
    %p123 = por %p121, %p122
    %p124 = scmp.ne.s32.totalorder %s113, %s116
    %p125 = scmp.eq.s32.totalorder %s16, 8
    %p126 = por %p124, %p125
    %p127 = scmp.ne.s32.totalorder %s116, %s117
    %p128 = scmp.eq.s32.totalorder %s16, 0
    %p129 = por %p127, %p128
    %p130 = scmp.ne.s32.totalorder %s116, %s117
    %p131 = scmp.eq.s32.totalorder %s17, 8
    %p132 = por %p130, %p131
    %p134 = scmp.ne.s32.totalorder %s117, %s133
    %p135 = scmp.eq.s32.totalorder %s17, 0
    %p136 = por %p134, %p135
    %s137 = ssub.s32 %s18, %s30
    %p138 = scmp.eq.s32.totalorder %s137, 0
    %s140 = sadd.s32 %s139, 1
    %s141 = scalar_select %p138, %s139, %s140
    %p144 = pneg %p138
    %p145 = scmp.eq.s32.totalorder %s11, 8
    %p146 = por %p144, %p145
    %p147 = scmp.ne.s32.totalorder %s139, %s142
    %p148 = scmp.eq.s32.totalorder %s11, 0
    %p149 = por %p147, %p148
    %p150 = scmp.ne.s32.totalorder %s139, %s142
    %p151 = scmp.eq.s32.totalorder %s16, 8
    %p152 = por %p150, %p151
    %p153 = scmp.ne.s32.totalorder %s142, %s143
    %p154 = scmp.eq.s32.totalorder %s16, 0
    %p155 = por %p153, %p154
    %p156 = scmp.ne.s32.totalorder %s142, %s143
    %p157 = scmp.eq.s32.totalorder %s17, 8
    %p158 = por %p156, %p157
    %p160 = scmp.ne.s32.totalorder %s143, %s159
    %p161 = scmp.eq.s32.totalorder %s17, 0
    %p162 = por %p160, %p161
    %s163 = ssub.s32 %s18, %s30
    %p164 = scmp.eq.s32.totalorder %s163, 0
    %s166 = sadd.s32 %s165, 1
    %s167 = scalar_select %p164, %s165, %s166
    %p170 = pneg %p164
    %p171 = scmp.eq.s32.totalorder %s11, 8
    %p172 = por %p170, %p171
    %p173 = scmp.ne.s32.totalorder %s165, %s168
    %p174 = scmp.eq.s32.totalorder %s11, 0
    %p175 = por %p173, %p174
    %p176 = scmp.ne.s32.totalorder %s165, %s168
    %p177 = scmp.eq.s32.totalorder %s16, 8
    %p178 = por %p176, %p177
    %p179 = scmp.ne.s32.totalorder %s168, %s169
    %p180 = scmp.eq.s32.totalorder %s16, 0
    %p181 = por %p179, %p180
    %p182 = scmp.ne.s32.totalorder %s168, %s169
    %p183 = scmp.eq.s32.totalorder %s17, 8
    %p184 = por %p182, %p183
    %p186 = scmp.ne.s32.totalorder %s169, %s185
    %p187 = scmp.eq.s32.totalorder %s17, 0
    %p188 = por %p186, %p187
    %p189 = scmp.le.s32.totalorder 1, %s11
    %p190 = scmp.lt.s32.totalorder %s11, 10
    %p191 = pnand %p189, %p190
    %p192 = pneg %p191
    // Predicated region
    $region9: #{resnet_small_forward.24} parent=5 // pred_check
      _
    $region10: #{resnet_small_forward.24} parent=5 // pred_check_branch
      %194 = sbr.rel (%p191) target = $region12
    $region11: #{resnet_small_forward.24} parent=5 // pred_region
      %s195 = ssub.s32 %s11, 1
      // Predicated region
      $region13: #{resnet_small_forward.24} parent=11 // pred_check
        %p196 = pneg %p103
      $region14: #{resnet_small_forward.24} parent=11 // pred_check_branch
        %198 = sbr.rel (%p196) target = $region16
      $region15: #{resnet_small_forward.24} parent=11 // pred_region
        %s199 = smul.u32 2, %s20
        %p200 = scmp.lt.s32.totalorder %s199, 1
        %s201 = scalar_select %p200, %s199, 1
        %s202 = scalar_lea.vmem %s2, %s201
        %s203 = smul.u32 2, %s20
      $region16: #{resnet_small_forward.24} parent=11 // pred_fallthru
        _
      // Predicated region
      $region17: #{resnet_small_forward.24} parent=11 // pred_check
        %p204 = pneg %p129
      $region18: #{resnet_small_forward.24} parent=11 // pred_check_branch
        %206 = sbr.rel (%p204) target = $region20
      $region19: #{resnet_small_forward.24} parent=11 // pred_region
        %s207 = smul.u32 2, %s20
        %p208 = scmp.lt.s32.totalorder %s207, 1
        %s209 = scalar_select %p208, %s207, 1
        %s210 = scalar_lea.vmem %s3, %s209
        %s211 = smul.u32 2, %s20
      $region20: #{resnet_small_forward.24} parent=11 // pred_fallthru
        _
      // Predicated region
      $region21: #{resnet_small_forward.24} parent=11 // pred_check
        %p212 = pneg %p155
      $region22: #{resnet_small_forward.24} parent=11 // pred_check_branch
        %214 = sbr.rel (%p212) target = $region24
      $region23: #{resnet_small_forward.24} parent=11 // pred_region
        %s215 = smul.u32 2, %s20
        %p216 = scmp.lt.s32.totalorder %s215, 1
        %s217 = scalar_select %p216, %s215, 1
        %s218 = smul.addr %s217, 8
        %s219 = scalar_lea.vmem %s4, %s218
        %s220 = smul.u32 2, %s20
      $region24: #{resnet_small_forward.24} parent=11 // pred_fallthru
        _
    $region12: #{resnet_small_forward.24} parent=5 // pred_fallthru
      _
    %p221 = scmp.lt.s32.totalorder %s11, 9
    // Predicated region
    $region25: #{resnet_small_forward.24} parent=5 // pred_check
      %p222 = pneg %p221
    $region26: #{resnet_small_forward.24} parent=5 // pred_check_branch
      %224 = sbr.rel (%p222) target = $region28
    $region27: #{resnet_small_forward.24} parent=5 // pred_region
      // Predicated region
      $region29: #{resnet_small_forward.24} parent=27 // pred_check
        %p225 = pneg %p43
      $region30: #{resnet_small_forward.24} parent=27 // pred_check_branch
        %227 = sbr.rel (%p225) target = $region32
      $region31: #{resnet_small_forward.24} parent=27 // pred_region
        %s228 = smul.u32 2, %s19
        %p229 = scmp.lt.s32.totalorder %s228, 17
        %s230 = scalar_select %p229, %s228, 17
        %s231 = smul.addr %s230, 4
        %s232 = scalar_lea.vmem %s0, %s231
        %s233 = smul.u32 2, %s19
      $region32: #{resnet_small_forward.24} parent=27 // pred_fallthru
        _
      // Predicated region
      $region33: #{resnet_small_forward.24} parent=27 // pred_check
        %p234 = pneg %p71
      $region34: #{resnet_small_forward.24} parent=27 // pred_check_branch
        %236 = sbr.rel (%p234) target = $region36
      $region35: #{resnet_small_forward.24} parent=27 // pred_region
        %s237 = smul.u32 32, %s19
        %s238 = smul.u32 2, %s18
        %p239 = scmp.lt.s32.totalorder %s237, 287
        %s240 = scalar_select %p239, %s237, 287
        %p241 = scmp.lt.s32.totalorder %s238, 1
        %s242 = scalar_select %p241, %s238, 1
        %s243 = smul.addr %s240, 2
        %s244 = sadd.s32 %s242, %s243
        %s245 = smul.addr %s244, 4
        %s246 = scalar_lea.vmem %s1, %s245
        %s247 = smul.u32 32, %s19
        %s248 = smul.u32 2, %s18
      $region36: #{resnet_small_forward.24} parent=27 // pred_fallthru
        _
    $region28: #{resnet_small_forward.24} parent=5 // pred_fallthru
      _
    %p249 = scmp.le.s32.totalorder 1, %s11
    %p250 = scmp.lt.s32.totalorder %s11, 10
    %p251 = pnand %p249, %p250
    %p252 = pneg %p251
    // Predicated region
    $region37: #{resnet_small_forward.24} parent=5 // pred_check
      _
    $region38: #{resnet_small_forward.24} parent=5 // pred_check_branch
      %254 = sbr.rel (%p251) target = $region40
    $region39: #{resnet_small_forward.24} parent=5 // pred_region
      %s255 = ssub.s32 %s11, 1
      %s256 = smul.u32 2, %s21
      %p257 = scmp.lt.s32.totalorder %s256, 17
      %s258 = scalar_select %p257, %s256, 17
      %s259 = smul.addr %s258, 4
      %s260 = scalar_lea.vmem %s0, %s259
      %p261 = pneg %p49
      %p262 = pneg %p46
      %s263 = smul.u32 32, %s21
      %s264 = smul.u32 2, %s20
      %p265 = scmp.lt.s32.totalorder %s263, 287
      %s266 = scalar_select %p265, %s263, 287
      %p267 = scmp.lt.s32.totalorder %s264, 1
      %s268 = scalar_select %p267, %s264, 1
      %s269 = smul.addr %s266, 2
      %s270 = sadd.s32 %s268, %s269
      %s271 = smul.addr %s270, 4
      %s272 = scalar_lea.vmem %s1, %s271
      %p273 = pneg %p77
      %p274 = pneg %p74
      %s275 = smul.u32 2, %s20
      %p276 = scmp.lt.s32.totalorder %s275, 1
      %s277 = scalar_select %p276, %s275, 1
      %s278 = scalar_lea.vmem %s2, %s277
      %p279 = pneg %p103
      %p280 = pneg %p100
      %s281 = smul.u32 2, %s20
      %p282 = scmp.lt.s32.totalorder %s281, 1
      %s283 = scalar_select %p282, %s281, 1
      %s284 = scalar_lea.vmem %s3, %s283
      %p285 = pneg %p129
      %p286 = pneg %p126
      %s287 = smul.u32 2, %s20
      %p288 = scmp.lt.s32.totalorder %s287, 1
      %s289 = scalar_select %p288, %s287, 1
      %s290 = smul.addr %s289, 8
      %s291 = scalar_lea.vmem %s4, %s290
      %p292 = pneg %p155
      %p293 = pneg %p152
      %p294 = pneg %p181
      %p295 = pneg %p178
      %s296 = smul.u32 2, %s20
      %p297 = scmp.lt.s32.totalorder %s296, 1
      %s298 = scalar_select %p297, %s296, 1
      %s299 = smul.addr %s298, 8
      %s300 = scalar_lea.vmem %s5, %s299
      %s301 = smul.u32 2, %s21
      %p302 = scmp.lt.s32.totalorder %s301, 17
      %s303 = scalar_select %p302, %s301, 17
      %s304 = smul.addr %s303, 4
      %s305 = scalar_lea.vmem %s0, %s304
      %s306 = smul.u32 2, %s21
      %s307 = smul.u32 32, %s21
      %s308 = smul.u32 2, %s20
      %p309 = scmp.lt.s32.totalorder %s307, 287
      %s310 = scalar_select %p309, %s307, 287
      %p311 = scmp.lt.s32.totalorder %s308, 1
      %s312 = scalar_select %p311, %s308, 1
      %s313 = smul.addr %s310, 2
      %s314 = sadd.s32 %s312, %s313
      %s315 = smul.addr %s314, 4
      %s316 = scalar_lea.vmem %s1, %s315
      %s317 = smul.u32 32, %s21
      %s318 = smul.u32 2, %s20
      %s319 = smul.u32 2, %s20
      %p320 = scmp.lt.s32.totalorder %s319, 1
      %s321 = scalar_select %p320, %s319, 1
      %s322 = scalar_lea.vmem %s2, %s321
      %s323 = smul.u32 2, %s20
      %s324 = smul.u32 2, %s20
      %p325 = scmp.lt.s32.totalorder %s324, 1
      %s326 = scalar_select %p325, %s324, 1
      %s327 = scalar_lea.vmem %s3, %s326
      %s328 = smul.u32 2, %s20
      %s329 = smul.u32 2, %s20
      %p330 = scmp.lt.s32.totalorder %s329, 1
      %s331 = scalar_select %p330, %s329, 1
      %s332 = smul.addr %s331, 8
      %s333 = scalar_lea.vmem %s4, %s332
      %s334 = smul.u32 2, %s20
      %s335 = smul.u32 2, %s20
      %p336 = scmp.lt.s32.totalorder %s335, 1
      %s337 = scalar_select %p336, %s335, 1
      %s338 = smul.addr %s337, 8
      %s339 = scalar_lea.vmem %s5, %s338
      %s340 = smul.u32 2, %s20
      %p341 = scmp.eq.s32.totalorder %s21, 0
      // Predicated region
      $region41: #{resnet_small_forward.24} parent=39 // pred_check
        %p342 = pneg %p341
      $region42: #{resnet_small_forward.24} parent=39 // pred_check_branch
        %344 = sbr.rel (%p342) target = $region44
      $region43: #{resnet_small_forward.24} parent=39 // pred_region
        %345 = vst [vmem:[#allocation2] sm:$0xff] 0.0
        %346 = vst [vmem:[#allocation2 + $0x8] sm:$0xff] 0.0
      $region44: #{resnet_small_forward.24} parent=39 // pred_fallthru
        _
      %v347 = vld [vmem:[#allocation2] sm:$0xff]
      %v348 = vld [vmem:[#allocation2 + $0x8] sm:$0xff]
      %v349 = vld [vmem:[%s305] sm:$0xff]
      %v350 = vld [vmem:[%s316] sm:$0xff]
      %v351 = vld [vmem:[%s316 + $0x8] sm:$0xff]
      %v352 = vld [vmem:[%s316 + $0x10] sm:$0xff]
      %v353 = vld [vmem:[%s316 + $0x18] sm:$0xff]
      %v354 = vld [vmem:[%s316 + $0x20] sm:$0xff]
      %v355 = vld [vmem:[%s316 + $0x28] sm:$0xff]
      %v356 = vld [vmem:[%s316 + $0x30] sm:$0xff]
      %v357 = vld [vmem:[%s316 + $0x38] sm:$0xff]
      %v358 = vld [vmem:[%s316 + $0x40] sm:$0xff]
      %v359 = vld [vmem:[%s316 + $0x48] sm:$0xff]
      %v360 = vld [vmem:[%s316 + $0x50] sm:$0xff]
      %v361 = vld [vmem:[%s316 + $0x58] sm:$0xff]
      %v362 = vld [vmem:[%s316 + $0x60] sm:$0xff]
      %v363 = vld [vmem:[%s316 + $0x68] sm:$0xff]
      %v364 = vld [vmem:[%s316 + $0x70] sm:$0xff]
      %v365 = vld [vmem:[%s316 + $0x78] sm:$0xff]
      %v366 = vld [vmem:[%s316 + $0x80] sm:$0xff]
      %v367 = vld [vmem:[%s316 + $0x88] sm:$0xff]
      %v368 = vld [vmem:[%s316 + $0x90] sm:$0xff]
      %v369 = vld [vmem:[%s316 + $0x98] sm:$0xff]
      %v370 = vld [vmem:[%s316 + $0xa0] sm:$0xff]
      %v371 = vld [vmem:[%s316 + $0xa8] sm:$0xff]
      %v372 = vld [vmem:[%s316 + $0xb0] sm:$0xff]
      %v373 = vld [vmem:[%s316 + $0xb8] sm:$0xff]
      %v374 = vld [vmem:[%s316 + $0xc0] sm:$0xff]
      %v375 = vld [vmem:[%s316 + $0xc8] sm:$0xff]
      %v376 = vld [vmem:[%s316 + $0xd0] sm:$0xff]
      %v377 = vld [vmem:[%s316 + $0xd8] sm:$0xff]
      %v378 = vld [vmem:[%s316 + $0xe0] sm:$0xff]
      %v379 = vld [vmem:[%s316 + $0xe8] sm:$0xff]
      %v380 = vld [vmem:[%s316 + $0xf0] sm:$0xff]
      %v381 = vld [vmem:[%s316 + $0xf8] sm:$0xff]
      %v383 = vunpack.c.l.b16 %v349
      %v384 = vunpack.c.h.b16 %v349
      %v385 = vpack.c.b16 %v383, %v383
      %v386 = vpack.c.b16 %v384, %v384
      %v421 = vunpack.c.l.b16 %v350
      %v422 = vunpack.c.h.b16 %v350
      %v423 = vunpack.c.l.b16 %v351
      %v424 = vunpack.c.h.b16 %v351
      %v425 = vunpack.c.l.b16 %v352
      %v426 = vunpack.c.h.b16 %v352
      %v427 = vunpack.c.l.b16 %v353
      %v428 = vunpack.c.h.b16 %v353
      %v429 = vunpack.c.l.b16 %v354
      %v430 = vunpack.c.h.b16 %v354
      %v431 = vunpack.c.l.b16 %v355
      %v432 = vunpack.c.h.b16 %v355
      %v433 = vunpack.c.l.b16 %v356
      %v434 = vunpack.c.h.b16 %v356
      %v435 = vunpack.c.l.b16 %v357
      %v436 = vunpack.c.h.b16 %v357
      %v437 = vunpack.c.l.b16 %v358
      %v438 = vunpack.c.h.b16 %v358
      %v439 = vunpack.c.l.b16 %v359
      %v440 = vunpack.c.h.b16 %v359
      %v441 = vunpack.c.l.b16 %v360
      %v442 = vunpack.c.h.b16 %v360
      %v443 = vunpack.c.l.b16 %v361
      %v444 = vunpack.c.h.b16 %v361
      %v445 = vunpack.c.l.b16 %v362
      %v446 = vunpack.c.h.b16 %v362
      %v447 = vunpack.c.l.b16 %v363
      %v448 = vunpack.c.h.b16 %v363
      %v449 = vunpack.c.l.b16 %v364
      %v450 = vunpack.c.h.b16 %v364
      %v451 = vunpack.c.l.b16 %v365
      %v452 = vunpack.c.h.b16 %v365
      %v453 = vunpack.c.l.b16 %v366
      %v454 = vunpack.c.h.b16 %v366
      %v455 = vunpack.c.l.b16 %v367
      %v456 = vunpack.c.h.b16 %v367
      %v457 = vunpack.c.l.b16 %v368
      %v458 = vunpack.c.h.b16 %v368
      %v459 = vunpack.c.l.b16 %v369
      %v460 = vunpack.c.h.b16 %v369
      %v461 = vunpack.c.l.b16 %v370
      %v462 = vunpack.c.h.b16 %v370
      %v463 = vunpack.c.l.b16 %v371
      %v464 = vunpack.c.h.b16 %v371
      %v465 = vunpack.c.l.b16 %v372
      %v466 = vunpack.c.h.b16 %v372
      %v467 = vunpack.c.l.b16 %v373
      %v468 = vunpack.c.h.b16 %v373
      %v469 = vunpack.c.l.b16 %v374
      %v470 = vunpack.c.h.b16 %v374
      %v471 = vunpack.c.l.b16 %v375
      %v472 = vunpack.c.h.b16 %v375
      %v473 = vunpack.c.l.b16 %v376
      %v474 = vunpack.c.h.b16 %v376
      %v475 = vunpack.c.l.b16 %v377
      %v476 = vunpack.c.h.b16 %v377
      %v477 = vunpack.c.l.b16 %v378
      %v478 = vunpack.c.h.b16 %v378
      %v479 = vunpack.c.l.b16 %v379
      %v480 = vunpack.c.h.b16 %v379
      %v481 = vunpack.c.l.b16 %v380
      %v482 = vunpack.c.h.b16 %v380
      %v483 = vunpack.c.l.b16 %v381
      %v484 = vunpack.c.h.b16 %v381
      %v485 = vpack.c.b16 %v423, %v421
      %v486 = vpack.c.b16 %v424, %v422
      %v487 = vpack.c.b16 %v427, %v425
      %v488 = vpack.c.b16 %v428, %v426
      %v489 = vpack.c.b16 %v431, %v429
      %v490 = vpack.c.b16 %v432, %v430
      %v491 = vpack.c.b16 %v435, %v433
      %v492 = vpack.c.b16 %v436, %v434
      %v493 = vpack.c.b16 %v439, %v437
      %v494 = vpack.c.b16 %v440, %v438
      %v495 = vpack.c.b16 %v443, %v441
      %v496 = vpack.c.b16 %v444, %v442
      %v497 = vpack.c.b16 %v447, %v445
      %v498 = vpack.c.b16 %v448, %v446
      %v499 = vpack.c.b16 %v451, %v449
      %v500 = vpack.c.b16 %v452, %v450
      %v501 = vpack.c.b16 %v455, %v453
      %v502 = vpack.c.b16 %v456, %v454
      %v503 = vpack.c.b16 %v459, %v457
      %v504 = vpack.c.b16 %v460, %v458
      %v505 = vpack.c.b16 %v463, %v461
      %v506 = vpack.c.b16 %v464, %v462
      %v507 = vpack.c.b16 %v467, %v465
      %v508 = vpack.c.b16 %v468, %v466
      %v509 = vpack.c.b16 %v471, %v469
      %v510 = vpack.c.b16 %v472, %v470
      %v511 = vpack.c.b16 %v475, %v473
      %v512 = vpack.c.b16 %v476, %v474
      %v513 = vpack.c.b16 %v479, %v477
      %v514 = vpack.c.b16 %v480, %v478
      %v515 = vpack.c.b16 %v483, %v481
      %v516 = vpack.c.b16 %v484, %v482
      %549 = vmatpush.bf16.msra.mxu0 %v499
      %550 = vmatpush.bf16.msra.mxu0 %v497
      %551 = vmatpush.bf16.msra.mxu0 %v495
      %552 = vmatpush.bf16.msra.mxu0 %v493
      %553 = vmatpush.bf16.msra.mxu0 %v491
      %554 = vmatpush.bf16.msra.mxu0 %v489
      %555 = vmatpush.bf16.msra.mxu0 %v487
      %556 = vmatpush.bf16.msra.mxu0 %v485
      %557 = vmatmul.bf16.gmra.mxu0 %v385
      %v558 = vpop.f32.mrf.mxu0
      %v559 = vadd.f32 0.0, %v558
      %v560 = vpop.f32.mrf.mxu0
      %561 = vdwg.mxu0
      %562 = vmatpush.bf16.msra.mxu0 %v515
      %563 = vmatpush.bf16.msra.mxu0 %v513
      %564 = vmatpush.bf16.msra.mxu0 %v511
      %565 = vmatpush.bf16.msra.mxu0 %v509
      %566 = vmatpush.bf16.msra.mxu0 %v507
      %567 = vmatpush.bf16.msra.mxu0 %v505
      %568 = vmatpush.bf16.msra.mxu0 %v503
      %569 = vmatpush.bf16.msra.mxu0 %v501
      %570 = vmatmul.bf16.gmra.mxu0 %v386
      %v571 = vpop.f32.mrf.mxu0
      %v572 = vadd.f32 %v559, %v571
      %v573 = vpop.f32.mrf.mxu0
      %574 = vdwg.mxu0
      %575 = vmatpush.bf16.msra.mxu0 %v500
      %576 = vmatpush.bf16.msra.mxu0 %v498
      %577 = vmatpush.bf16.msra.mxu0 %v496
      %578 = vmatpush.bf16.msra.mxu0 %v494
      %579 = vmatpush.bf16.msra.mxu0 %v492
      %580 = vmatpush.bf16.msra.mxu0 %v490
      %581 = vmatpush.bf16.msra.mxu0 %v488
      %582 = vmatpush.bf16.msra.mxu0 %v486
      %583 = vmatmul.bf16.gmra.mxu0 %v385
      %v584 = vpop.f32.mrf.mxu0
      %v585 = vadd.f32 0.0, %v584
      %v586 = vpop.f32.mrf.mxu0
      %587 = vdwg.mxu0
      %588 = vmatpush.bf16.msra.mxu0 %v516
      %589 = vmatpush.bf16.msra.mxu0 %v514
      %590 = vmatpush.bf16.msra.mxu0 %v512
      %591 = vmatpush.bf16.msra.mxu0 %v510
      %592 = vmatpush.bf16.msra.mxu0 %v508
      %593 = vmatpush.bf16.msra.mxu0 %v506
      %594 = vmatpush.bf16.msra.mxu0 %v504
      %595 = vmatpush.bf16.msra.mxu0 %v502
      %596 = vmatmul.bf16.gmra.mxu0 %v386
      %v597 = vpop.f32.mrf.mxu0
      %v598 = vadd.f32 %v585, %v597
      %v599 = vpop.f32.mrf.mxu0
      %600 = vdwg.mxu0
      %v601 = vadd.f32 %v347, %v572
      %v602 = vadd.f32 %v348, %v598
      %603 = vst [vmem:[#allocation2] sm:$0xff] %v601
      %604 = vst [vmem:[#allocation2 + $0x8] sm:$0xff] %v602
      %p605 = scmp.eq.s32.totalorder %s21, 8
      // Predicated region
      $region45: #{resnet_small_forward.24} parent=39 // pred_check
        %p606 = pneg %p605
      $region46: #{resnet_small_forward.24} parent=39 // pred_check_branch
        %608 = sbr.rel (%p606) target = $region48
      $region47: #{resnet_small_forward.24} parent=39 // pred_region
        %v609 = vld [vmem:[#allocation2] sm:$0xff]
        %v610 = vld [vmem:[#allocation2 + $0x8] sm:$0xff]
        %v611 = vrot.slane %v609, 4
        %v612 = vadd.f32 %v609, %v611
        %v613 = vrot.slane %v612, 2
        %v614 = vadd.f32 %v612, %v613
        %v615 = vrot.slane %v614, 1
        %v616 = vadd.f32 %v614, %v615
        %v617 = vrot.slane %v610, 4
        %v618 = vadd.f32 %v610, %v617
        %v619 = vrot.slane %v618, 2
        %v620 = vadd.f32 %v618, %v619
        %v621 = vrot.slane %v620, 1
        %v622 = vadd.f32 %v620, %v621
        %v623 = vmul.f32 %v616, 0.5
        %v624 = vmul.f32 %v622, 0.5
        %v625 = vmul.f32 %v609, %v609
        %v626 = vmul.f32 %v610, %v610
        %v627 = vrot.slane %v625, 4
        %v628 = vadd.f32 %v625, %v627
        %v629 = vrot.slane %v628, 2
        %v630 = vadd.f32 %v628, %v629
        %v631 = vrot.slane %v630, 1
        %v632 = vadd.f32 %v630, %v631
        %v633 = vrot.slane %v626, 4
        %v634 = vadd.f32 %v626, %v633
        %v635 = vrot.slane %v634, 2
        %v636 = vadd.f32 %v634, %v635
        %v637 = vrot.slane %v636, 1
        %v638 = vadd.f32 %v636, %v637
        %v639 = vmul.f32 %v632, 0.5
        %v640 = vmul.f32 %v638, 0.5
        %v641 = vmul.f32 %v623, %v623
        %v642 = vmul.f32 %v624, %v624
        %v643 = vsub.f32 %v639, %v641
        %v644 = vsub.f32 %v640, %v642
        %v645 = vadd.f32 %v643, 1e-05
        %v646 = vadd.f32 %v644, 1e-05
        %v647 = vrsqrt.pop %v645
        %v648 = vmul.f32 %v647, %v645
        %v649 = vmul.f32 %v648, %v647
        %v650 = vmul.f32 0.5, %v649
        %v651 = vsub.f32 1.5, %v650
        %v652 = vmul.f32 %v647, %v651
        %vm653 = vweird.f32 %v645
        %vm654 = vweird.f32 %v647
        %vm655 = vmor %vm653, %vm654
        %v656 = vsel %vm655, %v647, %v652
        %v657 = vrsqrt.pop %v646
        %v658 = vmul.f32 %v657, %v646
        %v659 = vmul.f32 %v658, %v657
        %v660 = vmul.f32 0.5, %v659
        %v661 = vsub.f32 1.5, %v660
        %v662 = vmul.f32 %v657, %v661
        %vm663 = vweird.f32 %v646
        %vm664 = vweird.f32 %v657
        %vm665 = vmor %vm663, %vm664
        %v666 = vsel %vm665, %v657, %v662
        %v667 = vld [vmem:[%s322] sm:$0x3]
        %v669 = vperm.slane %v667, 0
        %v670 = vperm.slane %v667, 1
        %v673 = vmul.f32 %v656, %v669
        %v674 = vmul.f32 %v666, %v670
        %v675 = vld [vmem:[%s327] sm:$0x3]
        %v676 = vmul.f32 %v623, %v673
        %v677 = vmul.f32 %v624, %v674
        %v680 = vrot.slane %v677, 7
        %vm681 = vcmask 1040384
        %v682 = vsel %vm681, %v676, %v680
        %v684 = vsub.f32 %v675, %v682
        %v685 = vperm.slane %v673, 0
        %v686 = vperm.slane %v674, 0
        %v687 = vmul.f32 %v609, %v685
        %v688 = vmul.f32 %v610, %v686
        %v690 = vperm.slane %v684, 0
        %v691 = vperm.slane %v684, 1
        %v694 = vadd.f32 %v687, %v690
        %v695 = vadd.f32 %v688, %v691
        %v696 = vmax.f32 %v694, 0.0
        %v697 = vmax.f32 %v695, 0.0
        %v698 = vld [vmem:[%s333] sm:$0xff]
        %v699 = vld [vmem:[%s333 + $0x8] sm:$0xff]
        %v700 = vadd.f32 %v696, %v698
        %v701 = vadd.f32 %v697, %v699
        %v702 = vmax.f32 %v700, 0.0
        %v703 = vmax.f32 %v701, 0.0
        %704 = vst [vmem:[%s339] sm:$0xff] %v702
        %705 = vst [vmem:[%s339 + $0x8] sm:$0xff] %v703
      $region48: #{resnet_small_forward.24} parent=39 // pred_fallthru
        _
      %s706 = smul.u32 2, %s20
      %p707 = scmp.lt.s32.totalorder %s706, 1
      %s708 = scalar_select %p707, %s706, 1
      %s709 = smul.addr %s708, 8
      %s710 = scalar_lea.vmem %s5, %s709
      // Predicated region
      $region49: #{resnet_small_forward.24} parent=39 // pred_check
        %p711 = pneg %p178
      $region50: #{resnet_small_forward.24} parent=39 // pred_check_branch
        %713 = sbr.rel (%p711) target = $region52
      $region51: #{resnet_small_forward.24} parent=39 // pred_region
        %s714 = smul.u32 2, %s20
      $region52: #{resnet_small_forward.24} parent=39 // pred_fallthru
        _
      // Predicated region
      $region53: #{resnet_small_forward.24} parent=39 // pred_check
        %p715 = pneg %p178
      $region54: #{resnet_small_forward.24} parent=39 // pred_check_branch
        %717 = sbr.rel (%p715) target = $region56
      $region55: #{resnet_small_forward.24} parent=39 // pred_region
        %s718 = smul.u32 2, %s20
        %p719 = scmp.lt.s32.totalorder %s718, 1
        %s720 = scalar_select %p719, %s718, 1
        %s721 = smul.addr %s720, 8
        %s722 = scalar_lea.vmem %s5, %s721
      $region56: #{resnet_small_forward.24} parent=39 // pred_fallthru
        _
    $region40: #{resnet_small_forward.24} parent=5 // pred_fallthru
      _
    %p723 = scmp.le.s32.totalorder 2, %s11
    // Predicated region
    $region57: #{resnet_small_forward.24} parent=5 // pred_check
      %p724 = pneg %p723
    $region58: #{resnet_small_forward.24} parent=5 // pred_check_branch
      %726 = sbr.rel (%p724) target = $region60
    $region59: #{resnet_small_forward.24} parent=5 // pred_region
      %s727 = ssub.s32 %s11, 2
    $region60: #{resnet_small_forward.24} parent=5 // pred_fallthru
      _
  $region6: #{resnet_small_forward.24} parent=0 // loop_footer
    %s15 = sadd.s32 1, %s11
  $region7: #{resnet_small_forward.24} parent=0 // loop_footer_branch
    %10 = sbr.rel target = $region3
  $region8: #{resnet_small_forward.24} parent=0 // loop_exit
    _

// kernel: resnet_small_forward.23
$region0: #{resnet_small_forward.23}
  #allocation0 [shape = 'u32[]', space=smem, size = 0x4, offset = 0x4, fixed_abs, tag = 'smem constant byte address 0x4 - core index']
  #allocation1 [shape = 'u32[72,128]{1,0:T(1,128)}', space=vmem, size = 0x9000, scoped, tag = 'internal scratch']
  #allocation2 [shape = 'f32[8,256]{1,0:T(8,128)}', space=vmem, size = 0x2000, scoped, tag = 'scratch operand']
  %s0 = inlined_call_operand.vmem [shape: bf16[8,128], index: 0, kind: input, shape index: {}]
  %s1 = inlined_call_operand.vmem [shape: bf16[128,256], index: 1, kind: input, shape index: {}]
  %s2 = inlined_call_operand.vmem [shape: f32[1,256], index: 2, kind: input, shape index: {}]
  %s3 = inlined_call_operand.vmem [shape: f32[1,256], index: 3, kind: input, shape index: {}]
  %s4 = inlined_call_operand.vmem [shape: f32[8,256], index: 4, kind: output, shape index: {}]
  %s5 = sld [smem:[#allocation0]]
  $region34: #{resnet_small_forward.23} parent=0
    _
  %s7 = ssub.s32 1, %s5
  %s8 = scalar_select 0, %s7, %s5
  // Predicated region
  $region2: #{resnet_small_forward.23} parent=0 // pred_check
    _
  $region3: #{resnet_small_forward.23} parent=0 // pred_check_branch
    %10 = sbr.rel (0) target = $region5
  $region4: #{resnet_small_forward.23} parent=0 // pred_region
    _
  $region5: #{resnet_small_forward.23} parent=0 // pred_fallthru
    _
  // Predicated region
  $region6: #{resnet_small_forward.23} parent=0 // pred_check
    _
  $region7: #{resnet_small_forward.23} parent=0 // pred_check_branch
    %12 = sbr.rel (0) target = $region9
  $region8: #{resnet_small_forward.23} parent=0 // pred_region
    _
  $region9: #{resnet_small_forward.23} parent=0 // pred_fallthru
    _
  // Predicated region
  $region10: #{resnet_small_forward.23} parent=0 // pred_check
    _
  $region11: #{resnet_small_forward.23} parent=0 // pred_check_branch
    %14 = sbr.rel (0) target = $region13
  $region12: #{resnet_small_forward.23} parent=0 // pred_region
    _
  $region13: #{resnet_small_forward.23} parent=0 // pred_fallthru
    _
  // Predicated region
  $region14: #{resnet_small_forward.23} parent=0 // pred_check
    _
  $region15: #{resnet_small_forward.23} parent=0 // pred_check_branch
    %16 = sbr.rel (0) target = $region17
  $region16: #{resnet_small_forward.23} parent=0 // pred_region
    _
  $region17: #{resnet_small_forward.23} parent=0 // pred_fallthru
    _
  %p17 = scmp.eq.s32.totalorder 0, 0
  // Predicated region
  $region18: #{resnet_small_forward.23} parent=0 // pred_check
    %p18 = pneg %p17
  $region19: #{resnet_small_forward.23} parent=0 // pred_check_branch
    %20 = sbr.rel (%p18) target = $region21
  $region20: #{resnet_small_forward.23} parent=0 // pred_region
    %21 = vst [vmem:[#allocation2] sm:$0xff] 0.0
    %22 = vst [vmem:[#allocation2 + $0x8] sm:$0xff] 0.0
  $region21: #{resnet_small_forward.23} parent=0 // pred_fallthru
    _
  %v23 = vld [vmem:[#allocation2] sm:$0xff]
  %v24 = vld [vmem:[#allocation2 + $0x8] sm:$0xff]
  %v25 = vld [vmem:[%s0] sm:$0xf]
  %v26 = vld [vmem:[%s1] sm:$0xff]
  %v27 = vld [vmem:[%s1 + $0x8] sm:$0xff]
  %v28 = vld [vmem:[%s1 + $0x10] sm:$0xff]
  %v29 = vld [vmem:[%s1 + $0x18] sm:$0xff]
  %v30 = vld [vmem:[%s1 + $0x20] sm:$0xff]
  %v31 = vld [vmem:[%s1 + $0x28] sm:$0xff]
  %v32 = vld [vmem:[%s1 + $0x30] sm:$0xff]
  %v33 = vld [vmem:[%s1 + $0x38] sm:$0xff]
  %v34 = vld [vmem:[%s1 + $0x40] sm:$0xff]
  %v35 = vld [vmem:[%s1 + $0x48] sm:$0xff]
  %v36 = vld [vmem:[%s1 + $0x50] sm:$0xff]
  %v37 = vld [vmem:[%s1 + $0x58] sm:$0xff]
  %v38 = vld [vmem:[%s1 + $0x60] sm:$0xff]
  %v39 = vld [vmem:[%s1 + $0x68] sm:$0xff]
  %v40 = vld [vmem:[%s1 + $0x70] sm:$0xff]
  %v41 = vld [vmem:[%s1 + $0x78] sm:$0xff]
  %v58 = vunpack.c.l.b16 %v26
  %v59 = vunpack.c.h.b16 %v26
  %v60 = vunpack.c.l.b16 %v27
  %v61 = vunpack.c.h.b16 %v27
  %v62 = vunpack.c.l.b16 %v28
  %v63 = vunpack.c.h.b16 %v28
  %v64 = vunpack.c.l.b16 %v29
  %v65 = vunpack.c.h.b16 %v29
  %v66 = vunpack.c.l.b16 %v30
  %v67 = vunpack.c.h.b16 %v30
  %v68 = vunpack.c.l.b16 %v31
  %v69 = vunpack.c.h.b16 %v31
  %v70 = vunpack.c.l.b16 %v32
  %v71 = vunpack.c.h.b16 %v32
  %v72 = vunpack.c.l.b16 %v33
  %v73 = vunpack.c.h.b16 %v33
  %v74 = vunpack.c.l.b16 %v34
  %v75 = vunpack.c.h.b16 %v34
  %v76 = vunpack.c.l.b16 %v35
  %v77 = vunpack.c.h.b16 %v35
  %v78 = vunpack.c.l.b16 %v36
  %v79 = vunpack.c.h.b16 %v36
  %v80 = vunpack.c.l.b16 %v37
  %v81 = vunpack.c.h.b16 %v37
  %v82 = vunpack.c.l.b16 %v38
  %v83 = vunpack.c.h.b16 %v38
  %v84 = vunpack.c.l.b16 %v39
  %v85 = vunpack.c.h.b16 %v39
  %v86 = vunpack.c.l.b16 %v40
  %v87 = vunpack.c.h.b16 %v40
  %v88 = vunpack.c.l.b16 %v41
  %v89 = vunpack.c.h.b16 %v41
  %v90 = vpack.c.b16 %v60, %v58
  %v91 = vpack.c.b16 %v61, %v59
  %v92 = vpack.c.b16 %v64, %v62
  %v93 = vpack.c.b16 %v65, %v63
  %v94 = vpack.c.b16 %v68, %v66
  %v95 = vpack.c.b16 %v69, %v67
  %v96 = vpack.c.b16 %v72, %v70
  %v97 = vpack.c.b16 %v73, %v71
  %v98 = vpack.c.b16 %v76, %v74
  %v99 = vpack.c.b16 %v77, %v75
  %v100 = vpack.c.b16 %v80, %v78
  %v101 = vpack.c.b16 %v81, %v79
  %v102 = vpack.c.b16 %v84, %v82
  %v103 = vpack.c.b16 %v85, %v83
  %v104 = vpack.c.b16 %v88, %v86
  %v105 = vpack.c.b16 %v89, %v87
  %122 = vmatpush.bf16.msra.mxu0 %v104
  %123 = vmatpush.bf16.msra.mxu0 %v102
  %124 = vmatpush.bf16.msra.mxu0 %v100
  %125 = vmatpush.bf16.msra.mxu0 %v98
  %126 = vmatpush.bf16.msra.mxu0 %v96
  %127 = vmatpush.bf16.msra.mxu0 %v94
  %128 = vmatpush.bf16.msra.mxu0 %v92
  %129 = vmatpush.bf16.msra.mxu0 %v90
  %130 = vmatmul.bf16.gmra.mxu0 %v25
  %v131 = vpop.f32.mrf.mxu0
  %v132 = vadd.f32 0.0, %v131
  %v133 = vpop.f32.mrf.mxu0
  %134 = vdwg.mxu0
  %135 = vmatpush.bf16.msra.mxu0 %v105
  %136 = vmatpush.bf16.msra.mxu0 %v103
  %137 = vmatpush.bf16.msra.mxu0 %v101
  %138 = vmatpush.bf16.msra.mxu0 %v99
  %139 = vmatpush.bf16.msra.mxu0 %v97
  %140 = vmatpush.bf16.msra.mxu0 %v95
  %141 = vmatpush.bf16.msra.mxu0 %v93
  %142 = vmatpush.bf16.msra.mxu0 %v91
  %143 = vmatmul.bf16.gmra.mxu0 %v25
  %v144 = vpop.f32.mrf.mxu0
  %v145 = vadd.f32 0.0, %v144
  %v146 = vpop.f32.mrf.mxu0
  %147 = vdwg.mxu0
  %v148 = vadd.f32 %v23, %v132
  %v149 = vadd.f32 %v24, %v145
  %150 = vst [vmem:[#allocation2] sm:$0xff] %v148
  %151 = vst [vmem:[#allocation2 + $0x8] sm:$0xff] %v149
  // Predicated region
  $region22: #{resnet_small_forward.23} parent=0 // pred_check
    %p152 = pneg %p17
  $region23: #{resnet_small_forward.23} parent=0 // pred_check_branch
    %154 = sbr.rel (%p152) target = $region25
  $region24: #{resnet_small_forward.23} parent=0 // pred_region
    %v155 = vld [vmem:[#allocation2] sm:$0xff]
    %v156 = vld [vmem:[#allocation2 + $0x8] sm:$0xff]
    %v157 = vrot.slane %v155, 4
    %v158 = vadd.f32 %v155, %v157
    %v159 = vrot.slane %v158, 2
    %v160 = vadd.f32 %v158, %v159
    %v161 = vrot.slane %v160, 1
    %v162 = vadd.f32 %v160, %v161
    %v163 = vrot.slane %v156, 4
    %v164 = vadd.f32 %v156, %v163
    %v165 = vrot.slane %v164, 2
    %v166 = vadd.f32 %v164, %v165
    %v167 = vrot.slane %v166, 1
    %v168 = vadd.f32 %v166, %v167
    %v169 = vmul.f32 %v162, 0.5
    %v170 = vmul.f32 %v168, 0.5
    %v171 = vmul.f32 %v155, %v155
    %v172 = vmul.f32 %v156, %v156
    %v173 = vrot.slane %v171, 4
    %v174 = vadd.f32 %v171, %v173
    %v175 = vrot.slane %v174, 2
    %v176 = vadd.f32 %v174, %v175
    %v177 = vrot.slane %v176, 1
    %v178 = vadd.f32 %v176, %v177
    %v179 = vrot.slane %v172, 4
    %v180 = vadd.f32 %v172, %v179
    %v181 = vrot.slane %v180, 2
    %v182 = vadd.f32 %v180, %v181
    %v183 = vrot.slane %v182, 1
    %v184 = vadd.f32 %v182, %v183
    %v185 = vmul.f32 %v178, 0.5
    %v186 = vmul.f32 %v184, 0.5
    %v187 = vmul.f32 %v169, %v169
    %v188 = vmul.f32 %v170, %v170
    %v189 = vsub.f32 %v185, %v187
    %v190 = vsub.f32 %v186, %v188
    %v191 = vadd.f32 %v189, 1e-05
    %v192 = vadd.f32 %v190, 1e-05
    %v193 = vrsqrt.pop %v191
    %v194 = vmul.f32 %v193, %v191
    %v195 = vmul.f32 %v194, %v193
    %v196 = vmul.f32 0.5, %v195
    %v197 = vsub.f32 1.5, %v196
    %v198 = vmul.f32 %v193, %v197
    %vm199 = vweird.f32 %v191
    %vm200 = vweird.f32 %v193
    %vm201 = vmor %vm199, %vm200
    %v202 = vsel %vm201, %v193, %v198
    %v203 = vrsqrt.pop %v192
    %v204 = vmul.f32 %v203, %v192
    %v205 = vmul.f32 %v204, %v203
    %v206 = vmul.f32 0.5, %v205
    %v207 = vsub.f32 1.5, %v206
    %v208 = vmul.f32 %v203, %v207
    %vm209 = vweird.f32 %v192
    %vm210 = vweird.f32 %v203
    %vm211 = vmor %vm209, %vm210
    %v212 = vsel %vm211, %v203, %v208
    %v213 = vld [vmem:[%s2] sm:$0x3]
    %v215 = vperm.slane %v213, 0
    %v216 = vperm.slane %v213, 1
    %v219 = vmul.f32 %v202, %v215
    %v220 = vmul.f32 %v212, %v216
    %v221 = vld [vmem:[%s3] sm:$0x3]
    %v222 = vmul.f32 %v169, %v219
    %v223 = vmul.f32 %v170, %v220
    %v226 = vrot.slane %v223, 7
    %vm227 = vcmask 1040384
    %v228 = vsel %vm227, %v222, %v226
    %v230 = vsub.f32 %v221, %v228
    %v231 = vperm.slane %v219, 0
    %v232 = vperm.slane %v220, 0
    %v233 = vmul.f32 %v155, %v231
    %v234 = vmul.f32 %v156, %v232
    %v236 = vperm.slane %v230, 0
    %v237 = vperm.slane %v230, 1
    %v240 = vadd.f32 %v233, %v236
    %v241 = vadd.f32 %v234, %v237
    %242 = vst [vmem:[%s4] sm:$0xff] %v240
    %243 = vst [vmem:[%s4 + $0x8] sm:$0xff] %v241
  $region25: #{resnet_small_forward.23} parent=0 // pred_fallthru
    _
  // Predicated region
  $region26: #{resnet_small_forward.23} parent=0 // pred_check
    _
  $region27: #{resnet_small_forward.23} parent=0 // pred_check_branch
    %245 = sbr.rel (0) target = $region29
  $region28: #{resnet_small_forward.23} parent=0 // pred_region
    _
  $region29: #{resnet_small_forward.23} parent=0 // pred_fallthru
    _
  // Predicated region
  $region30: #{resnet_small_forward.23} parent=0 // pred_check
    _
  $region31: #{resnet_small_forward.23} parent=0 // pred_check_branch
    %247 = sbr.rel (0) target = $region33
  $region32: #{resnet_small_forward.23} parent=0 // pred_region
    _
  $region33: #{resnet_small_forward.23} parent=0 // pred_fallthru
    _

// kernel: resnet_small_forward.25
$region0: #{resnet_small_forward.25}
  #allocation0 [shape = 'u32[]', space=smem, size = 0x4, offset = 0x4, fixed_abs, tag = 'smem constant byte address 0x4 - core index']
  #allocation1 [shape = 'u32[72,128]{1,0:T(1,128)}', space=vmem, size = 0x9000, scoped, tag = 'internal scratch']
  #allocation2 [shape = 'f32[8,256]{1,0:T(8,128)}', space=vmem, size = 0x2000, scoped, tag = 'scratch operand']
  %s0 = inlined_call_operand.vmem [shape: bf16[8,2304], index: 0, kind: input, shape index: {}]
  %s1 = inlined_call_operand.vmem [shape: bf16[2304,512], index: 1, kind: input, shape index: {}]
  %s2 = inlined_call_operand.vmem [shape: f32[1,512], index: 2, kind: input, shape index: {}]
  %s3 = inlined_call_operand.vmem [shape: f32[1,512], index: 3, kind: input, shape index: {}]
  %s4 = inlined_call_operand.vmem [shape: f32[8,512], index: 4, kind: output, shape index: {}]
  %s5 = sld [smem:[#allocation0]]
  $region95: #{resnet_small_forward.25} parent=0
    _
  %s7 = ssub.s32 1, %s5
  %s8 = scalar_select 0, %s7, %s5
  $region1: #{resnet_small_forward.25} parent=0
    #allocation3 [shape = 'u8[262144]{0}', space=vmem, size = 0x40000, scoped, tag = 'input window, operand 1']
    loop: start=0, step=1, limit=20
    $region2: #{resnet_small_forward.25} parent=1 // loop_pre_header
      _
    $region3: #{resnet_small_forward.25} parent=1 // loop_header
      %s10 = sphi 0, %s14
      %p11 = scmp.ge.s32.totalorder %s10, 20
      %s17 = sphi 0, %s29
      %s18 = sphi 0, %s25
      %s19 = sphi 0, %s17
      %s20 = sphi 0, %s18
      %s21 = sphi 0, %s19
      %s22 = sphi 0, %s20
      %s32 = sphi 0, %s34
      %s35 = sphi 0, %s32
      %s36 = sphi 0, %s35
      %s52 = sphi 0, %s36
      %s60 = sphi 0, %s62
      %s63 = sphi 0, %s60
      %s64 = sphi 0, %s63
      %s80 = sphi 0, %s64
      %s86 = sphi 0, %s88
      %s89 = sphi 0, %s86
      %s90 = sphi 0, %s89
      %s106 = sphi 0, %s90
      %s112 = sphi 0, %s114
      %s115 = sphi 0, %s112
      %s116 = sphi 0, %s115
      %s132 = sphi 0, %s116
      %s138 = sphi 0, %s140
      %s141 = sphi 0, %s138
      %s142 = sphi 0, %s141
      %s158 = sphi 0, %s142
    $region4: #{resnet_small_forward.25} parent=1 // loop_header_branch
      %13 = sbr.rel (%p11) target = $region8
    $region5: #{resnet_small_forward.25} parent=1 // loop_body
      %s15 = ssub.s32 %s10, 1
      %s16 = ssub.s32 %s10, 2
      %s23 = sadd.s32 1, %s18
      %p24 = scmp.ge.s32.totalorder %s23, 9
      %s25 = scalar_select %p24, 0, %s23
      %s26 = sadd.s32 1, %s17
      %s27 = scalar_select %p24, %s26, %s17
      %p28 = scmp.ge.s32.totalorder %s27, 2
      %s29 = scalar_select %p28, 0, %s27
      %s30 = ssub.s32 %s18, %s25
      %p31 = scmp.eq.s32.totalorder %s30, 0
      %s33 = sadd.s32 %s32, 1
      %s34 = scalar_select %p31, %s32, %s33
      %p37 = pneg %p31
      %p38 = scmp.eq.s32.totalorder %s10, 17
      %p39 = por %p37, %p38
      %p40 = scmp.ne.s32.totalorder %s32, %s35
      %p41 = scmp.eq.s32.totalorder %s10, 0
      %p42 = por %p40, %p41
      %p43 = scmp.ne.s32.totalorder %s32, %s35
      %p44 = scmp.eq.s32.totalorder %s15, 17
      %p45 = por %p43, %p44
      %p46 = scmp.ne.s32.totalorder %s35, %s36
      %p47 = scmp.eq.s32.totalorder %s15, 0
      %p48 = por %p46, %p47
      %p49 = scmp.ne.s32.totalorder %s35, %s36
      %p50 = scmp.eq.s32.totalorder %s16, 17
      %p51 = por %p49, %p50
      %p53 = scmp.ne.s32.totalorder %s36, %s52
      %p54 = scmp.eq.s32.totalorder %s16, 0
      %p55 = por %p53, %p54
      %s56 = ssub.s32 %s18, %s25
      %s57 = ssub.s32 %s17, %s29
      %s58 = sor.u32 %s56, %s57
      %p59 = scmp.eq.s32.totalorder %s58, 0
      %s61 = sadd.s32 %s60, 1
      %s62 = scalar_select %p59, %s60, %s61
      %p65 = pneg %p59
      %p66 = scmp.eq.s32.totalorder %s10, 17
      %p67 = por %p65, %p66
      %p68 = scmp.ne.s32.totalorder %s60, %s63
      %p69 = scmp.eq.s32.totalorder %s10, 0
      %p70 = por %p68, %p69
      %p71 = scmp.ne.s32.totalorder %s60, %s63
      %p72 = scmp.eq.s32.totalorder %s15, 17
      %p73 = por %p71, %p72
      %p74 = scmp.ne.s32.totalorder %s63, %s64
      %p75 = scmp.eq.s32.totalorder %s15, 0
      %p76 = por %p74, %p75
      %p77 = scmp.ne.s32.totalorder %s63, %s64
      %p78 = scmp.eq.s32.totalorder %s16, 17
      %p79 = por %p77, %p78
      %p81 = scmp.ne.s32.totalorder %s64, %s80
      %p82 = scmp.eq.s32.totalorder %s16, 0
      %p83 = por %p81, %p82
      %s84 = ssub.s32 %s17, %s29
      %p85 = scmp.eq.s32.totalorder %s84, 0
      %s87 = sadd.s32 %s86, 1
      %s88 = scalar_select %p85, %s86, %s87
      %p91 = pneg %p85
      %p92 = scmp.eq.s32.totalorder %s10, 17
      %p93 = por %p91, %p92
      %p94 = scmp.ne.s32.totalorder %s86, %s89
      %p95 = scmp.eq.s32.totalorder %s10, 0
      %p96 = por %p94, %p95
      %p97 = scmp.ne.s32.totalorder %s86, %s89
      %p98 = scmp.eq.s32.totalorder %s15, 17
      %p99 = por %p97, %p98
      %p100 = scmp.ne.s32.totalorder %s89, %s90
      %p101 = scmp.eq.s32.totalorder %s15, 0
      %p102 = por %p100, %p101
      %p103 = scmp.ne.s32.totalorder %s89, %s90
      %p104 = scmp.eq.s32.totalorder %s16, 17
      %p105 = por %p103, %p104
      %p107 = scmp.ne.s32.totalorder %s90, %s106
      %p108 = scmp.eq.s32.totalorder %s16, 0
      %p109 = por %p107, %p108
      %s110 = ssub.s32 %s17, %s29
      %p111 = scmp.eq.s32.totalorder %s110, 0
      %s113 = sadd.s32 %s112, 1
      %s114 = scalar_select %p111, %s112, %s113
      %p117 = pneg %p111
      %p118 = scmp.eq.s32.totalorder %s10, 17
      %p119 = por %p117, %p118
      %p120 = scmp.ne.s32.totalorder %s112, %s115
      %p121 = scmp.eq.s32.totalorder %s10, 0
      %p122 = por %p120, %p121
      %p123 = scmp.ne.s32.totalorder %s112, %s115
      %p124 = scmp.eq.s32.totalorder %s15, 17
      %p125 = por %p123, %p124
      %p126 = scmp.ne.s32.totalorder %s115, %s116
      %p127 = scmp.eq.s32.totalorder %s15, 0
      %p128 = por %p126, %p127
      %p129 = scmp.ne.s32.totalorder %s115, %s116
      %p130 = scmp.eq.s32.totalorder %s16, 17
      %p131 = por %p129, %p130
      %p133 = scmp.ne.s32.totalorder %s116, %s132
      %p134 = scmp.eq.s32.totalorder %s16, 0
      %p135 = por %p133, %p134
      %s136 = ssub.s32 %s17, %s29
      %p137 = scmp.eq.s32.totalorder %s136, 0
      %s139 = sadd.s32 %s138, 1
      %s140 = scalar_select %p137, %s138, %s139
      %p143 = pneg %p137
      %p144 = scmp.eq.s32.totalorder %s10, 17
      %p145 = por %p143, %p144
      %p146 = scmp.ne.s32.totalorder %s138, %s141
      %p147 = scmp.eq.s32.totalorder %s10, 0
      %p148 = por %p146, %p147
      %p149 = scmp.ne.s32.totalorder %s138, %s141
      %p150 = scmp.eq.s32.totalorder %s15, 17
      %p151 = por %p149, %p150
      %p152 = scmp.ne.s32.totalorder %s141, %s142
      %p153 = scmp.eq.s32.totalorder %s15, 0
      %p154 = por %p152, %p153
      %p155 = scmp.ne.s32.totalorder %s141, %s142
      %p156 = scmp.eq.s32.totalorder %s16, 17
      %p157 = por %p155, %p156
      %p159 = scmp.ne.s32.totalorder %s142, %s158
      %p160 = scmp.eq.s32.totalorder %s16, 0
      %p161 = por %p159, %p160
      %p162 = scmp.le.s32.totalorder 1, %s10
      %p163 = scmp.lt.s32.totalorder %s10, 19
      %p164 = pnand %p162, %p163
      %p165 = pneg %p164
      // Predicated region
      $region9: #{resnet_small_forward.25} parent=5 // pred_check
        _
      $region10: #{resnet_small_forward.25} parent=5 // pred_check_branch
        %167 = sbr.rel (%p164) target = $region12
      $region11: #{resnet_small_forward.25} parent=5 // pred_region
        %s168 = ssub.s32 %s10, 1
      $region12: #{resnet_small_forward.25} parent=5 // pred_fallthru
        _
      %p169 = scmp.lt.s32.totalorder %s10, 18
      // Predicated region
      $region13: #{resnet_small_forward.25} parent=5 // pred_check
        %p170 = pneg %p169
      $region14: #{resnet_small_forward.25} parent=5 // pred_check_branch
        %172 = sbr.rel (%p170) target = $region16
      $region15: #{resnet_small_forward.25} parent=5 // pred_region
        // Predicated region
        $region17: #{resnet_small_forward.25} parent=15 // pred_check
          %p173 = pneg %p42
        $region18: #{resnet_small_forward.25} parent=15 // pred_check_branch
          %175 = sbr.rel (%p173) target = $region20
        $region19: #{resnet_small_forward.25} parent=15 // pred_region
          %s176 = smul.u32 2, %s18
          %p177 = scmp.lt.s32.totalorder %s176, 17
          %s178 = scalar_select %p177, %s176, 17
          %s179 = smul.addr %s178, 4
          %s180 = scalar_lea.vmem %s0, %s179
          %s181 = smul.u32 2, %s18
        $region20: #{resnet_small_forward.25} parent=15 // pred_fallthru
          _
        // Predicated region
        $region21: #{resnet_small_forward.25} parent=15 // pred_check
          %p182 = pneg %p70
        $region22: #{resnet_small_forward.25} parent=15 // pred_check_branch
          %184 = sbr.rel (%p182) target = $region24
        $region23: #{resnet_small_forward.25} parent=15 // pred_region
          %s185 = sand.u32 %s60, 1
          %s186 = sand.u32 %s60, 1
          %s187 = smul.addr %s186, 256
          %s188 = scalar_lea.vmem [#allocation3], %s187
          %s189 = smul.u32 32, %s18
          %s190 = smul.u32 2, %s17
          %s191 = smul.addr %s189, 4
          %s192 = sadd.s32 %s190, %s191
          %s193 = smul.addr %s192, 4
          %s194 = scalar_lea.vmem %s1, %s193
          // Predicated region
          $region25: #{resnet_small_forward.25} parent=23 // pred_check
            _
          $region26: #{resnet_small_forward.25} parent=23 // pred_check_branch
            %196 = sbr.rel (0) target = $region28
          $region27: #{resnet_small_forward.25} parent=23 // pred_region
            // Predicated region
            $region29: #{resnet_small_forward.25} parent=27 // pred_check
              _
            $region30: #{resnet_small_forward.25} parent=27 // pred_check_branch
              %198 = sbr.rel (0) target = $region32
            $region31: #{resnet_small_forward.25} parent=27 // pred_region
              // Predicated region
              $region44: #{resnet_small_forward.25} parent=31 // pred_check
                _
              $region45: #{resnet_small_forward.25} parent=31 // pred_check_branch
                %276 = sbr.rel (0) target = $region47
              $region46: #{resnet_small_forward.25} parent=31 // pred_region
                loop: start=0, step=1, limit=1
                $region48: #{resnet_small_forward.25} parent=46 // loop_pre_header
                  _
                $region49: #{resnet_small_forward.25} parent=46 // loop_header
                  %s278 = sphi 0, %s282
                  %p279 = scmp.ge.s32.totalorder %s278, 1
                  %s283 = sphi %s194, %s194
                  %s284 = sphi %s188, %s188
                $region50: #{resnet_small_forward.25} parent=46 // loop_header_branch
                  %281 = sbr.rel (%p279) target = $region54
                $region51: #{resnet_small_forward.25} parent=46 // loop_body
                  %v285 = vld [vmem:[%s283] sm:$0xff]
                  %286 = vst [vmem:[%s284] sm:$0xff] %v285
                  %v287 = vld [vmem:[%s283 + $0x10] sm:$0xff]
                  %288 = vst [vmem:[%s284 + $0x8] sm:$0xff] %v287
                  %v289 = vld [vmem:[%s283 + $0x20] sm:$0xff]
                  %290 = vst [vmem:[%s284 + $0x10] sm:$0xff] %v289
                  %v291 = vld [vmem:[%s283 + $0x30] sm:$0xff]
                  %292 = vst [vmem:[%s284 + $0x18] sm:$0xff] %v291
                  %v293 = vld [vmem:[%s283 + $0x40] sm:$0xff]
                  %294 = vst [vmem:[%s284 + $0x20] sm:$0xff] %v293
                  %v295 = vld [vmem:[%s283 + $0x50] sm:$0xff]
                  %296 = vst [vmem:[%s284 + $0x28] sm:$0xff] %v295
                  %v297 = vld [vmem:[%s283 + $0x60] sm:$0xff]
                  %298 = vst [vmem:[%s284 + $0x30] sm:$0xff] %v297
                  %v299 = vld [vmem:[%s283 + $0x70] sm:$0xff]
                  %300 = vst [vmem:[%s284 + $0x38] sm:$0xff] %v299
                  %v301 = vld [vmem:[%s283 + $0x80] sm:$0xff]
                  %302 = vst [vmem:[%s284 + $0x40] sm:$0xff] %v301
                  %v303 = vld [vmem:[%s283 + $0x90] sm:$0xff]
                  %304 = vst [vmem:[%s284 + $0x48] sm:$0xff] %v303
                  %v305 = vld [vmem:[%s283 + $0xa0] sm:$0xff]
                  %306 = vst [vmem:[%s284 + $0x50] sm:$0xff] %v305
                  %v307 = vld [vmem:[%s283 + $0xb0] sm:$0xff]
                  %308 = vst [vmem:[%s284 + $0x58] sm:$0xff] %v307
                  %v309 = vld [vmem:[%s283 + $0xc0] sm:$0xff]
                  %310 = vst [vmem:[%s284 + $0x60] sm:$0xff] %v309
                  %v311 = vld [vmem:[%s283 + $0xd0] sm:$0xff]
                  %312 = vst [vmem:[%s284 + $0x68] sm:$0xff] %v311
                  %v313 = vld [vmem:[%s283 + $0xe0] sm:$0xff]
                  %314 = vst [vmem:[%s284 + $0x70] sm:$0xff] %v313
                  %v315 = vld [vmem:[%s283 + $0xf0] sm:$0xff]
                  %316 = vst [vmem:[%s284 + $0x78] sm:$0xff] %v315
                  %v317 = vld [vmem:[%s283 + $0x100] sm:$0xff]
                  %318 = vst [vmem:[%s284 + $0x80] sm:$0xff] %v317
                  %v319 = vld [vmem:[%s283 + $0x110] sm:$0xff]
                  %320 = vst [vmem:[%s284 + $0x88] sm:$0xff] %v319
                  %v321 = vld [vmem:[%s283 + $0x120] sm:$0xff]
                  %322 = vst [vmem:[%s284 + $0x90] sm:$0xff] %v321
                  %v323 = vld [vmem:[%s283 + $0x130] sm:$0xff]
                  %324 = vst [vmem:[%s284 + $0x98] sm:$0xff] %v323
                  %v325 = vld [vmem:[%s283 + $0x140] sm:$0xff]
                  %326 = vst [vmem:[%s284 + $0xa0] sm:$0xff] %v325
                  %v327 = vld [vmem:[%s283 + $0x150] sm:$0xff]
                  %328 = vst [vmem:[%s284 + $0xa8] sm:$0xff] %v327
                  %v329 = vld [vmem:[%s283 + $0x160] sm:$0xff]
                  %330 = vst [vmem:[%s284 + $0xb0] sm:$0xff] %v329
                  %v331 = vld [vmem:[%s283 + $0x170] sm:$0xff]
                  %332 = vst [vmem:[%s284 + $0xb8] sm:$0xff] %v331
                  %v333 = vld [vmem:[%s283 + $0x180] sm:$0xff]
                  %334 = vst [vmem:[%s284 + $0xc0] sm:$0xff] %v333
                  %v335 = vld [vmem:[%s283 + $0x190] sm:$0xff]
                  %336 = vst [vmem:[%s284 + $0xc8] sm:$0xff] %v335
                  %v337 = vld [vmem:[%s283 + $0x1a0] sm:$0xff]
                  %338 = vst [vmem:[%s284 + $0xd0] sm:$0xff] %v337
                  %v339 = vld [vmem:[%s283 + $0x1b0] sm:$0xff]
                  %340 = vst [vmem:[%s284 + $0xd8] sm:$0xff] %v339
                  %v341 = vld [vmem:[%s283 + $0x1c0] sm:$0xff]
                  %342 = vst [vmem:[%s284 + $0xe0] sm:$0xff] %v341
                  %v343 = vld [vmem:[%s283 + $0x1d0] sm:$0xff]
                  %344 = vst [vmem:[%s284 + $0xe8] sm:$0xff] %v343
                  %v345 = vld [vmem:[%s283 + $0x1e0] sm:$0xff]
                  %346 = vst [vmem:[%s284 + $0xf0] sm:$0xff] %v345
                  %v347 = vld [vmem:[%s283 + $0x1f0] sm:$0xff]
                  %348 = vst [vmem:[%s284 + $0xf8] sm:$0xff] %v347
                $region52: #{resnet_small_forward.25} parent=46 // loop_footer
                  %s282 = sadd.s32 1, %s278
                $region53: #{resnet_small_forward.25} parent=46 // loop_footer_branch
                  %277 = sbr.rel target = $region49
                $region54: #{resnet_small_forward.25} parent=46 // loop_exit
                  _
              $region47: #{resnet_small_forward.25} parent=31 // pred_fallthru
                _
              // Predicated region
              $region55: #{resnet_small_forward.25} parent=31 // pred_check
                _
              $region56: #{resnet_small_forward.25} parent=31 // pred_check_branch
                %350 = sbr.rel target = $region58
              $region57: #{resnet_small_forward.25} parent=31 // pred_region
                _
              $region58: #{resnet_small_forward.25} parent=31 // pred_fallthru
                _
            $region32: #{resnet_small_forward.25} parent=27 // pred_fallthru
              _
            // Predicated region
            $region33: #{resnet_small_forward.25} parent=27 // pred_check
              _
            $region34: #{resnet_small_forward.25} parent=27 // pred_check_branch
              %200 = sbr.rel target = $region36
            $region35: #{resnet_small_forward.25} parent=27 // pred_region
              %s202 = ssub.s32 256, 1
              loop: start=0, step=1, limit=1
              $region37: #{resnet_small_forward.25} parent=35 // loop_pre_header
                _
              $region38: #{resnet_small_forward.25} parent=35 // loop_header
                %s204 = sphi 0, %s208
                %p205 = scmp.ge.s32.totalorder %s204, 1
                %s209 = sphi %s194, %s194
                %s210 = sphi %s188, %s188
              $region39: #{resnet_small_forward.25} parent=35 // loop_header_branch
                %207 = sbr.rel (%p205) target = $region43
              $region40: #{resnet_small_forward.25} parent=35 // loop_body
                %v211 = vld [vmem:[%s209] sm:%s202]
                %212 = vst [vmem:[%s210] sm:%s202] %v211
                %v213 = vld [vmem:[%s209 + $0x10] sm:%s202]
                %214 = vst [vmem:[%s210 + $0x8] sm:%s202] %v213
                %v215 = vld [vmem:[%s209 + $0x20] sm:%s202]
                %216 = vst [vmem:[%s210 + $0x10] sm:%s202] %v215
                %v217 = vld [vmem:[%s209 + $0x30] sm:%s202]
                %218 = vst [vmem:[%s210 + $0x18] sm:%s202] %v217
                %v219 = vld [vmem:[%s209 + $0x40] sm:%s202]
                %220 = vst [vmem:[%s210 + $0x20] sm:%s202] %v219
                %v221 = vld [vmem:[%s209 + $0x50] sm:%s202]
                %222 = vst [vmem:[%s210 + $0x28] sm:%s202] %v221
                %v223 = vld [vmem:[%s209 + $0x60] sm:%s202]
                %224 = vst [vmem:[%s210 + $0x30] sm:%s202] %v223
                %v225 = vld [vmem:[%s209 + $0x70] sm:%s202]
                %226 = vst [vmem:[%s210 + $0x38] sm:%s202] %v225
                %v227 = vld [vmem:[%s209 + $0x80] sm:%s202]
                %228 = vst [vmem:[%s210 + $0x40] sm:%s202] %v227
                %v229 = vld [vmem:[%s209 + $0x90] sm:%s202]
                %230 = vst [vmem:[%s210 + $0x48] sm:%s202] %v229
                %v231 = vld [vmem:[%s209 + $0xa0] sm:%s202]
                %232 = vst [vmem:[%s210 + $0x50] sm:%s202] %v231
                %v233 = vld [vmem:[%s209 + $0xb0] sm:%s202]
                %234 = vst [vmem:[%s210 + $0x58] sm:%s202] %v233
                %v235 = vld [vmem:[%s209 + $0xc0] sm:%s202]
                %236 = vst [vmem:[%s210 + $0x60] sm:%s202] %v235
                %v237 = vld [vmem:[%s209 + $0xd0] sm:%s202]
                %238 = vst [vmem:[%s210 + $0x68] sm:%s202] %v237
                %v239 = vld [vmem:[%s209 + $0xe0] sm:%s202]
                %240 = vst [vmem:[%s210 + $0x70] sm:%s202] %v239
                %v241 = vld [vmem:[%s209 + $0xf0] sm:%s202]
                %242 = vst [vmem:[%s210 + $0x78] sm:%s202] %v241
                %v243 = vld [vmem:[%s209 + $0x100] sm:%s202]
                %244 = vst [vmem:[%s210 + $0x80] sm:%s202] %v243
                %v245 = vld [vmem:[%s209 + $0x110] sm:%s202]
                %246 = vst [vmem:[%s210 + $0x88] sm:%s202] %v245
                %v247 = vld [vmem:[%s209 + $0x120] sm:%s202]
                %248 = vst [vmem:[%s210 + $0x90] sm:%s202] %v247
                %v249 = vld [vmem:[%s209 + $0x130] sm:%s202]
                %250 = vst [vmem:[%s210 + $0x98] sm:%s202] %v249
                %v251 = vld [vmem:[%s209 + $0x140] sm:%s202]
                %252 = vst [vmem:[%s210 + $0xa0] sm:%s202] %v251
                %v253 = vld [vmem:[%s209 + $0x150] sm:%s202]
                %254 = vst [vmem:[%s210 + $0xa8] sm:%s202] %v253
                %v255 = vld [vmem:[%s209 + $0x160] sm:%s202]
                %256 = vst [vmem:[%s210 + $0xb0] sm:%s202] %v255
                %v257 = vld [vmem:[%s209 + $0x170] sm:%s202]
                %258 = vst [vmem:[%s210 + $0xb8] sm:%s202] %v257
                %v259 = vld [vmem:[%s209 + $0x180] sm:%s202]
                %260 = vst [vmem:[%s210 + $0xc0] sm:%s202] %v259
                %v261 = vld [vmem:[%s209 + $0x190] sm:%s202]
                %262 = vst [vmem:[%s210 + $0xc8] sm:%s202] %v261
                %v263 = vld [vmem:[%s209 + $0x1a0] sm:%s202]
                %264 = vst [vmem:[%s210 + $0xd0] sm:%s202] %v263
                %v265 = vld [vmem:[%s209 + $0x1b0] sm:%s202]
                %266 = vst [vmem:[%s210 + $0xd8] sm:%s202] %v265
                %v267 = vld [vmem:[%s209 + $0x1c0] sm:%s202]
                %268 = vst [vmem:[%s210 + $0xe0] sm:%s202] %v267
                %v269 = vld [vmem:[%s209 + $0x1d0] sm:%s202]
                %270 = vst [vmem:[%s210 + $0xe8] sm:%s202] %v269
                %v271 = vld [vmem:[%s209 + $0x1e0] sm:%s202]
                %272 = vst [vmem:[%s210 + $0xf0] sm:%s202] %v271
                %v273 = vld [vmem:[%s209 + $0x1f0] sm:%s202]
                %274 = vst [vmem:[%s210 + $0xf8] sm:%s202] %v273
              $region41: #{resnet_small_forward.25} parent=35 // loop_footer
                %s208 = sadd.s32 1, %s204
              $region42: #{resnet_small_forward.25} parent=35 // loop_footer_branch
                %203 = sbr.rel target = $region38
              $region43: #{resnet_small_forward.25} parent=35 // loop_exit
                _
            $region36: #{resnet_small_forward.25} parent=27 // pred_fallthru
              _
          $region28: #{resnet_small_forward.25} parent=23 // pred_fallthru
            _
          %351 = vnop
        $region24: #{resnet_small_forward.25} parent=15 // pred_fallthru
          _
        // Predicated region
        $region59: #{resnet_small_forward.25} parent=15 // pred_check
          %p352 = pneg %p96
        $region60: #{resnet_small_forward.25} parent=15 // pred_check_branch
          %354 = sbr.rel (%p352) target = $region62
        $region61: #{resnet_small_forward.25} parent=15 // pred_region
          %s355 = smul.u32 2, %s17
          %p356 = scmp.lt.s32.totalorder %s355, 3
          %s357 = scalar_select %p356, %s355, 3
          %s358 = scalar_lea.vmem %s2, %s357
          %s359 = smul.u32 2, %s17
        $region62: #{resnet_small_forward.25} parent=15 // pred_fallthru
          _
        // Predicated region
        $region63: #{resnet_small_forward.25} parent=15 // pred_check
          %p360 = pneg %p122
        $region64: #{resnet_small_forward.25} parent=15 // pred_check_branch
          %362 = sbr.rel (%p360) target = $region66
        $region65: #{resnet_small_forward.25} parent=15 // pred_region
          %s363 = smul.u32 2, %s17
          %p364 = scmp.lt.s32.totalorder %s363, 3
          %s365 = scalar_select %p364, %s363, 3
          %s366 = scalar_lea.vmem %s3, %s365
          %s367 = smul.u32 2, %s17
        $region66: #{resnet_small_forward.25} parent=15 // pred_fallthru
          _
      $region16: #{resnet_small_forward.25} parent=5 // pred_fallthru
        _
      %p368 = scmp.le.s32.totalorder 1, %s10
      %p369 = scmp.lt.s32.totalorder %s10, 19
      %p370 = pnand %p368, %p369
      %p371 = pneg %p370
      // Predicated region
      $region67: #{resnet_small_forward.25} parent=5 // pred_check
        _
      $region68: #{resnet_small_forward.25} parent=5 // pred_check_branch
        %373 = sbr.rel (%p370) target = $region70
      $region69: #{resnet_small_forward.25} parent=5 // pred_region
        %s374 = ssub.s32 %s10, 1
        %s375 = sand.u32 %s63, 1
        %s376 = sand.u32 %s63, 1
        %s377 = smul.addr %s376, 256
        %s378 = scalar_lea.vmem [#allocation3], %s377
        // Predicated region
        $region71: #{resnet_small_forward.25} parent=69 // pred_check
          %p379 = pneg %p76
        $region72: #{resnet_small_forward.25} parent=69 // pred_check_branch
          %381 = sbr.rel (%p379) target = $region74
        $region73: #{resnet_small_forward.25} parent=69 // pred_region
          _
        $region74: #{resnet_small_forward.25} parent=69 // pred_fallthru
          _
        %s382 = smul.u32 2, %s20
        %p383 = scmp.lt.s32.totalorder %s382, 17
        %s384 = scalar_select %p383, %s382, 17
        %s385 = smul.addr %s384, 4
        %s386 = scalar_lea.vmem %s0, %s385
        %p387 = pneg %p48
        %p388 = pneg %p45
        %s389 = sand.u32 %s63, 1
        %s390 = sand.u32 %s63, 1
        %s391 = smul.addr %s390, 256
        %s392 = scalar_lea.vmem [#allocation3], %s391
        %p393 = pneg %p76
        %p394 = pneg %p73
        %s395 = smul.u32 2, %s19
        %p396 = scmp.lt.s32.totalorder %s395, 3
        %s397 = scalar_select %p396, %s395, 3
        %s398 = scalar_lea.vmem %s2, %s397
        %p399 = pneg %p102
        %p400 = pneg %p99
        %s401 = smul.u32 2, %s19
        %p402 = scmp.lt.s32.totalorder %s401, 3
        %s403 = scalar_select %p402, %s401, 3
        %s404 = scalar_lea.vmem %s3, %s403
        %p405 = pneg %p128
        %p406 = pneg %p125
        %p407 = pneg %p154
        %p408 = pneg %p151
        %s409 = smul.u32 2, %s19
        %p410 = scmp.lt.s32.totalorder %s409, 3
        %s411 = scalar_select %p410, %s409, 3
        %s412 = smul.addr %s411, 8
        %s413 = scalar_lea.vmem %s4, %s412
        %s414 = smul.u32 2, %s20
        %p415 = scmp.lt.s32.totalorder %s414, 17
        %s416 = scalar_select %p415, %s414, 17
        %s417 = smul.addr %s416, 4
        %s418 = scalar_lea.vmem %s0, %s417
        %s419 = smul.u32 2, %s20
        %s420 = smul.u32 32, %s20
        %s421 = smul.u32 2, %s19
        %s422 = smul.u32 2, %s19
        %p423 = scmp.lt.s32.totalorder %s422, 3
        %s424 = scalar_select %p423, %s422, 3
        %s425 = scalar_lea.vmem %s2, %s424
        %s426 = smul.u32 2, %s19
        %s427 = smul.u32 2, %s19
        %p428 = scmp.lt.s32.totalorder %s427, 3
        %s429 = scalar_select %p428, %s427, 3
        %s430 = scalar_lea.vmem %s3, %s429
        %s431 = smul.u32 2, %s19
        %s432 = smul.u32 2, %s19
        %p433 = scmp.lt.s32.totalorder %s432, 3
        %s434 = scalar_select %p433, %s432, 3
        %s435 = smul.addr %s434, 8
        %s436 = scalar_lea.vmem %s4, %s435
        %s437 = smul.u32 2, %s19
        %p438 = scmp.eq.s32.totalorder %s20, 0
        // Predicated region
        $region75: #{resnet_small_forward.25} parent=69 // pred_check
          %p439 = pneg %p438
        $region76: #{resnet_small_forward.25} parent=69 // pred_check_branch
          %441 = sbr.rel (%p439) target = $region78
        $region77: #{resnet_small_forward.25} parent=69 // pred_region
          %442 = vst [vmem:[#allocation2] sm:$0xff] 0.0
          %443 = vst [vmem:[#allocation2 + $0x8] sm:$0xff] 0.0
        $region78: #{resnet_small_forward.25} parent=69 // pred_fallthru
          _
        %v444 = vld [vmem:[#allocation2] sm:$0xff]
        %v445 = vld [vmem:[#allocation2 + $0x8] sm:$0xff]
        %v446 = vld [vmem:[%s418] sm:$0xff]
        %v447 = vld [vmem:[%s378] sm:$0xff]
        %v448 = vld [vmem:[%s378 + $0x8] sm:$0xff]
        %v449 = vld [vmem:[%s378 + $0x10] sm:$0xff]
        %v450 = vld [vmem:[%s378 + $0x18] sm:$0xff]
        %v451 = vld [vmem:[%s378 + $0x20] sm:$0xff]
        %v452 = vld [vmem:[%s378 + $0x28] sm:$0xff]
        %v453 = vld [vmem:[%s378 + $0x30] sm:$0xff]
        %v454 = vld [vmem:[%s378 + $0x38] sm:$0xff]
        %v455 = vld [vmem:[%s378 + $0x40] sm:$0xff]
        %v456 = vld [vmem:[%s378 + $0x48] sm:$0xff]
        %v457 = vld [vmem:[%s378 + $0x50] sm:$0xff]
        %v458 = vld [vmem:[%s378 + $0x58] sm:$0xff]
        %v459 = vld [vmem:[%s378 + $0x60] sm:$0xff]
        %v460 = vld [vmem:[%s378 + $0x68] sm:$0xff]
        %v461 = vld [vmem:[%s378 + $0x70] sm:$0xff]
        %v462 = vld [vmem:[%s378 + $0x78] sm:$0xff]
        %v463 = vld [vmem:[%s378 + $0x80] sm:$0xff]
        %v464 = vld [vmem:[%s378 + $0x88] sm:$0xff]
        %v465 = vld [vmem:[%s378 + $0x90] sm:$0xff]
        %v466 = vld [vmem:[%s378 + $0x98] sm:$0xff]
        %v467 = vld [vmem:[%s378 + $0xa0] sm:$0xff]
        %v468 = vld [vmem:[%s378 + $0xa8] sm:$0xff]
        %v469 = vld [vmem:[%s378 + $0xb0] sm:$0xff]
        %v470 = vld [vmem:[%s378 + $0xb8] sm:$0xff]
        %v471 = vld [vmem:[%s378 + $0xc0] sm:$0xff]
        %v472 = vld [vmem:[%s378 + $0xc8] sm:$0xff]
        %v473 = vld [vmem:[%s378 + $0xd0] sm:$0xff]
        %v474 = vld [vmem:[%s378 + $0xd8] sm:$0xff]
        %v475 = vld [vmem:[%s378 + $0xe0] sm:$0xff]
        %v476 = vld [vmem:[%s378 + $0xe8] sm:$0xff]
        %v477 = vld [vmem:[%s378 + $0xf0] sm:$0xff]
        %v478 = vld [vmem:[%s378 + $0xf8] sm:$0xff]
        %v480 = vunpack.c.l.b16 %v446
        %v481 = vunpack.c.h.b16 %v446
        %v482 = vpack.c.b16 %v480, %v480
        %v483 = vpack.c.b16 %v481, %v481
        %v518 = vunpack.c.l.b16 %v447
        %v519 = vunpack.c.h.b16 %v447
        %v520 = vunpack.c.l.b16 %v448
        %v521 = vunpack.c.h.b16 %v448
        %v522 = vunpack.c.l.b16 %v449
        %v523 = vunpack.c.h.b16 %v449
        %v524 = vunpack.c.l.b16 %v450
        %v525 = vunpack.c.h.b16 %v450
        %v526 = vunpack.c.l.b16 %v451
        %v527 = vunpack.c.h.b16 %v451
        %v528 = vunpack.c.l.b16 %v452
        %v529 = vunpack.c.h.b16 %v452
        %v530 = vunpack.c.l.b16 %v453
        %v531 = vunpack.c.h.b16 %v453
        %v532 = vunpack.c.l.b16 %v454
        %v533 = vunpack.c.h.b16 %v454
        %v534 = vunpack.c.l.b16 %v455
        %v535 = vunpack.c.h.b16 %v455
        %v536 = vunpack.c.l.b16 %v456
        %v537 = vunpack.c.h.b16 %v456
        %v538 = vunpack.c.l.b16 %v457
        %v539 = vunpack.c.h.b16 %v457
        %v540 = vunpack.c.l.b16 %v458
        %v541 = vunpack.c.h.b16 %v458
        %v542 = vunpack.c.l.b16 %v459
        %v543 = vunpack.c.h.b16 %v459
        %v544 = vunpack.c.l.b16 %v460
        %v545 = vunpack.c.h.b16 %v460
        %v546 = vunpack.c.l.b16 %v461
        %v547 = vunpack.c.h.b16 %v461
        %v548 = vunpack.c.l.b16 %v462
        %v549 = vunpack.c.h.b16 %v462
        %v550 = vunpack.c.l.b16 %v463
        %v551 = vunpack.c.h.b16 %v463
        %v552 = vunpack.c.l.b16 %v464
        %v553 = vunpack.c.h.b16 %v464
        %v554 = vunpack.c.l.b16 %v465
        %v555 = vunpack.c.h.b16 %v465
        %v556 = vunpack.c.l.b16 %v466
        %v557 = vunpack.c.h.b16 %v466
        %v558 = vunpack.c.l.b16 %v467
        %v559 = vunpack.c.h.b16 %v467
        %v560 = vunpack.c.l.b16 %v468
        %v561 = vunpack.c.h.b16 %v468
        %v562 = vunpack.c.l.b16 %v469
        %v563 = vunpack.c.h.b16 %v469
        %v564 = vunpack.c.l.b16 %v470
        %v565 = vunpack.c.h.b16 %v470
        %v566 = vunpack.c.l.b16 %v471
        %v567 = vunpack.c.h.b16 %v471
        %v568 = vunpack.c.l.b16 %v472
        %v569 = vunpack.c.h.b16 %v472
        %v570 = vunpack.c.l.b16 %v473
        %v571 = vunpack.c.h.b16 %v473
        %v572 = vunpack.c.l.b16 %v474
        %v573 = vunpack.c.h.b16 %v474
        %v574 = vunpack.c.l.b16 %v475
        %v575 = vunpack.c.h.b16 %v475
        %v576 = vunpack.c.l.b16 %v476
        %v577 = vunpack.c.h.b16 %v476
        %v578 = vunpack.c.l.b16 %v477
        %v579 = vunpack.c.h.b16 %v477
        %v580 = vunpack.c.l.b16 %v478
        %v581 = vunpack.c.h.b16 %v478
        %v582 = vpack.c.b16 %v520, %v518
        %v583 = vpack.c.b16 %v521, %v519
        %v584 = vpack.c.b16 %v524, %v522
        %v585 = vpack.c.b16 %v525, %v523
        %v586 = vpack.c.b16 %v528, %v526
        %v587 = vpack.c.b16 %v529, %v527
        %v588 = vpack.c.b16 %v532, %v530
        %v589 = vpack.c.b16 %v533, %v531
        %v590 = vpack.c.b16 %v536, %v534
        %v591 = vpack.c.b16 %v537, %v535
        %v592 = vpack.c.b16 %v540, %v538
        %v593 = vpack.c.b16 %v541, %v539
        %v594 = vpack.c.b16 %v544, %v542
        %v595 = vpack.c.b16 %v545, %v543
        %v596 = vpack.c.b16 %v548, %v546
        %v597 = vpack.c.b16 %v549, %v547
        %v598 = vpack.c.b16 %v552, %v550
        %v599 = vpack.c.b16 %v553, %v551
        %v600 = vpack.c.b16 %v556, %v554
        %v601 = vpack.c.b16 %v557, %v555
        %v602 = vpack.c.b16 %v560, %v558
        %v603 = vpack.c.b16 %v561, %v559
        %v604 = vpack.c.b16 %v564, %v562
        %v605 = vpack.c.b16 %v565, %v563
        %v606 = vpack.c.b16 %v568, %v566
        %v607 = vpack.c.b16 %v569, %v567
        %v608 = vpack.c.b16 %v572, %v570
        %v609 = vpack.c.b16 %v573, %v571
        %v610 = vpack.c.b16 %v576, %v574
        %v611 = vpack.c.b16 %v577, %v575
        %v612 = vpack.c.b16 %v580, %v578
        %v613 = vpack.c.b16 %v581, %v579
        %646 = vmatpush.bf16.msra.mxu0 %v596
        %647 = vmatpush.bf16.msra.mxu0 %v594
        %648 = vmatpush.bf16.msra.mxu0 %v592
        %649 = vmatpush.bf16.msra.mxu0 %v590
        %650 = vmatpush.bf16.msra.mxu0 %v588
        %651 = vmatpush.bf16.msra.mxu0 %v586
        %652 = vmatpush.bf16.msra.mxu0 %v584
        %653 = vmatpush.bf16.msra.mxu0 %v582
        %654 = vmatmul.bf16.gmra.mxu0 %v482
        %v655 = vpop.f32.mrf.mxu0
        %v656 = vadd.f32 0.0, %v655
        %v657 = vpop.f32.mrf.mxu0
        %658 = vdwg.mxu0
        %659 = vmatpush.bf16.msra.mxu0 %v612
        %660 = vmatpush.bf16.msra.mxu0 %v610
        %661 = vmatpush.bf16.msra.mxu0 %v608
        %662 = vmatpush.bf16.msra.mxu0 %v606
        %663 = vmatpush.bf16.msra.mxu0 %v604
        %664 = vmatpush.bf16.msra.mxu0 %v602
        %665 = vmatpush.bf16.msra.mxu0 %v600
        %666 = vmatpush.bf16.msra.mxu0 %v598
        %667 = vmatmul.bf16.gmra.mxu0 %v483
        %v668 = vpop.f32.mrf.mxu0
        %v669 = vadd.f32 %v656, %v668
        %v670 = vpop.f32.mrf.mxu0
        %671 = vdwg.mxu0
        %672 = vmatpush.bf16.msra.mxu0 %v597
        %673 = vmatpush.bf16.msra.mxu0 %v595
        %674 = vmatpush.bf16.msra.mxu0 %v593
        %675 = vmatpush.bf16.msra.mxu0 %v591
        %676 = vmatpush.bf16.msra.mxu0 %v589
        %677 = vmatpush.bf16.msra.mxu0 %v587
        %678 = vmatpush.bf16.msra.mxu0 %v585
        %679 = vmatpush.bf16.msra.mxu0 %v583
        %680 = vmatmul.bf16.gmra.mxu0 %v482
        %v681 = vpop.f32.mrf.mxu0
        %v682 = vadd.f32 0.0, %v681
        %v683 = vpop.f32.mrf.mxu0
        %684 = vdwg.mxu0
        %685 = vmatpush.bf16.msra.mxu0 %v613
        %686 = vmatpush.bf16.msra.mxu0 %v611
        %687 = vmatpush.bf16.msra.mxu0 %v609
        %688 = vmatpush.bf16.msra.mxu0 %v607
        %689 = vmatpush.bf16.msra.mxu0 %v605
        %690 = vmatpush.bf16.msra.mxu0 %v603
        %691 = vmatpush.bf16.msra.mxu0 %v601
        %692 = vmatpush.bf16.msra.mxu0 %v599
        %693 = vmatmul.bf16.gmra.mxu0 %v483
        %v694 = vpop.f32.mrf.mxu0
        %v695 = vadd.f32 %v682, %v694
        %v696 = vpop.f32.mrf.mxu0
        %697 = vdwg.mxu0
        %v698 = vadd.f32 %v444, %v669
        %v699 = vadd.f32 %v445, %v695
        %700 = vst [vmem:[#allocation2] sm:$0xff] %v698
        %701 = vst [vmem:[#allocation2 + $0x8] sm:$0xff] %v699
        %p702 = scmp.eq.s32.totalorder %s20, 8
        // Predicated region
        $region79: #{resnet_small_forward.25} parent=69 // pred_check
          %p703 = pneg %p702
        $region80: #{resnet_small_forward.25} parent=69 // pred_check_branch
          %705 = sbr.rel (%p703) target = $region82
        $region81: #{resnet_small_forward.25} parent=69 // pred_region
          %v706 = vld [vmem:[#allocation2] sm:$0xff]
          %v707 = vld [vmem:[#allocation2 + $0x8] sm:$0xff]
          %v708 = vrot.slane %v706, 4
          %v709 = vadd.f32 %v706, %v708
          %v710 = vrot.slane %v709, 2
          %v711 = vadd.f32 %v709, %v710
          %v712 = vrot.slane %v711, 1
          %v713 = vadd.f32 %v711, %v712
          %v714 = vrot.slane %v707, 4
          %v715 = vadd.f32 %v707, %v714
          %v716 = vrot.slane %v715, 2
          %v717 = vadd.f32 %v715, %v716
          %v718 = vrot.slane %v717, 1
          %v719 = vadd.f32 %v717, %v718
          %v720 = vmul.f32 %v713, 0.5
          %v721 = vmul.f32 %v719, 0.5
          %v722 = vmul.f32 %v706, %v706
          %v723 = vmul.f32 %v707, %v707
          %v724 = vrot.slane %v722, 4
          %v725 = vadd.f32 %v722, %v724
          %v726 = vrot.slane %v725, 2
          %v727 = vadd.f32 %v725, %v726
          %v728 = vrot.slane %v727, 1
          %v729 = vadd.f32 %v727, %v728
          %v730 = vrot.slane %v723, 4
          %v731 = vadd.f32 %v723, %v730
          %v732 = vrot.slane %v731, 2
          %v733 = vadd.f32 %v731, %v732
          %v734 = vrot.slane %v733, 1
          %v735 = vadd.f32 %v733, %v734
          %v736 = vmul.f32 %v729, 0.5
          %v737 = vmul.f32 %v735, 0.5
          %v738 = vmul.f32 %v720, %v720
          %v739 = vmul.f32 %v721, %v721
          %v740 = vsub.f32 %v736, %v738
          %v741 = vsub.f32 %v737, %v739
          %v742 = vadd.f32 %v740, 1e-05
          %v743 = vadd.f32 %v741, 1e-05
          %v744 = vrsqrt.pop %v742
          %v745 = vmul.f32 %v744, %v742
          %v746 = vmul.f32 %v745, %v744
          %v747 = vmul.f32 0.5, %v746
          %v748 = vsub.f32 1.5, %v747
          %v749 = vmul.f32 %v744, %v748
          %vm750 = vweird.f32 %v742
          %vm751 = vweird.f32 %v744
          %vm752 = vmor %vm750, %vm751
          %v753 = vsel %vm752, %v744, %v749
          %v754 = vrsqrt.pop %v743
          %v755 = vmul.f32 %v754, %v743
          %v756 = vmul.f32 %v755, %v754
          %v757 = vmul.f32 0.5, %v756
          %v758 = vsub.f32 1.5, %v757
          %v759 = vmul.f32 %v754, %v758
          %vm760 = vweird.f32 %v743
          %vm761 = vweird.f32 %v754
          %vm762 = vmor %vm760, %vm761
          %v763 = vsel %vm762, %v754, %v759
          %v764 = vld [vmem:[%s425] sm:$0x3]
          %v766 = vperm.slane %v764, 0
          %v767 = vperm.slane %v764, 1
          %v770 = vmul.f32 %v753, %v766
          %v771 = vmul.f32 %v763, %v767
          %v772 = vld [vmem:[%s430] sm:$0x3]
          %v773 = vmul.f32 %v720, %v770
          %v774 = vmul.f32 %v721, %v771
          %v777 = vrot.slane %v774, 7
          %vm778 = vcmask 1040384
          %v779 = vsel %vm778, %v773, %v777
          %v781 = vsub.f32 %v772, %v779
          %v782 = vperm.slane %v770, 0
          %v783 = vperm.slane %v771, 0
          %v784 = vmul.f32 %v706, %v782
          %v785 = vmul.f32 %v707, %v783
          %v787 = vperm.slane %v781, 0
          %v788 = vperm.slane %v781, 1
          %v791 = vadd.f32 %v784, %v787
          %v792 = vadd.f32 %v785, %v788
          %v793 = vmax.f32 %v791, 0.0
          %v794 = vmax.f32 %v792, 0.0
          %795 = vst [vmem:[%s436] sm:$0xff] %v793
          %796 = vst [vmem:[%s436 + $0x8] sm:$0xff] %v794
        $region82: #{resnet_small_forward.25} parent=69 // pred_fallthru
          _
        %s797 = smul.u32 2, %s19
        %p798 = scmp.lt.s32.totalorder %s797, 3
        %s799 = scalar_select %p798, %s797, 3
        %s800 = smul.addr %s799, 8
        %s801 = scalar_lea.vmem %s4, %s800
        // Predicated region
        $region83: #{resnet_small_forward.25} parent=69 // pred_check
          %p802 = pneg %p151
        $region84: #{resnet_small_forward.25} parent=69 // pred_check_branch
          %804 = sbr.rel (%p802) target = $region86
        $region85: #{resnet_small_forward.25} parent=69 // pred_region
          %s805 = smul.u32 2, %s19
        $region86: #{resnet_small_forward.25} parent=69 // pred_fallthru
          _
      $region70: #{resnet_small_forward.25} parent=5 // pred_fallthru
        _
      %p806 = scmp.le.s32.totalorder 2, %s10
      // Predicated region
      $region87: #{resnet_small_forward.25} parent=5 // pred_check
        %p807 = pneg %p806
      $region88: #{resnet_small_forward.25} parent=5 // pred_check_branch
        %809 = sbr.rel (%p807) target = $region90
      $region89: #{resnet_small_forward.25} parent=5 // pred_region
        %s810 = ssub.s32 %s10, 2
        // Predicated region
        $region91: #{resnet_small_forward.25} parent=89 // pred_check
          %p811 = pneg %p157
        $region92: #{resnet_small_forward.25} parent=89 // pred_check_branch
          %813 = sbr.rel (%p811) target = $region94
        $region93: #{resnet_small_forward.25} parent=89 // pred_region
          %s814 = smul.u32 2, %s21
          %p815 = scmp.lt.s32.totalorder %s814, 3
          %s816 = scalar_select %p815, %s814, 3
          %s817 = smul.addr %s816, 8
          %s818 = scalar_lea.vmem %s4, %s817
        $region94: #{resnet_small_forward.25} parent=89 // pred_fallthru
          _
      $region90: #{resnet_small_forward.25} parent=5 // pred_fallthru
        _
    $region6: #{resnet_small_forward.25} parent=1 // loop_footer
      %s14 = sadd.s32 1, %s10
    $region7: #{resnet_small_forward.25} parent=1 // loop_footer_branch
      %9 = sbr.rel target = $region3
    $region8: #{resnet_small_forward.25} parent=1 // loop_exit
      _

// kernel: resnet_small_forward.26
$region0: #{resnet_small_forward.26}
  #allocation0 [shape = 'u32[]', space=smem, size = 0x4, offset = 0x4, fixed_abs, tag = 'smem constant byte address 0x4 - core index']
  #allocation1 [shape = 'u32[72,128]{1,0:T(1,128)}', space=vmem, size = 0x9000, scoped, tag = 'internal scratch']
  #allocation2 [shape = 'f32[8,256]{1,0:T(8,128)}', space=vmem, size = 0x2000, scoped, tag = 'scratch operand']
  %s0 = inlined_call_operand.vmem [shape: bf16[8,256], index: 0, kind: input, shape index: {}]
  %s1 = inlined_call_operand.vmem [shape: bf16[256,512], index: 1, kind: input, shape index: {}]
  %s2 = inlined_call_operand.vmem [shape: f32[1,512], index: 2, kind: input, shape index: {}]
  %s3 = inlined_call_operand.vmem [shape: f32[1,512], index: 3, kind: input, shape index: {}]
  %s4 = inlined_call_operand.vmem [shape: f32[8,512], index: 4, kind: output, shape index: {}]
  %s5 = sld [smem:[#allocation0]]
  $region95: #{resnet_small_forward.26} parent=0
    _
  %s7 = ssub.s32 1, %s5
  %s8 = scalar_select 0, %s7, %s5
  $region1: #{resnet_small_forward.26} parent=0
    #allocation3 [shape = 'u8[262144]{0}', space=vmem, size = 0x40000, scoped, tag = 'input window, operand 1']
    loop: start=0, step=1, limit=4
    $region2: #{resnet_small_forward.26} parent=1 // loop_pre_header
      _
    $region3: #{resnet_small_forward.26} parent=1 // loop_header
      %s10 = sphi 0, %s14
      %p11 = scmp.ge.s32.totalorder %s10, 4
      %s17 = sphi 0, %s29
      %s18 = sphi 0, %s25
      %s19 = sphi 0, %s17
      %s20 = sphi 0, %s18
      %s21 = sphi 0, %s19
      %s22 = sphi 0, %s20
      %s32 = sphi 0, %s34
      %s35 = sphi 0, %s32
      %s36 = sphi 0, %s35
      %s52 = sphi 0, %s36
      %s60 = sphi 0, %s62
      %s63 = sphi 0, %s60
      %s64 = sphi 0, %s63
      %s80 = sphi 0, %s64
      %s86 = sphi 0, %s88
      %s89 = sphi 0, %s86
      %s90 = sphi 0, %s89
      %s106 = sphi 0, %s90
      %s112 = sphi 0, %s114
      %s115 = sphi 0, %s112
      %s116 = sphi 0, %s115
      %s132 = sphi 0, %s116
      %s138 = sphi 0, %s140
      %s141 = sphi 0, %s138
      %s142 = sphi 0, %s141
      %s158 = sphi 0, %s142
    $region4: #{resnet_small_forward.26} parent=1 // loop_header_branch
      %13 = sbr.rel (%p11) target = $region8
    $region5: #{resnet_small_forward.26} parent=1 // loop_body
      %s15 = ssub.s32 %s10, 1
      %s16 = ssub.s32 %s10, 2
      %s23 = sadd.s32 1, %s18
      %p24 = scmp.ge.s32.totalorder %s23, 1
      %s25 = scalar_select %p24, 0, %s23
      %s26 = sadd.s32 1, %s17
      %s27 = scalar_select %p24, %s26, %s17
      %p28 = scmp.ge.s32.totalorder %s27, 2
      %s29 = scalar_select %p28, 0, %s27
      %s30 = ssub.s32 %s18, %s25
      %p31 = scmp.eq.s32.totalorder %s30, 0
      %s33 = sadd.s32 %s32, 1
      %s34 = scalar_select %p31, %s32, %s33
      %p37 = pneg %p31
      %p38 = scmp.eq.s32.totalorder %s10, 1
      %p39 = por %p37, %p38
      %p40 = scmp.ne.s32.totalorder %s32, %s35
      %p41 = scmp.eq.s32.totalorder %s10, 0
      %p42 = por %p40, %p41
      %p43 = scmp.ne.s32.totalorder %s32, %s35
      %p44 = scmp.eq.s32.totalorder %s15, 1
      %p45 = por %p43, %p44
      %p46 = scmp.ne.s32.totalorder %s35, %s36
      %p47 = scmp.eq.s32.totalorder %s15, 0
      %p48 = por %p46, %p47
      %p49 = scmp.ne.s32.totalorder %s35, %s36
      %p50 = scmp.eq.s32.totalorder %s16, 1
      %p51 = por %p49, %p50
      %p53 = scmp.ne.s32.totalorder %s36, %s52
      %p54 = scmp.eq.s32.totalorder %s16, 0
      %p55 = por %p53, %p54
      %s56 = ssub.s32 %s18, %s25
      %s57 = ssub.s32 %s17, %s29
      %s58 = sor.u32 %s56, %s57
      %p59 = scmp.eq.s32.totalorder %s58, 0
      %s61 = sadd.s32 %s60, 1
      %s62 = scalar_select %p59, %s60, %s61
      %p65 = pneg %p59
      %p66 = scmp.eq.s32.totalorder %s10, 1
      %p67 = por %p65, %p66
      %p68 = scmp.ne.s32.totalorder %s60, %s63
      %p69 = scmp.eq.s32.totalorder %s10, 0
      %p70 = por %p68, %p69
      %p71 = scmp.ne.s32.totalorder %s60, %s63
      %p72 = scmp.eq.s32.totalorder %s15, 1
      %p73 = por %p71, %p72
      %p74 = scmp.ne.s32.totalorder %s63, %s64
      %p75 = scmp.eq.s32.totalorder %s15, 0
      %p76 = por %p74, %p75
      %p77 = scmp.ne.s32.totalorder %s63, %s64
      %p78 = scmp.eq.s32.totalorder %s16, 1
      %p79 = por %p77, %p78
      %p81 = scmp.ne.s32.totalorder %s64, %s80
      %p82 = scmp.eq.s32.totalorder %s16, 0
      %p83 = por %p81, %p82
      %s84 = ssub.s32 %s17, %s29
      %p85 = scmp.eq.s32.totalorder %s84, 0
      %s87 = sadd.s32 %s86, 1
      %s88 = scalar_select %p85, %s86, %s87
      %p91 = pneg %p85
      %p92 = scmp.eq.s32.totalorder %s10, 1
      %p93 = por %p91, %p92
      %p94 = scmp.ne.s32.totalorder %s86, %s89
      %p95 = scmp.eq.s32.totalorder %s10, 0
      %p96 = por %p94, %p95
      %p97 = scmp.ne.s32.totalorder %s86, %s89
      %p98 = scmp.eq.s32.totalorder %s15, 1
      %p99 = por %p97, %p98
      %p100 = scmp.ne.s32.totalorder %s89, %s90
      %p101 = scmp.eq.s32.totalorder %s15, 0
      %p102 = por %p100, %p101
      %p103 = scmp.ne.s32.totalorder %s89, %s90
      %p104 = scmp.eq.s32.totalorder %s16, 1
      %p105 = por %p103, %p104
      %p107 = scmp.ne.s32.totalorder %s90, %s106
      %p108 = scmp.eq.s32.totalorder %s16, 0
      %p109 = por %p107, %p108
      %s110 = ssub.s32 %s17, %s29
      %p111 = scmp.eq.s32.totalorder %s110, 0
      %s113 = sadd.s32 %s112, 1
      %s114 = scalar_select %p111, %s112, %s113
      %p117 = pneg %p111
      %p118 = scmp.eq.s32.totalorder %s10, 1
      %p119 = por %p117, %p118
      %p120 = scmp.ne.s32.totalorder %s112, %s115
      %p121 = scmp.eq.s32.totalorder %s10, 0
      %p122 = por %p120, %p121
      %p123 = scmp.ne.s32.totalorder %s112, %s115
      %p124 = scmp.eq.s32.totalorder %s15, 1
      %p125 = por %p123, %p124
      %p126 = scmp.ne.s32.totalorder %s115, %s116
      %p127 = scmp.eq.s32.totalorder %s15, 0
      %p128 = por %p126, %p127
      %p129 = scmp.ne.s32.totalorder %s115, %s116
      %p130 = scmp.eq.s32.totalorder %s16, 1
      %p131 = por %p129, %p130
      %p133 = scmp.ne.s32.totalorder %s116, %s132
      %p134 = scmp.eq.s32.totalorder %s16, 0
      %p135 = por %p133, %p134
      %s136 = ssub.s32 %s17, %s29
      %p137 = scmp.eq.s32.totalorder %s136, 0
      %s139 = sadd.s32 %s138, 1
      %s140 = scalar_select %p137, %s138, %s139
      %p143 = pneg %p137
      %p144 = scmp.eq.s32.totalorder %s10, 1
      %p145 = por %p143, %p144
      %p146 = scmp.ne.s32.totalorder %s138, %s141
      %p147 = scmp.eq.s32.totalorder %s10, 0
      %p148 = por %p146, %p147
      %p149 = scmp.ne.s32.totalorder %s138, %s141
      %p150 = scmp.eq.s32.totalorder %s15, 1
      %p151 = por %p149, %p150
      %p152 = scmp.ne.s32.totalorder %s141, %s142
      %p153 = scmp.eq.s32.totalorder %s15, 0
      %p154 = por %p152, %p153
      %p155 = scmp.ne.s32.totalorder %s141, %s142
      %p156 = scmp.eq.s32.totalorder %s16, 1
      %p157 = por %p155, %p156
      %p159 = scmp.ne.s32.totalorder %s142, %s158
      %p160 = scmp.eq.s32.totalorder %s16, 0
      %p161 = por %p159, %p160
      %p162 = scmp.le.s32.totalorder 1, %s10
      %p163 = scmp.lt.s32.totalorder %s10, 3
      %p164 = pnand %p162, %p163
      %p165 = pneg %p164
      // Predicated region
      $region9: #{resnet_small_forward.26} parent=5 // pred_check
        _
      $region10: #{resnet_small_forward.26} parent=5 // pred_check_branch
        %167 = sbr.rel (%p164) target = $region12
      $region11: #{resnet_small_forward.26} parent=5 // pred_region
        %s168 = ssub.s32 %s10, 1
        // Predicated region
        $region13: #{resnet_small_forward.26} parent=11 // pred_check
          %p169 = pneg %p48
        $region14: #{resnet_small_forward.26} parent=11 // pred_check_branch
          %171 = sbr.rel (%p169) target = $region16
        $region15: #{resnet_small_forward.26} parent=11 // pred_region
          %s172 = smul.u32 2, %s20
          %p173 = scmp.lt.s32.totalorder %s172, 1
          %s174 = scalar_select %p173, %s172, 1
          %s175 = smul.addr %s174, 4
          %s176 = scalar_lea.vmem %s0, %s175
          %s177 = smul.u32 2, %s20
        $region16: #{resnet_small_forward.26} parent=11 // pred_fallthru
          _
      $region12: #{resnet_small_forward.26} parent=5 // pred_fallthru
        _
      %p178 = scmp.lt.s32.totalorder %s10, 2
      // Predicated region
      $region17: #{resnet_small_forward.26} parent=5 // pred_check
        %p179 = pneg %p178
      $region18: #{resnet_small_forward.26} parent=5 // pred_check_branch
        %181 = sbr.rel (%p179) target = $region20
      $region19: #{resnet_small_forward.26} parent=5 // pred_region
        // Predicated region
        $region21: #{resnet_small_forward.26} parent=19 // pred_check
          %p182 = pneg %p70
        $region22: #{resnet_small_forward.26} parent=19 // pred_check_branch
          %184 = sbr.rel (%p182) target = $region24
        $region23: #{resnet_small_forward.26} parent=19 // pred_region
          %s185 = sand.u32 %s60, 1
          %s186 = sand.u32 %s60, 1
          %s187 = smul.addr %s186, 256
          %s188 = scalar_lea.vmem [#allocation3], %s187
          %s189 = smul.u32 32, %s18
          %s190 = smul.u32 2, %s17
          %s191 = smul.addr %s189, 4
          %s192 = sadd.s32 %s190, %s191
          %s193 = smul.addr %s192, 4
          %s194 = scalar_lea.vmem %s1, %s193
          // Predicated region
          $region25: #{resnet_small_forward.26} parent=23 // pred_check
            _
          $region26: #{resnet_small_forward.26} parent=23 // pred_check_branch
            %196 = sbr.rel (0) target = $region28
          $region27: #{resnet_small_forward.26} parent=23 // pred_region
            // Predicated region
            $region29: #{resnet_small_forward.26} parent=27 // pred_check
              _
            $region30: #{resnet_small_forward.26} parent=27 // pred_check_branch
              %198 = sbr.rel (0) target = $region32
            $region31: #{resnet_small_forward.26} parent=27 // pred_region
              // Predicated region
              $region44: #{resnet_small_forward.26} parent=31 // pred_check
                _
              $region45: #{resnet_small_forward.26} parent=31 // pred_check_branch
                %276 = sbr.rel (0) target = $region47
              $region46: #{resnet_small_forward.26} parent=31 // pred_region
                loop: start=0, step=1, limit=1
                $region48: #{resnet_small_forward.26} parent=46 // loop_pre_header
                  _
                $region49: #{resnet_small_forward.26} parent=46 // loop_header
                  %s278 = sphi 0, %s282
                  %p279 = scmp.ge.s32.totalorder %s278, 1
                  %s283 = sphi %s194, %s194
                  %s284 = sphi %s188, %s188
                $region50: #{resnet_small_forward.26} parent=46 // loop_header_branch
                  %281 = sbr.rel (%p279) target = $region54
                $region51: #{resnet_small_forward.26} parent=46 // loop_body
                  %v285 = vld [vmem:[%s283] sm:$0xff]
                  %286 = vst [vmem:[%s284] sm:$0xff] %v285
                  %v287 = vld [vmem:[%s283 + $0x10] sm:$0xff]
                  %288 = vst [vmem:[%s284 + $0x8] sm:$0xff] %v287
                  %v289 = vld [vmem:[%s283 + $0x20] sm:$0xff]
                  %290 = vst [vmem:[%s284 + $0x10] sm:$0xff] %v289
                  %v291 = vld [vmem:[%s283 + $0x30] sm:$0xff]
                  %292 = vst [vmem:[%s284 + $0x18] sm:$0xff] %v291
                  %v293 = vld [vmem:[%s283 + $0x40] sm:$0xff]
                  %294 = vst [vmem:[%s284 + $0x20] sm:$0xff] %v293
                  %v295 = vld [vmem:[%s283 + $0x50] sm:$0xff]
                  %296 = vst [vmem:[%s284 + $0x28] sm:$0xff] %v295
                  %v297 = vld [vmem:[%s283 + $0x60] sm:$0xff]
                  %298 = vst [vmem:[%s284 + $0x30] sm:$0xff] %v297
                  %v299 = vld [vmem:[%s283 + $0x70] sm:$0xff]
                  %300 = vst [vmem:[%s284 + $0x38] sm:$0xff] %v299
                  %v301 = vld [vmem:[%s283 + $0x80] sm:$0xff]
                  %302 = vst [vmem:[%s284 + $0x40] sm:$0xff] %v301
                  %v303 = vld [vmem:[%s283 + $0x90] sm:$0xff]
                  %304 = vst [vmem:[%s284 + $0x48] sm:$0xff] %v303
                  %v305 = vld [vmem:[%s283 + $0xa0] sm:$0xff]
                  %306 = vst [vmem:[%s284 + $0x50] sm:$0xff] %v305
                  %v307 = vld [vmem:[%s283 + $0xb0] sm:$0xff]
                  %308 = vst [vmem:[%s284 + $0x58] sm:$0xff] %v307
                  %v309 = vld [vmem:[%s283 + $0xc0] sm:$0xff]
                  %310 = vst [vmem:[%s284 + $0x60] sm:$0xff] %v309
                  %v311 = vld [vmem:[%s283 + $0xd0] sm:$0xff]
                  %312 = vst [vmem:[%s284 + $0x68] sm:$0xff] %v311
                  %v313 = vld [vmem:[%s283 + $0xe0] sm:$0xff]
                  %314 = vst [vmem:[%s284 + $0x70] sm:$0xff] %v313
                  %v315 = vld [vmem:[%s283 + $0xf0] sm:$0xff]
                  %316 = vst [vmem:[%s284 + $0x78] sm:$0xff] %v315
                  %v317 = vld [vmem:[%s283 + $0x100] sm:$0xff]
                  %318 = vst [vmem:[%s284 + $0x80] sm:$0xff] %v317
                  %v319 = vld [vmem:[%s283 + $0x110] sm:$0xff]
                  %320 = vst [vmem:[%s284 + $0x88] sm:$0xff] %v319
                  %v321 = vld [vmem:[%s283 + $0x120] sm:$0xff]
                  %322 = vst [vmem:[%s284 + $0x90] sm:$0xff] %v321
                  %v323 = vld [vmem:[%s283 + $0x130] sm:$0xff]
                  %324 = vst [vmem:[%s284 + $0x98] sm:$0xff] %v323
                  %v325 = vld [vmem:[%s283 + $0x140] sm:$0xff]
                  %326 = vst [vmem:[%s284 + $0xa0] sm:$0xff] %v325
                  %v327 = vld [vmem:[%s283 + $0x150] sm:$0xff]
                  %328 = vst [vmem:[%s284 + $0xa8] sm:$0xff] %v327
                  %v329 = vld [vmem:[%s283 + $0x160] sm:$0xff]
                  %330 = vst [vmem:[%s284 + $0xb0] sm:$0xff] %v329
                  %v331 = vld [vmem:[%s283 + $0x170] sm:$0xff]
                  %332 = vst [vmem:[%s284 + $0xb8] sm:$0xff] %v331
                  %v333 = vld [vmem:[%s283 + $0x180] sm:$0xff]
                  %334 = vst [vmem:[%s284 + $0xc0] sm:$0xff] %v333
                  %v335 = vld [vmem:[%s283 + $0x190] sm:$0xff]
                  %336 = vst [vmem:[%s284 + $0xc8] sm:$0xff] %v335
                  %v337 = vld [vmem:[%s283 + $0x1a0] sm:$0xff]
                  %338 = vst [vmem:[%s284 + $0xd0] sm:$0xff] %v337
                  %v339 = vld [vmem:[%s283 + $0x1b0] sm:$0xff]
                  %340 = vst [vmem:[%s284 + $0xd8] sm:$0xff] %v339
                  %v341 = vld [vmem:[%s283 + $0x1c0] sm:$0xff]
                  %342 = vst [vmem:[%s284 + $0xe0] sm:$0xff] %v341
                  %v343 = vld [vmem:[%s283 + $0x1d0] sm:$0xff]
                  %344 = vst [vmem:[%s284 + $0xe8] sm:$0xff] %v343
                  %v345 = vld [vmem:[%s283 + $0x1e0] sm:$0xff]
                  %346 = vst [vmem:[%s284 + $0xf0] sm:$0xff] %v345
                  %v347 = vld [vmem:[%s283 + $0x1f0] sm:$0xff]
                  %348 = vst [vmem:[%s284 + $0xf8] sm:$0xff] %v347
                $region52: #{resnet_small_forward.26} parent=46 // loop_footer
                  %s282 = sadd.s32 1, %s278
                $region53: #{resnet_small_forward.26} parent=46 // loop_footer_branch
                  %277 = sbr.rel target = $region49
                $region54: #{resnet_small_forward.26} parent=46 // loop_exit
                  _
              $region47: #{resnet_small_forward.26} parent=31 // pred_fallthru
                _
              // Predicated region
              $region55: #{resnet_small_forward.26} parent=31 // pred_check
                _
              $region56: #{resnet_small_forward.26} parent=31 // pred_check_branch
                %350 = sbr.rel target = $region58
              $region57: #{resnet_small_forward.26} parent=31 // pred_region
                _
              $region58: #{resnet_small_forward.26} parent=31 // pred_fallthru
                _
            $region32: #{resnet_small_forward.26} parent=27 // pred_fallthru
              _
            // Predicated region
            $region33: #{resnet_small_forward.26} parent=27 // pred_check
              _
            $region34: #{resnet_small_forward.26} parent=27 // pred_check_branch
              %200 = sbr.rel target = $region36
            $region35: #{resnet_small_forward.26} parent=27 // pred_region
              %s202 = ssub.s32 256, 1
              loop: start=0, step=1, limit=1
              $region37: #{resnet_small_forward.26} parent=35 // loop_pre_header
                _
              $region38: #{resnet_small_forward.26} parent=35 // loop_header
                %s204 = sphi 0, %s208
                %p205 = scmp.ge.s32.totalorder %s204, 1
                %s209 = sphi %s194, %s194
                %s210 = sphi %s188, %s188
              $region39: #{resnet_small_forward.26} parent=35 // loop_header_branch
                %207 = sbr.rel (%p205) target = $region43
              $region40: #{resnet_small_forward.26} parent=35 // loop_body
                %v211 = vld [vmem:[%s209] sm:%s202]
                %212 = vst [vmem:[%s210] sm:%s202] %v211
                %v213 = vld [vmem:[%s209 + $0x10] sm:%s202]
                %214 = vst [vmem:[%s210 + $0x8] sm:%s202] %v213
                %v215 = vld [vmem:[%s209 + $0x20] sm:%s202]
                %216 = vst [vmem:[%s210 + $0x10] sm:%s202] %v215
                %v217 = vld [vmem:[%s209 + $0x30] sm:%s202]
                %218 = vst [vmem:[%s210 + $0x18] sm:%s202] %v217
                %v219 = vld [vmem:[%s209 + $0x40] sm:%s202]
                %220 = vst [vmem:[%s210 + $0x20] sm:%s202] %v219
                %v221 = vld [vmem:[%s209 + $0x50] sm:%s202]
                %222 = vst [vmem:[%s210 + $0x28] sm:%s202] %v221
                %v223 = vld [vmem:[%s209 + $0x60] sm:%s202]
                %224 = vst [vmem:[%s210 + $0x30] sm:%s202] %v223
                %v225 = vld [vmem:[%s209 + $0x70] sm:%s202]
                %226 = vst [vmem:[%s210 + $0x38] sm:%s202] %v225
                %v227 = vld [vmem:[%s209 + $0x80] sm:%s202]
                %228 = vst [vmem:[%s210 + $0x40] sm:%s202] %v227
                %v229 = vld [vmem:[%s209 + $0x90] sm:%s202]
                %230 = vst [vmem:[%s210 + $0x48] sm:%s202] %v229
                %v231 = vld [vmem:[%s209 + $0xa0] sm:%s202]
                %232 = vst [vmem:[%s210 + $0x50] sm:%s202] %v231
                %v233 = vld [vmem:[%s209 + $0xb0] sm:%s202]
                %234 = vst [vmem:[%s210 + $0x58] sm:%s202] %v233
                %v235 = vld [vmem:[%s209 + $0xc0] sm:%s202]
                %236 = vst [vmem:[%s210 + $0x60] sm:%s202] %v235
                %v237 = vld [vmem:[%s209 + $0xd0] sm:%s202]
                %238 = vst [vmem:[%s210 + $0x68] sm:%s202] %v237
                %v239 = vld [vmem:[%s209 + $0xe0] sm:%s202]
                %240 = vst [vmem:[%s210 + $0x70] sm:%s202] %v239
                %v241 = vld [vmem:[%s209 + $0xf0] sm:%s202]
                %242 = vst [vmem:[%s210 + $0x78] sm:%s202] %v241
                %v243 = vld [vmem:[%s209 + $0x100] sm:%s202]
                %244 = vst [vmem:[%s210 + $0x80] sm:%s202] %v243
                %v245 = vld [vmem:[%s209 + $0x110] sm:%s202]
                %246 = vst [vmem:[%s210 + $0x88] sm:%s202] %v245
                %v247 = vld [vmem:[%s209 + $0x120] sm:%s202]
                %248 = vst [vmem:[%s210 + $0x90] sm:%s202] %v247
                %v249 = vld [vmem:[%s209 + $0x130] sm:%s202]
                %250 = vst [vmem:[%s210 + $0x98] sm:%s202] %v249
                %v251 = vld [vmem:[%s209 + $0x140] sm:%s202]
                %252 = vst [vmem:[%s210 + $0xa0] sm:%s202] %v251
                %v253 = vld [vmem:[%s209 + $0x150] sm:%s202]
                %254 = vst [vmem:[%s210 + $0xa8] sm:%s202] %v253
                %v255 = vld [vmem:[%s209 + $0x160] sm:%s202]
                %256 = vst [vmem:[%s210 + $0xb0] sm:%s202] %v255
                %v257 = vld [vmem:[%s209 + $0x170] sm:%s202]
                %258 = vst [vmem:[%s210 + $0xb8] sm:%s202] %v257
                %v259 = vld [vmem:[%s209 + $0x180] sm:%s202]
                %260 = vst [vmem:[%s210 + $0xc0] sm:%s202] %v259
                %v261 = vld [vmem:[%s209 + $0x190] sm:%s202]
                %262 = vst [vmem:[%s210 + $0xc8] sm:%s202] %v261
                %v263 = vld [vmem:[%s209 + $0x1a0] sm:%s202]
                %264 = vst [vmem:[%s210 + $0xd0] sm:%s202] %v263
                %v265 = vld [vmem:[%s209 + $0x1b0] sm:%s202]
                %266 = vst [vmem:[%s210 + $0xd8] sm:%s202] %v265
                %v267 = vld [vmem:[%s209 + $0x1c0] sm:%s202]
                %268 = vst [vmem:[%s210 + $0xe0] sm:%s202] %v267
                %v269 = vld [vmem:[%s209 + $0x1d0] sm:%s202]
                %270 = vst [vmem:[%s210 + $0xe8] sm:%s202] %v269
                %v271 = vld [vmem:[%s209 + $0x1e0] sm:%s202]
                %272 = vst [vmem:[%s210 + $0xf0] sm:%s202] %v271
                %v273 = vld [vmem:[%s209 + $0x1f0] sm:%s202]
                %274 = vst [vmem:[%s210 + $0xf8] sm:%s202] %v273
              $region41: #{resnet_small_forward.26} parent=35 // loop_footer
                %s208 = sadd.s32 1, %s204
              $region42: #{resnet_small_forward.26} parent=35 // loop_footer_branch
                %203 = sbr.rel target = $region38
              $region43: #{resnet_small_forward.26} parent=35 // loop_exit
                _
            $region36: #{resnet_small_forward.26} parent=27 // pred_fallthru
              _
          $region28: #{resnet_small_forward.26} parent=23 // pred_fallthru
            _
          %351 = vnop
        $region24: #{resnet_small_forward.26} parent=19 // pred_fallthru
          _
        // Predicated region
        $region59: #{resnet_small_forward.26} parent=19 // pred_check
          %p352 = pneg %p96
        $region60: #{resnet_small_forward.26} parent=19 // pred_check_branch
          %354 = sbr.rel (%p352) target = $region62
        $region61: #{resnet_small_forward.26} parent=19 // pred_region
          %s355 = smul.u32 2, %s17
          %p356 = scmp.lt.s32.totalorder %s355, 3
          %s357 = scalar_select %p356, %s355, 3
          %s358 = scalar_lea.vmem %s2, %s357
          %s359 = smul.u32 2, %s17
        $region62: #{resnet_small_forward.26} parent=19 // pred_fallthru
          _
        // Predicated region
        $region63: #{resnet_small_forward.26} parent=19 // pred_check
          %p360 = pneg %p122
        $region64: #{resnet_small_forward.26} parent=19 // pred_check_branch
          %362 = sbr.rel (%p360) target = $region66
        $region65: #{resnet_small_forward.26} parent=19 // pred_region
          %s363 = smul.u32 2, %s17
          %p364 = scmp.lt.s32.totalorder %s363, 3
          %s365 = scalar_select %p364, %s363, 3
          %s366 = scalar_lea.vmem %s3, %s365
          %s367 = smul.u32 2, %s17
        $region66: #{resnet_small_forward.26} parent=19 // pred_fallthru
          _
      $region20: #{resnet_small_forward.26} parent=5 // pred_fallthru
        _
      %p368 = scmp.le.s32.totalorder 1, %s10
      %p369 = scmp.lt.s32.totalorder %s10, 3
      %p370 = pnand %p368, %p369
      %p371 = pneg %p370
      // Predicated region
      $region67: #{resnet_small_forward.26} parent=5 // pred_check
        _
      $region68: #{resnet_small_forward.26} parent=5 // pred_check_branch
        %373 = sbr.rel (%p370) target = $region70
      $region69: #{resnet_small_forward.26} parent=5 // pred_region
        %s374 = ssub.s32 %s10, 1
        %s375 = sand.u32 %s63, 1
        %s376 = sand.u32 %s63, 1
        %s377 = smul.addr %s376, 256
        %s378 = scalar_lea.vmem [#allocation3], %s377
        // Predicated region
        $region71: #{resnet_small_forward.26} parent=69 // pred_check
          %p379 = pneg %p76
        $region72: #{resnet_small_forward.26} parent=69 // pred_check_branch
          %381 = sbr.rel (%p379) target = $region74
        $region73: #{resnet_small_forward.26} parent=69 // pred_region
          _
        $region74: #{resnet_small_forward.26} parent=69 // pred_fallthru
          _
        %s382 = smul.u32 2, %s20
        %p383 = scmp.lt.s32.totalorder %s382, 1
        %s384 = scalar_select %p383, %s382, 1
        %s385 = smul.addr %s384, 4
        %s386 = scalar_lea.vmem %s0, %s385
        %p387 = pneg %p48
        %p388 = pneg %p45
        %s389 = sand.u32 %s63, 1
        %s390 = sand.u32 %s63, 1
        %s391 = smul.addr %s390, 256
        %s392 = scalar_lea.vmem [#allocation3], %s391
        %p393 = pneg %p76
        %p394 = pneg %p73
        %s395 = smul.u32 2, %s19
        %p396 = scmp.lt.s32.totalorder %s395, 3
        %s397 = scalar_select %p396, %s395, 3
        %s398 = scalar_lea.vmem %s2, %s397
        %p399 = pneg %p102
        %p400 = pneg %p99
        %s401 = smul.u32 2, %s19
        %p402 = scmp.lt.s32.totalorder %s401, 3
        %s403 = scalar_select %p402, %s401, 3
        %s404 = scalar_lea.vmem %s3, %s403
        %p405 = pneg %p128
        %p406 = pneg %p125
        %p407 = pneg %p154
        %p408 = pneg %p151
        %s409 = smul.u32 2, %s19
        %p410 = scmp.lt.s32.totalorder %s409, 3
        %s411 = scalar_select %p410, %s409, 3
        %s412 = smul.addr %s411, 8
        %s413 = scalar_lea.vmem %s4, %s412
        %s414 = smul.u32 2, %s20
        %p415 = scmp.lt.s32.totalorder %s414, 1
        %s416 = scalar_select %p415, %s414, 1
        %s417 = smul.addr %s416, 4
        %s418 = scalar_lea.vmem %s0, %s417
        %s419 = smul.u32 2, %s20
        %s420 = smul.u32 32, %s20
        %s421 = smul.u32 2, %s19
        %s422 = smul.u32 2, %s19
        %p423 = scmp.lt.s32.totalorder %s422, 3
        %s424 = scalar_select %p423, %s422, 3
        %s425 = scalar_lea.vmem %s2, %s424
        %s426 = smul.u32 2, %s19
        %s427 = smul.u32 2, %s19
        %p428 = scmp.lt.s32.totalorder %s427, 3
        %s429 = scalar_select %p428, %s427, 3
        %s430 = scalar_lea.vmem %s3, %s429
        %s431 = smul.u32 2, %s19
        %s432 = smul.u32 2, %s19
        %p433 = scmp.lt.s32.totalorder %s432, 3
        %s434 = scalar_select %p433, %s432, 3
        %s435 = smul.addr %s434, 8
        %s436 = scalar_lea.vmem %s4, %s435
        %s437 = smul.u32 2, %s19
        %p438 = scmp.eq.s32.totalorder %s20, 0
        // Predicated region
        $region75: #{resnet_small_forward.26} parent=69 // pred_check
          %p439 = pneg %p438
        $region76: #{resnet_small_forward.26} parent=69 // pred_check_branch
          %441 = sbr.rel (%p439) target = $region78
        $region77: #{resnet_small_forward.26} parent=69 // pred_region
          %442 = vst [vmem:[#allocation2] sm:$0xff] 0.0
          %443 = vst [vmem:[#allocation2 + $0x8] sm:$0xff] 0.0
        $region78: #{resnet_small_forward.26} parent=69 // pred_fallthru
          _
        %v444 = vld [vmem:[#allocation2] sm:$0xff]
        %v445 = vld [vmem:[#allocation2 + $0x8] sm:$0xff]
        %v446 = vld [vmem:[%s418] sm:$0xff]
        %v447 = vld [vmem:[%s378] sm:$0xff]
        %v448 = vld [vmem:[%s378 + $0x8] sm:$0xff]
        %v449 = vld [vmem:[%s378 + $0x10] sm:$0xff]
        %v450 = vld [vmem:[%s378 + $0x18] sm:$0xff]
        %v451 = vld [vmem:[%s378 + $0x20] sm:$0xff]
        %v452 = vld [vmem:[%s378 + $0x28] sm:$0xff]
        %v453 = vld [vmem:[%s378 + $0x30] sm:$0xff]
        %v454 = vld [vmem:[%s378 + $0x38] sm:$0xff]
        %v455 = vld [vmem:[%s378 + $0x40] sm:$0xff]
        %v456 = vld [vmem:[%s378 + $0x48] sm:$0xff]
        %v457 = vld [vmem:[%s378 + $0x50] sm:$0xff]
        %v458 = vld [vmem:[%s378 + $0x58] sm:$0xff]
        %v459 = vld [vmem:[%s378 + $0x60] sm:$0xff]
        %v460 = vld [vmem:[%s378 + $0x68] sm:$0xff]
        %v461 = vld [vmem:[%s378 + $0x70] sm:$0xff]
        %v462 = vld [vmem:[%s378 + $0x78] sm:$0xff]
        %v463 = vld [vmem:[%s378 + $0x80] sm:$0xff]
        %v464 = vld [vmem:[%s378 + $0x88] sm:$0xff]
        %v465 = vld [vmem:[%s378 + $0x90] sm:$0xff]
        %v466 = vld [vmem:[%s378 + $0x98] sm:$0xff]
        %v467 = vld [vmem:[%s378 + $0xa0] sm:$0xff]
        %v468 = vld [vmem:[%s378 + $0xa8] sm:$0xff]
        %v469 = vld [vmem:[%s378 + $0xb0] sm:$0xff]
        %v470 = vld [vmem:[%s378 + $0xb8] sm:$0xff]
        %v471 = vld [vmem:[%s378 + $0xc0] sm:$0xff]
        %v472 = vld [vmem:[%s378 + $0xc8] sm:$0xff]
        %v473 = vld [vmem:[%s378 + $0xd0] sm:$0xff]
        %v474 = vld [vmem:[%s378 + $0xd8] sm:$0xff]
        %v475 = vld [vmem:[%s378 + $0xe0] sm:$0xff]
        %v476 = vld [vmem:[%s378 + $0xe8] sm:$0xff]
        %v477 = vld [vmem:[%s378 + $0xf0] sm:$0xff]
        %v478 = vld [vmem:[%s378 + $0xf8] sm:$0xff]
        %v480 = vunpack.c.l.b16 %v446
        %v481 = vunpack.c.h.b16 %v446
        %v482 = vpack.c.b16 %v480, %v480
        %v483 = vpack.c.b16 %v481, %v481
        %v518 = vunpack.c.l.b16 %v447
        %v519 = vunpack.c.h.b16 %v447
        %v520 = vunpack.c.l.b16 %v448
        %v521 = vunpack.c.h.b16 %v448
        %v522 = vunpack.c.l.b16 %v449
        %v523 = vunpack.c.h.b16 %v449
        %v524 = vunpack.c.l.b16 %v450
        %v525 = vunpack.c.h.b16 %v450
        %v526 = vunpack.c.l.b16 %v451
        %v527 = vunpack.c.h.b16 %v451
        %v528 = vunpack.c.l.b16 %v452
        %v529 = vunpack.c.h.b16 %v452
        %v530 = vunpack.c.l.b16 %v453
        %v531 = vunpack.c.h.b16 %v453
        %v532 = vunpack.c.l.b16 %v454
        %v533 = vunpack.c.h.b16 %v454
        %v534 = vunpack.c.l.b16 %v455
        %v535 = vunpack.c.h.b16 %v455
        %v536 = vunpack.c.l.b16 %v456
        %v537 = vunpack.c.h.b16 %v456
        %v538 = vunpack.c.l.b16 %v457
        %v539 = vunpack.c.h.b16 %v457
        %v540 = vunpack.c.l.b16 %v458
        %v541 = vunpack.c.h.b16 %v458
        %v542 = vunpack.c.l.b16 %v459
        %v543 = vunpack.c.h.b16 %v459
        %v544 = vunpack.c.l.b16 %v460
        %v545 = vunpack.c.h.b16 %v460
        %v546 = vunpack.c.l.b16 %v461
        %v547 = vunpack.c.h.b16 %v461
        %v548 = vunpack.c.l.b16 %v462
        %v549 = vunpack.c.h.b16 %v462
        %v550 = vunpack.c.l.b16 %v463
        %v551 = vunpack.c.h.b16 %v463
        %v552 = vunpack.c.l.b16 %v464
        %v553 = vunpack.c.h.b16 %v464
        %v554 = vunpack.c.l.b16 %v465
        %v555 = vunpack.c.h.b16 %v465
        %v556 = vunpack.c.l.b16 %v466
        %v557 = vunpack.c.h.b16 %v466
        %v558 = vunpack.c.l.b16 %v467
        %v559 = vunpack.c.h.b16 %v467
        %v560 = vunpack.c.l.b16 %v468
        %v561 = vunpack.c.h.b16 %v468
        %v562 = vunpack.c.l.b16 %v469
        %v563 = vunpack.c.h.b16 %v469
        %v564 = vunpack.c.l.b16 %v470
        %v565 = vunpack.c.h.b16 %v470
        %v566 = vunpack.c.l.b16 %v471
        %v567 = vunpack.c.h.b16 %v471
        %v568 = vunpack.c.l.b16 %v472
        %v569 = vunpack.c.h.b16 %v472
        %v570 = vunpack.c.l.b16 %v473
        %v571 = vunpack.c.h.b16 %v473
        %v572 = vunpack.c.l.b16 %v474
        %v573 = vunpack.c.h.b16 %v474
        %v574 = vunpack.c.l.b16 %v475
        %v575 = vunpack.c.h.b16 %v475
        %v576 = vunpack.c.l.b16 %v476
        %v577 = vunpack.c.h.b16 %v476
        %v578 = vunpack.c.l.b16 %v477
        %v579 = vunpack.c.h.b16 %v477
        %v580 = vunpack.c.l.b16 %v478
        %v581 = vunpack.c.h.b16 %v478
        %v582 = vpack.c.b16 %v520, %v518
        %v583 = vpack.c.b16 %v521, %v519
        %v584 = vpack.c.b16 %v524, %v522
        %v585 = vpack.c.b16 %v525, %v523
        %v586 = vpack.c.b16 %v528, %v526
        %v587 = vpack.c.b16 %v529, %v527
        %v588 = vpack.c.b16 %v532, %v530
        %v589 = vpack.c.b16 %v533, %v531
        %v590 = vpack.c.b16 %v536, %v534
        %v591 = vpack.c.b16 %v537, %v535
        %v592 = vpack.c.b16 %v540, %v538
        %v593 = vpack.c.b16 %v541, %v539
        %v594 = vpack.c.b16 %v544, %v542
        %v595 = vpack.c.b16 %v545, %v543
        %v596 = vpack.c.b16 %v548, %v546
        %v597 = vpack.c.b16 %v549, %v547
        %v598 = vpack.c.b16 %v552, %v550
        %v599 = vpack.c.b16 %v553, %v551
        %v600 = vpack.c.b16 %v556, %v554
        %v601 = vpack.c.b16 %v557, %v555
        %v602 = vpack.c.b16 %v560, %v558
        %v603 = vpack.c.b16 %v561, %v559
        %v604 = vpack.c.b16 %v564, %v562
        %v605 = vpack.c.b16 %v565, %v563
        %v606 = vpack.c.b16 %v568, %v566
        %v607 = vpack.c.b16 %v569, %v567
        %v608 = vpack.c.b16 %v572, %v570
        %v609 = vpack.c.b16 %v573, %v571
        %v610 = vpack.c.b16 %v576, %v574
        %v611 = vpack.c.b16 %v577, %v575
        %v612 = vpack.c.b16 %v580, %v578
        %v613 = vpack.c.b16 %v581, %v579
        %646 = vmatpush.bf16.msra.mxu0 %v596
        %647 = vmatpush.bf16.msra.mxu0 %v594
        %648 = vmatpush.bf16.msra.mxu0 %v592
        %649 = vmatpush.bf16.msra.mxu0 %v590
        %650 = vmatpush.bf16.msra.mxu0 %v588
        %651 = vmatpush.bf16.msra.mxu0 %v586
        %652 = vmatpush.bf16.msra.mxu0 %v584
        %653 = vmatpush.bf16.msra.mxu0 %v582
        %654 = vmatmul.bf16.gmra.mxu0 %v482
        %v655 = vpop.f32.mrf.mxu0
        %v656 = vadd.f32 0.0, %v655
        %v657 = vpop.f32.mrf.mxu0
        %658 = vdwg.mxu0
        %659 = vmatpush.bf16.msra.mxu0 %v612
        %660 = vmatpush.bf16.msra.mxu0 %v610
        %661 = vmatpush.bf16.msra.mxu0 %v608
        %662 = vmatpush.bf16.msra.mxu0 %v606
        %663 = vmatpush.bf16.msra.mxu0 %v604
        %664 = vmatpush.bf16.msra.mxu0 %v602
        %665 = vmatpush.bf16.msra.mxu0 %v600
        %666 = vmatpush.bf16.msra.mxu0 %v598
        %667 = vmatmul.bf16.gmra.mxu0 %v483
        %v668 = vpop.f32.mrf.mxu0
        %v669 = vadd.f32 %v656, %v668
        %v670 = vpop.f32.mrf.mxu0
        %671 = vdwg.mxu0
        %672 = vmatpush.bf16.msra.mxu0 %v597
        %673 = vmatpush.bf16.msra.mxu0 %v595
        %674 = vmatpush.bf16.msra.mxu0 %v593
        %675 = vmatpush.bf16.msra.mxu0 %v591
        %676 = vmatpush.bf16.msra.mxu0 %v589
        %677 = vmatpush.bf16.msra.mxu0 %v587
        %678 = vmatpush.bf16.msra.mxu0 %v585
        %679 = vmatpush.bf16.msra.mxu0 %v583
        %680 = vmatmul.bf16.gmra.mxu0 %v482
        %v681 = vpop.f32.mrf.mxu0
        %v682 = vadd.f32 0.0, %v681
        %v683 = vpop.f32.mrf.mxu0
        %684 = vdwg.mxu0
        %685 = vmatpush.bf16.msra.mxu0 %v613
        %686 = vmatpush.bf16.msra.mxu0 %v611
        %687 = vmatpush.bf16.msra.mxu0 %v609
        %688 = vmatpush.bf16.msra.mxu0 %v607
        %689 = vmatpush.bf16.msra.mxu0 %v605
        %690 = vmatpush.bf16.msra.mxu0 %v603
        %691 = vmatpush.bf16.msra.mxu0 %v601
        %692 = vmatpush.bf16.msra.mxu0 %v599
        %693 = vmatmul.bf16.gmra.mxu0 %v483
        %v694 = vpop.f32.mrf.mxu0
        %v695 = vadd.f32 %v682, %v694
        %v696 = vpop.f32.mrf.mxu0
        %697 = vdwg.mxu0
        %v698 = vadd.f32 %v444, %v669
        %v699 = vadd.f32 %v445, %v695
        %700 = vst [vmem:[#allocation2] sm:$0xff] %v698
        %701 = vst [vmem:[#allocation2 + $0x8] sm:$0xff] %v699
        // Predicated region
        $region79: #{resnet_small_forward.26} parent=69 // pred_check
          %p702 = pneg %p438
        $region80: #{resnet_small_forward.26} parent=69 // pred_check_branch
          %704 = sbr.rel (%p702) target = $region82
        $region81: #{resnet_small_forward.26} parent=69 // pred_region
          %v705 = vld [vmem:[#allocation2] sm:$0xff]
          %v706 = vld [vmem:[#allocation2 + $0x8] sm:$0xff]
          %v707 = vrot.slane %v705, 4
          %v708 = vadd.f32 %v705, %v707
          %v709 = vrot.slane %v708, 2
          %v710 = vadd.f32 %v708, %v709
          %v711 = vrot.slane %v710, 1
          %v712 = vadd.f32 %v710, %v711
          %v713 = vrot.slane %v706, 4
          %v714 = vadd.f32 %v706, %v713
          %v715 = vrot.slane %v714, 2
          %v716 = vadd.f32 %v714, %v715
          %v717 = vrot.slane %v716, 1
          %v718 = vadd.f32 %v716, %v717
          %v719 = vmul.f32 %v712, 0.5
          %v720 = vmul.f32 %v718, 0.5
          %v721 = vmul.f32 %v705, %v705
          %v722 = vmul.f32 %v706, %v706
          %v723 = vrot.slane %v721, 4
          %v724 = vadd.f32 %v721, %v723
          %v725 = vrot.slane %v724, 2
          %v726 = vadd.f32 %v724, %v725
          %v727 = vrot.slane %v726, 1
          %v728 = vadd.f32 %v726, %v727
          %v729 = vrot.slane %v722, 4
          %v730 = vadd.f32 %v722, %v729
          %v731 = vrot.slane %v730, 2
          %v732 = vadd.f32 %v730, %v731
          %v733 = vrot.slane %v732, 1
          %v734 = vadd.f32 %v732, %v733
          %v735 = vmul.f32 %v728, 0.5
          %v736 = vmul.f32 %v734, 0.5
          %v737 = vmul.f32 %v719, %v719
          %v738 = vmul.f32 %v720, %v720
          %v739 = vsub.f32 %v735, %v737
          %v740 = vsub.f32 %v736, %v738
          %v741 = vadd.f32 %v739, 1e-05
          %v742 = vadd.f32 %v740, 1e-05
          %v743 = vrsqrt.pop %v741
          %v744 = vmul.f32 %v743, %v741
          %v745 = vmul.f32 %v744, %v743
          %v746 = vmul.f32 0.5, %v745
          %v747 = vsub.f32 1.5, %v746
          %v748 = vmul.f32 %v743, %v747
          %vm749 = vweird.f32 %v741
          %vm750 = vweird.f32 %v743
          %vm751 = vmor %vm749, %vm750
          %v752 = vsel %vm751, %v743, %v748
          %v753 = vrsqrt.pop %v742
          %v754 = vmul.f32 %v753, %v742
          %v755 = vmul.f32 %v754, %v753
          %v756 = vmul.f32 0.5, %v755
          %v757 = vsub.f32 1.5, %v756
          %v758 = vmul.f32 %v753, %v757
          %vm759 = vweird.f32 %v742
          %vm760 = vweird.f32 %v753
          %vm761 = vmor %vm759, %vm760
          %v762 = vsel %vm761, %v753, %v758
          %v763 = vld [vmem:[%s425] sm:$0x3]
          %v765 = vperm.slane %v763, 0
          %v766 = vperm.slane %v763, 1
          %v769 = vmul.f32 %v752, %v765
          %v770 = vmul.f32 %v762, %v766
          %v771 = vld [vmem:[%s430] sm:$0x3]
          %v772 = vmul.f32 %v719, %v769
          %v773 = vmul.f32 %v720, %v770
          %v776 = vrot.slane %v773, 7
          %vm777 = vcmask 1040384
          %v778 = vsel %vm777, %v772, %v776
          %v780 = vsub.f32 %v771, %v778
          %v781 = vperm.slane %v769, 0
          %v782 = vperm.slane %v770, 0
          %v783 = vmul.f32 %v705, %v781
          %v784 = vmul.f32 %v706, %v782
          %v786 = vperm.slane %v780, 0
          %v787 = vperm.slane %v780, 1
          %v790 = vadd.f32 %v783, %v786
          %v791 = vadd.f32 %v784, %v787
          %792 = vst [vmem:[%s436] sm:$0xff] %v790
          %793 = vst [vmem:[%s436 + $0x8] sm:$0xff] %v791
        $region82: #{resnet_small_forward.26} parent=69 // pred_fallthru
          _
        %s794 = smul.u32 2, %s19
        %p795 = scmp.lt.s32.totalorder %s794, 3
        %s796 = scalar_select %p795, %s794, 3
        %s797 = smul.addr %s796, 8
        %s798 = scalar_lea.vmem %s4, %s797
        // Predicated region
        $region83: #{resnet_small_forward.26} parent=69 // pred_check
          %p799 = pneg %p151
        $region84: #{resnet_small_forward.26} parent=69 // pred_check_branch
          %801 = sbr.rel (%p799) target = $region86
        $region85: #{resnet_small_forward.26} parent=69 // pred_region
          %s802 = smul.u32 2, %s19
        $region86: #{resnet_small_forward.26} parent=69 // pred_fallthru
          _
      $region70: #{resnet_small_forward.26} parent=5 // pred_fallthru
        _
      %p803 = scmp.le.s32.totalorder 2, %s10
      // Predicated region
      $region87: #{resnet_small_forward.26} parent=5 // pred_check
        %p804 = pneg %p803
      $region88: #{resnet_small_forward.26} parent=5 // pred_check_branch
        %806 = sbr.rel (%p804) target = $region90
      $region89: #{resnet_small_forward.26} parent=5 // pred_region
        %s807 = ssub.s32 %s10, 2
        // Predicated region
        $region91: #{resnet_small_forward.26} parent=89 // pred_check
          %p808 = pneg %p157
        $region92: #{resnet_small_forward.26} parent=89 // pred_check_branch
          %810 = sbr.rel (%p808) target = $region94
        $region93: #{resnet_small_forward.26} parent=89 // pred_region
          %s811 = smul.u32 2, %s21
          %p812 = scmp.lt.s32.totalorder %s811, 3
          %s813 = scalar_select %p812, %s811, 3
          %s814 = smul.addr %s813, 8
          %s815 = scalar_lea.vmem %s4, %s814
        $region94: #{resnet_small_forward.26} parent=89 // pred_fallthru
          _
      $region90: #{resnet_small_forward.26} parent=5 // pred_fallthru
        _
    $region6: #{resnet_small_forward.26} parent=1 // loop_footer
      %s14 = sadd.s32 1, %s10
    $region7: #{resnet_small_forward.26} parent=1 // loop_footer_branch
      %9 = sbr.rel target = $region3
    $region8: #{resnet_small_forward.26} parent=1 // loop_exit
      _

// kernel: resnet_small_forward.27
$region0: #{resnet_small_forward.27}
  #allocation0 [shape = 'u32[]', space=smem, size = 0x4, offset = 0x4, fixed_abs, tag = 'smem constant byte address 0x4 - core index']
  #allocation1 [shape = 'u32[72,128]{1,0:T(1,128)}', space=vmem, size = 0x9000, scoped, tag = 'internal scratch']
  #allocation2 [shape = 'f32[8,256]{1,0:T(8,128)}', space=vmem, size = 0x2000, scoped, tag = 'scratch operand']
  %s0 = inlined_call_operand.vmem [shape: bf16[8,4608], index: 0, kind: input, shape index: {}]
  %s1 = inlined_call_operand.vmem [shape: bf16[4608,512], index: 1, kind: input, shape index: {}]
  %s2 = inlined_call_operand.vmem [shape: f32[1,512], index: 2, kind: input, shape index: {}]
  %s3 = inlined_call_operand.vmem [shape: f32[1,512], index: 3, kind: input, shape index: {}]
  %s4 = inlined_call_operand.vmem [shape: f32[8,512], index: 4, kind: input, shape index: {}]
  %s5 = inlined_call_operand.vmem [shape: f32[8,512], index: 5, kind: output, shape index: {}]
  %s6 = sld [smem:[#allocation0]]
  $region99: #{resnet_small_forward.27} parent=0
    _
  %s8 = ssub.s32 1, %s6
  %s9 = scalar_select 0, %s8, %s6
  $region1: #{resnet_small_forward.27} parent=0
    #allocation3 [shape = 'u8[262144]{0}', space=vmem, size = 0x40000, scoped, tag = 'input window, operand 1']
    loop: start=0, step=1, limit=38
    $region2: #{resnet_small_forward.27} parent=1 // loop_pre_header
      _
    $region3: #{resnet_small_forward.27} parent=1 // loop_header
      %s11 = sphi 0, %s15
      %p12 = scmp.ge.s32.totalorder %s11, 38
      %s18 = sphi 0, %s30
      %s19 = sphi 0, %s26
      %s20 = sphi 0, %s18
      %s21 = sphi 0, %s19
      %s22 = sphi 0, %s20
      %s23 = sphi 0, %s21
      %s33 = sphi 0, %s35
      %s36 = sphi 0, %s33
      %s37 = sphi 0, %s36
      %s53 = sphi 0, %s37
      %s61 = sphi 0, %s63
      %s64 = sphi 0, %s61
      %s65 = sphi 0, %s64
      %s81 = sphi 0, %s65
      %s87 = sphi 0, %s89
      %s90 = sphi 0, %s87
      %s91 = sphi 0, %s90
      %s107 = sphi 0, %s91
      %s113 = sphi 0, %s115
      %s116 = sphi 0, %s113
      %s117 = sphi 0, %s116
      %s133 = sphi 0, %s117
      %s139 = sphi 0, %s141
      %s142 = sphi 0, %s139
      %s143 = sphi 0, %s142
      %s159 = sphi 0, %s143
      %s165 = sphi 0, %s167
      %s168 = sphi 0, %s165
      %s169 = sphi 0, %s168
      %s185 = sphi 0, %s169
    $region4: #{resnet_small_forward.27} parent=1 // loop_header_branch
      %14 = sbr.rel (%p12) target = $region8
    $region5: #{resnet_small_forward.27} parent=1 // loop_body
      %s16 = ssub.s32 %s11, 1
      %s17 = ssub.s32 %s11, 2
      %s24 = sadd.s32 1, %s19
      %p25 = scmp.ge.s32.totalorder %s24, 18
      %s26 = scalar_select %p25, 0, %s24
      %s27 = sadd.s32 1, %s18
      %s28 = scalar_select %p25, %s27, %s18
      %p29 = scmp.ge.s32.totalorder %s28, 2
      %s30 = scalar_select %p29, 0, %s28
      %s31 = ssub.s32 %s19, %s26
      %p32 = scmp.eq.s32.totalorder %s31, 0
      %s34 = sadd.s32 %s33, 1
      %s35 = scalar_select %p32, %s33, %s34
      %p38 = pneg %p32
      %p39 = scmp.eq.s32.totalorder %s11, 35
      %p40 = por %p38, %p39
      %p41 = scmp.ne.s32.totalorder %s33, %s36
      %p42 = scmp.eq.s32.totalorder %s11, 0
      %p43 = por %p41, %p42
      %p44 = scmp.ne.s32.totalorder %s33, %s36
      %p45 = scmp.eq.s32.totalorder %s16, 35
      %p46 = por %p44, %p45
      %p47 = scmp.ne.s32.totalorder %s36, %s37
      %p48 = scmp.eq.s32.totalorder %s16, 0
      %p49 = por %p47, %p48
      %p50 = scmp.ne.s32.totalorder %s36, %s37
      %p51 = scmp.eq.s32.totalorder %s17, 35
      %p52 = por %p50, %p51
      %p54 = scmp.ne.s32.totalorder %s37, %s53
      %p55 = scmp.eq.s32.totalorder %s17, 0
      %p56 = por %p54, %p55
      %s57 = ssub.s32 %s19, %s26
      %s58 = ssub.s32 %s18, %s30
      %s59 = sor.u32 %s57, %s58
      %p60 = scmp.eq.s32.totalorder %s59, 0
      %s62 = sadd.s32 %s61, 1
      %s63 = scalar_select %p60, %s61, %s62
      %p66 = pneg %p60
      %p67 = scmp.eq.s32.totalorder %s11, 35
      %p68 = por %p66, %p67
      %p69 = scmp.ne.s32.totalorder %s61, %s64
      %p70 = scmp.eq.s32.totalorder %s11, 0
      %p71 = por %p69, %p70
      %p72 = scmp.ne.s32.totalorder %s61, %s64
      %p73 = scmp.eq.s32.totalorder %s16, 35
      %p74 = por %p72, %p73
      %p75 = scmp.ne.s32.totalorder %s64, %s65
      %p76 = scmp.eq.s32.totalorder %s16, 0
      %p77 = por %p75, %p76
      %p78 = scmp.ne.s32.totalorder %s64, %s65
      %p79 = scmp.eq.s32.totalorder %s17, 35
      %p80 = por %p78, %p79
      %p82 = scmp.ne.s32.totalorder %s65, %s81
      %p83 = scmp.eq.s32.totalorder %s17, 0
      %p84 = por %p82, %p83
      %s85 = ssub.s32 %s18, %s30
      %p86 = scmp.eq.s32.totalorder %s85, 0
      %s88 = sadd.s32 %s87, 1
      %s89 = scalar_select %p86, %s87, %s88
      %p92 = pneg %p86
      %p93 = scmp.eq.s32.totalorder %s11, 35
      %p94 = por %p92, %p93
      %p95 = scmp.ne.s32.totalorder %s87, %s90
      %p96 = scmp.eq.s32.totalorder %s11, 0
      %p97 = por %p95, %p96
      %p98 = scmp.ne.s32.totalorder %s87, %s90
      %p99 = scmp.eq.s32.totalorder %s16, 35
      %p100 = por %p98, %p99
      %p101 = scmp.ne.s32.totalorder %s90, %s91
      %p102 = scmp.eq.s32.totalorder %s16, 0
      %p103 = por %p101, %p102
      %p104 = scmp.ne.s32.totalorder %s90, %s91
      %p105 = scmp.eq.s32.totalorder %s17, 35
      %p106 = por %p104, %p105
      %p108 = scmp.ne.s32.totalorder %s91, %s107
      %p109 = scmp.eq.s32.totalorder %s17, 0
      %p110 = por %p108, %p109
      %s111 = ssub.s32 %s18, %s30
      %p112 = scmp.eq.s32.totalorder %s111, 0
      %s114 = sadd.s32 %s113, 1
      %s115 = scalar_select %p112, %s113, %s114
      %p118 = pneg %p112
      %p119 = scmp.eq.s32.totalorder %s11, 35
      %p120 = por %p118, %p119
      %p121 = scmp.ne.s32.totalorder %s113, %s116
      %p122 = scmp.eq.s32.totalorder %s11, 0
      %p123 = por %p121, %p122
      %p124 = scmp.ne.s32.totalorder %s113, %s116
      %p125 = scmp.eq.s32.totalorder %s16, 35
      %p126 = por %p124, %p125
      %p127 = scmp.ne.s32.totalorder %s116, %s117
      %p128 = scmp.eq.s32.totalorder %s16, 0
      %p129 = por %p127, %p128
      %p130 = scmp.ne.s32.totalorder %s116, %s117
      %p131 = scmp.eq.s32.totalorder %s17, 35
      %p132 = por %p130, %p131
      %p134 = scmp.ne.s32.totalorder %s117, %s133
      %p135 = scmp.eq.s32.totalorder %s17, 0
      %p136 = por %p134, %p135
      %s137 = ssub.s32 %s18, %s30
      %p138 = scmp.eq.s32.totalorder %s137, 0
      %s140 = sadd.s32 %s139, 1
      %s141 = scalar_select %p138, %s139, %s140
      %p144 = pneg %p138
      %p145 = scmp.eq.s32.totalorder %s11, 35
      %p146 = por %p144, %p145
      %p147 = scmp.ne.s32.totalorder %s139, %s142
      %p148 = scmp.eq.s32.totalorder %s11, 0
      %p149 = por %p147, %p148
      %p150 = scmp.ne.s32.totalorder %s139, %s142
      %p151 = scmp.eq.s32.totalorder %s16, 35
      %p152 = por %p150, %p151
      %p153 = scmp.ne.s32.totalorder %s142, %s143
      %p154 = scmp.eq.s32.totalorder %s16, 0
      %p155 = por %p153, %p154
      %p156 = scmp.ne.s32.totalorder %s142, %s143
      %p157 = scmp.eq.s32.totalorder %s17, 35
      %p158 = por %p156, %p157
      %p160 = scmp.ne.s32.totalorder %s143, %s159
      %p161 = scmp.eq.s32.totalorder %s17, 0
      %p162 = por %p160, %p161
      %s163 = ssub.s32 %s18, %s30
      %p164 = scmp.eq.s32.totalorder %s163, 0
      %s166 = sadd.s32 %s165, 1
      %s167 = scalar_select %p164, %s165, %s166
      %p170 = pneg %p164
      %p171 = scmp.eq.s32.totalorder %s11, 35
      %p172 = por %p170, %p171
      %p173 = scmp.ne.s32.totalorder %s165, %s168
      %p174 = scmp.eq.s32.totalorder %s11, 0
      %p175 = por %p173, %p174
      %p176 = scmp.ne.s32.totalorder %s165, %s168
      %p177 = scmp.eq.s32.totalorder %s16, 35
      %p178 = por %p176, %p177
      %p179 = scmp.ne.s32.totalorder %s168, %s169
      %p180 = scmp.eq.s32.totalorder %s16, 0
      %p181 = por %p179, %p180
      %p182 = scmp.ne.s32.totalorder %s168, %s169
      %p183 = scmp.eq.s32.totalorder %s17, 35
      %p184 = por %p182, %p183
      %p186 = scmp.ne.s32.totalorder %s169, %s185
      %p187 = scmp.eq.s32.totalorder %s17, 0
      %p188 = por %p186, %p187
      %p189 = scmp.le.s32.totalorder 1, %s11
      %p190 = scmp.lt.s32.totalorder %s11, 37
      %p191 = pnand %p189, %p190
      %p192 = pneg %p191
      // Predicated region
      $region9: #{resnet_small_forward.27} parent=5 // pred_check
        _
      $region10: #{resnet_small_forward.27} parent=5 // pred_check_branch
        %194 = sbr.rel (%p191) target = $region12
      $region11: #{resnet_small_forward.27} parent=5 // pred_region
        %s195 = ssub.s32 %s11, 1
      $region12: #{resnet_small_forward.27} parent=5 // pred_fallthru
        _
      %p196 = scmp.lt.s32.totalorder %s11, 36
      // Predicated region
      $region13: #{resnet_small_forward.27} parent=5 // pred_check
        %p197 = pneg %p196
      $region14: #{resnet_small_forward.27} parent=5 // pred_check_branch
        %199 = sbr.rel (%p197) target = $region16
      $region15: #{resnet_small_forward.27} parent=5 // pred_region
        // Predicated region
        $region17: #{resnet_small_forward.27} parent=15 // pred_check
          %p200 = pneg %p43
        $region18: #{resnet_small_forward.27} parent=15 // pred_check_branch
          %202 = sbr.rel (%p200) target = $region20
        $region19: #{resnet_small_forward.27} parent=15 // pred_region
          %s203 = smul.u32 2, %s19
          %p204 = scmp.lt.s32.totalorder %s203, 35
          %s205 = scalar_select %p204, %s203, 35
          %s206 = smul.addr %s205, 4
          %s207 = scalar_lea.vmem %s0, %s206
          %s208 = smul.u32 2, %s19
        $region20: #{resnet_small_forward.27} parent=15 // pred_fallthru
          _
        // Predicated region
        $region21: #{resnet_small_forward.27} parent=15 // pred_check
          %p209 = pneg %p71
        $region22: #{resnet_small_forward.27} parent=15 // pred_check_branch
          %211 = sbr.rel (%p209) target = $region24
        $region23: #{resnet_small_forward.27} parent=15 // pred_region
          %s212 = sand.u32 %s61, 1
          %s213 = sand.u32 %s61, 1
          %s214 = smul.addr %s213, 256
          %s215 = scalar_lea.vmem [#allocation3], %s214
          %s216 = smul.u32 32, %s19
          %s217 = smul.u32 2, %s18
          %s218 = smul.addr %s216, 4
          %s219 = sadd.s32 %s217, %s218
          %s220 = smul.addr %s219, 4
          %s221 = scalar_lea.vmem %s1, %s220
          // Predicated region
          $region25: #{resnet_small_forward.27} parent=23 // pred_check
            _
          $region26: #{resnet_small_forward.27} parent=23 // pred_check_branch
            %223 = sbr.rel (0) target = $region28
          $region27: #{resnet_small_forward.27} parent=23 // pred_region
            // Predicated region
            $region29: #{resnet_small_forward.27} parent=27 // pred_check
              _
            $region30: #{resnet_small_forward.27} parent=27 // pred_check_branch
              %225 = sbr.rel (0) target = $region32
            $region31: #{resnet_small_forward.27} parent=27 // pred_region
              // Predicated region
              $region44: #{resnet_small_forward.27} parent=31 // pred_check
                _
              $region45: #{resnet_small_forward.27} parent=31 // pred_check_branch
                %303 = sbr.rel (0) target = $region47
              $region46: #{resnet_small_forward.27} parent=31 // pred_region
                loop: start=0, step=1, limit=1
                $region48: #{resnet_small_forward.27} parent=46 // loop_pre_header
                  _
                $region49: #{resnet_small_forward.27} parent=46 // loop_header
                  %s305 = sphi 0, %s309
                  %p306 = scmp.ge.s32.totalorder %s305, 1
                  %s310 = sphi %s221, %s221
                  %s311 = sphi %s215, %s215
                $region50: #{resnet_small_forward.27} parent=46 // loop_header_branch
                  %308 = sbr.rel (%p306) target = $region54
                $region51: #{resnet_small_forward.27} parent=46 // loop_body
                  %v312 = vld [vmem:[%s310] sm:$0xff]
                  %313 = vst [vmem:[%s311] sm:$0xff] %v312
                  %v314 = vld [vmem:[%s310 + $0x10] sm:$0xff]
                  %315 = vst [vmem:[%s311 + $0x8] sm:$0xff] %v314
                  %v316 = vld [vmem:[%s310 + $0x20] sm:$0xff]
                  %317 = vst [vmem:[%s311 + $0x10] sm:$0xff] %v316
                  %v318 = vld [vmem:[%s310 + $0x30] sm:$0xff]
                  %319 = vst [vmem:[%s311 + $0x18] sm:$0xff] %v318
                  %v320 = vld [vmem:[%s310 + $0x40] sm:$0xff]
                  %321 = vst [vmem:[%s311 + $0x20] sm:$0xff] %v320
                  %v322 = vld [vmem:[%s310 + $0x50] sm:$0xff]
                  %323 = vst [vmem:[%s311 + $0x28] sm:$0xff] %v322
                  %v324 = vld [vmem:[%s310 + $0x60] sm:$0xff]
                  %325 = vst [vmem:[%s311 + $0x30] sm:$0xff] %v324
                  %v326 = vld [vmem:[%s310 + $0x70] sm:$0xff]
                  %327 = vst [vmem:[%s311 + $0x38] sm:$0xff] %v326
                  %v328 = vld [vmem:[%s310 + $0x80] sm:$0xff]
                  %329 = vst [vmem:[%s311 + $0x40] sm:$0xff] %v328
                  %v330 = vld [vmem:[%s310 + $0x90] sm:$0xff]
                  %331 = vst [vmem:[%s311 + $0x48] sm:$0xff] %v330
                  %v332 = vld [vmem:[%s310 + $0xa0] sm:$0xff]
                  %333 = vst [vmem:[%s311 + $0x50] sm:$0xff] %v332
                  %v334 = vld [vmem:[%s310 + $0xb0] sm:$0xff]
                  %335 = vst [vmem:[%s311 + $0x58] sm:$0xff] %v334
                  %v336 = vld [vmem:[%s310 + $0xc0] sm:$0xff]
                  %337 = vst [vmem:[%s311 + $0x60] sm:$0xff] %v336
                  %v338 = vld [vmem:[%s310 + $0xd0] sm:$0xff]
                  %339 = vst [vmem:[%s311 + $0x68] sm:$0xff] %v338
                  %v340 = vld [vmem:[%s310 + $0xe0] sm:$0xff]
                  %341 = vst [vmem:[%s311 + $0x70] sm:$0xff] %v340
                  %v342 = vld [vmem:[%s310 + $0xf0] sm:$0xff]
                  %343 = vst [vmem:[%s311 + $0x78] sm:$0xff] %v342
                  %v344 = vld [vmem:[%s310 + $0x100] sm:$0xff]
                  %345 = vst [vmem:[%s311 + $0x80] sm:$0xff] %v344
                  %v346 = vld [vmem:[%s310 + $0x110] sm:$0xff]
                  %347 = vst [vmem:[%s311 + $0x88] sm:$0xff] %v346
                  %v348 = vld [vmem:[%s310 + $0x120] sm:$0xff]
                  %349 = vst [vmem:[%s311 + $0x90] sm:$0xff] %v348
                  %v350 = vld [vmem:[%s310 + $0x130] sm:$0xff]
                  %351 = vst [vmem:[%s311 + $0x98] sm:$0xff] %v350
                  %v352 = vld [vmem:[%s310 + $0x140] sm:$0xff]
                  %353 = vst [vmem:[%s311 + $0xa0] sm:$0xff] %v352
                  %v354 = vld [vmem:[%s310 + $0x150] sm:$0xff]
                  %355 = vst [vmem:[%s311 + $0xa8] sm:$0xff] %v354
                  %v356 = vld [vmem:[%s310 + $0x160] sm:$0xff]
                  %357 = vst [vmem:[%s311 + $0xb0] sm:$0xff] %v356
                  %v358 = vld [vmem:[%s310 + $0x170] sm:$0xff]
                  %359 = vst [vmem:[%s311 + $0xb8] sm:$0xff] %v358
                  %v360 = vld [vmem:[%s310 + $0x180] sm:$0xff]
                  %361 = vst [vmem:[%s311 + $0xc0] sm:$0xff] %v360
                  %v362 = vld [vmem:[%s310 + $0x190] sm:$0xff]
                  %363 = vst [vmem:[%s311 + $0xc8] sm:$0xff] %v362
                  %v364 = vld [vmem:[%s310 + $0x1a0] sm:$0xff]
                  %365 = vst [vmem:[%s311 + $0xd0] sm:$0xff] %v364
                  %v366 = vld [vmem:[%s310 + $0x1b0] sm:$0xff]
                  %367 = vst [vmem:[%s311 + $0xd8] sm:$0xff] %v366
                  %v368 = vld [vmem:[%s310 + $0x1c0] sm:$0xff]
                  %369 = vst [vmem:[%s311 + $0xe0] sm:$0xff] %v368
                  %v370 = vld [vmem:[%s310 + $0x1d0] sm:$0xff]
                  %371 = vst [vmem:[%s311 + $0xe8] sm:$0xff] %v370
                  %v372 = vld [vmem:[%s310 + $0x1e0] sm:$0xff]
                  %373 = vst [vmem:[%s311 + $0xf0] sm:$0xff] %v372
                  %v374 = vld [vmem:[%s310 + $0x1f0] sm:$0xff]
                  %375 = vst [vmem:[%s311 + $0xf8] sm:$0xff] %v374
                $region52: #{resnet_small_forward.27} parent=46 // loop_footer
                  %s309 = sadd.s32 1, %s305
                $region53: #{resnet_small_forward.27} parent=46 // loop_footer_branch
                  %304 = sbr.rel target = $region49
                $region54: #{resnet_small_forward.27} parent=46 // loop_exit
                  _
              $region47: #{resnet_small_forward.27} parent=31 // pred_fallthru
                _
              // Predicated region
              $region55: #{resnet_small_forward.27} parent=31 // pred_check
                _
              $region56: #{resnet_small_forward.27} parent=31 // pred_check_branch
                %377 = sbr.rel target = $region58
              $region57: #{resnet_small_forward.27} parent=31 // pred_region
                _
              $region58: #{resnet_small_forward.27} parent=31 // pred_fallthru
                _
            $region32: #{resnet_small_forward.27} parent=27 // pred_fallthru
              _
            // Predicated region
            $region33: #{resnet_small_forward.27} parent=27 // pred_check
              _
            $region34: #{resnet_small_forward.27} parent=27 // pred_check_branch
              %227 = sbr.rel target = $region36
            $region35: #{resnet_small_forward.27} parent=27 // pred_region
              %s229 = ssub.s32 256, 1
              loop: start=0, step=1, limit=1
              $region37: #{resnet_small_forward.27} parent=35 // loop_pre_header
                _
              $region38: #{resnet_small_forward.27} parent=35 // loop_header
                %s231 = sphi 0, %s235
                %p232 = scmp.ge.s32.totalorder %s231, 1
                %s236 = sphi %s221, %s221
                %s237 = sphi %s215, %s215
              $region39: #{resnet_small_forward.27} parent=35 // loop_header_branch
                %234 = sbr.rel (%p232) target = $region43
              $region40: #{resnet_small_forward.27} parent=35 // loop_body
                %v238 = vld [vmem:[%s236] sm:%s229]
                %239 = vst [vmem:[%s237] sm:%s229] %v238
                %v240 = vld [vmem:[%s236 + $0x10] sm:%s229]
                %241 = vst [vmem:[%s237 + $0x8] sm:%s229] %v240
                %v242 = vld [vmem:[%s236 + $0x20] sm:%s229]
                %243 = vst [vmem:[%s237 + $0x10] sm:%s229] %v242
                %v244 = vld [vmem:[%s236 + $0x30] sm:%s229]
                %245 = vst [vmem:[%s237 + $0x18] sm:%s229] %v244
                %v246 = vld [vmem:[%s236 + $0x40] sm:%s229]
                %247 = vst [vmem:[%s237 + $0x20] sm:%s229] %v246
                %v248 = vld [vmem:[%s236 + $0x50] sm:%s229]
                %249 = vst [vmem:[%s237 + $0x28] sm:%s229] %v248
                %v250 = vld [vmem:[%s236 + $0x60] sm:%s229]
                %251 = vst [vmem:[%s237 + $0x30] sm:%s229] %v250
                %v252 = vld [vmem:[%s236 + $0x70] sm:%s229]
                %253 = vst [vmem:[%s237 + $0x38] sm:%s229] %v252
                %v254 = vld [vmem:[%s236 + $0x80] sm:%s229]
                %255 = vst [vmem:[%s237 + $0x40] sm:%s229] %v254
                %v256 = vld [vmem:[%s236 + $0x90] sm:%s229]
                %257 = vst [vmem:[%s237 + $0x48] sm:%s229] %v256
                %v258 = vld [vmem:[%s236 + $0xa0] sm:%s229]
                %259 = vst [vmem:[%s237 + $0x50] sm:%s229] %v258
                %v260 = vld [vmem:[%s236 + $0xb0] sm:%s229]
                %261 = vst [vmem:[%s237 + $0x58] sm:%s229] %v260
                %v262 = vld [vmem:[%s236 + $0xc0] sm:%s229]
                %263 = vst [vmem:[%s237 + $0x60] sm:%s229] %v262
                %v264 = vld [vmem:[%s236 + $0xd0] sm:%s229]
                %265 = vst [vmem:[%s237 + $0x68] sm:%s229] %v264
                %v266 = vld [vmem:[%s236 + $0xe0] sm:%s229]
                %267 = vst [vmem:[%s237 + $0x70] sm:%s229] %v266
                %v268 = vld [vmem:[%s236 + $0xf0] sm:%s229]
                %269 = vst [vmem:[%s237 + $0x78] sm:%s229] %v268
                %v270 = vld [vmem:[%s236 + $0x100] sm:%s229]
                %271 = vst [vmem:[%s237 + $0x80] sm:%s229] %v270
                %v272 = vld [vmem:[%s236 + $0x110] sm:%s229]
                %273 = vst [vmem:[%s237 + $0x88] sm:%s229] %v272
                %v274 = vld [vmem:[%s236 + $0x120] sm:%s229]
                %275 = vst [vmem:[%s237 + $0x90] sm:%s229] %v274
                %v276 = vld [vmem:[%s236 + $0x130] sm:%s229]
                %277 = vst [vmem:[%s237 + $0x98] sm:%s229] %v276
                %v278 = vld [vmem:[%s236 + $0x140] sm:%s229]
                %279 = vst [vmem:[%s237 + $0xa0] sm:%s229] %v278
                %v280 = vld [vmem:[%s236 + $0x150] sm:%s229]
                %281 = vst [vmem:[%s237 + $0xa8] sm:%s229] %v280
                %v282 = vld [vmem:[%s236 + $0x160] sm:%s229]
                %283 = vst [vmem:[%s237 + $0xb0] sm:%s229] %v282
                %v284 = vld [vmem:[%s236 + $0x170] sm:%s229]
                %285 = vst [vmem:[%s237 + $0xb8] sm:%s229] %v284
                %v286 = vld [vmem:[%s236 + $0x180] sm:%s229]
                %287 = vst [vmem:[%s237 + $0xc0] sm:%s229] %v286
                %v288 = vld [vmem:[%s236 + $0x190] sm:%s229]
                %289 = vst [vmem:[%s237 + $0xc8] sm:%s229] %v288
                %v290 = vld [vmem:[%s236 + $0x1a0] sm:%s229]
                %291 = vst [vmem:[%s237 + $0xd0] sm:%s229] %v290
                %v292 = vld [vmem:[%s236 + $0x1b0] sm:%s229]
                %293 = vst [vmem:[%s237 + $0xd8] sm:%s229] %v292
                %v294 = vld [vmem:[%s236 + $0x1c0] sm:%s229]
                %295 = vst [vmem:[%s237 + $0xe0] sm:%s229] %v294
                %v296 = vld [vmem:[%s236 + $0x1d0] sm:%s229]
                %297 = vst [vmem:[%s237 + $0xe8] sm:%s229] %v296
                %v298 = vld [vmem:[%s236 + $0x1e0] sm:%s229]
                %299 = vst [vmem:[%s237 + $0xf0] sm:%s229] %v298
                %v300 = vld [vmem:[%s236 + $0x1f0] sm:%s229]
                %301 = vst [vmem:[%s237 + $0xf8] sm:%s229] %v300
              $region41: #{resnet_small_forward.27} parent=35 // loop_footer
                %s235 = sadd.s32 1, %s231
              $region42: #{resnet_small_forward.27} parent=35 // loop_footer_branch
                %230 = sbr.rel target = $region38
              $region43: #{resnet_small_forward.27} parent=35 // loop_exit
                _
            $region36: #{resnet_small_forward.27} parent=27 // pred_fallthru
              _
          $region28: #{resnet_small_forward.27} parent=23 // pred_fallthru
            _
          %378 = vnop
        $region24: #{resnet_small_forward.27} parent=15 // pred_fallthru
          _
        // Predicated region
        $region59: #{resnet_small_forward.27} parent=15 // pred_check
          %p379 = pneg %p97
        $region60: #{resnet_small_forward.27} parent=15 // pred_check_branch
          %381 = sbr.rel (%p379) target = $region62
        $region61: #{resnet_small_forward.27} parent=15 // pred_region
          %s382 = smul.u32 2, %s18
          %p383 = scmp.lt.s32.totalorder %s382, 3
          %s384 = scalar_select %p383, %s382, 3
          %s385 = scalar_lea.vmem %s2, %s384
          %s386 = smul.u32 2, %s18
        $region62: #{resnet_small_forward.27} parent=15 // pred_fallthru
          _
        // Predicated region
        $region63: #{resnet_small_forward.27} parent=15 // pred_check
          %p387 = pneg %p123
        $region64: #{resnet_small_forward.27} parent=15 // pred_check_branch
          %389 = sbr.rel (%p387) target = $region66
        $region65: #{resnet_small_forward.27} parent=15 // pred_region
          %s390 = smul.u32 2, %s18
          %p391 = scmp.lt.s32.totalorder %s390, 3
          %s392 = scalar_select %p391, %s390, 3
          %s393 = scalar_lea.vmem %s3, %s392
          %s394 = smul.u32 2, %s18
        $region66: #{resnet_small_forward.27} parent=15 // pred_fallthru
          _
        // Predicated region
        $region67: #{resnet_small_forward.27} parent=15 // pred_check
          %p395 = pneg %p149
        $region68: #{resnet_small_forward.27} parent=15 // pred_check_branch
          %397 = sbr.rel (%p395) target = $region70
        $region69: #{resnet_small_forward.27} parent=15 // pred_region
          %s398 = smul.u32 2, %s18
          %p399 = scmp.lt.s32.totalorder %s398, 3
          %s400 = scalar_select %p399, %s398, 3
          %s401 = smul.addr %s400, 8
          %s402 = scalar_lea.vmem %s4, %s401
          %s403 = smul.u32 2, %s18
        $region70: #{resnet_small_forward.27} parent=15 // pred_fallthru
          _
      $region16: #{resnet_small_forward.27} parent=5 // pred_fallthru
        _
      %p404 = scmp.le.s32.totalorder 1, %s11
      %p405 = scmp.lt.s32.totalorder %s11, 37
      %p406 = pnand %p404, %p405
      %p407 = pneg %p406
      // Predicated region
      $region71: #{resnet_small_forward.27} parent=5 // pred_check
        _
      $region72: #{resnet_small_forward.27} parent=5 // pred_check_branch
        %409 = sbr.rel (%p406) target = $region74
      $region73: #{resnet_small_forward.27} parent=5 // pred_region
        %s410 = ssub.s32 %s11, 1
        %s411 = sand.u32 %s64, 1
        %s412 = sand.u32 %s64, 1
        %s413 = smul.addr %s412, 256
        %s414 = scalar_lea.vmem [#allocation3], %s413
        // Predicated region
        $region75: #{resnet_small_forward.27} parent=73 // pred_check
          %p415 = pneg %p77
        $region76: #{resnet_small_forward.27} parent=73 // pred_check_branch
          %417 = sbr.rel (%p415) target = $region78
        $region77: #{resnet_small_forward.27} parent=73 // pred_region
          _
        $region78: #{resnet_small_forward.27} parent=73 // pred_fallthru
          _
        %s418 = smul.u32 2, %s21
        %p419 = scmp.lt.s32.totalorder %s418, 35
        %s420 = scalar_select %p419, %s418, 35
        %s421 = smul.addr %s420, 4
        %s422 = scalar_lea.vmem %s0, %s421
        %p423 = pneg %p49
        %p424 = pneg %p46
        %s425 = sand.u32 %s64, 1
        %s426 = sand.u32 %s64, 1
        %s427 = smul.addr %s426, 256
        %s428 = scalar_lea.vmem [#allocation3], %s427
        %p429 = pneg %p77
        %p430 = pneg %p74
        %s431 = smul.u32 2, %s20
        %p432 = scmp.lt.s32.totalorder %s431, 3
        %s433 = scalar_select %p432, %s431, 3
        %s434 = scalar_lea.vmem %s2, %s433
        %p435 = pneg %p103
        %p436 = pneg %p100
        %s437 = smul.u32 2, %s20
        %p438 = scmp.lt.s32.totalorder %s437, 3
        %s439 = scalar_select %p438, %s437, 3
        %s440 = scalar_lea.vmem %s3, %s439
        %p441 = pneg %p129
        %p442 = pneg %p126
        %s443 = smul.u32 2, %s20
        %p444 = scmp.lt.s32.totalorder %s443, 3
        %s445 = scalar_select %p444, %s443, 3
        %s446 = smul.addr %s445, 8
        %s447 = scalar_lea.vmem %s4, %s446
        %p448 = pneg %p155
        %p449 = pneg %p152
        %p450 = pneg %p181
        %p451 = pneg %p178
        %s452 = smul.u32 2, %s20
        %p453 = scmp.lt.s32.totalorder %s452, 3
        %s454 = scalar_select %p453, %s452, 3
        %s455 = smul.addr %s454, 8
        %s456 = scalar_lea.vmem %s5, %s455
        %s457 = smul.u32 2, %s21
        %p458 = scmp.lt.s32.totalorder %s457, 35
        %s459 = scalar_select %p458, %s457, 35
        %s460 = smul.addr %s459, 4
        %s461 = scalar_lea.vmem %s0, %s460
        %s462 = smul.u32 2, %s21
        %s463 = smul.u32 32, %s21
        %s464 = smul.u32 2, %s20
        %s465 = smul.u32 2, %s20
        %p466 = scmp.lt.s32.totalorder %s465, 3
        %s467 = scalar_select %p466, %s465, 3
        %s468 = scalar_lea.vmem %s2, %s467
        %s469 = smul.u32 2, %s20
        %s470 = smul.u32 2, %s20
        %p471 = scmp.lt.s32.totalorder %s470, 3
        %s472 = scalar_select %p471, %s470, 3
        %s473 = scalar_lea.vmem %s3, %s472
        %s474 = smul.u32 2, %s20
        %s475 = smul.u32 2, %s20
        %p476 = scmp.lt.s32.totalorder %s475, 3
        %s477 = scalar_select %p476, %s475, 3
        %s478 = smul.addr %s477, 8
        %s479 = scalar_lea.vmem %s4, %s478
        %s480 = smul.u32 2, %s20
        %s481 = smul.u32 2, %s20
        %p482 = scmp.lt.s32.totalorder %s481, 3
        %s483 = scalar_select %p482, %s481, 3
        %s484 = smul.addr %s483, 8
        %s485 = scalar_lea.vmem %s5, %s484
        %s486 = smul.u32 2, %s20
        %p487 = scmp.eq.s32.totalorder %s21, 0
        // Predicated region
        $region79: #{resnet_small_forward.27} parent=73 // pred_check
          %p488 = pneg %p487
        $region80: #{resnet_small_forward.27} parent=73 // pred_check_branch
          %490 = sbr.rel (%p488) target = $region82
        $region81: #{resnet_small_forward.27} parent=73 // pred_region
          %491 = vst [vmem:[#allocation2] sm:$0xff] 0.0
          %492 = vst [vmem:[#allocation2 + $0x8] sm:$0xff] 0.0
        $region82: #{resnet_small_forward.27} parent=73 // pred_fallthru
          _
        %v493 = vld [vmem:[#allocation2] sm:$0xff]
        %v494 = vld [vmem:[#allocation2 + $0x8] sm:$0xff]
        %v495 = vld [vmem:[%s461] sm:$0xff]
        %v496 = vld [vmem:[%s414] sm:$0xff]
        %v497 = vld [vmem:[%s414 + $0x8] sm:$0xff]
        %v498 = vld [vmem:[%s414 + $0x10] sm:$0xff]
        %v499 = vld [vmem:[%s414 + $0x18] sm:$0xff]
        %v500 = vld [vmem:[%s414 + $0x20] sm:$0xff]
        %v501 = vld [vmem:[%s414 + $0x28] sm:$0xff]
        %v502 = vld [vmem:[%s414 + $0x30] sm:$0xff]
        %v503 = vld [vmem:[%s414 + $0x38] sm:$0xff]
        %v504 = vld [vmem:[%s414 + $0x40] sm:$0xff]
        %v505 = vld [vmem:[%s414 + $0x48] sm:$0xff]
        %v506 = vld [vmem:[%s414 + $0x50] sm:$0xff]
        %v507 = vld [vmem:[%s414 + $0x58] sm:$0xff]
        %v508 = vld [vmem:[%s414 + $0x60] sm:$0xff]
        %v509 = vld [vmem:[%s414 + $0x68] sm:$0xff]
        %v510 = vld [vmem:[%s414 + $0x70] sm:$0xff]
        %v511 = vld [vmem:[%s414 + $0x78] sm:$0xff]
        %v512 = vld [vmem:[%s414 + $0x80] sm:$0xff]
        %v513 = vld [vmem:[%s414 + $0x88] sm:$0xff]
        %v514 = vld [vmem:[%s414 + $0x90] sm:$0xff]
        %v515 = vld [vmem:[%s414 + $0x98] sm:$0xff]
        %v516 = vld [vmem:[%s414 + $0xa0] sm:$0xff]
        %v517 = vld [vmem:[%s414 + $0xa8] sm:$0xff]
        %v518 = vld [vmem:[%s414 + $0xb0] sm:$0xff]
        %v519 = vld [vmem:[%s414 + $0xb8] sm:$0xff]
        %v520 = vld [vmem:[%s414 + $0xc0] sm:$0xff]
        %v521 = vld [vmem:[%s414 + $0xc8] sm:$0xff]
        %v522 = vld [vmem:[%s414 + $0xd0] sm:$0xff]
        %v523 = vld [vmem:[%s414 + $0xd8] sm:$0xff]
        %v524 = vld [vmem:[%s414 + $0xe0] sm:$0xff]
        %v525 = vld [vmem:[%s414 + $0xe8] sm:$0xff]
        %v526 = vld [vmem:[%s414 + $0xf0] sm:$0xff]
        %v527 = vld [vmem:[%s414 + $0xf8] sm:$0xff]
        %v529 = vunpack.c.l.b16 %v495
        %v530 = vunpack.c.h.b16 %v495
        %v531 = vpack.c.b16 %v529, %v529
        %v532 = vpack.c.b16 %v530, %v530
        %v567 = vunpack.c.l.b16 %v496
        %v568 = vunpack.c.h.b16 %v496
        %v569 = vunpack.c.l.b16 %v497
        %v570 = vunpack.c.h.b16 %v497
        %v571 = vunpack.c.l.b16 %v498
        %v572 = vunpack.c.h.b16 %v498
        %v573 = vunpack.c.l.b16 %v499
        %v574 = vunpack.c.h.b16 %v499
        %v575 = vunpack.c.l.b16 %v500
        %v576 = vunpack.c.h.b16 %v500
        %v577 = vunpack.c.l.b16 %v501
        %v578 = vunpack.c.h.b16 %v501
        %v579 = vunpack.c.l.b16 %v502
        %v580 = vunpack.c.h.b16 %v502
        %v581 = vunpack.c.l.b16 %v503
        %v582 = vunpack.c.h.b16 %v503
        %v583 = vunpack.c.l.b16 %v504
        %v584 = vunpack.c.h.b16 %v504
        %v585 = vunpack.c.l.b16 %v505
        %v586 = vunpack.c.h.b16 %v505
        %v587 = vunpack.c.l.b16 %v506
        %v588 = vunpack.c.h.b16 %v506
        %v589 = vunpack.c.l.b16 %v507
        %v590 = vunpack.c.h.b16 %v507
        %v591 = vunpack.c.l.b16 %v508
        %v592 = vunpack.c.h.b16 %v508
        %v593 = vunpack.c.l.b16 %v509
        %v594 = vunpack.c.h.b16 %v509
        %v595 = vunpack.c.l.b16 %v510
        %v596 = vunpack.c.h.b16 %v510
        %v597 = vunpack.c.l.b16 %v511
        %v598 = vunpack.c.h.b16 %v511
        %v599 = vunpack.c.l.b16 %v512
        %v600 = vunpack.c.h.b16 %v512
        %v601 = vunpack.c.l.b16 %v513
        %v602 = vunpack.c.h.b16 %v513
        %v603 = vunpack.c.l.b16 %v514
        %v604 = vunpack.c.h.b16 %v514
        %v605 = vunpack.c.l.b16 %v515
        %v606 = vunpack.c.h.b16 %v515
        %v607 = vunpack.c.l.b16 %v516
        %v608 = vunpack.c.h.b16 %v516
        %v609 = vunpack.c.l.b16 %v517
        %v610 = vunpack.c.h.b16 %v517
        %v611 = vunpack.c.l.b16 %v518
        %v612 = vunpack.c.h.b16 %v518
        %v613 = vunpack.c.l.b16 %v519
        %v614 = vunpack.c.h.b16 %v519
        %v615 = vunpack.c.l.b16 %v520
        %v616 = vunpack.c.h.b16 %v520
        %v617 = vunpack.c.l.b16 %v521
        %v618 = vunpack.c.h.b16 %v521
        %v619 = vunpack.c.l.b16 %v522
        %v620 = vunpack.c.h.b16 %v522
        %v621 = vunpack.c.l.b16 %v523
        %v622 = vunpack.c.h.b16 %v523
        %v623 = vunpack.c.l.b16 %v524
        %v624 = vunpack.c.h.b16 %v524
        %v625 = vunpack.c.l.b16 %v525
        %v626 = vunpack.c.h.b16 %v525
        %v627 = vunpack.c.l.b16 %v526
        %v628 = vunpack.c.h.b16 %v526
        %v629 = vunpack.c.l.b16 %v527
        %v630 = vunpack.c.h.b16 %v527
        %v631 = vpack.c.b16 %v569, %v567
        %v632 = vpack.c.b16 %v570, %v568
        %v633 = vpack.c.b16 %v573, %v571
        %v634 = vpack.c.b16 %v574, %v572
        %v635 = vpack.c.b16 %v577, %v575
        %v636 = vpack.c.b16 %v578, %v576
        %v637 = vpack.c.b16 %v581, %v579
        %v638 = vpack.c.b16 %v582, %v580
        %v639 = vpack.c.b16 %v585, %v583
        %v640 = vpack.c.b16 %v586, %v584
        %v641 = vpack.c.b16 %v589, %v587
        %v642 = vpack.c.b16 %v590, %v588
        %v643 = vpack.c.b16 %v593, %v591
        %v644 = vpack.c.b16 %v594, %v592
        %v645 = vpack.c.b16 %v597, %v595
        %v646 = vpack.c.b16 %v598, %v596
        %v647 = vpack.c.b16 %v601, %v599
        %v648 = vpack.c.b16 %v602, %v600
        %v649 = vpack.c.b16 %v605, %v603
        %v650 = vpack.c.b16 %v606, %v604
        %v651 = vpack.c.b16 %v609, %v607
        %v652 = vpack.c.b16 %v610, %v608
        %v653 = vpack.c.b16 %v613, %v611
        %v654 = vpack.c.b16 %v614, %v612
        %v655 = vpack.c.b16 %v617, %v615
        %v656 = vpack.c.b16 %v618, %v616
        %v657 = vpack.c.b16 %v621, %v619
        %v658 = vpack.c.b16 %v622, %v620
        %v659 = vpack.c.b16 %v625, %v623
        %v660 = vpack.c.b16 %v626, %v624
        %v661 = vpack.c.b16 %v629, %v627
        %v662 = vpack.c.b16 %v630, %v628
        %695 = vmatpush.bf16.msra.mxu0 %v645
        %696 = vmatpush.bf16.msra.mxu0 %v643
        %697 = vmatpush.bf16.msra.mxu0 %v641
        %698 = vmatpush.bf16.msra.mxu0 %v639
        %699 = vmatpush.bf16.msra.mxu0 %v637
        %700 = vmatpush.bf16.msra.mxu0 %v635
        %701 = vmatpush.bf16.msra.mxu0 %v633
        %702 = vmatpush.bf16.msra.mxu0 %v631
        %703 = vmatmul.bf16.gmra.mxu0 %v531
        %v704 = vpop.f32.mrf.mxu0
        %v705 = vadd.f32 0.0, %v704
        %v706 = vpop.f32.mrf.mxu0
        %707 = vdwg.mxu0
        %708 = vmatpush.bf16.msra.mxu0 %v661
        %709 = vmatpush.bf16.msra.mxu0 %v659
        %710 = vmatpush.bf16.msra.mxu0 %v657
        %711 = vmatpush.bf16.msra.mxu0 %v655
        %712 = vmatpush.bf16.msra.mxu0 %v653
        %713 = vmatpush.bf16.msra.mxu0 %v651
        %714 = vmatpush.bf16.msra.mxu0 %v649
        %715 = vmatpush.bf16.msra.mxu0 %v647
        %716 = vmatmul.bf16.gmra.mxu0 %v532
        %v717 = vpop.f32.mrf.mxu0
        %v718 = vadd.f32 %v705, %v717
        %v719 = vpop.f32.mrf.mxu0
        %720 = vdwg.mxu0
        %721 = vmatpush.bf16.msra.mxu0 %v646
        %722 = vmatpush.bf16.msra.mxu0 %v644
        %723 = vmatpush.bf16.msra.mxu0 %v642
        %724 = vmatpush.bf16.msra.mxu0 %v640
        %725 = vmatpush.bf16.msra.mxu0 %v638
        %726 = vmatpush.bf16.msra.mxu0 %v636
        %727 = vmatpush.bf16.msra.mxu0 %v634
        %728 = vmatpush.bf16.msra.mxu0 %v632
        %729 = vmatmul.bf16.gmra.mxu0 %v531
        %v730 = vpop.f32.mrf.mxu0
        %v731 = vadd.f32 0.0, %v730
        %v732 = vpop.f32.mrf.mxu0
        %733 = vdwg.mxu0
        %734 = vmatpush.bf16.msra.mxu0 %v662
        %735 = vmatpush.bf16.msra.mxu0 %v660
        %736 = vmatpush.bf16.msra.mxu0 %v658
        %737 = vmatpush.bf16.msra.mxu0 %v656
        %738 = vmatpush.bf16.msra.mxu0 %v654
        %739 = vmatpush.bf16.msra.mxu0 %v652
        %740 = vmatpush.bf16.msra.mxu0 %v650
        %741 = vmatpush.bf16.msra.mxu0 %v648
        %742 = vmatmul.bf16.gmra.mxu0 %v532
        %v743 = vpop.f32.mrf.mxu0
        %v744 = vadd.f32 %v731, %v743
        %v745 = vpop.f32.mrf.mxu0
        %746 = vdwg.mxu0
        %v747 = vadd.f32 %v493, %v718
        %v748 = vadd.f32 %v494, %v744
        %749 = vst [vmem:[#allocation2] sm:$0xff] %v747
        %750 = vst [vmem:[#allocation2 + $0x8] sm:$0xff] %v748
        %p751 = scmp.eq.s32.totalorder %s21, 17
        // Predicated region
        $region83: #{resnet_small_forward.27} parent=73 // pred_check
          %p752 = pneg %p751
        $region84: #{resnet_small_forward.27} parent=73 // pred_check_branch
          %754 = sbr.rel (%p752) target = $region86
        $region85: #{resnet_small_forward.27} parent=73 // pred_region
          %v755 = vld [vmem:[#allocation2] sm:$0xff]
          %v756 = vld [vmem:[#allocation2 + $0x8] sm:$0xff]
          %v757 = vrot.slane %v755, 4
          %v758 = vadd.f32 %v755, %v757
          %v759 = vrot.slane %v758, 2
          %v760 = vadd.f32 %v758, %v759
          %v761 = vrot.slane %v760, 1
          %v762 = vadd.f32 %v760, %v761
          %v763 = vrot.slane %v756, 4
          %v764 = vadd.f32 %v756, %v763
          %v765 = vrot.slane %v764, 2
          %v766 = vadd.f32 %v764, %v765
          %v767 = vrot.slane %v766, 1
          %v768 = vadd.f32 %v766, %v767
          %v769 = vmul.f32 %v762, 0.5
          %v770 = vmul.f32 %v768, 0.5
          %v771 = vmul.f32 %v755, %v755
          %v772 = vmul.f32 %v756, %v756
          %v773 = vrot.slane %v771, 4
          %v774 = vadd.f32 %v771, %v773
          %v775 = vrot.slane %v774, 2
          %v776 = vadd.f32 %v774, %v775
          %v777 = vrot.slane %v776, 1
          %v778 = vadd.f32 %v776, %v777
          %v779 = vrot.slane %v772, 4
          %v780 = vadd.f32 %v772, %v779
          %v781 = vrot.slane %v780, 2
          %v782 = vadd.f32 %v780, %v781
          %v783 = vrot.slane %v782, 1
          %v784 = vadd.f32 %v782, %v783
          %v785 = vmul.f32 %v778, 0.5
          %v786 = vmul.f32 %v784, 0.5
          %v787 = vmul.f32 %v769, %v769
          %v788 = vmul.f32 %v770, %v770
          %v789 = vsub.f32 %v785, %v787
          %v790 = vsub.f32 %v786, %v788
          %v791 = vadd.f32 %v789, 1e-05
          %v792 = vadd.f32 %v790, 1e-05
          %v793 = vrsqrt.pop %v791
          %v794 = vmul.f32 %v793, %v791
          %v795 = vmul.f32 %v794, %v793
          %v796 = vmul.f32 0.5, %v795
          %v797 = vsub.f32 1.5, %v796
          %v798 = vmul.f32 %v793, %v797
          %vm799 = vweird.f32 %v791
          %vm800 = vweird.f32 %v793
          %vm801 = vmor %vm799, %vm800
          %v802 = vsel %vm801, %v793, %v798
          %v803 = vrsqrt.pop %v792
          %v804 = vmul.f32 %v803, %v792
          %v805 = vmul.f32 %v804, %v803
          %v806 = vmul.f32 0.5, %v805
          %v807 = vsub.f32 1.5, %v806
          %v808 = vmul.f32 %v803, %v807
          %vm809 = vweird.f32 %v792
          %vm810 = vweird.f32 %v803
          %vm811 = vmor %vm809, %vm810
          %v812 = vsel %vm811, %v803, %v808
          %v813 = vld [vmem:[%s468] sm:$0x3]
          %v815 = vperm.slane %v813, 0
          %v816 = vperm.slane %v813, 1
          %v819 = vmul.f32 %v802, %v815
          %v820 = vmul.f32 %v812, %v816
          %v821 = vld [vmem:[%s473] sm:$0x3]
          %v822 = vmul.f32 %v769, %v819
          %v823 = vmul.f32 %v770, %v820
          %v826 = vrot.slane %v823, 7
          %vm827 = vcmask 1040384
          %v828 = vsel %vm827, %v822, %v826
          %v830 = vsub.f32 %v821, %v828
          %v831 = vperm.slane %v819, 0
          %v832 = vperm.slane %v820, 0
          %v833 = vmul.f32 %v755, %v831
          %v834 = vmul.f32 %v756, %v832
          %v836 = vperm.slane %v830, 0
          %v837 = vperm.slane %v830, 1
          %v840 = vadd.f32 %v833, %v836
          %v841 = vadd.f32 %v834, %v837
          %v842 = vmax.f32 %v840, 0.0
          %v843 = vmax.f32 %v841, 0.0
          %v844 = vld [vmem:[%s479] sm:$0xff]
          %v845 = vld [vmem:[%s479 + $0x8] sm:$0xff]
          %v846 = vadd.f32 %v842, %v844
          %v847 = vadd.f32 %v843, %v845
          %v848 = vmax.f32 %v846, 0.0
          %v849 = vmax.f32 %v847, 0.0
          %850 = vst [vmem:[%s485] sm:$0xff] %v848
          %851 = vst [vmem:[%s485 + $0x8] sm:$0xff] %v849
        $region86: #{resnet_small_forward.27} parent=73 // pred_fallthru
          _
        %s852 = smul.u32 2, %s20
        %p853 = scmp.lt.s32.totalorder %s852, 3
        %s854 = scalar_select %p853, %s852, 3
        %s855 = smul.addr %s854, 8
        %s856 = scalar_lea.vmem %s5, %s855
        // Predicated region
        $region87: #{resnet_small_forward.27} parent=73 // pred_check
          %p857 = pneg %p178
        $region88: #{resnet_small_forward.27} parent=73 // pred_check_branch
          %859 = sbr.rel (%p857) target = $region90
        $region89: #{resnet_small_forward.27} parent=73 // pred_region
          %s860 = smul.u32 2, %s20
        $region90: #{resnet_small_forward.27} parent=73 // pred_fallthru
          _
      $region74: #{resnet_small_forward.27} parent=5 // pred_fallthru
        _
      %p861 = scmp.le.s32.totalorder 2, %s11
      // Predicated region
      $region91: #{resnet_small_forward.27} parent=5 // pred_check
        %p862 = pneg %p861
      $region92: #{resnet_small_forward.27} parent=5 // pred_check_branch
        %864 = sbr.rel (%p862) target = $region94
      $region93: #{resnet_small_forward.27} parent=5 // pred_region
        %s865 = ssub.s32 %s11, 2
        // Predicated region
        $region95: #{resnet_small_forward.27} parent=93 // pred_check
          %p866 = pneg %p184
        $region96: #{resnet_small_forward.27} parent=93 // pred_check_branch
          %868 = sbr.rel (%p866) target = $region98
        $region97: #{resnet_small_forward.27} parent=93 // pred_region
          %s869 = smul.u32 2, %s22
          %p870 = scmp.lt.s32.totalorder %s869, 3
          %s871 = scalar_select %p870, %s869, 3
          %s872 = smul.addr %s871, 8
          %s873 = scalar_lea.vmem %s5, %s872
        $region98: #{resnet_small_forward.27} parent=93 // pred_fallthru
          _
      $region94: #{resnet_small_forward.27} parent=5 // pred_fallthru
        _
    $region6: #{resnet_small_forward.27} parent=1 // loop_footer
      %s15 = sadd.s32 1, %s11
    $region7: #{resnet_small_forward.27} parent=1 // loop_footer_branch
      %10 = sbr.rel target = $region3
    $region8: #{resnet_small_forward.27} parent=1 // loop_exit
      _

// kernel: resnet_small_forward.28
$region0: #{resnet_small_forward.28}
  #allocation0 [shape = 'u32[]', space=smem, size = 0x4, offset = 0x4, fixed_abs, tag = 'smem constant byte address 0x4 - core index']
  #allocation1 [shape = 'u32[72,128]{1,0:T(1,128)}', space=vmem, size = 0x9000, scoped, tag = 'internal scratch']
  %s0 = inlined_call_operand.vmem [shape: f32[8,1,512], index: 0, kind: input, shape index: {}]
  %s1 = inlined_call_operand.vmem [shape: f32[8,512], index: 1, kind: output, shape index: {}]
  %s2 = sld [smem:[#allocation0]]
  $region14: #{resnet_small_forward.28} parent=0
    _
  %s4 = ssub.s32 1, %s2
  %s5 = scalar_select 0, %s4, %s2
  // Predicated region
  $region2: #{resnet_small_forward.28} parent=0 // pred_check
    _
  $region3: #{resnet_small_forward.28} parent=0 // pred_check_branch
    %7 = sbr.rel (0) target = $region5
  $region4: #{resnet_small_forward.28} parent=0 // pred_region
    _
  $region5: #{resnet_small_forward.28} parent=0 // pred_fallthru
    _
  %v8 = vld [vmem:[%s0] sm:$0xf]
  %v9 = vld [vmem:[%s0 + $0x4] sm:$0xf]
  %v10 = vld [vmem:[%s0 + $0x8] sm:$0xf]
  %v11 = vld [vmem:[%s0 + $0xc] sm:$0xf]
  %v12 = vld [vmem:[%s0 + $0x10] sm:$0xf]
  %v13 = vld [vmem:[%s0 + $0x14] sm:$0xf]
  %v14 = vld [vmem:[%s0 + $0x18] sm:$0xf]
  %v15 = vld [vmem:[%s0 + $0x1c] sm:$0xf]
  %v16 = vadd.f32 %v8, 0.0
  %v17 = vadd.f32 %v9, 0.0
  %v18 = vadd.f32 %v10, 0.0
  %v19 = vadd.f32 %v11, 0.0
  %v20 = vadd.f32 %v12, 0.0
  %v21 = vadd.f32 %v13, 0.0
  %v22 = vadd.f32 %v14, 0.0
  %v23 = vadd.f32 %v15, 0.0
  %32 = vst [vmem:[#allocation1] ss:$9 sm:$0xff] %v16
  %s33 = scalar_lea.vmem [#allocation1], 1
  %34 = vst [vmem:[%s33] ss:$9 sm:$0xff] %v17
  %s35 = scalar_lea.vmem [#allocation1], 2
  %36 = vst [vmem:[%s35] ss:$9 sm:$0xff] %v18
  %s37 = scalar_lea.vmem [#allocation1], 3
  %38 = vst [vmem:[%s37] ss:$9 sm:$0xff] %v19
  %s39 = scalar_lea.vmem [#allocation1], 4
  %40 = vst [vmem:[%s39] ss:$9 sm:$0xff] %v20
  %s41 = scalar_lea.vmem [#allocation1], 5
  %42 = vst [vmem:[%s41] ss:$9 sm:$0xff] %v21
  %s43 = scalar_lea.vmem [#allocation1], 6
  %44 = vst [vmem:[%s43] ss:$9 sm:$0xff] %v22
  %s45 = scalar_lea.vmem [#allocation1], 7
  %46 = vst [vmem:[%s45] ss:$9 sm:$0xff] %v23
  %v47 = vld [vmem:[#allocation1] sm:$0xff]
  %v48 = vld [vmem:[#allocation1 + $0x9] sm:$0xff]
  %v49 = vld [vmem:[#allocation1 + $0x12] sm:$0xff]
  %v50 = vld [vmem:[#allocation1 + $0x1b] sm:$0xff]
  %55 = vst [vmem:[%s1] sm:$0xff] %v47
  %56 = vst [vmem:[%s1 + $0x8] sm:$0xff] %v48
  %57 = vst [vmem:[%s1 + $0x10] sm:$0xff] %v49
  %58 = vst [vmem:[%s1 + $0x18] sm:$0xff] %v50
  // Predicated region
  $region6: #{resnet_small_forward.28} parent=0 // pred_check
    _
  $region7: #{resnet_small_forward.28} parent=0 // pred_check_branch
    %60 = sbr.rel (0) target = $region9
  $region8: #{resnet_small_forward.28} parent=0 // pred_region
    _
  $region9: #{resnet_small_forward.28} parent=0 // pred_fallthru
    _
  // Predicated region
  $region10: #{resnet_small_forward.28} parent=0 // pred_check
    _
  $region11: #{resnet_small_forward.28} parent=0 // pred_check_branch
    %62 = sbr.rel (0) target = $region13
  $region12: #{resnet_small_forward.28} parent=0 // pred_region
    _
  $region13: #{resnet_small_forward.28} parent=0 // pred_fallthru
    _

// kernel: resnet_small_forward.29
$region0: #{resnet_small_forward.29}
  #allocation0 [shape = 'u32[]', space=smem, size = 0x4, offset = 0x4, fixed_abs, tag = 'smem constant byte address 0x4 - core index']
  #allocation1 [shape = 'u32[72,128]{1,0:T(1,128)}', space=vmem, size = 0x9000, scoped, tag = 'internal scratch']
  #allocation2 [shape = 'f32[8,128]{1,0:T(8,128)}', space=vmem, size = 0x1000, scoped, tag = 'scratch operand']
  %s0 = inlined_call_operand.vmem [shape: bf16[8,512], index: 0, kind: input, shape index: {}]
  %s1 = inlined_call_operand.vmem [shape: bf16[512,128], index: 1, kind: input, shape index: {}]
  %s2 = inlined_call_operand.vmem [shape: f32[1,128], index: 2, kind: input, shape index: {}]
  %s3 = inlined_call_operand.vmem [shape: f32[8,128], index: 3, kind: output, shape index: {}]
  %s4 = sld [smem:[#allocation0]]
  $region53: #{resnet_small_forward.29} parent=0
    _
  %s6 = ssub.s32 1, %s4
  %s7 = scalar_select 0, %s6, %s4
  loop: start=0, step=1, limit=4
  $region2: #{resnet_small_forward.29} parent=0 // loop_pre_header
    _
  $region3: #{resnet_small_forward.29} parent=0 // loop_header
    %s9 = sphi 0, %s13
    %p10 = scmp.ge.s32.totalorder %s9, 4
    %s16 = sphi 0, %s35
    %s17 = sphi 0, %s31
    %s18 = sphi 0, %s27
    %s19 = sphi 0, %s16
    %s20 = sphi 0, %s17
    %s21 = sphi 0, %s18
    %s22 = sphi 0, %s19
    %s23 = sphi 0, %s20
    %s24 = sphi 0, %s21
    %s40 = sphi 0, %s42
    %s43 = sphi 0, %s40
    %s44 = sphi 0, %s43
    %s60 = sphi 0, %s44
    %s68 = sphi 0, %s70
    %s71 = sphi 0, %s68
    %s72 = sphi 0, %s71
    %s88 = sphi 0, %s72
    %s94 = sphi 0, %s96
    %s97 = sphi 0, %s94
    %s98 = sphi 0, %s97
    %s114 = sphi 0, %s98
    %s122 = sphi 0, %s124
    %s125 = sphi 0, %s122
    %s126 = sphi 0, %s125
    %s142 = sphi 0, %s126
  $region4: #{resnet_small_forward.29} parent=0 // loop_header_branch
    %12 = sbr.rel (%p10) target = $region8
  $region5: #{resnet_small_forward.29} parent=0 // loop_body
    %s14 = ssub.s32 %s9, 1
    %s15 = ssub.s32 %s9, 2
    %s25 = sadd.s32 1, %s18
    %p26 = scmp.ge.s32.totalorder %s25, 2
    %s27 = scalar_select %p26, 0, %s25
    %s28 = sadd.s32 1, %s17
    %s29 = scalar_select %p26, %s28, %s17
    %p30 = scmp.ge.s32.totalorder %s29, 1
    %s31 = scalar_select %p30, 0, %s29
    %s32 = sadd.s32 1, %s16
    %s33 = scalar_select %p30, %s32, %s16
    %p34 = scmp.ge.s32.totalorder %s33, 1
    %s35 = scalar_select %p34, 0, %s33
    %s36 = ssub.s32 %s16, %s35
    %s37 = ssub.s32 %s18, %s27
    %s38 = sor.u32 %s36, %s37
    %p39 = scmp.eq.s32.totalorder %s38, 0
    %s41 = sadd.s32 %s40, 1
    %s42 = scalar_select %p39, %s40, %s41
    %p45 = pneg %p39
    %p46 = scmp.eq.s32.totalorder %s9, 1
    %p47 = por %p45, %p46
    %p48 = scmp.ne.s32.totalorder %s40, %s43
    %p49 = scmp.eq.s32.totalorder %s9, 0
    %p50 = por %p48, %p49
    %p51 = scmp.ne.s32.totalorder %s40, %s43
    %p52 = scmp.eq.s32.totalorder %s14, 1
    %p53 = por %p51, %p52
    %p54 = scmp.ne.s32.totalorder %s43, %s44
    %p55 = scmp.eq.s32.totalorder %s14, 0
    %p56 = por %p54, %p55
    %p57 = scmp.ne.s32.totalorder %s43, %s44
    %p58 = scmp.eq.s32.totalorder %s15, 1
    %p59 = por %p57, %p58
    %p61 = scmp.ne.s32.totalorder %s44, %s60
    %p62 = scmp.eq.s32.totalorder %s15, 0
    %p63 = por %p61, %p62
    %s64 = ssub.s32 %s18, %s27
    %s65 = ssub.s32 %s17, %s31
    %s66 = sor.u32 %s64, %s65
    %p67 = scmp.eq.s32.totalorder %s66, 0
    %s69 = sadd.s32 %s68, 1
    %s70 = scalar_select %p67, %s68, %s69
    %p73 = pneg %p67
    %p74 = scmp.eq.s32.totalorder %s9, 1
    %p75 = por %p73, %p74
    %p76 = scmp.ne.s32.totalorder %s68, %s71
    %p77 = scmp.eq.s32.totalorder %s9, 0
    %p78 = por %p76, %p77
    %p79 = scmp.ne.s32.totalorder %s68, %s71
    %p80 = scmp.eq.s32.totalorder %s14, 1
    %p81 = por %p79, %p80
    %p82 = scmp.ne.s32.totalorder %s71, %s72
    %p83 = scmp.eq.s32.totalorder %s14, 0
    %p84 = por %p82, %p83
    %p85 = scmp.ne.s32.totalorder %s71, %s72
    %p86 = scmp.eq.s32.totalorder %s15, 1
    %p87 = por %p85, %p86
    %p89 = scmp.ne.s32.totalorder %s72, %s88
    %p90 = scmp.eq.s32.totalorder %s15, 0
    %p91 = por %p89, %p90
    %s92 = ssub.s32 %s17, %s31
    %p93 = scmp.eq.s32.totalorder %s92, 0
    %s95 = sadd.s32 %s94, 1
    %s96 = scalar_select %p93, %s94, %s95
    %p99 = pneg %p93
    %p100 = scmp.eq.s32.totalorder %s9, 1
    %p101 = por %p99, %p100
    %p102 = scmp.ne.s32.totalorder %s94, %s97
    %p103 = scmp.eq.s32.totalorder %s9, 0
    %p104 = por %p102, %p103
    %p105 = scmp.ne.s32.totalorder %s94, %s97
    %p106 = scmp.eq.s32.totalorder %s14, 1
    %p107 = por %p105, %p106
    %p108 = scmp.ne.s32.totalorder %s97, %s98
    %p109 = scmp.eq.s32.totalorder %s14, 0
    %p110 = por %p108, %p109
    %p111 = scmp.ne.s32.totalorder %s97, %s98
    %p112 = scmp.eq.s32.totalorder %s15, 1
    %p113 = por %p111, %p112
    %p115 = scmp.ne.s32.totalorder %s98, %s114
    %p116 = scmp.eq.s32.totalorder %s15, 0
    %p117 = por %p115, %p116
    %s118 = ssub.s32 %s16, %s35
    %s119 = ssub.s32 %s17, %s31
    %s120 = sor.u32 %s118, %s119
    %p121 = scmp.eq.s32.totalorder %s120, 0
    %s123 = sadd.s32 %s122, 1
    %s124 = scalar_select %p121, %s122, %s123
    %p127 = pneg %p121
    %p128 = scmp.eq.s32.totalorder %s9, 1
    %p129 = por %p127, %p128
    %p130 = scmp.ne.s32.totalorder %s122, %s125
    %p131 = scmp.eq.s32.totalorder %s9, 0
    %p132 = por %p130, %p131
    %p133 = scmp.ne.s32.totalorder %s122, %s125
    %p134 = scmp.eq.s32.totalorder %s14, 1
    %p135 = por %p133, %p134
    %p136 = scmp.ne.s32.totalorder %s125, %s126
    %p137 = scmp.eq.s32.totalorder %s14, 0
    %p138 = por %p136, %p137
    %p139 = scmp.ne.s32.totalorder %s125, %s126
    %p140 = scmp.eq.s32.totalorder %s15, 1
    %p141 = por %p139, %p140
    %p143 = scmp.ne.s32.totalorder %s126, %s142
    %p144 = scmp.eq.s32.totalorder %s15, 0
    %p145 = por %p143, %p144
    %p146 = scmp.le.s32.totalorder 1, %s9
    %p147 = scmp.lt.s32.totalorder %s9, 3
    %p148 = pnand %p146, %p147
    %p149 = pneg %p148
    // Predicated region
    $region9: #{resnet_small_forward.29} parent=5 // pred_check
      _
    $region10: #{resnet_small_forward.29} parent=5 // pred_check_branch
      %151 = sbr.rel (%p148) target = $region12
    $region11: #{resnet_small_forward.29} parent=5 // pred_region
      %s152 = ssub.s32 %s9, 1
      // Predicated region
      $region13: #{resnet_small_forward.29} parent=11 // pred_check
        %p153 = pneg %p110
      $region14: #{resnet_small_forward.29} parent=11 // pred_check_branch
        %155 = sbr.rel (%p153) target = $region16
      $region15: #{resnet_small_forward.29} parent=11 // pred_region
        %p156 = scmp.lt.s32.totalorder %s20, 0
        %s157 = scalar_select %p156, %s20, 0
        %s158 = scalar_lea.vmem %s2, %s157
      $region16: #{resnet_small_forward.29} parent=11 // pred_fallthru
        _
    $region12: #{resnet_small_forward.29} parent=5 // pred_fallthru
      _
    %p159 = scmp.lt.s32.totalorder %s9, 2
    // Predicated region
    $region17: #{resnet_small_forward.29} parent=5 // pred_check
      %p160 = pneg %p159
    $region18: #{resnet_small_forward.29} parent=5 // pred_check_branch
      %162 = sbr.rel (%p160) target = $region20
    $region19: #{resnet_small_forward.29} parent=5 // pred_region
      // Predicated region
      $region21: #{resnet_small_forward.29} parent=19 // pred_check
        %p163 = pneg %p50
      $region22: #{resnet_small_forward.29} parent=19 // pred_check_branch
        %165 = sbr.rel (%p163) target = $region24
      $region23: #{resnet_small_forward.29} parent=19 // pred_region
        %s166 = smul.u32 2, %s18
        %p167 = scmp.lt.s32.totalorder %s16, 0
        %s168 = scalar_select %p167, %s16, 0
        %p169 = scmp.lt.s32.totalorder %s166, 3
        %s170 = scalar_select %p169, %s166, 3
        %s171 = smul.addr %s168, 4
        %s172 = sadd.s32 %s170, %s171
        %s173 = smul.addr %s172, 4
        %s174 = scalar_lea.vmem %s0, %s173
        %s175 = smul.u32 2, %s18
      $region24: #{resnet_small_forward.29} parent=19 // pred_fallthru
        _
      // Predicated region
      $region25: #{resnet_small_forward.29} parent=19 // pred_check
        %p176 = pneg %p78
      $region26: #{resnet_small_forward.29} parent=19 // pred_check_branch
        %178 = sbr.rel (%p176) target = $region28
      $region27: #{resnet_small_forward.29} parent=19 // pred_region
        %s179 = smul.u32 32, %s18
        %p180 = scmp.lt.s32.totalorder %s179, 63
        %s181 = scalar_select %p180, %s179, 63
        %p182 = scmp.lt.s32.totalorder %s17, 0
        %s183 = scalar_select %p182, %s17, 0
        %s184 = sadd.s32 %s183, %s181
        %s185 = smul.addr %s184, 4
        %s186 = scalar_lea.vmem %s1, %s185
        %s187 = smul.u32 32, %s18
      $region28: #{resnet_small_forward.29} parent=19 // pred_fallthru
        _
    $region20: #{resnet_small_forward.29} parent=5 // pred_fallthru
      _
    %p188 = scmp.le.s32.totalorder 1, %s9
    %p189 = scmp.lt.s32.totalorder %s9, 3
    %p190 = pnand %p188, %p189
    %p191 = pneg %p190
    // Predicated region
    $region29: #{resnet_small_forward.29} parent=5 // pred_check
      _
    $region30: #{resnet_small_forward.29} parent=5 // pred_check_branch
      %193 = sbr.rel (%p190) target = $region32
    $region31: #{resnet_small_forward.29} parent=5 // pred_region
      %s194 = ssub.s32 %s9, 1
      %s195 = smul.u32 2, %s21
      %p196 = scmp.lt.s32.totalorder %s19, 0
      %s197 = scalar_select %p196, %s19, 0
      %p198 = scmp.lt.s32.totalorder %s195, 3
      %s199 = scalar_select %p198, %s195, 3
      %s200 = smul.addr %s197, 4
      %s201 = sadd.s32 %s199, %s200
      %s202 = smul.addr %s201, 4
      %s203 = scalar_lea.vmem %s0, %s202
      %p204 = pneg %p56
      %p205 = pneg %p53
      %s206 = smul.u32 32, %s21
      %p207 = scmp.lt.s32.totalorder %s206, 63
      %s208 = scalar_select %p207, %s206, 63
      %p209 = scmp.lt.s32.totalorder %s20, 0
      %s210 = scalar_select %p209, %s20, 0
      %s211 = sadd.s32 %s210, %s208
      %s212 = smul.addr %s211, 4
      %s213 = scalar_lea.vmem %s1, %s212
      %p214 = pneg %p84
      %p215 = pneg %p81
      %p216 = scmp.lt.s32.totalorder %s20, 0
      %s217 = scalar_select %p216, %s20, 0
      %s218 = scalar_lea.vmem %s2, %s217
      %p219 = pneg %p110
      %p220 = pneg %p107
      %p221 = pneg %p138
      %p222 = pneg %p135
      %p223 = scmp.lt.s32.totalorder %s19, 0
      %s224 = scalar_select %p223, %s19, 0
      %p225 = scmp.lt.s32.totalorder %s20, 0
      %s226 = scalar_select %p225, %s20, 0
      %s227 = sadd.s32 %s226, %s224
      %s228 = smul.addr %s227, 8
      %s229 = scalar_lea.vmem %s3, %s228
      %s230 = smul.u32 2, %s21
      %p231 = scmp.lt.s32.totalorder %s19, 0
      %s232 = scalar_select %p231, %s19, 0
      %p233 = scmp.lt.s32.totalorder %s230, 3
      %s234 = scalar_select %p233, %s230, 3
      %s235 = smul.addr %s232, 4
      %s236 = sadd.s32 %s234, %s235
      %s237 = smul.addr %s236, 4
      %s238 = scalar_lea.vmem %s0, %s237
      %s239 = smul.u32 2, %s21
      %s240 = smul.u32 32, %s21
      %p241 = scmp.lt.s32.totalorder %s240, 63
      %s242 = scalar_select %p241, %s240, 63
      %p243 = scmp.lt.s32.totalorder %s20, 0
      %s244 = scalar_select %p243, %s20, 0
      %s245 = sadd.s32 %s244, %s242
      %s246 = smul.addr %s245, 4
      %s247 = scalar_lea.vmem %s1, %s246
      %s248 = smul.u32 32, %s21
      %p249 = scmp.lt.s32.totalorder %s20, 0
      %s250 = scalar_select %p249, %s20, 0
      %s251 = scalar_lea.vmem %s2, %s250
      %p252 = scmp.lt.s32.totalorder %s19, 0
      %s253 = scalar_select %p252, %s19, 0
      %p254 = scmp.lt.s32.totalorder %s20, 0
      %s255 = scalar_select %p254, %s20, 0
      %s256 = sadd.s32 %s255, %s253
      %s257 = smul.addr %s256, 8
      %s258 = scalar_lea.vmem %s3, %s257
      %p259 = scmp.eq.s32.totalorder %s21, 0
      // Predicated region
      $region33: #{resnet_small_forward.29} parent=31 // pred_check
        %p260 = pneg %p259
      $region34: #{resnet_small_forward.29} parent=31 // pred_check_branch
        %262 = sbr.rel (%p260) target = $region36
      $region35: #{resnet_small_forward.29} parent=31 // pred_region
        %263 = vst [vmem:[#allocation2] sm:$0xff] 0.0
      $region36: #{resnet_small_forward.29} parent=31 // pred_fallthru
        _
      %v264 = vld [vmem:[#allocation2] sm:$0xff]
      %v265 = vld [vmem:[%s238] sm:$0xff]
      %v266 = vld [vmem:[%s247] sm:$0xf]
      %v267 = vld [vmem:[%s247 + $0x4] sm:$0xf]
      %v268 = vld [vmem:[%s247 + $0x8] sm:$0xf]
      %v269 = vld [vmem:[%s247 + $0xc] sm:$0xf]
      %v270 = vld [vmem:[%s247 + $0x10] sm:$0xf]
      %v271 = vld [vmem:[%s247 + $0x14] sm:$0xf]
      %v272 = vld [vmem:[%s247 + $0x18] sm:$0xf]
      %v273 = vld [vmem:[%s247 + $0x1c] sm:$0xf]
      %v274 = vld [vmem:[%s247 + $0x20] sm:$0xf]
      %v275 = vld [vmem:[%s247 + $0x24] sm:$0xf]
      %v276 = vld [vmem:[%s247 + $0x28] sm:$0xf]
      %v277 = vld [vmem:[%s247 + $0x2c] sm:$0xf]
      %v278 = vld [vmem:[%s247 + $0x30] sm:$0xf]
      %v279 = vld [vmem:[%s247 + $0x34] sm:$0xf]
      %v280 = vld [vmem:[%s247 + $0x38] sm:$0xf]
      %v281 = vld [vmem:[%s247 + $0x3c] sm:$0xf]
      %v282 = vld [vmem:[%s247 + $0x40] sm:$0xf]
      %v283 = vld [vmem:[%s247 + $0x44] sm:$0xf]
      %v284 = vld [vmem:[%s247 + $0x48] sm:$0xf]
      %v285 = vld [vmem:[%s247 + $0x4c] sm:$0xf]
      %v286 = vld [vmem:[%s247 + $0x50] sm:$0xf]
      %v287 = vld [vmem:[%s247 + $0x54] sm:$0xf]
      %v288 = vld [vmem:[%s247 + $0x58] sm:$0xf]
      %v289 = vld [vmem:[%s247 + $0x5c] sm:$0xf]
      %v290 = vld [vmem:[%s247 + $0x60] sm:$0xf]
      %v291 = vld [vmem:[%s247 + $0x64] sm:$0xf]
      %v292 = vld [vmem:[%s247 + $0x68] sm:$0xf]
      %v293 = vld [vmem:[%s247 + $0x6c] sm:$0xf]
      %v294 = vld [vmem:[%s247 + $0x70] sm:$0xf]
      %v295 = vld [vmem:[%s247 + $0x74] sm:$0xf]
      %v296 = vld [vmem:[%s247 + $0x78] sm:$0xf]
      %v297 = vld [vmem:[%s247 + $0x7c] sm:$0xf]
      %v299 = vunpack.c.l.b16 %v265
      %v300 = vunpack.c.h.b16 %v265
      %v301 = vpack.c.b16 %v299, %v299
      %v302 = vpack.c.b16 %v300, %v300
      %v337 = vunpack.c.l.b16 %v266
      %v338 = vunpack.c.l.b16 %v267
      %v339 = vunpack.c.l.b16 %v268
      %v340 = vunpack.c.l.b16 %v269
      %v341 = vunpack.c.l.b16 %v270
      %v342 = vunpack.c.l.b16 %v271
      %v343 = vunpack.c.l.b16 %v272
      %v344 = vunpack.c.l.b16 %v273
      %v345 = vunpack.c.l.b16 %v274
      %v346 = vunpack.c.l.b16 %v275
      %v347 = vunpack.c.l.b16 %v276
      %v348 = vunpack.c.l.b16 %v277
      %v349 = vunpack.c.l.b16 %v278
      %v350 = vunpack.c.l.b16 %v279
      %v351 = vunpack.c.l.b16 %v280
      %v352 = vunpack.c.l.b16 %v281
      %v353 = vunpack.c.l.b16 %v282
      %v354 = vunpack.c.l.b16 %v283
      %v355 = vunpack.c.l.b16 %v284
      %v356 = vunpack.c.l.b16 %v285
      %v357 = vunpack.c.l.b16 %v286
      %v358 = vunpack.c.l.b16 %v287
      %v359 = vunpack.c.l.b16 %v288
      %v360 = vunpack.c.l.b16 %v289
      %v361 = vunpack.c.l.b16 %v290
      %v362 = vunpack.c.l.b16 %v291
      %v363 = vunpack.c.l.b16 %v292
      %v364 = vunpack.c.l.b16 %v293
      %v365 = vunpack.c.l.b16 %v294
      %v366 = vunpack.c.l.b16 %v295
      %v367 = vunpack.c.l.b16 %v296
      %v368 = vunpack.c.l.b16 %v297
      %v369 = vpack.c.b16 %v338, %v337
      %v370 = vpack.c.b16 %v340, %v339
      %v371 = vpack.c.b16 %v342, %v341
      %v372 = vpack.c.b16 %v344, %v343
      %v373 = vpack.c.b16 %v346, %v345
      %v374 = vpack.c.b16 %v348, %v347
      %v375 = vpack.c.b16 %v350, %v349
      %v376 = vpack.c.b16 %v352, %v351
      %v377 = vpack.c.b16 %v354, %v353
      %v378 = vpack.c.b16 %v356, %v355
      %v379 = vpack.c.b16 %v358, %v357
      %v380 = vpack.c.b16 %v360, %v359
      %v381 = vpack.c.b16 %v362, %v361
      %v382 = vpack.c.b16 %v364, %v363
      %v383 = vpack.c.b16 %v366, %v365
      %v384 = vpack.c.b16 %v368, %v367
      %401 = vmatpush.bf16.msra.mxu0 %v376
      %402 = vmatpush.bf16.msra.mxu0 %v375
      %403 = vmatpush.bf16.msra.mxu0 %v374
      %404 = vmatpush.bf16.msra.mxu0 %v373
      %405 = vmatpush.bf16.msra.mxu0 %v372
      %406 = vmatpush.bf16.msra.mxu0 %v371
      %407 = vmatpush.bf16.msra.mxu0 %v370
      %408 = vmatpush.bf16.msra.mxu0 %v369
      %409 = vmatmul.bf16.gmra.mxu0 %v301
      %v410 = vpop.f32.mrf.mxu0
      %v411 = vadd.f32 0.0, %v410
      %v412 = vpop.f32.mrf.mxu0
      %413 = vdwg.mxu0
      %414 = vmatpush.bf16.msra.mxu0 %v384
      %415 = vmatpush.bf16.msra.mxu0 %v383
      %416 = vmatpush.bf16.msra.mxu0 %v382
      %417 = vmatpush.bf16.msra.mxu0 %v381
      %418 = vmatpush.bf16.msra.mxu0 %v380
      %419 = vmatpush.bf16.msra.mxu0 %v379
      %420 = vmatpush.bf16.msra.mxu0 %v378
      %421 = vmatpush.bf16.msra.mxu0 %v377
      %422 = vmatmul.bf16.gmra.mxu0 %v302
      %v423 = vpop.f32.mrf.mxu0
      %v424 = vadd.f32 %v411, %v423
      %v425 = vpop.f32.mrf.mxu0
      %426 = vdwg.mxu0
      %v427 = vadd.f32 %v264, %v424
      %428 = vst [vmem:[#allocation2] sm:$0xff] %v427
      %p429 = scmp.eq.s32.totalorder %s21, 1
      // Predicated region
      $region37: #{resnet_small_forward.29} parent=31 // pred_check
        %p430 = pneg %p429
      $region38: #{resnet_small_forward.29} parent=31 // pred_check_branch
        %432 = sbr.rel (%p430) target = $region40
      $region39: #{resnet_small_forward.29} parent=31 // pred_region
        %v433 = vld [vmem:[#allocation2] sm:$0xff]
        %v434 = vld [vmem:[%s251] sm:$0x1]
        %v436 = vperm.slane %v434, 0
        %v438 = vadd.f32 %v433, %v436
        %439 = vst [vmem:[%s258] sm:$0xff] %v438
      $region40: #{resnet_small_forward.29} parent=31 // pred_fallthru
        _
      %p440 = scmp.lt.s32.totalorder %s19, 0
      %s441 = scalar_select %p440, %s19, 0
      %p442 = scmp.lt.s32.totalorder %s20, 0
      %s443 = scalar_select %p442, %s20, 0
      %s444 = sadd.s32 %s443, %s441
      %s445 = smul.addr %s444, 8
      %s446 = scalar_lea.vmem %s3, %s445
      // Predicated region
      $region41: #{resnet_small_forward.29} parent=31 // pred_check
        %p447 = pneg %p135
      $region42: #{resnet_small_forward.29} parent=31 // pred_check_branch
        %449 = sbr.rel (%p447) target = $region44
      $region43: #{resnet_small_forward.29} parent=31 // pred_region
        _
      $region44: #{resnet_small_forward.29} parent=31 // pred_fallthru
        _
      // Predicated region
      $region45: #{resnet_small_forward.29} parent=31 // pred_check
        %p450 = pneg %p135
      $region46: #{resnet_small_forward.29} parent=31 // pred_check_branch
        %452 = sbr.rel (%p450) target = $region48
      $region47: #{resnet_small_forward.29} parent=31 // pred_region
        %p453 = scmp.lt.s32.totalorder %s19, 0
        %s454 = scalar_select %p453, %s19, 0
        %p455 = scmp.lt.s32.totalorder %s20, 0
        %s456 = scalar_select %p455, %s20, 0
        %s457 = sadd.s32 %s456, %s454
        %s458 = smul.addr %s457, 8
        %s459 = scalar_lea.vmem %s3, %s458
      $region48: #{resnet_small_forward.29} parent=31 // pred_fallthru
        _
    $region32: #{resnet_small_forward.29} parent=5 // pred_fallthru
      _
    %p460 = scmp.le.s32.totalorder 2, %s9
    // Predicated region
    $region49: #{resnet_small_forward.29} parent=5 // pred_check
      %p461 = pneg %p460
    $region50: #{resnet_small_forward.29} parent=5 // pred_check_branch
      %463 = sbr.rel (%p461) target = $region52
    $region51: #{resnet_small_forward.29} parent=5 // pred_region
      %s464 = ssub.s32 %s9, 2
    $region52: #{resnet_small_forward.29} parent=5 // pred_fallthru
      _
  $region6: #{resnet_small_forward.29} parent=0 // loop_footer
    %s13 = sadd.s32 1, %s9
  $region7: #{resnet_small_forward.29} parent=0 // loop_footer_branch
    %8 = sbr.rel target = $region3
  $region8: #{resnet_small_forward.29} parent=0 // loop_exit
    _

</llo_original>
